<compile_context>
chip_gen: v6e
topology: v6e:2x2x1
jax: 0.10.0
libtpu: 0.0.40
codegen_flags: <defaults>
</compile_context>

<pallas_src>
import math

import jax
import jax.numpy as jnp
from jax import lax
from jax.experimental import pallas as pl
from jax.experimental.pallas import tpu as pltpu

# ----------------- hyper-parameters (small, structurally faithful) ----------
INPUT_CHANNELS = 2
INPUT_LENGTH   = 32                                  # stands in for 512
NUM_PATCHES    = 8
EMBED_DIM      = 48                                  # stands in for 768
NUM_HEADS      = 3                                   # IQST-S
NUM_LAYERS     = 3                                   # IQST-S
FFN_DIM        = EMBED_DIM * 4
PATCH_SIZE     = (INPUT_CHANNELS * INPUT_LENGTH) // NUM_PATCHES
SEQ_LEN        = NUM_PATCHES + 1
HEAD_DIM       = EMBED_DIM // NUM_HEADS
LN_EPS         = 1e-5
INV_SQRT2      = 0.7071067811865476

# padded (vreg-friendly) sizes
E_PAD    = 128
S_PAD    = 16
F_PAD    = 256
QKV_PAD  = 3 * E_PAD
MISC_ROWS = 24            # 16 pos rows + tokpos + b_pe + lnf_g + lnf_b + pad


# ----------------- math helpers ----------------------------------------------
def _gelu_exact(x):
    # exact (erf-based) GELU, matching torch.nn.functional.gelu default
    return 0.5 * x * (1.0 + lax.erf(x * INV_SQRT2))


def _layer_norm_ref(x, g, b):
    mu = jnp.mean(x, axis=-1, keepdims=True)
    xc = x - mu
    var = jnp.mean(xc * xc, axis=-1, keepdims=True)
    return xc * lax.rsqrt(var + LN_EPS) * g + b


def _layer_norm_pad(x, g, b, lane_valid):
    """LayerNorm over the true EMBED_DIM lanes of a lane-padded activation.

    Requires pad lanes of x, g, b to be zero; keeps pad lanes zero.
    """
    mu = jnp.sum(x, axis=-1, keepdims=True) * (1.0 / EMBED_DIM)
    xc = jnp.where(lane_valid, x - mu, 0.0)
    var = jnp.sum(xc * xc, axis=-1, keepdims=True) * (1.0 / EMBED_DIM)
    return xc * lax.rsqrt(var + LN_EPS) * g + b


# ----------------------------- fused Pallas kernel ---------------------------
def _fused_forward_kernel(bb):
    """Fused forward for a batch chunk of `bb` elements (rows = bb * S_PAD)."""
    rows = bb * S_PAD
    scale = 1.0 / math.sqrt(HEAD_DIM)

    def kernel(patches_ref, w_pe_ref, misc_ref,
               w_qkv_ref, w_out_ref, w1_ref, w2_ref, vec_ref, o_ref):
        # ---- unpack consolidated small params --------------------------------
        posp   = misc_ref[0:S_PAD, :]                    # (16, 128), pad rows 0
        tokpos = misc_ref[S_PAD:S_PAD + 1, :]            # shared_token + pos[0]
        b_pe   = misc_ref[S_PAD + 1:S_PAD + 2, :]
        lnf_g  = misc_ref[S_PAD + 2:S_PAD + 3, :]
        lnf_b  = misc_ref[S_PAD + 3:S_PAD + 4, :]

        lane_valid = lax.broadcasted_iota(jnp.int32, (1, E_PAD), 1) < EMBED_DIM

        # ---- patch embedding: one MXU push for the whole chunk ----------------
        # patch rows were pre-positioned (wrapper) at offsets 1..8 of each
        # 16-row block; row 0 and rows 9..15 are zero input (-> bias only).
        pe = jnp.dot(patches_ref[...], w_pe_ref[...].astype(jnp.float32),
                     preferred_element_type=jnp.float32) + b_pe       # (rows, 128)
        pe3 = pe.reshape(bb, S_PAD, E_PAD)

        # ---- vectorized [shared_token ; patches] + positional embedding -------
        row_id = lax.broadcasted_iota(jnp.int32, (bb, S_PAD, E_PAD), 1)
        h3 = jnp.where(row_id == 0, tokpos[None], pe3 + posp[None])
        h = h3.reshape(rows, E_PAD)                                    # (rows, 128)

        # softmax key mask for padded sequence rows (built once, reused)
        kcol = lax.broadcasted_iota(jnp.int32, (bb, S_PAD, S_PAD), 2)
        kmask = kcol < SEQ_LEN

        # ---- post-norm transformer encoder layers (static unroll over 3) ------
        for l in range(NUM_LAYERS):
            vp = vec_ref[l]                                # (8, 384) vector pack
            b_qkv = vp[0:1, :]
            b_out = vp[1:2, 0:E_PAD]
            ln1_g = vp[2:3, 0:E_PAD]
            ln1_b = vp[3:4, 0:E_PAD]
            b1    = vp[4:5, 0:F_PAD]
            b2    = vp[5:6, 0:E_PAD]
            ln2_g = vp[6:7, 0:E_PAD]
            ln2_b = vp[7:8, 0:E_PAD]

            qkv = jnp.dot(h, w_qkv_ref[l].astype(jnp.float32),
                          preferred_element_type=jnp.float32) + b_qkv  # (rows,384)
            q = qkv[:, 0:E_PAD] * scale            # vreg-aligned slices (0/128/256)
            k = qkv[:, E_PAD:2 * E_PAD]
            v = qkv[:, 2 * E_PAD:3 * E_PAD]
            q3 = q.reshape(bb, S_PAD, E_PAD)
            k3 = k.reshape(bb, S_PAD, E_PAD)
            v3 = v.reshape(bb, S_PAD, E_PAD)

            w_out_l = w_out_ref[l].astype(jnp.float32)

            # batched attention, loop over the 3 heads only; per-head context
            # folds straight into the output projection (no VMEM scratch).
            attn = jnp.zeros((rows, E_PAD), jnp.float32)
            for hh in range(NUM_HEADS):
                lo = hh * HEAD_DIM
                qh = q3[:, :, lo:lo + HEAD_DIM]
                kh = k3[:, :, lo:lo + HEAD_DIM]
                vh = v3[:, :, lo:lo + HEAD_DIM]
                s = jnp.einsum("bqd,bkd->bqk", qh, kh,
                               preferred_element_type=jnp.float32)
                s = jnp.where(kmask, s, -1e30)             # mask padded key rows
                s = s - jnp.max(s, axis=-1, keepdims=True)
                p = jnp.exp(s)
                p = p / jnp.sum(p, axis=-1, keepdims=True)  # exact softmax (torch)
                ctx = jnp.einsum("bqk,bkd->bqd", p, vh,
                                 preferred_element_type=jnp.float32)
                attn = attn + jnp.dot(ctx.reshape(rows, HEAD_DIM),
                                      w_out_l[lo:lo + HEAD_DIM, :],
                                      preferred_element_type=jnp.float32)
            attn = attn + b_out

            h = _layer_norm_pad(h + attn, ln1_g, ln1_b, lane_valid)      # norm1

            f = jnp.dot(h, w1_ref[l].astype(jnp.float32),
                        preferred_element_type=jnp.float32) + b1
            f = _gelu_exact(f)
            f = jnp.dot(f, w2_ref[l].astype(jnp.float32),
                        preferred_element_type=jnp.float32) + b2
            h = _layer_norm_pad(h + f, ln2_g, ln2_b, lane_valid)         # norm2

        # ---- final encoder LayerNorm on the shared-token rows (vectorized) ----
        tok_rows = h.reshape(bb, S_PAD, E_PAD)[:, 0:1, :].reshape(bb, E_PAD)
        o_ref[...] = _layer_norm_pad(tok_rows, lnf_g, lnf_b, lane_valid)

    return kernel


# ----------------------------- wrapper ---------------------------------------
def _pad_to(a, shape):
    return jnp.pad(a, [(0, t - s) for s, t in zip(a.shape, shape)])


def _prep_weights(params):
    """Pad / pack parameters into the 8 kernel inputs (matrices -> bf16)."""
    w_qkv_l, w_out_l, w1_l, w2_l, vec_l = [], [], [], [], []
    for lp in params["layers"]:
        wq, wk, wv = jnp.split(lp["w_in"], 3, axis=1)        # (E, E) each
        bq, bk, bv = jnp.split(lp["b_in"], 3, axis=1)        # (1, E) each
        w_qkv = jnp.concatenate([_pad_to(wq, (E_PAD, E_PAD)),
                                 _pad_to(wk, (E_PAD, E_PAD)),
                                 _pad_to(wv, (E_PAD, E_PAD))], axis=1)  # (128,384)
        b_qkv = jnp.concatenate([_pad_to(bq, (1, E_PAD)),
                                 _pad_to(bk, (1, E_PAD)),
                                 _pad_to(bv, (1, E_PAD))], axis=1)      # (1,384)
        vec = jnp.concatenate([
            b_qkv,
            _pad_to(lp["b_out"], (1, QKV_PAD)),
            _pad_to(lp["ln1_g"], (1, QKV_PAD)),
            _pad_to(lp["ln1_b"], (1, QKV_PAD)),
            _pad_to(lp["b1"],    (1, QKV_PAD)),
            _pad_to(lp["b2"],    (1, QKV_PAD)),
            _pad_to(lp["ln2_g"], (1, QKV_PAD)),
            _pad_to(lp["ln2_b"], (1, QKV_PAD)),
        ], axis=0)                                                      # (8,384)
        w_qkv_l.append(w_qkv)
        w_out_l.append(_pad_to(lp["w_out"], (E_PAD, E_PAD)))
        w1_l.append(_pad_to(lp["w1"], (E_PAD, F_PAD)))
        w2_l.append(_pad_to(lp["w2"], (F_PAD, E_PAD)))
        vec_l.append(vec)

    w_pe = _pad_to(params["w_pe"], (PATCH_SIZE, E_PAD)).astype(jnp.bfloat16)
    w_qkv = jnp.stack(w_qkv_l).astype(jnp.bfloat16)
    w_out = jnp.stack(w_out_l).astype(jnp.bfloat16)
    w1 = jnp.stack(w1_l).astype(jnp.bfloat16)
    w2 = jnp.stack(w2_l).astype(jnp.bfloat16)
    vecs = jnp.stack(vec_l).astype(jnp.float32)

    pos = params["pos_emb"].reshape(SEQ_LEN, EMBED_DIM)
    tokpos = params["shared_token"].reshape(1, EMBED_DIM) + pos[0:1]
    misc = jnp.concatenate([
        _pad_to(pos, (S_PAD, E_PAD)),                    # rows 0..15
        _pad_to(tokpos, (1, E_PAD)),                     # row 16
        _pad_to(params["b_pe"], (1, E_PAD)),             # row 17
        _pad_to(params["lnf_g"], (1, E_PAD)),            # row 18
        _pad_to(params["lnf_b"], (1, E_PAD)),            # row 19
        jnp.zeros((MISC_ROWS - S_PAD - 4, E_PAD), jnp.float32),
    ], axis=0).astype(jnp.float32)                       # (24, 128)
    return w_pe, misc, w_qkv, w_out, w1, w2, vecs


def iqst_backbone_forward(x, params, batch_block=None):
    """x: (B, INPUT_CHANNELS, INPUT_LENGTH) -> (B, EMBED_DIM, 1)."""
    B = x.shape[0]
    if batch_block is None:
        bb = B if B < 16 else 8     # >=2 grid steps for large B (v7x megacore)
    else:
        bb = batch_block
    assert B % bb == 0, "batch size must be divisible by batch_block"

    # glue: flatten + unfold (step == size) is a row-major reshape; the patch
    # rows are pre-positioned at offsets 1..8 of each 16-row block so the
    # kernel needs no per-batch assembly.
    patches = x.reshape(B, NUM_PATCHES, PATCH_SIZE).astype(jnp.float32)
    patches_pad = jnp.zeros((B, S_PAD, PATCH_SIZE), jnp.float32)
    patches_pad = patches_pad.at[:, 1:SEQ_LEN, :].set(patches)
    patches_pad = patches_pad.reshape(B * S_PAD, PATCH_SIZE)

    w_pe, misc, w_qkv, w_out, w1, w2, vecs = _prep_weights(params)

    def rep2(shape):
        return pl.BlockSpec(shape, lambda i: (0, 0))

    def rep3(shape):
        return pl.BlockSpec(shape, lambda i: (0, 0, 0))

    shared = pl.pallas_call(
        _fused_forward_kernel(bb),
        out_shape=jax.ShapeDtypeStruct((B, E_PAD), jnp.float32),
        grid_spec=pltpu.PrefetchScalarGridSpec(
            num_scalar_prefetch=0,
            grid=(B // bb,),
            in_specs=[
                pl.BlockSpec((bb * S_PAD, PATCH_SIZE), lambda i: (i, 0)),
                rep2((PATCH_SIZE, E_PAD)),                       # w_pe (bf16)
                rep2((MISC_ROWS, E_PAD)),                        # misc pack
                rep3((NUM_LAYERS, E_PAD, QKV_PAD)),              # w_qkv (bf16)
                rep3((NUM_LAYERS, E_PAD, E_PAD)),                # w_out (bf16)
                rep3((NUM_LAYERS, E_PAD, F_PAD)),                # w1   (bf16)
                rep3((NUM_LAYERS, F_PAD, E_PAD)),                # w2   (bf16)
                rep3((NUM_LAYERS, 8, QKV_PAD)),                  # vector pack
            ],
            out_specs=pl.BlockSpec((bb, E_PAD), lambda i: (i, 0)),
            scratch_shapes=[],
        ),
        compiler_params=pltpu.CompilerParams(
            dimension_semantics=("parallel",)),
    )(patches_pad, w_pe, misc, w_qkv, w_out, w1, w2, vecs)

    return shared[:, :EMBED_DIM, None]                           # (B, E, 1)


# ----------------------- pure-JAX reference (exact f32) ----------------------
def reference_forward(x, params):
    hp = lax.Precision.HIGHEST
    B = x.shape[0]
    patches = x.reshape(B, -1).reshape(B, NUM_PATCHES, PATCH_SIZE)
    pe = jnp.einsum("bps,se->bpe", patches, params["w_pe"],
                    precision=hp) + params["b_pe"][0]
    tok = jnp.broadcast_to(params["shared_token"], (B, 1, EMBED_DIM))
    h = jnp.concatenate([tok, pe], axis=1) + params["pos_emb"]
    scale = 1.0 / math.sqrt(HEAD_DIM)
    for lp in params["layers"]:
        qkv = jnp.einsum("bse,ef->bsf", h, lp["w_in"], precision=hp) + lp["b_in"][0]
        q, k, v = jnp.split(qkv, 3, axis=-1)

        def heads(t):
            return t.reshape(B, SEQ_LEN, NUM_HEADS, HEAD_DIM).transpose(0, 2, 1, 3)

        qh, kh, vh = heads(q), heads(k), heads(v)
        s = jnp.einsum("bhsd,bhtd->bhst", qh, kh, precision=hp) * scale
        p = jax.nn.softmax(s, axis=-1)
        ctx = jnp.einsum("bhst,bhtd->bhsd", p, vh, precision=hp)
        ctx = ctx.transpose(0, 2, 1, 3).reshape(B, SEQ_LEN, EMBED_DIM)
        attn = jnp.einsum("bse,ef->bsf", ctx, lp["w_out"],
                          precision=hp) + lp["b_out"][0]
        h = _layer_norm_ref(h + attn, lp["ln1_g"][0], lp["ln1_b"][0])
        f = _gelu_exact(jnp.einsum("bse,ef->bsf", h, lp["w1"],
                                   precision=hp) + lp["b1"][0])
        f = jnp.einsum("bsf,fe->bse", f, lp["w2"], precision=hp) + lp["b2"][0]
        h = _layer_norm_ref(h + f, lp["ln2_g"][0], lp["ln2_b"][0])
    out = _layer_norm_ref(h, params["lnf_g"][0], params["lnf_b"][0])[:, 0]
    return out[:, :, None]


# ----------------------------- deterministic params --------------------------
def init_params(key):
    ks = jax.random.split(key, 8 + NUM_LAYERS)

    def nrm(k, shape, s=0.05):
        return (s * jax.random.normal(k, shape)).astype(jnp.float32)

    params = {
        "w_pe": nrm(ks[0], (PATCH_SIZE, EMBED_DIM)),
        "b_pe": nrm(ks[1], (1, EMBED_DIM), 0.02),
        "pos_emb": nrm(ks[2], (1, SEQ_LEN, EMBED_DIM), 0.1),
        "shared_token": nrm(ks[3], (1, 1, EMBED_DIM), 0.1),
        "lnf_g": (1.0 + nrm(ks[4], (1, EMBED_DIM))).astype(jnp.float32),
        "lnf_b": nrm(ks[5], (1, EMBED_DIM), 0.02),
        "layers": [],
    }
    for l in range(NUM_LAYERS):
        lk = jax.random.split(ks[8 + l], 12)
        params["layers"].append({
            "w_in":  nrm(lk[0], (EMBED_DIM, 3 * EMBED_DIM)),
            "b_in":  nrm(lk[1], (1, 3 * EMBED_DIM), 0.02),
            "w_out": nrm(lk[2], (EMBED_DIM, EMBED_DIM)),
            "b_out": nrm(lk[3], (1, EMBED_DIM), 0.02),
            "ln1_g": (1.0 + nrm(lk[4], (1, EMBED_DIM))).astype(jnp.float32),
            "ln1_b": nrm(lk[5], (1, EMBED_DIM), 0.02),
            "w1":    nrm(lk[6], (EMBED_DIM, FFN_DIM)),
            "b1":    nrm(lk[7], (1, FFN_DIM), 0.02),
            "w2":    nrm(lk[8], (FFN_DIM, EMBED_DIM)),
            "b2":    nrm(lk[9], (1, EMBED_DIM), 0.02),
            "ln2_g": (1.0 + nrm(lk[10], (1, EMBED_DIM))).astype(jnp.float32),
            "ln2_b": nrm(lk[11], (1, EMBED_DIM), 0.02),
        })
    return params


if __name__ == "__main__":
    key = jax.random.PRNGKey(0)
    kx, kp = jax.random.split(key)
    x = jax.random.normal(kx, (2, INPUT_CHANNELS, INPUT_LENGTH), jnp.float32)
    params = init_params(kp)

    fwd = jax.jit(iqst_backbone_forward)
    out = jax.block_until_ready(fwd(x, params))
    assert out.shape == (2, EMBED_DIM, 1), out.shape

    ref = reference_forward(x, params)
    err = float(jnp.max(jnp.abs(out - ref)))
    # bf16-stored weights + default-precision MXU (which rounds f32 operands to
    # bf16 internally anyway) vs the exact-f32 reference: allow that headroom;
    # structural bugs would show up as O(1) errors.
    assert err < 3e-2, f"mismatch vs exact-f32 reference: max abs err = {err}"
    print("KERNEL_OK")
</pallas_src>

<mosaic_0001>
module attributes {stable_mosaic.version = 11 : i64} {
  func.func @kernel(%arg0: i32, %arg1: memref<32x8xf32, #tpu.memory_space<vmem>>, %arg2: memref<8x128xbf16, #tpu.memory_space<vmem>>, %arg3: memref<24x128xf32, #tpu.memory_space<vmem>>, %arg4: memref<3x128x384xbf16, #tpu.memory_space<vmem>>, %arg5: memref<3x128x128xbf16, #tpu.memory_space<vmem>>, %arg6: memref<3x128x256xbf16, #tpu.memory_space<vmem>>, %arg7: memref<3x256x128xbf16, #tpu.memory_space<vmem>>, %arg8: memref<3x8x384xf32, #tpu.memory_space<vmem>>, %arg9: memref<2x128xf32, #tpu.memory_space<vmem>>) attributes {dimension_semantics = [#tpu.dimension_semantics<parallel>], iteration_bounds = array<i64: 1>, scalar_prefetch = 0 : i64, scratch_operands = 0 : i64, tpu.core_type = #tpu.core_type<tc>, window_params = [{transform_indices = @transform_0, window_bounds = array<i64: 32, 8>}, {pipeline_mode = #tpu.pipeline_mode<synchronous>, transform_indices = @transform_1, window_bounds = array<i64: 8, 128>}, {pipeline_mode = #tpu.pipeline_mode<synchronous>, transform_indices = @transform_2, window_bounds = array<i64: 24, 128>}, {pipeline_mode = #tpu.pipeline_mode<synchronous>, transform_indices = @transform_3, window_bounds = array<i64: 3, 128, 384>}, {pipeline_mode = #tpu.pipeline_mode<synchronous>, transform_indices = @transform_4, window_bounds = array<i64: 3, 128, 128>}, {pipeline_mode = #tpu.pipeline_mode<synchronous>, transform_indices = @transform_5, window_bounds = array<i64: 3, 128, 256>}, {pipeline_mode = #tpu.pipeline_mode<synchronous>, transform_indices = @transform_6, window_bounds = array<i64: 3, 256, 128>}, {pipeline_mode = #tpu.pipeline_mode<synchronous>, transform_indices = @transform_7, window_bounds = array<i64: 3, 8, 384>}, {transform_indices = @transform_8, window_bounds = array<i64: 2, 128>}]} {
    %c0 = arith.constant 0 : index
    %c0_0 = arith.constant 0 : index
    %0 = vector.load %arg3[%c0, %c0_0] : memref<24x128xf32, #tpu.memory_space<vmem>>, vector<16x128xf32>
    %c16 = arith.constant 16 : index
    %c0_1 = arith.constant 0 : index
    %1 = vector.load %arg3[%c16, %c0_1] : memref<24x128xf32, #tpu.memory_space<vmem>>, vector<1x128xf32>
    %c17 = arith.constant 17 : index
    %c0_2 = arith.constant 0 : index
    %2 = vector.load %arg3[%c17, %c0_2] : memref<24x128xf32, #tpu.memory_space<vmem>>, vector<1x128xf32>
    %c18 = arith.constant 18 : index
    %c0_3 = arith.constant 0 : index
    %3 = vector.load %arg3[%c18, %c0_3] : memref<24x128xf32, #tpu.memory_space<vmem>>, vector<1x128xf32>
    %c19 = arith.constant 19 : index
    %c0_4 = arith.constant 0 : index
    %4 = vector.load %arg3[%c19, %c0_4] : memref<24x128xf32, #tpu.memory_space<vmem>>, vector<1x128xf32>
    %5 = tpu.iota {dimensions = array<i32: 1>} : vector<1x128xi32>
    %c48_i32 = arith.constant 48 : i32
    %6 = vector.broadcast %c48_i32 : i32 to vector<1x128xi32>
    %7 = arith.cmpi slt, %5, %6 : vector<1x128xi32>
    %c0_5 = arith.constant 0 : index
    %c0_6 = arith.constant 0 : index
    %8 = vector.load %arg1[%c0_5, %c0_6] : memref<32x8xf32, #tpu.memory_space<vmem>>, vector<32x8xf32>
    %c0_7 = arith.constant 0 : index
    %c0_8 = arith.constant 0 : index
    %9 = vector.load %arg2[%c0_7, %c0_8] : memref<8x128xbf16, #tpu.memory_space<vmem>>, vector<8x128xbf16>
    %10 = arith.extf %9 : vector<8x128xbf16> to vector<8x128xf32>
    %cst = arith.constant dense<0.000000e+00> : vector<32x128xf32>
    %11 = tpu.matmul %8, %10, %cst {dimension_numbers = #tpu.dot_dimension_numbers<[1], [0], [0], [1], [0, 0, 1, 1], [], []>} : vector<32x8xf32>, vector<8x128xf32>, vector<32x128xf32> -> vector<32x128xf32>
    %12 = vector.broadcast %2 : vector<1x128xf32> to vector<32x128xf32>
    %13 = arith.addf %11, %12 : vector<32x128xf32>
    %14 = vector.shape_cast %13 : vector<32x128xf32> to vector<2x16x128xf32>
    %15 = tpu.iota {dimensions = array<i32: 1>} : vector<2x16x128xi32>
    %c0_i32 = arith.constant 0 : i32
    %16 = vector.broadcast %c0_i32 : i32 to vector<2x16x128xi32>
    %17 = arith.cmpi eq, %15, %16 : vector<2x16x128xi32>
    %18 = vector.shape_cast %1 : vector<1x128xf32> to vector<1x1x128xf32>
    %19 = vector.shape_cast %0 : vector<16x128xf32> to vector<1x16x128xf32>
    %20 = vector.broadcast %19 : vector<1x16x128xf32> to vector<2x16x128xf32>
    %21 = arith.addf %14, %20 : vector<2x16x128xf32>
    %22 = vector.shape_cast %18 : vector<1x1x128xf32> to vector<1x1x128xf32>
    %23 = vector.broadcast %22 : vector<1x1x128xf32> to vector<2x16x128xf32>
    %24 = arith.select %17, %23, %21 : vector<2x16x128xi1>, vector<2x16x128xf32>
    %25 = vector.shape_cast %24 : vector<2x16x128xf32> to vector<32x128xf32>
    %26 = tpu.iota {dimensions = array<i32: 2>} : vector<2x16x16xi32>
    %c9_i32 = arith.constant 9 : i32
    %27 = vector.broadcast %c9_i32 : i32 to vector<2x16x16xi32>
    %28 = arith.cmpi slt, %26, %27 : vector<2x16x16xi32>
    %c0_9 = arith.constant 0 : index
    %c0_10 = arith.constant 0 : index
    %c0_11 = arith.constant 0 : index
    %29 = vector.load %arg8[%c0_9, %c0_10, %c0_11] : memref<3x8x384xf32, #tpu.memory_space<vmem>>, vector<1x8x384xf32>
    %30 = vector.shape_cast %29 : vector<1x8x384xf32> to vector<8x384xf32>
    %31 = vector.extract_strided_slice %30 {offsets = [0, 0], sizes = [1, 384], strides = [1, 1]} : vector<8x384xf32> to vector<1x384xf32>
    %32 = vector.extract_strided_slice %30 {offsets = [1, 0], sizes = [1, 128], strides = [1, 1]} : vector<8x384xf32> to vector<1x128xf32>
    %33 = vector.extract_strided_slice %30 {offsets = [2, 0], sizes = [1, 128], strides = [1, 1]} : vector<8x384xf32> to vector<1x128xf32>
    %34 = vector.extract_strided_slice %30 {offsets = [3, 0], sizes = [1, 128], strides = [1, 1]} : vector<8x384xf32> to vector<1x128xf32>
    %35 = vector.extract_strided_slice %30 {offsets = [4, 0], sizes = [1, 256], strides = [1, 1]} : vector<8x384xf32> to vector<1x256xf32>
    %36 = vector.extract_strided_slice %30 {offsets = [5, 0], sizes = [1, 128], strides = [1, 1]} : vector<8x384xf32> to vector<1x128xf32>
    %37 = vector.extract_strided_slice %30 {offsets = [6, 0], sizes = [1, 128], strides = [1, 1]} : vector<8x384xf32> to vector<1x128xf32>
    %38 = vector.extract_strided_slice %30 {offsets = [7, 0], sizes = [1, 128], strides = [1, 1]} : vector<8x384xf32> to vector<1x128xf32>
    %c0_12 = arith.constant 0 : index
    %c0_13 = arith.constant 0 : index
    %c0_14 = arith.constant 0 : index
    %39 = vector.load %arg4[%c0_12, %c0_13, %c0_14] : memref<3x128x384xbf16, #tpu.memory_space<vmem>>, vector<1x128x384xbf16>
    %40 = vector.shape_cast %39 : vector<1x128x384xbf16> to vector<128x384xbf16>
    %41 = arith.extf %40 : vector<128x384xbf16> to vector<128x384xf32>
    %cst_15 = arith.constant dense<0.000000e+00> : vector<32x384xf32>
    %42 = tpu.matmul %25, %41, %cst_15 {dimension_numbers = #tpu.dot_dimension_numbers<[1], [0], [0], [1], [0, 0, 1, 1], [], []>} : vector<32x128xf32>, vector<128x384xf32>, vector<32x384xf32> -> vector<32x384xf32>
    %43 = vector.broadcast %31 : vector<1x384xf32> to vector<32x384xf32>
    %44 = arith.addf %42, %43 : vector<32x384xf32>
    %45 = vector.extract_strided_slice %44 {offsets = [0, 0], sizes = [32, 128], strides = [1, 1]} : vector<32x384xf32> to vector<32x128xf32>
    %cst_16 = arith.constant 2.500000e-01 : f32
    %46 = vector.broadcast %cst_16 : f32 to vector<32x128xf32>
    %47 = arith.mulf %45, %46 : vector<32x128xf32>
    %48 = vector.extract_strided_slice %44 {offsets = [0, 128], sizes = [32, 128], strides = [1, 1]} : vector<32x384xf32> to vector<32x128xf32>
    %49 = vector.extract_strided_slice %44 {offsets = [0, 256], sizes = [32, 128], strides = [1, 1]} : vector<32x384xf32> to vector<32x128xf32>
    %50 = vector.shape_cast %47 : vector<32x128xf32> to vector<2x16x128xf32>
    %51 = vector.shape_cast %48 : vector<32x128xf32> to vector<2x16x128xf32>
    %52 = vector.shape_cast %49 : vector<32x128xf32> to vector<2x16x128xf32>
    %c0_17 = arith.constant 0 : index
    %c0_18 = arith.constant 0 : index
    %c0_19 = arith.constant 0 : index
    %53 = vector.load %arg5[%c0_17, %c0_18, %c0_19] : memref<3x128x128xbf16, #tpu.memory_space<vmem>>, vector<1x128x128xbf16>
    %54 = vector.shape_cast %53 : vector<1x128x128xbf16> to vector<128x128xbf16>
    %55 = arith.extf %54 : vector<128x128xbf16> to vector<128x128xf32>
    %cst_20 = arith.constant 0.000000e+00 : f32
    %56 = vector.broadcast %cst_20 : f32 to vector<32x128xf32>
    %57 = vector.extract_strided_slice %50 {offsets = [0, 0, 0], sizes = [2, 16, 16], strides = [1, 1, 1]} : vector<2x16x128xf32> to vector<2x16x16xf32>
    %58 = vector.extract_strided_slice %51 {offsets = [0, 0, 0], sizes = [2, 16, 16], strides = [1, 1, 1]} : vector<2x16x128xf32> to vector<2x16x16xf32>
    %59 = vector.extract_strided_slice %52 {offsets = [0, 0, 0], sizes = [2, 16, 16], strides = [1, 1, 1]} : vector<2x16x128xf32> to vector<2x16x16xf32>
    "tpu.trace_start"() <{level = 10 : i32, message = "bqd,bkd->bqk"}> : () -> ()
    %cst_21 = arith.constant dense<0.000000e+00> : vector<2x16x16xf32>
    %60 = tpu.matmul %57, %58, %cst_21 {dimension_numbers = #tpu.dot_dimension_numbers<[2], [2], [1], [1], [0, 0, 0, 1, 1, 1], [0], [0]>} : vector<2x16x16xf32>, vector<2x16x16xf32>, vector<2x16x16xf32> -> vector<2x16x16xf32>
    %cst_22 = arith.constant -1.000000e+30 : f32
    "tpu.trace_stop"() : () -> ()
    %61 = vector.broadcast %cst_22 : f32 to vector<2x16x16xf32>
    %62 = arith.select %28, %60, %61 : vector<2x16x16xi1>, vector<2x16x16xf32>
    %cst_23 = arith.constant dense<0xFF800000> : vector<2x16xf32>
    %63 = vector.multi_reduction <maximumf>, %62, %cst_23 [2] : vector<2x16x16xf32> to vector<2x16xf32>
    %64 = vector.shape_cast %63 : vector<2x16xf32> to vector<2x16x1xf32>
    %65 = vector.broadcast %64 : vector<2x16x1xf32> to vector<2x16x16xf32>
    %66 = arith.subf %62, %65 : vector<2x16x16xf32>
    %67 = math.exp %66 : vector<2x16x16xf32>
    %cst_24 = arith.constant dense<0.000000e+00> : vector<2x16xf32>
    %68 = vector.multi_reduction <add>, %67, %cst_24 [2] : vector<2x16x16xf32> to vector<2x16xf32>
    %69 = vector.shape_cast %68 : vector<2x16xf32> to vector<2x16x1xf32>
    %70 = vector.broadcast %69 : vector<2x16x1xf32> to vector<2x16x16xf32>
    %71 = arith.divf %67, %70 : vector<2x16x16xf32>
    "tpu.trace_start"() <{level = 10 : i32, message = "bqk,bkd->bqd"}> : () -> ()
    %cst_25 = arith.constant dense<0.000000e+00> : vector<2x16x16xf32>
    %72 = tpu.matmul %71, %59, %cst_25 {dimension_numbers = #tpu.dot_dimension_numbers<[2], [1], [1], [2], [0, 0, 0, 1, 1, 2], [0], [0]>} : vector<2x16x16xf32>, vector<2x16x16xf32>, vector<2x16x16xf32> -> vector<2x16x16xf32>
    "tpu.trace_stop"() : () -> ()
    %73 = vector.shape_cast %72 : vector<2x16x16xf32> to vector<32x16xf32>
    %74 = vector.extract_strided_slice %55 {offsets = [0, 0], sizes = [16, 128], strides = [1, 1]} : vector<128x128xf32> to vector<16x128xf32>
    %cst_26 = arith.constant dense<0.000000e+00> : vector<32x128xf32>
    %75 = tpu.matmul %73, %74, %cst_26 {dimension_numbers = #tpu.dot_dimension_numbers<[1], [0], [0], [1], [0, 0, 1, 1], [], []>} : vector<32x16xf32>, vector<16x128xf32>, vector<32x128xf32> -> vector<32x128xf32>
    %76 = arith.addf %56, %75 : vector<32x128xf32>
    %77 = vector.extract_strided_slice %50 {offsets = [0, 0, 16], sizes = [2, 16, 16], strides = [1, 1, 1]} : vector<2x16x128xf32> to vector<2x16x16xf32>
    %78 = vector.extract_strided_slice %51 {offsets = [0, 0, 16], sizes = [2, 16, 16], strides = [1, 1, 1]} : vector<2x16x128xf32> to vector<2x16x16xf32>
    %79 = vector.extract_strided_slice %52 {offsets = [0, 0, 16], sizes = [2, 16, 16], strides = [1, 1, 1]} : vector<2x16x128xf32> to vector<2x16x16xf32>
    "tpu.trace_start"() <{level = 10 : i32, message = "bqd,bkd->bqk"}> : () -> ()
    %cst_27 = arith.constant dense<0.000000e+00> : vector<2x16x16xf32>
    %80 = tpu.matmul %77, %78, %cst_27 {dimension_numbers = #tpu.dot_dimension_numbers<[2], [2], [1], [1], [0, 0, 0, 1, 1, 1], [0], [0]>} : vector<2x16x16xf32>, vector<2x16x16xf32>, vector<2x16x16xf32> -> vector<2x16x16xf32>
    %cst_28 = arith.constant -1.000000e+30 : f32
    "tpu.trace_stop"() : () -> ()
    %81 = vector.broadcast %cst_28 : f32 to vector<2x16x16xf32>
    %82 = arith.select %28, %80, %81 : vector<2x16x16xi1>, vector<2x16x16xf32>
    %cst_29 = arith.constant dense<0xFF800000> : vector<2x16xf32>
    %83 = vector.multi_reduction <maximumf>, %82, %cst_29 [2] : vector<2x16x16xf32> to vector<2x16xf32>
    %84 = vector.shape_cast %83 : vector<2x16xf32> to vector<2x16x1xf32>
    %85 = vector.broadcast %84 : vector<2x16x1xf32> to vector<2x16x16xf32>
    %86 = arith.subf %82, %85 : vector<2x16x16xf32>
    %87 = math.exp %86 : vector<2x16x16xf32>
    %cst_30 = arith.constant dense<0.000000e+00> : vector<2x16xf32>
    %88 = vector.multi_reduction <add>, %87, %cst_30 [2] : vector<2x16x16xf32> to vector<2x16xf32>
    %89 = vector.shape_cast %88 : vector<2x16xf32> to vector<2x16x1xf32>
    %90 = vector.broadcast %89 : vector<2x16x1xf32> to vector<2x16x16xf32>
    %91 = arith.divf %87, %90 : vector<2x16x16xf32>
    "tpu.trace_start"() <{level = 10 : i32, message = "bqk,bkd->bqd"}> : () -> ()
    %cst_31 = arith.constant dense<0.000000e+00> : vector<2x16x16xf32>
    %92 = tpu.matmul %91, %79, %cst_31 {dimension_numbers = #tpu.dot_dimension_numbers<[2], [1], [1], [2], [0, 0, 0, 1, 1, 2], [0], [0]>} : vector<2x16x16xf32>, vector<2x16x16xf32>, vector<2x16x16xf32> -> vector<2x16x16xf32>
    "tpu.trace_stop"() : () -> ()
    %93 = vector.shape_cast %92 : vector<2x16x16xf32> to vector<32x16xf32>
    %94 = vector.extract_strided_slice %55 {offsets = [16, 0], sizes = [16, 128], strides = [1, 1]} : vector<128x128xf32> to vector<16x128xf32>
    %cst_32 = arith.constant dense<0.000000e+00> : vector<32x128xf32>
    %95 = tpu.matmul %93, %94, %cst_32 {dimension_numbers = #tpu.dot_dimension_numbers<[1], [0], [0], [1], [0, 0, 1, 1], [], []>} : vector<32x16xf32>, vector<16x128xf32>, vector<32x128xf32> -> vector<32x128xf32>
    %96 = arith.addf %76, %95 : vector<32x128xf32>
    %97 = vector.extract_strided_slice %50 {offsets = [0, 0, 32], sizes = [2, 16, 16], strides = [1, 1, 1]} : vector<2x16x128xf32> to vector<2x16x16xf32>
    %98 = vector.extract_strided_slice %51 {offsets = [0, 0, 32], sizes = [2, 16, 16], strides = [1, 1, 1]} : vector<2x16x128xf32> to vector<2x16x16xf32>
    %99 = vector.extract_strided_slice %52 {offsets = [0, 0, 32], sizes = [2, 16, 16], strides = [1, 1, 1]} : vector<2x16x128xf32> to vector<2x16x16xf32>
    "tpu.trace_start"() <{level = 10 : i32, message = "bqd,bkd->bqk"}> : () -> ()
    %cst_33 = arith.constant dense<0.000000e+00> : vector<2x16x16xf32>
    %100 = tpu.matmul %97, %98, %cst_33 {dimension_numbers = #tpu.dot_dimension_numbers<[2], [2], [1], [1], [0, 0, 0, 1, 1, 1], [0], [0]>} : vector<2x16x16xf32>, vector<2x16x16xf32>, vector<2x16x16xf32> -> vector<2x16x16xf32>
    %cst_34 = arith.constant -1.000000e+30 : f32
    "tpu.trace_stop"() : () -> ()
    %101 = vector.broadcast %cst_34 : f32 to vector<2x16x16xf32>
    %102 = arith.select %28, %100, %101 : vector<2x16x16xi1>, vector<2x16x16xf32>
    %cst_35 = arith.constant dense<0xFF800000> : vector<2x16xf32>
    %103 = vector.multi_reduction <maximumf>, %102, %cst_35 [2] : vector<2x16x16xf32> to vector<2x16xf32>
    %104 = vector.shape_cast %103 : vector<2x16xf32> to vector<2x16x1xf32>
    %105 = vector.broadcast %104 : vector<2x16x1xf32> to vector<2x16x16xf32>
    %106 = arith.subf %102, %105 : vector<2x16x16xf32>
    %107 = math.exp %106 : vector<2x16x16xf32>
    %cst_36 = arith.constant dense<0.000000e+00> : vector<2x16xf32>
    %108 = vector.multi_reduction <add>, %107, %cst_36 [2] : vector<2x16x16xf32> to vector<2x16xf32>
    %109 = vector.shape_cast %108 : vector<2x16xf32> to vector<2x16x1xf32>
    %110 = vector.broadcast %109 : vector<2x16x1xf32> to vector<2x16x16xf32>
    %111 = arith.divf %107, %110 : vector<2x16x16xf32>
    "tpu.trace_start"() <{level = 10 : i32, message = "bqk,bkd->bqd"}> : () -> ()
    %cst_37 = arith.constant dense<0.000000e+00> : vector<2x16x16xf32>
    %112 = tpu.matmul %111, %99, %cst_37 {dimension_numbers = #tpu.dot_dimension_numbers<[2], [1], [1], [2], [0, 0, 0, 1, 1, 2], [0], [0]>} : vector<2x16x16xf32>, vector<2x16x16xf32>, vector<2x16x16xf32> -> vector<2x16x16xf32>
    "tpu.trace_stop"() : () -> ()
    %113 = vector.shape_cast %112 : vector<2x16x16xf32> to vector<32x16xf32>
    %114 = vector.extract_strided_slice %55 {offsets = [32, 0], sizes = [16, 128], strides = [1, 1]} : vector<128x128xf32> to vector<16x128xf32>
    %cst_38 = arith.constant dense<0.000000e+00> : vector<32x128xf32>
    %115 = tpu.matmul %113, %114, %cst_38 {dimension_numbers = #tpu.dot_dimension_numbers<[1], [0], [0], [1], [0, 0, 1, 1], [], []>} : vector<32x16xf32>, vector<16x128xf32>, vector<32x128xf32> -> vector<32x128xf32>
    %116 = arith.addf %96, %115 : vector<32x128xf32>
    %117 = vector.broadcast %32 : vector<1x128xf32> to vector<32x128xf32>
    %118 = arith.addf %116, %117 : vector<32x128xf32>
    %119 = arith.addf %25, %118 : vector<32x128xf32>
    %cst_39 = arith.constant dense<0.000000e+00> : vector<32xf32>
    %120 = vector.multi_reduction <add>, %119, %cst_39 [1] : vector<32x128xf32> to vector<32xf32>
    %121 = vector.shape_cast %120 : vector<32xf32> to vector<32x1xf32>
    %cst_40 = arith.constant 0.020833334 : f32
    %122 = vector.broadcast %cst_40 : f32 to vector<32x1xf32>
    %123 = arith.mulf %121, %122 : vector<32x1xf32>
    %124 = vector.broadcast %123 : vector<32x1xf32> to vector<32x128xf32>
    %125 = arith.subf %119, %124 : vector<32x128xf32>
    %cst_41 = arith.constant 0.000000e+00 : f32
    %126 = vector.shape_cast %7 : vector<1x128xi1> to vector<1x128xi1>
    %127 = vector.broadcast %126 : vector<1x128xi1> to vector<32x128xi1>
    %128 = vector.broadcast %cst_41 : f32 to vector<32x128xf32>
    %129 = arith.select %127, %125, %128 : vector<32x128xi1>, vector<32x128xf32>
    %130 = arith.mulf %129, %129 : vector<32x128xf32>
    %cst_42 = arith.constant dense<0.000000e+00> : vector<32xf32>
    %131 = vector.multi_reduction <add>, %130, %cst_42 [1] : vector<32x128xf32> to vector<32xf32>
    %132 = vector.shape_cast %131 : vector<32xf32> to vector<32x1xf32>
    %cst_43 = arith.constant 0.020833334 : f32
    %133 = vector.broadcast %cst_43 : f32 to vector<32x1xf32>
    %134 = arith.mulf %132, %133 : vector<32x1xf32>
    %cst_44 = arith.constant 9.99999974E-6 : f32
    %135 = vector.broadcast %cst_44 : f32 to vector<32x1xf32>
    %136 = arith.addf %134, %135 : vector<32x1xf32>
    %137 = math.rsqrt %136 : vector<32x1xf32>
    %138 = vector.broadcast %137 : vector<32x1xf32> to vector<32x128xf32>
    %139 = arith.mulf %129, %138 : vector<32x128xf32>
    %140 = vector.broadcast %33 : vector<1x128xf32> to vector<32x128xf32>
    %141 = arith.mulf %139, %140 : vector<32x128xf32>
    %142 = vector.broadcast %34 : vector<1x128xf32> to vector<32x128xf32>
    %143 = arith.addf %141, %142 : vector<32x128xf32>
    %c0_45 = arith.constant 0 : index
    %c0_46 = arith.constant 0 : index
    %c0_47 = arith.constant 0 : index
    %144 = vector.load %arg6[%c0_45, %c0_46, %c0_47] : memref<3x128x256xbf16, #tpu.memory_space<vmem>>, vector<1x128x256xbf16>
    %145 = vector.shape_cast %144 : vector<1x128x256xbf16> to vector<128x256xbf16>
    %146 = arith.extf %145 : vector<128x256xbf16> to vector<128x256xf32>
    %cst_48 = arith.constant dense<0.000000e+00> : vector<32x256xf32>
    %147 = tpu.matmul %143, %146, %cst_48 {dimension_numbers = #tpu.dot_dimension_numbers<[1], [0], [0], [1], [0, 0, 1, 1], [], []>} : vector<32x128xf32>, vector<128x256xf32>, vector<32x256xf32> -> vector<32x256xf32>
    %148 = vector.broadcast %35 : vector<1x256xf32> to vector<32x256xf32>
    %149 = arith.addf %147, %148 : vector<32x256xf32>
    %cst_49 = arith.constant 5.000000e-01 : f32
    %150 = vector.broadcast %cst_49 : f32 to vector<32x256xf32>
    %151 = arith.mulf %150, %149 : vector<32x256xf32>
    %cst_50 = arith.constant 0.707106769 : f32
    %152 = vector.broadcast %cst_50 : f32 to vector<32x256xf32>
    %153 = arith.mulf %149, %152 : vector<32x256xf32>
    %154 = math.erf %153 : vector<32x256xf32>
    %cst_51 = arith.constant 1.000000e+00 : f32
    %155 = vector.broadcast %cst_51 : f32 to vector<32x256xf32>
    %156 = arith.addf %155, %154 : vector<32x256xf32>
    %157 = arith.mulf %151, %156 : vector<32x256xf32>
    %c0_52 = arith.constant 0 : index
    %c0_53 = arith.constant 0 : index
    %c0_54 = arith.constant 0 : index
    %158 = vector.load %arg7[%c0_52, %c0_53, %c0_54] : memref<3x256x128xbf16, #tpu.memory_space<vmem>>, vector<1x256x128xbf16>
    %159 = vector.shape_cast %158 : vector<1x256x128xbf16> to vector<256x128xbf16>
    %160 = arith.extf %159 : vector<256x128xbf16> to vector<256x128xf32>
    %cst_55 = arith.constant dense<0.000000e+00> : vector<32x128xf32>
    %161 = tpu.matmul %157, %160, %cst_55 {dimension_numbers = #tpu.dot_dimension_numbers<[1], [0], [0], [1], [0, 0, 1, 1], [], []>} : vector<32x256xf32>, vector<256x128xf32>, vector<32x128xf32> -> vector<32x128xf32>
    %162 = vector.broadcast %36 : vector<1x128xf32> to vector<32x128xf32>
    %163 = arith.addf %161, %162 : vector<32x128xf32>
    %164 = arith.addf %143, %163 : vector<32x128xf32>
    %cst_56 = arith.constant dense<0.000000e+00> : vector<32xf32>
    %165 = vector.multi_reduction <add>, %164, %cst_56 [1] : vector<32x128xf32> to vector<32xf32>
    %166 = vector.shape_cast %165 : vector<32xf32> to vector<32x1xf32>
    %cst_57 = arith.constant 0.020833334 : f32
    %167 = vector.broadcast %cst_57 : f32 to vector<32x1xf32>
    %168 = arith.mulf %166, %167 : vector<32x1xf32>
    %169 = vector.broadcast %168 : vector<32x1xf32> to vector<32x128xf32>
    %170 = arith.subf %164, %169 : vector<32x128xf32>
    %cst_58 = arith.constant 0.000000e+00 : f32
    %171 = vector.shape_cast %7 : vector<1x128xi1> to vector<1x128xi1>
    %172 = vector.broadcast %171 : vector<1x128xi1> to vector<32x128xi1>
    %173 = vector.broadcast %cst_58 : f32 to vector<32x128xf32>
    %174 = arith.select %172, %170, %173 : vector<32x128xi1>, vector<32x128xf32>
    %175 = arith.mulf %174, %174 : vector<32x128xf32>
    %cst_59 = arith.constant dense<0.000000e+00> : vector<32xf32>
    %176 = vector.multi_reduction <add>, %175, %cst_59 [1] : vector<32x128xf32> to vector<32xf32>
    %177 = vector.shape_cast %176 : vector<32xf32> to vector<32x1xf32>
    %cst_60 = arith.constant 0.020833334 : f32
    %178 = vector.broadcast %cst_60 : f32 to vector<32x1xf32>
    %179 = arith.mulf %177, %178 : vector<32x1xf32>
    %cst_61 = arith.constant 9.99999974E-6 : f32
    %180 = vector.broadcast %cst_61 : f32 to vector<32x1xf32>
    %181 = arith.addf %179, %180 : vector<32x1xf32>
    %182 = math.rsqrt %181 : vector<32x1xf32>
    %183 = vector.broadcast %182 : vector<32x1xf32> to vector<32x128xf32>
    %184 = arith.mulf %174, %183 : vector<32x128xf32>
    %185 = vector.broadcast %37 : vector<1x128xf32> to vector<32x128xf32>
    %186 = arith.mulf %184, %185 : vector<32x128xf32>
    %187 = vector.broadcast %38 : vector<1x128xf32> to vector<32x128xf32>
    %188 = arith.addf %186, %187 : vector<32x128xf32>
    %c1 = arith.constant 1 : index
    %c0_62 = arith.constant 0 : index
    %c0_63 = arith.constant 0 : index
    %189 = vector.load %arg8[%c1, %c0_62, %c0_63] : memref<3x8x384xf32, #tpu.memory_space<vmem>>, vector<1x8x384xf32>
    %190 = vector.shape_cast %189 : vector<1x8x384xf32> to vector<8x384xf32>
    %191 = vector.extract_strided_slice %190 {offsets = [0, 0], sizes = [1, 384], strides = [1, 1]} : vector<8x384xf32> to vector<1x384xf32>
    %192 = vector.extract_strided_slice %190 {offsets = [1, 0], sizes = [1, 128], strides = [1, 1]} : vector<8x384xf32> to vector<1x128xf32>
    %193 = vector.extract_strided_slice %190 {offsets = [2, 0], sizes = [1, 128], strides = [1, 1]} : vector<8x384xf32> to vector<1x128xf32>
    %194 = vector.extract_strided_slice %190 {offsets = [3, 0], sizes = [1, 128], strides = [1, 1]} : vector<8x384xf32> to vector<1x128xf32>
    %195 = vector.extract_strided_slice %190 {offsets = [4, 0], sizes = [1, 256], strides = [1, 1]} : vector<8x384xf32> to vector<1x256xf32>
    %196 = vector.extract_strided_slice %190 {offsets = [5, 0], sizes = [1, 128], strides = [1, 1]} : vector<8x384xf32> to vector<1x128xf32>
    %197 = vector.extract_strided_slice %190 {offsets = [6, 0], sizes = [1, 128], strides = [1, 1]} : vector<8x384xf32> to vector<1x128xf32>
    %198 = vector.extract_strided_slice %190 {offsets = [7, 0], sizes = [1, 128], strides = [1, 1]} : vector<8x384xf32> to vector<1x128xf32>
    %c1_64 = arith.constant 1 : index
    %c0_65 = arith.constant 0 : index
    %c0_66 = arith.constant 0 : index
    %199 = vector.load %arg4[%c1_64, %c0_65, %c0_66] : memref<3x128x384xbf16, #tpu.memory_space<vmem>>, vector<1x128x384xbf16>
    %200 = vector.shape_cast %199 : vector<1x128x384xbf16> to vector<128x384xbf16>
    %201 = arith.extf %200 : vector<128x384xbf16> to vector<128x384xf32>
    %cst_67 = arith.constant dense<0.000000e+00> : vector<32x384xf32>
    %202 = tpu.matmul %188, %201, %cst_67 {dimension_numbers = #tpu.dot_dimension_numbers<[1], [0], [0], [1], [0, 0, 1, 1], [], []>} : vector<32x128xf32>, vector<128x384xf32>, vector<32x384xf32> -> vector<32x384xf32>
    %203 = vector.broadcast %191 : vector<1x384xf32> to vector<32x384xf32>
    %204 = arith.addf %202, %203 : vector<32x384xf32>
    %205 = vector.extract_strided_slice %204 {offsets = [0, 0], sizes = [32, 128], strides = [1, 1]} : vector<32x384xf32> to vector<32x128xf32>
    %cst_68 = arith.constant 2.500000e-01 : f32
    %206 = vector.broadcast %cst_68 : f32 to vector<32x128xf32>
    %207 = arith.mulf %205, %206 : vector<32x128xf32>
    %208 = vector.extract_strided_slice %204 {offsets = [0, 128], sizes = [32, 128], strides = [1, 1]} : vector<32x384xf32> to vector<32x128xf32>
    %209 = vector.extract_strided_slice %204 {offsets = [0, 256], sizes = [32, 128], strides = [1, 1]} : vector<32x384xf32> to vector<32x128xf32>
    %210 = vector.shape_cast %207 : vector<32x128xf32> to vector<2x16x128xf32>
    %211 = vector.shape_cast %208 : vector<32x128xf32> to vector<2x16x128xf32>
    %212 = vector.shape_cast %209 : vector<32x128xf32> to vector<2x16x128xf32>
    %c1_69 = arith.constant 1 : index
    %c0_70 = arith.constant 0 : index
    %c0_71 = arith.constant 0 : index
    %213 = vector.load %arg5[%c1_69, %c0_70, %c0_71] : memref<3x128x128xbf16, #tpu.memory_space<vmem>>, vector<1x128x128xbf16>
    %214 = vector.shape_cast %213 : vector<1x128x128xbf16> to vector<128x128xbf16>
    %215 = arith.extf %214 : vector<128x128xbf16> to vector<128x128xf32>
    %cst_72 = arith.constant 0.000000e+00 : f32
    %216 = vector.broadcast %cst_72 : f32 to vector<32x128xf32>
    %217 = vector.extract_strided_slice %210 {offsets = [0, 0, 0], sizes = [2, 16, 16], strides = [1, 1, 1]} : vector<2x16x128xf32> to vector<2x16x16xf32>
    %218 = vector.extract_strided_slice %211 {offsets = [0, 0, 0], sizes = [2, 16, 16], strides = [1, 1, 1]} : vector<2x16x128xf32> to vector<2x16x16xf32>
    %219 = vector.extract_strided_slice %212 {offsets = [0, 0, 0], sizes = [2, 16, 16], strides = [1, 1, 1]} : vector<2x16x128xf32> to vector<2x16x16xf32>
    "tpu.trace_start"() <{level = 10 : i32, message = "bqd,bkd->bqk"}> : () -> ()
    %cst_73 = arith.constant dense<0.000000e+00> : vector<2x16x16xf32>
    %220 = tpu.matmul %217, %218, %cst_73 {dimension_numbers = #tpu.dot_dimension_numbers<[2], [2], [1], [1], [0, 0, 0, 1, 1, 1], [0], [0]>} : vector<2x16x16xf32>, vector<2x16x16xf32>, vector<2x16x16xf32> -> vector<2x16x16xf32>
    %cst_74 = arith.constant -1.000000e+30 : f32
    "tpu.trace_stop"() : () -> ()
    %221 = vector.broadcast %cst_74 : f32 to vector<2x16x16xf32>
    %222 = arith.select %28, %220, %221 : vector<2x16x16xi1>, vector<2x16x16xf32>
    %cst_75 = arith.constant dense<0xFF800000> : vector<2x16xf32>
    %223 = vector.multi_reduction <maximumf>, %222, %cst_75 [2] : vector<2x16x16xf32> to vector<2x16xf32>
    %224 = vector.shape_cast %223 : vector<2x16xf32> to vector<2x16x1xf32>
    %225 = vector.broadcast %224 : vector<2x16x1xf32> to vector<2x16x16xf32>
    %226 = arith.subf %222, %225 : vector<2x16x16xf32>
    %227 = math.exp %226 : vector<2x16x16xf32>
    %cst_76 = arith.constant dense<0.000000e+00> : vector<2x16xf32>
    %228 = vector.multi_reduction <add>, %227, %cst_76 [2] : vector<2x16x16xf32> to vector<2x16xf32>
    %229 = vector.shape_cast %228 : vector<2x16xf32> to vector<2x16x1xf32>
    %230 = vector.broadcast %229 : vector<2x16x1xf32> to vector<2x16x16xf32>
    %231 = arith.divf %227, %230 : vector<2x16x16xf32>
    "tpu.trace_start"() <{level = 10 : i32, message = "bqk,bkd->bqd"}> : () -> ()
    %cst_77 = arith.constant dense<0.000000e+00> : vector<2x16x16xf32>
    %232 = tpu.matmul %231, %219, %cst_77 {dimension_numbers = #tpu.dot_dimension_numbers<[2], [1], [1], [2], [0, 0, 0, 1, 1, 2], [0], [0]>} : vector<2x16x16xf32>, vector<2x16x16xf32>, vector<2x16x16xf32> -> vector<2x16x16xf32>
    "tpu.trace_stop"() : () -> ()
    %233 = vector.shape_cast %232 : vector<2x16x16xf32> to vector<32x16xf32>
    %234 = vector.extract_strided_slice %215 {offsets = [0, 0], sizes = [16, 128], strides = [1, 1]} : vector<128x128xf32> to vector<16x128xf32>
    %cst_78 = arith.constant dense<0.000000e+00> : vector<32x128xf32>
    %235 = tpu.matmul %233, %234, %cst_78 {dimension_numbers = #tpu.dot_dimension_numbers<[1], [0], [0], [1], [0, 0, 1, 1], [], []>} : vector<32x16xf32>, vector<16x128xf32>, vector<32x128xf32> -> vector<32x128xf32>
    %236 = arith.addf %216, %235 : vector<32x128xf32>
    %237 = vector.extract_strided_slice %210 {offsets = [0, 0, 16], sizes = [2, 16, 16], strides = [1, 1, 1]} : vector<2x16x128xf32> to vector<2x16x16xf32>
    %238 = vector.extract_strided_slice %211 {offsets = [0, 0, 16], sizes = [2, 16, 16], strides = [1, 1, 1]} : vector<2x16x128xf32> to vector<2x16x16xf32>
    %239 = vector.extract_strided_slice %212 {offsets = [0, 0, 16], sizes = [2, 16, 16], strides = [1, 1, 1]} : vector<2x16x128xf32> to vector<2x16x16xf32>
    "tpu.trace_start"() <{level = 10 : i32, message = "bqd,bkd->bqk"}> : () -> ()
    %cst_79 = arith.constant dense<0.000000e+00> : vector<2x16x16xf32>
    %240 = tpu.matmul %237, %238, %cst_79 {dimension_numbers = #tpu.dot_dimension_numbers<[2], [2], [1], [1], [0, 0, 0, 1, 1, 1], [0], [0]>} : vector<2x16x16xf32>, vector<2x16x16xf32>, vector<2x16x16xf32> -> vector<2x16x16xf32>
    %cst_80 = arith.constant -1.000000e+30 : f32
    "tpu.trace_stop"() : () -> ()
    %241 = vector.broadcast %cst_80 : f32 to vector<2x16x16xf32>
    %242 = arith.select %28, %240, %241 : vector<2x16x16xi1>, vector<2x16x16xf32>
    %cst_81 = arith.constant dense<0xFF800000> : vector<2x16xf32>
    %243 = vector.multi_reduction <maximumf>, %242, %cst_81 [2] : vector<2x16x16xf32> to vector<2x16xf32>
    %244 = vector.shape_cast %243 : vector<2x16xf32> to vector<2x16x1xf32>
    %245 = vector.broadcast %244 : vector<2x16x1xf32> to vector<2x16x16xf32>
    %246 = arith.subf %242, %245 : vector<2x16x16xf32>
    %247 = math.exp %246 : vector<2x16x16xf32>
    %cst_82 = arith.constant dense<0.000000e+00> : vector<2x16xf32>
    %248 = vector.multi_reduction <add>, %247, %cst_82 [2] : vector<2x16x16xf32> to vector<2x16xf32>
    %249 = vector.shape_cast %248 : vector<2x16xf32> to vector<2x16x1xf32>
    %250 = vector.broadcast %249 : vector<2x16x1xf32> to vector<2x16x16xf32>
    %251 = arith.divf %247, %250 : vector<2x16x16xf32>
    "tpu.trace_start"() <{level = 10 : i32, message = "bqk,bkd->bqd"}> : () -> ()
    %cst_83 = arith.constant dense<0.000000e+00> : vector<2x16x16xf32>
    %252 = tpu.matmul %251, %239, %cst_83 {dimension_numbers = #tpu.dot_dimension_numbers<[2], [1], [1], [2], [0, 0, 0, 1, 1, 2], [0], [0]>} : vector<2x16x16xf32>, vector<2x16x16xf32>, vector<2x16x16xf32> -> vector<2x16x16xf32>
    "tpu.trace_stop"() : () -> ()
    %253 = vector.shape_cast %252 : vector<2x16x16xf32> to vector<32x16xf32>
    %254 = vector.extract_strided_slice %215 {offsets = [16, 0], sizes = [16, 128], strides = [1, 1]} : vector<128x128xf32> to vector<16x128xf32>
    %cst_84 = arith.constant dense<0.000000e+00> : vector<32x128xf32>
    %255 = tpu.matmul %253, %254, %cst_84 {dimension_numbers = #tpu.dot_dimension_numbers<[1], [0], [0], [1], [0, 0, 1, 1], [], []>} : vector<32x16xf32>, vector<16x128xf32>, vector<32x128xf32> -> vector<32x128xf32>
    %256 = arith.addf %236, %255 : vector<32x128xf32>
    %257 = vector.extract_strided_slice %210 {offsets = [0, 0, 32], sizes = [2, 16, 16], strides = [1, 1, 1]} : vector<2x16x128xf32> to vector<2x16x16xf32>
    %258 = vector.extract_strided_slice %211 {offsets = [0, 0, 32], sizes = [2, 16, 16], strides = [1, 1, 1]} : vector<2x16x128xf32> to vector<2x16x16xf32>
    %259 = vector.extract_strided_slice %212 {offsets = [0, 0, 32], sizes = [2, 16, 16], strides = [1, 1, 1]} : vector<2x16x128xf32> to vector<2x16x16xf32>
    "tpu.trace_start"() <{level = 10 : i32, message = "bqd,bkd->bqk"}> : () -> ()
    %cst_85 = arith.constant dense<0.000000e+00> : vector<2x16x16xf32>
    %260 = tpu.matmul %257, %258, %cst_85 {dimension_numbers = #tpu.dot_dimension_numbers<[2], [2], [1], [1], [0, 0, 0, 1, 1, 1], [0], [0]>} : vector<2x16x16xf32>, vector<2x16x16xf32>, vector<2x16x16xf32> -> vector<2x16x16xf32>
    %cst_86 = arith.constant -1.000000e+30 : f32
    "tpu.trace_stop"() : () -> ()
    %261 = vector.broadcast %cst_86 : f32 to vector<2x16x16xf32>
    %262 = arith.select %28, %260, %261 : vector<2x16x16xi1>, vector<2x16x16xf32>
    %cst_87 = arith.constant dense<0xFF800000> : vector<2x16xf32>
    %263 = vector.multi_reduction <maximumf>, %262, %cst_87 [2] : vector<2x16x16xf32> to vector<2x16xf32>
    %264 = vector.shape_cast %263 : vector<2x16xf32> to vector<2x16x1xf32>
    %265 = vector.broadcast %264 : vector<2x16x1xf32> to vector<2x16x16xf32>
    %266 = arith.subf %262, %265 : vector<2x16x16xf32>
    %267 = math.exp %266 : vector<2x16x16xf32>
    %cst_88 = arith.constant dense<0.000000e+00> : vector<2x16xf32>
    %268 = vector.multi_reduction <add>, %267, %cst_88 [2] : vector<2x16x16xf32> to vector<2x16xf32>
    %269 = vector.shape_cast %268 : vector<2x16xf32> to vector<2x16x1xf32>
    %270 = vector.broadcast %269 : vector<2x16x1xf32> to vector<2x16x16xf32>
    %271 = arith.divf %267, %270 : vector<2x16x16xf32>
    "tpu.trace_start"() <{level = 10 : i32, message = "bqk,bkd->bqd"}> : () -> ()
    %cst_89 = arith.constant dense<0.000000e+00> : vector<2x16x16xf32>
    %272 = tpu.matmul %271, %259, %cst_89 {dimension_numbers = #tpu.dot_dimension_numbers<[2], [1], [1], [2], [0, 0, 0, 1, 1, 2], [0], [0]>} : vector<2x16x16xf32>, vector<2x16x16xf32>, vector<2x16x16xf32> -> vector<2x16x16xf32>
    "tpu.trace_stop"() : () -> ()
    %273 = vector.shape_cast %272 : vector<2x16x16xf32> to vector<32x16xf32>
    %274 = vector.extract_strided_slice %215 {offsets = [32, 0], sizes = [16, 128], strides = [1, 1]} : vector<128x128xf32> to vector<16x128xf32>
    %cst_90 = arith.constant dense<0.000000e+00> : vector<32x128xf32>
    %275 = tpu.matmul %273, %274, %cst_90 {dimension_numbers = #tpu.dot_dimension_numbers<[1], [0], [0], [1], [0, 0, 1, 1], [], []>} : vector<32x16xf32>, vector<16x128xf32>, vector<32x128xf32> -> vector<32x128xf32>
    %276 = arith.addf %256, %275 : vector<32x128xf32>
    %277 = vector.broadcast %192 : vector<1x128xf32> to vector<32x128xf32>
    %278 = arith.addf %276, %277 : vector<32x128xf32>
    %279 = arith.addf %188, %278 : vector<32x128xf32>
    %cst_91 = arith.constant dense<0.000000e+00> : vector<32xf32>
    %280 = vector.multi_reduction <add>, %279, %cst_91 [1] : vector<32x128xf32> to vector<32xf32>
    %281 = vector.shape_cast %280 : vector<32xf32> to vector<32x1xf32>
    %cst_92 = arith.constant 0.020833334 : f32
    %282 = vector.broadcast %cst_92 : f32 to vector<32x1xf32>
    %283 = arith.mulf %281, %282 : vector<32x1xf32>
    %284 = vector.broadcast %283 : vector<32x1xf32> to vector<32x128xf32>
    %285 = arith.subf %279, %284 : vector<32x128xf32>
    %cst_93 = arith.constant 0.000000e+00 : f32
    %286 = vector.shape_cast %7 : vector<1x128xi1> to vector<1x128xi1>
    %287 = vector.broadcast %286 : vector<1x128xi1> to vector<32x128xi1>
    %288 = vector.broadcast %cst_93 : f32 to vector<32x128xf32>
    %289 = arith.select %287, %285, %288 : vector<32x128xi1>, vector<32x128xf32>
    %290 = arith.mulf %289, %289 : vector<32x128xf32>
    %cst_94 = arith.constant dense<0.000000e+00> : vector<32xf32>
    %291 = vector.multi_reduction <add>, %290, %cst_94 [1] : vector<32x128xf32> to vector<32xf32>
    %292 = vector.shape_cast %291 : vector<32xf32> to vector<32x1xf32>
    %cst_95 = arith.constant 0.020833334 : f32
    %293 = vector.broadcast %cst_95 : f32 to vector<32x1xf32>
    %294 = arith.mulf %292, %293 : vector<32x1xf32>
    %cst_96 = arith.constant 9.99999974E-6 : f32
    %295 = vector.broadcast %cst_96 : f32 to vector<32x1xf32>
    %296 = arith.addf %294, %295 : vector<32x1xf32>
    %297 = math.rsqrt %296 : vector<32x1xf32>
    %298 = vector.broadcast %297 : vector<32x1xf32> to vector<32x128xf32>
    %299 = arith.mulf %289, %298 : vector<32x128xf32>
    %300 = vector.broadcast %193 : vector<1x128xf32> to vector<32x128xf32>
    %301 = arith.mulf %299, %300 : vector<32x128xf32>
    %302 = vector.broadcast %194 : vector<1x128xf32> to vector<32x128xf32>
    %303 = arith.addf %301, %302 : vector<32x128xf32>
    %c1_97 = arith.constant 1 : index
    %c0_98 = arith.constant 0 : index
    %c0_99 = arith.constant 0 : index
    %304 = vector.load %arg6[%c1_97, %c0_98, %c0_99] : memref<3x128x256xbf16, #tpu.memory_space<vmem>>, vector<1x128x256xbf16>
    %305 = vector.shape_cast %304 : vector<1x128x256xbf16> to vector<128x256xbf16>
    %306 = arith.extf %305 : vector<128x256xbf16> to vector<128x256xf32>
    %cst_100 = arith.constant dense<0.000000e+00> : vector<32x256xf32>
    %307 = tpu.matmul %303, %306, %cst_100 {dimension_numbers = #tpu.dot_dimension_numbers<[1], [0], [0], [1], [0, 0, 1, 1], [], []>} : vector<32x128xf32>, vector<128x256xf32>, vector<32x256xf32> -> vector<32x256xf32>
    %308 = vector.broadcast %195 : vector<1x256xf32> to vector<32x256xf32>
    %309 = arith.addf %307, %308 : vector<32x256xf32>
    %cst_101 = arith.constant 5.000000e-01 : f32
    %310 = vector.broadcast %cst_101 : f32 to vector<32x256xf32>
    %311 = arith.mulf %310, %309 : vector<32x256xf32>
    %cst_102 = arith.constant 0.707106769 : f32
    %312 = vector.broadcast %cst_102 : f32 to vector<32x256xf32>
    %313 = arith.mulf %309, %312 : vector<32x256xf32>
    %314 = math.erf %313 : vector<32x256xf32>
    %cst_103 = arith.constant 1.000000e+00 : f32
    %315 = vector.broadcast %cst_103 : f32 to vector<32x256xf32>
    %316 = arith.addf %315, %314 : vector<32x256xf32>
    %317 = arith.mulf %311, %316 : vector<32x256xf32>
    %c1_104 = arith.constant 1 : index
    %c0_105 = arith.constant 0 : index
    %c0_106 = arith.constant 0 : index
    %318 = vector.load %arg7[%c1_104, %c0_105, %c0_106] : memref<3x256x128xbf16, #tpu.memory_space<vmem>>, vector<1x256x128xbf16>
    %319 = vector.shape_cast %318 : vector<1x256x128xbf16> to vector<256x128xbf16>
    %320 = arith.extf %319 : vector<256x128xbf16> to vector<256x128xf32>
    %cst_107 = arith.constant dense<0.000000e+00> : vector<32x128xf32>
    %321 = tpu.matmul %317, %320, %cst_107 {dimension_numbers = #tpu.dot_dimension_numbers<[1], [0], [0], [1], [0, 0, 1, 1], [], []>} : vector<32x256xf32>, vector<256x128xf32>, vector<32x128xf32> -> vector<32x128xf32>
    %322 = vector.broadcast %196 : vector<1x128xf32> to vector<32x128xf32>
    %323 = arith.addf %321, %322 : vector<32x128xf32>
    %324 = arith.addf %303, %323 : vector<32x128xf32>
    %cst_108 = arith.constant dense<0.000000e+00> : vector<32xf32>
    %325 = vector.multi_reduction <add>, %324, %cst_108 [1] : vector<32x128xf32> to vector<32xf32>
    %326 = vector.shape_cast %325 : vector<32xf32> to vector<32x1xf32>
    %cst_109 = arith.constant 0.020833334 : f32
    %327 = vector.broadcast %cst_109 : f32 to vector<32x1xf32>
    %328 = arith.mulf %326, %327 : vector<32x1xf32>
    %329 = vector.broadcast %328 : vector<32x1xf32> to vector<32x128xf32>
    %330 = arith.subf %324, %329 : vector<32x128xf32>
    %cst_110 = arith.constant 0.000000e+00 : f32
    %331 = vector.shape_cast %7 : vector<1x128xi1> to vector<1x128xi1>
    %332 = vector.broadcast %331 : vector<1x128xi1> to vector<32x128xi1>
    %333 = vector.broadcast %cst_110 : f32 to vector<32x128xf32>
    %334 = arith.select %332, %330, %333 : vector<32x128xi1>, vector<32x128xf32>
    %335 = arith.mulf %334, %334 : vector<32x128xf32>
    %cst_111 = arith.constant dense<0.000000e+00> : vector<32xf32>
    %336 = vector.multi_reduction <add>, %335, %cst_111 [1] : vector<32x128xf32> to vector<32xf32>
    %337 = vector.shape_cast %336 : vector<32xf32> to vector<32x1xf32>
    %cst_112 = arith.constant 0.020833334 : f32
    %338 = vector.broadcast %cst_112 : f32 to vector<32x1xf32>
    %339 = arith.mulf %337, %338 : vector<32x1xf32>
    %cst_113 = arith.constant 9.99999974E-6 : f32
    %340 = vector.broadcast %cst_113 : f32 to vector<32x1xf32>
    %341 = arith.addf %339, %340 : vector<32x1xf32>
    %342 = math.rsqrt %341 : vector<32x1xf32>
    %343 = vector.broadcast %342 : vector<32x1xf32> to vector<32x128xf32>
    %344 = arith.mulf %334, %343 : vector<32x128xf32>
    %345 = vector.broadcast %197 : vector<1x128xf32> to vector<32x128xf32>
    %346 = arith.mulf %344, %345 : vector<32x128xf32>
    %347 = vector.broadcast %198 : vector<1x128xf32> to vector<32x128xf32>
    %348 = arith.addf %346, %347 : vector<32x128xf32>
    %c2 = arith.constant 2 : index
    %c0_114 = arith.constant 0 : index
    %c0_115 = arith.constant 0 : index
    %349 = vector.load %arg8[%c2, %c0_114, %c0_115] : memref<3x8x384xf32, #tpu.memory_space<vmem>>, vector<1x8x384xf32>
    %350 = vector.shape_cast %349 : vector<1x8x384xf32> to vector<8x384xf32>
    %351 = vector.extract_strided_slice %350 {offsets = [0, 0], sizes = [1, 384], strides = [1, 1]} : vector<8x384xf32> to vector<1x384xf32>
    %352 = vector.extract_strided_slice %350 {offsets = [1, 0], sizes = [1, 128], strides = [1, 1]} : vector<8x384xf32> to vector<1x128xf32>
    %353 = vector.extract_strided_slice %350 {offsets = [2, 0], sizes = [1, 128], strides = [1, 1]} : vector<8x384xf32> to vector<1x128xf32>
    %354 = vector.extract_strided_slice %350 {offsets = [3, 0], sizes = [1, 128], strides = [1, 1]} : vector<8x384xf32> to vector<1x128xf32>
    %355 = vector.extract_strided_slice %350 {offsets = [4, 0], sizes = [1, 256], strides = [1, 1]} : vector<8x384xf32> to vector<1x256xf32>
    %356 = vector.extract_strided_slice %350 {offsets = [5, 0], sizes = [1, 128], strides = [1, 1]} : vector<8x384xf32> to vector<1x128xf32>
    %357 = vector.extract_strided_slice %350 {offsets = [6, 0], sizes = [1, 128], strides = [1, 1]} : vector<8x384xf32> to vector<1x128xf32>
    %358 = vector.extract_strided_slice %350 {offsets = [7, 0], sizes = [1, 128], strides = [1, 1]} : vector<8x384xf32> to vector<1x128xf32>
    %c2_116 = arith.constant 2 : index
    %c0_117 = arith.constant 0 : index
    %c0_118 = arith.constant 0 : index
    %359 = vector.load %arg4[%c2_116, %c0_117, %c0_118] : memref<3x128x384xbf16, #tpu.memory_space<vmem>>, vector<1x128x384xbf16>
    %360 = vector.shape_cast %359 : vector<1x128x384xbf16> to vector<128x384xbf16>
    %361 = arith.extf %360 : vector<128x384xbf16> to vector<128x384xf32>
    %cst_119 = arith.constant dense<0.000000e+00> : vector<32x384xf32>
    %362 = tpu.matmul %348, %361, %cst_119 {dimension_numbers = #tpu.dot_dimension_numbers<[1], [0], [0], [1], [0, 0, 1, 1], [], []>} : vector<32x128xf32>, vector<128x384xf32>, vector<32x384xf32> -> vector<32x384xf32>
    %363 = vector.broadcast %351 : vector<1x384xf32> to vector<32x384xf32>
    %364 = arith.addf %362, %363 : vector<32x384xf32>
    %365 = vector.extract_strided_slice %364 {offsets = [0, 0], sizes = [32, 128], strides = [1, 1]} : vector<32x384xf32> to vector<32x128xf32>
    %cst_120 = arith.constant 2.500000e-01 : f32
    %366 = vector.broadcast %cst_120 : f32 to vector<32x128xf32>
    %367 = arith.mulf %365, %366 : vector<32x128xf32>
    %368 = vector.extract_strided_slice %364 {offsets = [0, 128], sizes = [32, 128], strides = [1, 1]} : vector<32x384xf32> to vector<32x128xf32>
    %369 = vector.extract_strided_slice %364 {offsets = [0, 256], sizes = [32, 128], strides = [1, 1]} : vector<32x384xf32> to vector<32x128xf32>
    %370 = vector.shape_cast %367 : vector<32x128xf32> to vector<2x16x128xf32>
    %371 = vector.shape_cast %368 : vector<32x128xf32> to vector<2x16x128xf32>
    %372 = vector.shape_cast %369 : vector<32x128xf32> to vector<2x16x128xf32>
    %c2_121 = arith.constant 2 : index
    %c0_122 = arith.constant 0 : index
    %c0_123 = arith.constant 0 : index
    %373 = vector.load %arg5[%c2_121, %c0_122, %c0_123] : memref<3x128x128xbf16, #tpu.memory_space<vmem>>, vector<1x128x128xbf16>
    %374 = vector.shape_cast %373 : vector<1x128x128xbf16> to vector<128x128xbf16>
    %375 = arith.extf %374 : vector<128x128xbf16> to vector<128x128xf32>
    %cst_124 = arith.constant 0.000000e+00 : f32
    %376 = vector.broadcast %cst_124 : f32 to vector<32x128xf32>
    %377 = vector.extract_strided_slice %370 {offsets = [0, 0, 0], sizes = [2, 16, 16], strides = [1, 1, 1]} : vector<2x16x128xf32> to vector<2x16x16xf32>
    %378 = vector.extract_strided_slice %371 {offsets = [0, 0, 0], sizes = [2, 16, 16], strides = [1, 1, 1]} : vector<2x16x128xf32> to vector<2x16x16xf32>
    %379 = vector.extract_strided_slice %372 {offsets = [0, 0, 0], sizes = [2, 16, 16], strides = [1, 1, 1]} : vector<2x16x128xf32> to vector<2x16x16xf32>
    "tpu.trace_start"() <{level = 10 : i32, message = "bqd,bkd->bqk"}> : () -> ()
    %cst_125 = arith.constant dense<0.000000e+00> : vector<2x16x16xf32>
    %380 = tpu.matmul %377, %378, %cst_125 {dimension_numbers = #tpu.dot_dimension_numbers<[2], [2], [1], [1], [0, 0, 0, 1, 1, 1], [0], [0]>} : vector<2x16x16xf32>, vector<2x16x16xf32>, vector<2x16x16xf32> -> vector<2x16x16xf32>
    %cst_126 = arith.constant -1.000000e+30 : f32
    "tpu.trace_stop"() : () -> ()
    %381 = vector.broadcast %cst_126 : f32 to vector<2x16x16xf32>
    %382 = arith.select %28, %380, %381 : vector<2x16x16xi1>, vector<2x16x16xf32>
    %cst_127 = arith.constant dense<0xFF800000> : vector<2x16xf32>
    %383 = vector.multi_reduction <maximumf>, %382, %cst_127 [2] : vector<2x16x16xf32> to vector<2x16xf32>
    %384 = vector.shape_cast %383 : vector<2x16xf32> to vector<2x16x1xf32>
    %385 = vector.broadcast %384 : vector<2x16x1xf32> to vector<2x16x16xf32>
    %386 = arith.subf %382, %385 : vector<2x16x16xf32>
    %387 = math.exp %386 : vector<2x16x16xf32>
    %cst_128 = arith.constant dense<0.000000e+00> : vector<2x16xf32>
    %388 = vector.multi_reduction <add>, %387, %cst_128 [2] : vector<2x16x16xf32> to vector<2x16xf32>
    %389 = vector.shape_cast %388 : vector<2x16xf32> to vector<2x16x1xf32>
    %390 = vector.broadcast %389 : vector<2x16x1xf32> to vector<2x16x16xf32>
    %391 = arith.divf %387, %390 : vector<2x16x16xf32>
    "tpu.trace_start"() <{level = 10 : i32, message = "bqk,bkd->bqd"}> : () -> ()
    %cst_129 = arith.constant dense<0.000000e+00> : vector<2x16x16xf32>
    %392 = tpu.matmul %391, %379, %cst_129 {dimension_numbers = #tpu.dot_dimension_numbers<[2], [1], [1], [2], [0, 0, 0, 1, 1, 2], [0], [0]>} : vector<2x16x16xf32>, vector<2x16x16xf32>, vector<2x16x16xf32> -> vector<2x16x16xf32>
    "tpu.trace_stop"() : () -> ()
    %393 = vector.shape_cast %392 : vector<2x16x16xf32> to vector<32x16xf32>
    %394 = vector.extract_strided_slice %375 {offsets = [0, 0], sizes = [16, 128], strides = [1, 1]} : vector<128x128xf32> to vector<16x128xf32>
    %cst_130 = arith.constant dense<0.000000e+00> : vector<32x128xf32>
    %395 = tpu.matmul %393, %394, %cst_130 {dimension_numbers = #tpu.dot_dimension_numbers<[1], [0], [0], [1], [0, 0, 1, 1], [], []>} : vector<32x16xf32>, vector<16x128xf32>, vector<32x128xf32> -> vector<32x128xf32>
    %396 = arith.addf %376, %395 : vector<32x128xf32>
    %397 = vector.extract_strided_slice %370 {offsets = [0, 0, 16], sizes = [2, 16, 16], strides = [1, 1, 1]} : vector<2x16x128xf32> to vector<2x16x16xf32>
    %398 = vector.extract_strided_slice %371 {offsets = [0, 0, 16], sizes = [2, 16, 16], strides = [1, 1, 1]} : vector<2x16x128xf32> to vector<2x16x16xf32>
    %399 = vector.extract_strided_slice %372 {offsets = [0, 0, 16], sizes = [2, 16, 16], strides = [1, 1, 1]} : vector<2x16x128xf32> to vector<2x16x16xf32>
    "tpu.trace_start"() <{level = 10 : i32, message = "bqd,bkd->bqk"}> : () -> ()
    %cst_131 = arith.constant dense<0.000000e+00> : vector<2x16x16xf32>
    %400 = tpu.matmul %397, %398, %cst_131 {dimension_numbers = #tpu.dot_dimension_numbers<[2], [2], [1], [1], [0, 0, 0, 1, 1, 1], [0], [0]>} : vector<2x16x16xf32>, vector<2x16x16xf32>, vector<2x16x16xf32> -> vector<2x16x16xf32>
    %cst_132 = arith.constant -1.000000e+30 : f32
    "tpu.trace_stop"() : () -> ()
    %401 = vector.broadcast %cst_132 : f32 to vector<2x16x16xf32>
    %402 = arith.select %28, %400, %401 : vector<2x16x16xi1>, vector<2x16x16xf32>
    %cst_133 = arith.constant dense<0xFF800000> : vector<2x16xf32>
    %403 = vector.multi_reduction <maximumf>, %402, %cst_133 [2] : vector<2x16x16xf32> to vector<2x16xf32>
    %404 = vector.shape_cast %403 : vector<2x16xf32> to vector<2x16x1xf32>
    %405 = vector.broadcast %404 : vector<2x16x1xf32> to vector<2x16x16xf32>
    %406 = arith.subf %402, %405 : vector<2x16x16xf32>
    %407 = math.exp %406 : vector<2x16x16xf32>
    %cst_134 = arith.constant dense<0.000000e+00> : vector<2x16xf32>
    %408 = vector.multi_reduction <add>, %407, %cst_134 [2] : vector<2x16x16xf32> to vector<2x16xf32>
    %409 = vector.shape_cast %408 : vector<2x16xf32> to vector<2x16x1xf32>
    %410 = vector.broadcast %409 : vector<2x16x1xf32> to vector<2x16x16xf32>
    %411 = arith.divf %407, %410 : vector<2x16x16xf32>
    "tpu.trace_start"() <{level = 10 : i32, message = "bqk,bkd->bqd"}> : () -> ()
    %cst_135 = arith.constant dense<0.000000e+00> : vector<2x16x16xf32>
    %412 = tpu.matmul %411, %399, %cst_135 {dimension_numbers = #tpu.dot_dimension_numbers<[2], [1], [1], [2], [0, 0, 0, 1, 1, 2], [0], [0]>} : vector<2x16x16xf32>, vector<2x16x16xf32>, vector<2x16x16xf32> -> vector<2x16x16xf32>
    "tpu.trace_stop"() : () -> ()
    %413 = vector.shape_cast %412 : vector<2x16x16xf32> to vector<32x16xf32>
    %414 = vector.extract_strided_slice %375 {offsets = [16, 0], sizes = [16, 128], strides = [1, 1]} : vector<128x128xf32> to vector<16x128xf32>
    %cst_136 = arith.constant dense<0.000000e+00> : vector<32x128xf32>
    %415 = tpu.matmul %413, %414, %cst_136 {dimension_numbers = #tpu.dot_dimension_numbers<[1], [0], [0], [1], [0, 0, 1, 1], [], []>} : vector<32x16xf32>, vector<16x128xf32>, vector<32x128xf32> -> vector<32x128xf32>
    %416 = arith.addf %396, %415 : vector<32x128xf32>
    %417 = vector.extract_strided_slice %370 {offsets = [0, 0, 32], sizes = [2, 16, 16], strides = [1, 1, 1]} : vector<2x16x128xf32> to vector<2x16x16xf32>
    %418 = vector.extract_strided_slice %371 {offsets = [0, 0, 32], sizes = [2, 16, 16], strides = [1, 1, 1]} : vector<2x16x128xf32> to vector<2x16x16xf32>
    %419 = vector.extract_strided_slice %372 {offsets = [0, 0, 32], sizes = [2, 16, 16], strides = [1, 1, 1]} : vector<2x16x128xf32> to vector<2x16x16xf32>
    "tpu.trace_start"() <{level = 10 : i32, message = "bqd,bkd->bqk"}> : () -> ()
    %cst_137 = arith.constant dense<0.000000e+00> : vector<2x16x16xf32>
    %420 = tpu.matmul %417, %418, %cst_137 {dimension_numbers = #tpu.dot_dimension_numbers<[2], [2], [1], [1], [0, 0, 0, 1, 1, 1], [0], [0]>} : vector<2x16x16xf32>, vector<2x16x16xf32>, vector<2x16x16xf32> -> vector<2x16x16xf32>
    %cst_138 = arith.constant -1.000000e+30 : f32
    "tpu.trace_stop"() : () -> ()
    %421 = vector.broadcast %cst_138 : f32 to vector<2x16x16xf32>
    %422 = arith.select %28, %420, %421 : vector<2x16x16xi1>, vector<2x16x16xf32>
    %cst_139 = arith.constant dense<0xFF800000> : vector<2x16xf32>
    %423 = vector.multi_reduction <maximumf>, %422, %cst_139 [2] : vector<2x16x16xf32> to vector<2x16xf32>
    %424 = vector.shape_cast %423 : vector<2x16xf32> to vector<2x16x1xf32>
    %425 = vector.broadcast %424 : vector<2x16x1xf32> to vector<2x16x16xf32>
    %426 = arith.subf %422, %425 : vector<2x16x16xf32>
    %427 = math.exp %426 : vector<2x16x16xf32>
    %cst_140 = arith.constant dense<0.000000e+00> : vector<2x16xf32>
    %428 = vector.multi_reduction <add>, %427, %cst_140 [2] : vector<2x16x16xf32> to vector<2x16xf32>
    %429 = vector.shape_cast %428 : vector<2x16xf32> to vector<2x16x1xf32>
    %430 = vector.broadcast %429 : vector<2x16x1xf32> to vector<2x16x16xf32>
    %431 = arith.divf %427, %430 : vector<2x16x16xf32>
    "tpu.trace_start"() <{level = 10 : i32, message = "bqk,bkd->bqd"}> : () -> ()
    %cst_141 = arith.constant dense<0.000000e+00> : vector<2x16x16xf32>
    %432 = tpu.matmul %431, %419, %cst_141 {dimension_numbers = #tpu.dot_dimension_numbers<[2], [1], [1], [2], [0, 0, 0, 1, 1, 2], [0], [0]>} : vector<2x16x16xf32>, vector<2x16x16xf32>, vector<2x16x16xf32> -> vector<2x16x16xf32>
    "tpu.trace_stop"() : () -> ()
    %433 = vector.shape_cast %432 : vector<2x16x16xf32> to vector<32x16xf32>
    %434 = vector.extract_strided_slice %375 {offsets = [32, 0], sizes = [16, 128], strides = [1, 1]} : vector<128x128xf32> to vector<16x128xf32>
    %cst_142 = arith.constant dense<0.000000e+00> : vector<32x128xf32>
    %435 = tpu.matmul %433, %434, %cst_142 {dimension_numbers = #tpu.dot_dimension_numbers<[1], [0], [0], [1], [0, 0, 1, 1], [], []>} : vector<32x16xf32>, vector<16x128xf32>, vector<32x128xf32> -> vector<32x128xf32>
    %436 = arith.addf %416, %435 : vector<32x128xf32>
    %437 = vector.broadcast %352 : vector<1x128xf32> to vector<32x128xf32>
    %438 = arith.addf %436, %437 : vector<32x128xf32>
    %439 = arith.addf %348, %438 : vector<32x128xf32>
    %cst_143 = arith.constant dense<0.000000e+00> : vector<32xf32>
    %440 = vector.multi_reduction <add>, %439, %cst_143 [1] : vector<32x128xf32> to vector<32xf32>
    %441 = vector.shape_cast %440 : vector<32xf32> to vector<32x1xf32>
    %cst_144 = arith.constant 0.020833334 : f32
    %442 = vector.broadcast %cst_144 : f32 to vector<32x1xf32>
    %443 = arith.mulf %441, %442 : vector<32x1xf32>
    %444 = vector.broadcast %443 : vector<32x1xf32> to vector<32x128xf32>
    %445 = arith.subf %439, %444 : vector<32x128xf32>
    %cst_145 = arith.constant 0.000000e+00 : f32
    %446 = vector.shape_cast %7 : vector<1x128xi1> to vector<1x128xi1>
    %447 = vector.broadcast %446 : vector<1x128xi1> to vector<32x128xi1>
    %448 = vector.broadcast %cst_145 : f32 to vector<32x128xf32>
    %449 = arith.select %447, %445, %448 : vector<32x128xi1>, vector<32x128xf32>
    %450 = arith.mulf %449, %449 : vector<32x128xf32>
    %cst_146 = arith.constant dense<0.000000e+00> : vector<32xf32>
    %451 = vector.multi_reduction <add>, %450, %cst_146 [1] : vector<32x128xf32> to vector<32xf32>
    %452 = vector.shape_cast %451 : vector<32xf32> to vector<32x1xf32>
    %cst_147 = arith.constant 0.020833334 : f32
    %453 = vector.broadcast %cst_147 : f32 to vector<32x1xf32>
    %454 = arith.mulf %452, %453 : vector<32x1xf32>
    %cst_148 = arith.constant 9.99999974E-6 : f32
    %455 = vector.broadcast %cst_148 : f32 to vector<32x1xf32>
    %456 = arith.addf %454, %455 : vector<32x1xf32>
    %457 = math.rsqrt %456 : vector<32x1xf32>
    %458 = vector.broadcast %457 : vector<32x1xf32> to vector<32x128xf32>
    %459 = arith.mulf %449, %458 : vector<32x128xf32>
    %460 = vector.broadcast %353 : vector<1x128xf32> to vector<32x128xf32>
    %461 = arith.mulf %459, %460 : vector<32x128xf32>
    %462 = vector.broadcast %354 : vector<1x128xf32> to vector<32x128xf32>
    %463 = arith.addf %461, %462 : vector<32x128xf32>
    %c2_149 = arith.constant 2 : index
    %c0_150 = arith.constant 0 : index
    %c0_151 = arith.constant 0 : index
    %464 = vector.load %arg6[%c2_149, %c0_150, %c0_151] : memref<3x128x256xbf16, #tpu.memory_space<vmem>>, vector<1x128x256xbf16>
    %465 = vector.shape_cast %464 : vector<1x128x256xbf16> to vector<128x256xbf16>
    %466 = arith.extf %465 : vector<128x256xbf16> to vector<128x256xf32>
    %cst_152 = arith.constant dense<0.000000e+00> : vector<32x256xf32>
    %467 = tpu.matmul %463, %466, %cst_152 {dimension_numbers = #tpu.dot_dimension_numbers<[1], [0], [0], [1], [0, 0, 1, 1], [], []>} : vector<32x128xf32>, vector<128x256xf32>, vector<32x256xf32> -> vector<32x256xf32>
    %468 = vector.broadcast %355 : vector<1x256xf32> to vector<32x256xf32>
    %469 = arith.addf %467, %468 : vector<32x256xf32>
    %cst_153 = arith.constant 5.000000e-01 : f32
    %470 = vector.broadcast %cst_153 : f32 to vector<32x256xf32>
    %471 = arith.mulf %470, %469 : vector<32x256xf32>
    %cst_154 = arith.constant 0.707106769 : f32
    %472 = vector.broadcast %cst_154 : f32 to vector<32x256xf32>
    %473 = arith.mulf %469, %472 : vector<32x256xf32>
    %474 = math.erf %473 : vector<32x256xf32>
    %cst_155 = arith.constant 1.000000e+00 : f32
    %475 = vector.broadcast %cst_155 : f32 to vector<32x256xf32>
    %476 = arith.addf %475, %474 : vector<32x256xf32>
    %477 = arith.mulf %471, %476 : vector<32x256xf32>
    %c2_156 = arith.constant 2 : index
    %c0_157 = arith.constant 0 : index
    %c0_158 = arith.constant 0 : index
    %478 = vector.load %arg7[%c2_156, %c0_157, %c0_158] : memref<3x256x128xbf16, #tpu.memory_space<vmem>>, vector<1x256x128xbf16>
    %479 = vector.shape_cast %478 : vector<1x256x128xbf16> to vector<256x128xbf16>
    %480 = arith.extf %479 : vector<256x128xbf16> to vector<256x128xf32>
    %cst_159 = arith.constant dense<0.000000e+00> : vector<32x128xf32>
    %481 = tpu.matmul %477, %480, %cst_159 {dimension_numbers = #tpu.dot_dimension_numbers<[1], [0], [0], [1], [0, 0, 1, 1], [], []>} : vector<32x256xf32>, vector<256x128xf32>, vector<32x128xf32> -> vector<32x128xf32>
    %482 = vector.broadcast %356 : vector<1x128xf32> to vector<32x128xf32>
    %483 = arith.addf %481, %482 : vector<32x128xf32>
    %484 = arith.addf %463, %483 : vector<32x128xf32>
    %cst_160 = arith.constant dense<0.000000e+00> : vector<32xf32>
    %485 = vector.multi_reduction <add>, %484, %cst_160 [1] : vector<32x128xf32> to vector<32xf32>
    %486 = vector.shape_cast %485 : vector<32xf32> to vector<32x1xf32>
    %cst_161 = arith.constant 0.020833334 : f32
    %487 = vector.broadcast %cst_161 : f32 to vector<32x1xf32>
    %488 = arith.mulf %486, %487 : vector<32x1xf32>
    %489 = vector.broadcast %488 : vector<32x1xf32> to vector<32x128xf32>
    %490 = arith.subf %484, %489 : vector<32x128xf32>
    %cst_162 = arith.constant 0.000000e+00 : f32
    %491 = vector.shape_cast %7 : vector<1x128xi1> to vector<1x128xi1>
    %492 = vector.broadcast %491 : vector<1x128xi1> to vector<32x128xi1>
    %493 = vector.broadcast %cst_162 : f32 to vector<32x128xf32>
    %494 = arith.select %492, %490, %493 : vector<32x128xi1>, vector<32x128xf32>
    %495 = arith.mulf %494, %494 : vector<32x128xf32>
    %cst_163 = arith.constant dense<0.000000e+00> : vector<32xf32>
    %496 = vector.multi_reduction <add>, %495, %cst_163 [1] : vector<32x128xf32> to vector<32xf32>
    %497 = vector.shape_cast %496 : vector<32xf32> to vector<32x1xf32>
    %cst_164 = arith.constant 0.020833334 : f32
    %498 = vector.broadcast %cst_164 : f32 to vector<32x1xf32>
    %499 = arith.mulf %497, %498 : vector<32x1xf32>
    %cst_165 = arith.constant 9.99999974E-6 : f32
    %500 = vector.broadcast %cst_165 : f32 to vector<32x1xf32>
    %501 = arith.addf %499, %500 : vector<32x1xf32>
    %502 = math.rsqrt %501 : vector<32x1xf32>
    %503 = vector.broadcast %502 : vector<32x1xf32> to vector<32x128xf32>
    %504 = arith.mulf %494, %503 : vector<32x128xf32>
    %505 = vector.broadcast %357 : vector<1x128xf32> to vector<32x128xf32>
    %506 = arith.mulf %504, %505 : vector<32x128xf32>
    %507 = vector.broadcast %358 : vector<1x128xf32> to vector<32x128xf32>
    %508 = arith.addf %506, %507 : vector<32x128xf32>
    %509 = vector.shape_cast %508 : vector<32x128xf32> to vector<2x16x128xf32>
    %510 = vector.extract_strided_slice %509 {offsets = [0, 0, 0], sizes = [2, 1, 128], strides = [1, 1, 1]} : vector<2x16x128xf32> to vector<2x1x128xf32>
    %511 = vector.shape_cast %510 : vector<2x1x128xf32> to vector<2x128xf32>
    %cst_166 = arith.constant dense<0.000000e+00> : vector<2xf32>
    %512 = vector.multi_reduction <add>, %511, %cst_166 [1] : vector<2x128xf32> to vector<2xf32>
    %513 = vector.shape_cast %512 : vector<2xf32> to vector<2x1xf32>
    %cst_167 = arith.constant 0.020833334 : f32
    %514 = vector.broadcast %cst_167 : f32 to vector<2x1xf32>
    %515 = arith.mulf %513, %514 : vector<2x1xf32>
    %516 = vector.broadcast %515 : vector<2x1xf32> to vector<2x128xf32>
    %517 = arith.subf %511, %516 : vector<2x128xf32>
    %cst_168 = arith.constant 0.000000e+00 : f32
    %518 = vector.shape_cast %7 : vector<1x128xi1> to vector<1x128xi1>
    %519 = vector.broadcast %518 : vector<1x128xi1> to vector<2x128xi1>
    %520 = vector.broadcast %cst_168 : f32 to vector<2x128xf32>
    %521 = arith.select %519, %517, %520 : vector<2x128xi1>, vector<2x128xf32>
    %522 = arith.mulf %521, %521 : vector<2x128xf32>
    %cst_169 = arith.constant dense<0.000000e+00> : vector<2xf32>
    %523 = vector.multi_reduction <add>, %522, %cst_169 [1] : vector<2x128xf32> to vector<2xf32>
    %524 = vector.shape_cast %523 : vector<2xf32> to vector<2x1xf32>
    %cst_170 = arith.constant 0.020833334 : f32
    %525 = vector.broadcast %cst_170 : f32 to vector<2x1xf32>
    %526 = arith.mulf %524, %525 : vector<2x1xf32>
    %cst_171 = arith.constant 9.99999974E-6 : f32
    %527 = vector.broadcast %cst_171 : f32 to vector<2x1xf32>
    %528 = arith.addf %526, %527 : vector<2x1xf32>
    %529 = math.rsqrt %528 : vector<2x1xf32>
    %530 = vector.broadcast %529 : vector<2x1xf32> to vector<2x128xf32>
    %531 = arith.mulf %521, %530 : vector<2x128xf32>
    %532 = vector.broadcast %3 : vector<1x128xf32> to vector<2x128xf32>
    %533 = arith.mulf %531, %532 : vector<2x128xf32>
    %534 = vector.broadcast %4 : vector<1x128xf32> to vector<2x128xf32>
    %535 = arith.addf %533, %534 : vector<2x128xf32>
    %c0_172 = arith.constant 0 : index
    %c0_173 = arith.constant 0 : index
    %536 = vector.load %arg9[%c0_172, %c0_173] : memref<2x128xf32, #tpu.memory_space<vmem>>, vector<2x128xf32>
    tpu.vector_store %arg9[%c0_172, %c0_173], %535 {strides = array<i32>} : memref<2x128xf32, #tpu.memory_space<vmem>>, vector<2x128xf32>,
    return
  }
  func.func @transform_0(%arg0: i32) -> (i32, i32) {
    %c0_i32 = arith.constant 0 : i32
    %c0_i32_0 = arith.constant 0 : i32
    return %arg0, %c0_i32 : i32, i32
  }
  func.func @transform_1(%arg0: i32) -> (i32, i32) {
    %c0_i32 = arith.constant 0 : i32
    %c0_i32_0 = arith.constant 0 : i32
    %c0_i32_1 = arith.constant 0 : i32
    return %c0_i32, %c0_i32_0 : i32, i32
  }
  func.func @transform_2(%arg0: i32) -> (i32, i32) {
    %c0_i32 = arith.constant 0 : i32
    %c0_i32_0 = arith.constant 0 : i32
    %c0_i32_1 = arith.constant 0 : i32
    return %c0_i32, %c0_i32_0 : i32, i32
  }
  func.func @transform_3(%arg0: i32) -> (i32, i32, i32) {
    %c0_i32 = arith.constant 0 : i32
    %c0_i32_0 = arith.constant 0 : i32
    %c0_i32_1 = arith.constant 0 : i32
    %c0_i32_2 = arith.constant 0 : i32
    return %c0_i32, %c0_i32_0, %c0_i32_1 : i32, i32, i32
  }
  func.func @transform_4(%arg0: i32) -> (i32, i32, i32) {
    %c0_i32 = arith.constant 0 : i32
    %c0_i32_0 = arith.constant 0 : i32
    %c0_i32_1 = arith.constant 0 : i32
    %c0_i32_2 = arith.constant 0 : i32
    return %c0_i32, %c0_i32_0, %c0_i32_1 : i32, i32, i32
  }
  func.func @transform_5(%arg0: i32) -> (i32, i32, i32) {
    %c0_i32 = arith.constant 0 : i32
    %c0_i32_0 = arith.constant 0 : i32
    %c0_i32_1 = arith.constant 0 : i32
    %c0_i32_2 = arith.constant 0 : i32
    return %c0_i32, %c0_i32_0, %c0_i32_1 : i32, i32, i32
  }
  func.func @transform_6(%arg0: i32) -> (i32, i32, i32) {
    %c0_i32 = arith.constant 0 : i32
    %c0_i32_0 = arith.constant 0 : i32
    %c0_i32_1 = arith.constant 0 : i32
    %c0_i32_2 = arith.constant 0 : i32
    return %c0_i32, %c0_i32_0, %c0_i32_1 : i32, i32, i32
  }
  func.func @transform_7(%arg0: i32) -> (i32, i32, i32) {
    %c0_i32 = arith.constant 0 : i32
    %c0_i32_0 = arith.constant 0 : i32
    %c0_i32_1 = arith.constant 0 : i32
    %c0_i32_2 = arith.constant 0 : i32
    return %c0_i32, %c0_i32_0, %c0_i32_1 : i32, i32, i32
  }
  func.func @transform_8(%arg0: i32) -> (i32, i32) {
    %c0_i32 = arith.constant 0 : i32
    %c0_i32_0 = arith.constant 0 : i32
    return %arg0, %c0_i32 : i32, i32
  }
}

</mosaic_0001>

<llo_original>
// kernel: iqst_backbone_forward.1
$region0: #{iqst_backbone_forward.1}
  #allocation0 [shape = 'u32[]', space=smem, size = 0x4, offset = 0x4, fixed_abs, tag = 'smem constant byte address 0x4 - core index']
  #allocation1 [shape = 'u32[144,128]{1,0:T(1,128)}', space=vmem, size = 0x12000, scoped, tag = 'internal scratch']
  %s0 = inlined_call_operand.vmem [shape: f32[32,8], index: 0, kind: input, shape index: {}]
  %s1 = inlined_call_operand.vmem [shape: bf16[8,128], index: 1, kind: input, shape index: {}]
  %s2 = inlined_call_operand.vmem [shape: f32[24,128], index: 2, kind: input, shape index: {}]
  %s3 = inlined_call_operand.vmem [shape: bf16[3,128,384], index: 3, kind: input, shape index: {}]
  %s4 = inlined_call_operand.vmem [shape: bf16[3,128,128], index: 4, kind: input, shape index: {}]
  %s5 = inlined_call_operand.vmem [shape: bf16[3,128,256], index: 5, kind: input, shape index: {}]
  %s6 = inlined_call_operand.vmem [shape: bf16[3,256,128], index: 6, kind: input, shape index: {}]
  %s7 = inlined_call_operand.vmem [shape: f32[3,8,384], index: 7, kind: input, shape index: {}]
  %s8 = inlined_call_operand.hbm [shape: f32[2,128], index: 8, kind: output, shape index: {}]
  %s9 = sld [smem:[#allocation0]]
  $region42: #{iqst_backbone_forward.1} parent=0
    _
  %s11 = ssub.s32 1, %s9
  %s12 = scalar_select 0, %s11, %s9
  $region1: #{iqst_backbone_forward.1} parent=0
    #allocation2 [shape = 'u8[1024]{0}', space=vmem, size = 0x400, scoped, tag = 'output window, operand 0, single buffered']
    #allocation3 [shape = 's32[1]{0}', space=sflag, size = 0x4, scoped, tag = 'scoped memory for iqst_backbone_forward.1']
    %13 = vsyncpa [#allocation3], 0
    // Predicated region
    $region2: #{iqst_backbone_forward.1} parent=1 // pred_check
      _
    $region3: #{iqst_backbone_forward.1} parent=1 // pred_check_branch
      %15 = sbr.rel (0) target = $region5
    $region4: #{iqst_backbone_forward.1} parent=1 // pred_region
      _
    $region5: #{iqst_backbone_forward.1} parent=1 // pred_fallthru
      _
    // Predicated region
    $region6: #{iqst_backbone_forward.1} parent=1 // pred_check
      _
    $region7: #{iqst_backbone_forward.1} parent=1 // pred_check_branch
      %17 = sbr.rel (0) target = $region9
    $region8: #{iqst_backbone_forward.1} parent=1 // pred_region
      _
    $region9: #{iqst_backbone_forward.1} parent=1 // pred_fallthru
      _
    // Predicated region
    $region10: #{iqst_backbone_forward.1} parent=1 // pred_check
      _
    $region11: #{iqst_backbone_forward.1} parent=1 // pred_check_branch
      %19 = sbr.rel (0) target = $region13
    $region12: #{iqst_backbone_forward.1} parent=1 // pred_region
      _
    $region13: #{iqst_backbone_forward.1} parent=1 // pred_fallthru
      _
    // Predicated region
    $region14: #{iqst_backbone_forward.1} parent=1 // pred_check
      _
    $region15: #{iqst_backbone_forward.1} parent=1 // pred_check_branch
      %21 = sbr.rel (0) target = $region17
    $region16: #{iqst_backbone_forward.1} parent=1 // pred_region
      _
    $region17: #{iqst_backbone_forward.1} parent=1 // pred_fallthru
      _
    // Predicated region
    $region18: #{iqst_backbone_forward.1} parent=1 // pred_check
      _
    $region19: #{iqst_backbone_forward.1} parent=1 // pred_check_branch
      %23 = sbr.rel (0) target = $region21
    $region20: #{iqst_backbone_forward.1} parent=1 // pred_region
      _
    $region21: #{iqst_backbone_forward.1} parent=1 // pred_fallthru
      _
    // Predicated region
    $region22: #{iqst_backbone_forward.1} parent=1 // pred_check
      _
    $region23: #{iqst_backbone_forward.1} parent=1 // pred_check_branch
      %25 = sbr.rel (0) target = $region25
    $region24: #{iqst_backbone_forward.1} parent=1 // pred_region
      _
    $region25: #{iqst_backbone_forward.1} parent=1 // pred_fallthru
      _
    // Predicated region
    $region26: #{iqst_backbone_forward.1} parent=1 // pred_check
      _
    $region27: #{iqst_backbone_forward.1} parent=1 // pred_check_branch
      %27 = sbr.rel (0) target = $region29
    $region28: #{iqst_backbone_forward.1} parent=1 // pred_region
      _
    $region29: #{iqst_backbone_forward.1} parent=1 // pred_fallthru
      _
    // Predicated region
    $region30: #{iqst_backbone_forward.1} parent=1 // pred_check
      _
    $region31: #{iqst_backbone_forward.1} parent=1 // pred_check_branch
      %29 = sbr.rel (0) target = $region33
    $region32: #{iqst_backbone_forward.1} parent=1 // pred_region
      _
    $region33: #{iqst_backbone_forward.1} parent=1 // pred_fallthru
      _
    %v30 = vld [vmem:[%s2] sm:$0xff]
    %v31 = vld [vmem:[%s2 + $0x8] sm:$0xff]
    %v32 = vld [vmem:[%s2 + $0x10] sm:$0x1]
    %v33 = vld [vmem:[%s2 + $0x11] sm:$0x1]
    %v34 = vld [vmem:[%s2 + $0x12] sm:$0x1]
    %v35 = vld [vmem:[%s2 + $0x13] sm:$0x1]
    %v36 = vlaneseq
    %v37 = vand.u32 %v36, 127
    %vm38 = vcmp.lt.s32.totalorder %v37, 48
    %v39 = vld [vmem:[%s0] sm:$0xff]
    %v40 = vld [vmem:[%s0 + $0x8] sm:$0xff]
    %v41 = vld [vmem:[%s0 + $0x10] sm:$0xff]
    %v42 = vld [vmem:[%s0 + $0x18] sm:$0xff]
    %v43 = vld [vmem:[%s1] sm:$0xf]
    %v44 = vunpack.c.l.bf16 %v43
    %v45 = vlaneseq
    %v46 = vshrl.u32 %v45, 7
    %v47 = vsub.s32 0, %v46
    %v48 = vrot.slane %v33, %v47
    %vm49 = vcmask 64512
    %v51 = vsel %vm49, %v39, 0
    %v54 = vsel %vm49, %v40, 0
    %v57 = vsel %vm49, %v41, 0
    %v60 = vsel %vm49, %v42, 0
    %62 = vmatprep.subr.mxu0 0.0
    %63 = vmatpush1.msra.mxu0 0.0
    %64 = vmatprep.subr.mxu0 0.0
    %65 = vmatpush1.msra.mxu0 0.0
    %66 = vmatprep.subr.mxu0 0.0
    %67 = vmatpush1.msra.mxu0 0.0
    %68 = vmatprep.subr.mxu0 0.0
    %69 = vmatpush1.msra.mxu0 0.0
    %70 = vmatprep.subr.mxu0 0.0
    %71 = vmatpush1.msra.mxu0 0.0
    %72 = vmatprep.subr.mxu0 0.0
    %73 = vmatpush1.msra.mxu0 0.0
    %74 = vmatprep.subr.mxu0 0.0
    %75 = vmatpush1.msra.mxu0 0.0
    %76 = vmatprep.subr.mxu0 0.0
    %77 = vmatpush1.msra.mxu0 0.0
    %78 = vmatprep.subr.mxu0 0.0
    %79 = vmatpush1.msra.mxu0 0.0
    %80 = vmatprep.subr.mxu0 0.0
    %81 = vmatpush1.msra.mxu0 0.0
    %82 = vmatprep.subr.mxu0 0.0
    %83 = vmatpush1.msra.mxu0 0.0
    %84 = vmatprep.subr.mxu0 0.0
    %85 = vmatpush1.msra.mxu0 0.0
    %86 = vmatprep.subr.mxu0 0.0
    %87 = vmatpush1.msra.mxu0 0.0
    %88 = vmatprep.subr.mxu0 0.0
    %89 = vmatpush1.msra.mxu0 0.0
    %90 = vmatprep.subr.mxu0 0.0
    %91 = vmatpush1.msra.mxu0 0.0
    %92 = vmatprep.subr.mxu0 0.0
    %93 = vmatpush1.msra.mxu0 %v44
    %94 = vmatprep.subr.mxu0 0.0
    %95 = vmatpush2.msra.mxu0 0.0
    %96 = vmatprep.subr.mxu0 0.0
    %97 = vmatpush2.msra.mxu0 0.0
    %98 = vmatprep.subr.mxu0 0.0
    %99 = vmatpush2.msra.mxu0 0.0
    %100 = vmatprep.subr.mxu0 0.0
    %101 = vmatpush2.msra.mxu0 0.0
    %102 = vmatprep.subr.mxu0 0.0
    %103 = vmatpush2.msra.mxu0 0.0
    %104 = vmatprep.subr.mxu0 0.0
    %105 = vmatpush2.msra.mxu0 0.0
    %106 = vmatprep.subr.mxu0 0.0
    %107 = vmatpush2.msra.mxu0 0.0
    %108 = vmatprep.subr.mxu0 0.0
    %109 = vmatpush2.msra.mxu0 0.0
    %110 = vmatprep.subr.mxu0 0.0
    %111 = vmatpush2.msra.mxu0 0.0
    %112 = vmatprep.subr.mxu0 0.0
    %113 = vmatpush2.msra.mxu0 0.0
    %114 = vmatprep.subr.mxu0 0.0
    %115 = vmatpush2.msra.mxu0 0.0
    %116 = vmatprep.subr.mxu0 0.0
    %117 = vmatpush2.msra.mxu0 0.0
    %118 = vmatprep.subr.mxu0 0.0
    %119 = vmatpush2.msra.mxu0 0.0
    %120 = vmatprep.subr.mxu0 0.0
    %121 = vmatpush2.msra.mxu0 0.0
    %122 = vmatprep.subr.mxu0 0.0
    %123 = vmatpush2.msra.mxu0 0.0
    %124 = vmatprep.subr.mxu0 0.0
    %125 = vmatpush2.msra.mxu0 0.0
    %126 = vmatprep.mubr.f32.mxu0 0.0
    %127 = vmatmul.mubr.f32.gmra.mxu0 %v51
    %v128 = vpop.f32.mrf.mxu0
    %v129 = vadd.f32 %v48, %v128
    %v130 = vpop.f32.mrf.mxu0
    %131 = vmatprep.mubr.f32.mxu0 0.0
    %132 = vmatmul.mubr.f32.gmra.mxu0 %v54
    %v133 = vpop.f32.mrf.mxu0
    %v134 = vadd.f32 %v48, %v133
    %v135 = vpop.f32.mrf.mxu0
    %136 = vmatprep.mubr.f32.mxu0 0.0
    %137 = vmatmul.mubr.f32.gmra.mxu0 %v57
    %v138 = vpop.f32.mrf.mxu0
    %v139 = vadd.f32 %v48, %v138
    %v140 = vpop.f32.mrf.mxu0
    %141 = vmatprep.mubr.f32.mxu0 0.0
    %142 = vmatmul.mubr.f32.gmra.mxu0 %v60
    %v143 = vpop.f32.mrf.mxu0
    %v144 = vadd.f32 %v48, %v143
    %v145 = vpop.f32.mrf.mxu0
    %146 = vdwg.mxu0
    %v147 = vlaneseq
    %v148 = vshrl.u32 %v147, 7
    %v149 = vadd.s32 %v148, 8
    %vm150 = vcmp.eq.s32.totalorder %v148, 0
    %vm151 = vcmp.eq.s32.totalorder %v149, 0
    %v152 = vadd.f32 %v129, %v30
    %v153 = vadd.f32 %v134, %v31
    %v154 = vadd.f32 %v139, %v30
    %v155 = vadd.f32 %v144, %v31
    %v156 = vlaneseq
    %v157 = vshrl.u32 %v156, 7
    %v158 = vsub.s32 0, %v157
    %v159 = vrot.slane %v32, %v158
    %v160 = vsel %vm150, %v159, %v152
    %v161 = vsel %vm151, %v159, %v153
    %v162 = vsel %vm150, %v159, %v154
    %v163 = vsel %vm151, %v159, %v155
    %vm164 = vcmp.lt.s32.totalorder %v37, 9
    %v165 = vld [vmem:[%s7] sm:$0xff]
    %v166 = vld [vmem:[%s7 + $0x8] sm:$0xff]
    %v167 = vld [vmem:[%s7 + $0x10] sm:$0xff]
    %v168 = vld [vmem:[%s3] sm:$0xff]
    %v169 = vld [vmem:[%s3 + $0x8] sm:$0xf]
    %v170 = vld [vmem:[%s3 + $0xc] sm:$0xff]
    %v171 = vld [vmem:[%s3 + $0x14] sm:$0xf]
    %v172 = vld [vmem:[%s3 + $0x18] sm:$0xff]
    %v173 = vld [vmem:[%s3 + $0x20] sm:$0xf]
    %v174 = vld [vmem:[%s3 + $0x24] sm:$0xff]
    %v175 = vld [vmem:[%s3 + $0x2c] sm:$0xf]
    %v176 = vld [vmem:[%s3 + $0x30] sm:$0xff]
    %v177 = vld [vmem:[%s3 + $0x38] sm:$0xf]
    %v178 = vld [vmem:[%s3 + $0x3c] sm:$0xff]
    %v179 = vld [vmem:[%s3 + $0x44] sm:$0xf]
    %v180 = vld [vmem:[%s3 + $0x48] sm:$0xff]
    %v181 = vld [vmem:[%s3 + $0x50] sm:$0xf]
    %v182 = vld [vmem:[%s3 + $0x54] sm:$0xff]
    %v183 = vld [vmem:[%s3 + $0x5c] sm:$0xf]
    %v184 = vld [vmem:[%s3 + $0x60] sm:$0xff]
    %v185 = vld [vmem:[%s3 + $0x68] sm:$0xf]
    %v186 = vld [vmem:[%s3 + $0x6c] sm:$0xff]
    %v187 = vld [vmem:[%s3 + $0x74] sm:$0xf]
    %v188 = vld [vmem:[%s3 + $0x78] sm:$0xff]
    %v189 = vld [vmem:[%s3 + $0x80] sm:$0xf]
    %v190 = vld [vmem:[%s3 + $0x84] sm:$0xff]
    %v191 = vld [vmem:[%s3 + $0x8c] sm:$0xf]
    %v192 = vld [vmem:[%s3 + $0x90] sm:$0xff]
    %v193 = vld [vmem:[%s3 + $0x98] sm:$0xf]
    %v194 = vld [vmem:[%s3 + $0x9c] sm:$0xff]
    %v195 = vld [vmem:[%s3 + $0xa4] sm:$0xf]
    %v196 = vld [vmem:[%s3 + $0xa8] sm:$0xff]
    %v197 = vld [vmem:[%s3 + $0xb0] sm:$0xf]
    %v198 = vld [vmem:[%s3 + $0xb4] sm:$0xff]
    %v199 = vld [vmem:[%s3 + $0xbc] sm:$0xf]
    %v200 = vunpack.c.l.bf16 %v168
    %v201 = vunpack.c.h.bf16 %v168
    %v202 = vunpack.c.l.bf16 %v169
    %v203 = vunpack.c.l.bf16 %v170
    %v204 = vunpack.c.h.bf16 %v170
    %v205 = vunpack.c.l.bf16 %v171
    %v206 = vunpack.c.l.bf16 %v172
    %v207 = vunpack.c.h.bf16 %v172
    %v208 = vunpack.c.l.bf16 %v173
    %v209 = vunpack.c.l.bf16 %v174
    %v210 = vunpack.c.h.bf16 %v174
    %v211 = vunpack.c.l.bf16 %v175
    %v212 = vunpack.c.l.bf16 %v176
    %v213 = vunpack.c.h.bf16 %v176
    %v214 = vunpack.c.l.bf16 %v177
    %v215 = vunpack.c.l.bf16 %v178
    %v216 = vunpack.c.h.bf16 %v178
    %v217 = vunpack.c.l.bf16 %v179
    %v218 = vunpack.c.l.bf16 %v180
    %v219 = vunpack.c.h.bf16 %v180
    %v220 = vunpack.c.l.bf16 %v181
    %v221 = vunpack.c.l.bf16 %v182
    %v222 = vunpack.c.h.bf16 %v182
    %v223 = vunpack.c.l.bf16 %v183
    %v224 = vunpack.c.l.bf16 %v184
    %v225 = vunpack.c.h.bf16 %v184
    %v226 = vunpack.c.l.bf16 %v185
    %v227 = vunpack.c.l.bf16 %v186
    %v228 = vunpack.c.h.bf16 %v186
    %v229 = vunpack.c.l.bf16 %v187
    %v230 = vunpack.c.l.bf16 %v188
    %v231 = vunpack.c.h.bf16 %v188
    %v232 = vunpack.c.l.bf16 %v189
    %v233 = vunpack.c.l.bf16 %v190
    %v234 = vunpack.c.h.bf16 %v190
    %v235 = vunpack.c.l.bf16 %v191
    %v236 = vunpack.c.l.bf16 %v192
    %v237 = vunpack.c.h.bf16 %v192
    %v238 = vunpack.c.l.bf16 %v193
    %v239 = vunpack.c.l.bf16 %v194
    %v240 = vunpack.c.h.bf16 %v194
    %v241 = vunpack.c.l.bf16 %v195
    %v242 = vunpack.c.l.bf16 %v196
    %v243 = vunpack.c.h.bf16 %v196
    %v244 = vunpack.c.l.bf16 %v197
    %v245 = vunpack.c.l.bf16 %v198
    %v246 = vunpack.c.h.bf16 %v198
    %v247 = vunpack.c.l.bf16 %v199
    %v248 = vlaneseq
    %v249 = vshrl.u32 %v248, 7
    %v250 = vsub.s32 0, %v249
    %v251 = vrot.slane %v165, %v250
    %v252 = vlaneseq
    %v253 = vshrl.u32 %v252, 7
    %v254 = vsub.s32 0, %v253
    %v255 = vrot.slane %v166, %v254
    %v256 = vlaneseq
    %v257 = vshrl.u32 %v256, 7
    %v258 = vsub.s32 0, %v257
    %v259 = vrot.slane %v167, %v258
    %260 = vmatprep.subr.mxu0 %v246
    %261 = vmatpush1.msra.mxu0 %v245
    %262 = vmatprep.subr.mxu0 %v243
    %263 = vmatpush1.msra.mxu0 %v242
    %264 = vmatprep.subr.mxu0 %v240
    %265 = vmatpush1.msra.mxu0 %v239
    %266 = vmatprep.subr.mxu0 %v237
    %267 = vmatpush1.msra.mxu0 %v236
    %268 = vmatprep.subr.mxu0 %v234
    %269 = vmatpush1.msra.mxu0 %v233
    %270 = vmatprep.subr.mxu0 %v231
    %271 = vmatpush1.msra.mxu0 %v230
    %272 = vmatprep.subr.mxu0 %v228
    %273 = vmatpush1.msra.mxu0 %v227
    %274 = vmatprep.subr.mxu0 %v225
    %275 = vmatpush1.msra.mxu0 %v224
    %276 = vmatprep.subr.mxu0 %v222
    %277 = vmatpush1.msra.mxu0 %v221
    %278 = vmatprep.subr.mxu0 %v219
    %279 = vmatpush1.msra.mxu0 %v218
    %280 = vmatprep.subr.mxu0 %v216
    %281 = vmatpush1.msra.mxu0 %v215
    %282 = vmatprep.subr.mxu0 %v213
    %283 = vmatpush1.msra.mxu0 %v212
    %284 = vmatprep.subr.mxu0 %v210
    %285 = vmatpush1.msra.mxu0 %v209
    %286 = vmatprep.subr.mxu0 %v207
    %287 = vmatpush1.msra.mxu0 %v206
    %288 = vmatprep.subr.mxu0 %v204
    %289 = vmatpush1.msra.mxu0 %v203
    %290 = vmatprep.subr.mxu0 %v201
    %291 = vmatpush1.msra.mxu0 %v200
    %292 = vmatprep.subr.mxu0 0.0
    %293 = vmatpush2.msra.mxu0 0.0
    %294 = vmatprep.subr.mxu0 0.0
    %295 = vmatpush2.msra.mxu0 0.0
    %296 = vmatprep.subr.mxu0 0.0
    %297 = vmatpush2.msra.mxu0 0.0
    %298 = vmatprep.subr.mxu0 0.0
    %299 = vmatpush2.msra.mxu0 0.0
    %300 = vmatprep.subr.mxu0 0.0
    %301 = vmatpush2.msra.mxu0 0.0
    %302 = vmatprep.subr.mxu0 0.0
    %303 = vmatpush2.msra.mxu0 0.0
    %304 = vmatprep.subr.mxu0 0.0
    %305 = vmatpush2.msra.mxu0 0.0
    %306 = vmatprep.subr.mxu0 0.0
    %307 = vmatpush2.msra.mxu0 0.0
    %308 = vmatprep.subr.mxu0 0.0
    %309 = vmatpush2.msra.mxu0 0.0
    %310 = vmatprep.subr.mxu0 0.0
    %311 = vmatpush2.msra.mxu0 0.0
    %312 = vmatprep.subr.mxu0 0.0
    %313 = vmatpush2.msra.mxu0 0.0
    %314 = vmatprep.subr.mxu0 0.0
    %315 = vmatpush2.msra.mxu0 0.0
    %316 = vmatprep.subr.mxu0 0.0
    %317 = vmatpush2.msra.mxu0 0.0
    %318 = vmatprep.subr.mxu0 0.0
    %319 = vmatpush2.msra.mxu0 0.0
    %320 = vmatprep.subr.mxu0 0.0
    %321 = vmatpush2.msra.mxu0 0.0
    %322 = vmatprep.subr.mxu0 0.0
    %323 = vmatpush2.msra.mxu0 0.0
    %324 = vmatprep.mubr.f32.mxu0 0.0
    %325 = vmatmul.mubr.f32.gmra.mxu0 %v160
    %v326 = vpop.f32.mrf.mxu0
    %v327 = vadd.f32 %v251, %v326
    %v328 = vpop.f32.mrf.mxu0
    %v329 = vadd.f32 %v255, %v328
    %330 = vmatprep.mubr.f32.mxu0 0.0
    %331 = vmatmul.mubr.f32.gmra.mxu0 %v161
    %v332 = vpop.f32.mrf.mxu0
    %v333 = vadd.f32 %v251, %v332
    %v334 = vpop.f32.mrf.mxu0
    %v335 = vadd.f32 %v255, %v334
    %336 = vmatprep.mubr.f32.mxu0 0.0
    %337 = vmatmul.mubr.f32.gmra.mxu0 %v162
    %v338 = vpop.f32.mrf.mxu0
    %v339 = vadd.f32 %v251, %v338
    %v340 = vpop.f32.mrf.mxu0
    %v341 = vadd.f32 %v255, %v340
    %342 = vmatprep.mubr.f32.mxu0 0.0
    %343 = vmatmul.mubr.f32.gmra.mxu0 %v163
    %v344 = vpop.f32.mrf.mxu0
    %v345 = vadd.f32 %v251, %v344
    %v346 = vpop.f32.mrf.mxu0
    %v347 = vadd.f32 %v255, %v346
    %348 = vdwg.mxu0
    %349 = vmatprep.subr.mxu0 0.0
    %350 = vmatpush1.msra.mxu0 %v247
    %351 = vmatprep.subr.mxu0 0.0
    %352 = vmatpush1.msra.mxu0 %v244
    %353 = vmatprep.subr.mxu0 0.0
    %354 = vmatpush1.msra.mxu0 %v241
    %355 = vmatprep.subr.mxu0 0.0
    %356 = vmatpush1.msra.mxu0 %v238
    %357 = vmatprep.subr.mxu0 0.0
    %358 = vmatpush1.msra.mxu0 %v235
    %359 = vmatprep.subr.mxu0 0.0
    %360 = vmatpush1.msra.mxu0 %v232
    %361 = vmatprep.subr.mxu0 0.0
    %362 = vmatpush1.msra.mxu0 %v229
    %363 = vmatprep.subr.mxu0 0.0
    %364 = vmatpush1.msra.mxu0 %v226
    %365 = vmatprep.subr.mxu0 0.0
    %366 = vmatpush1.msra.mxu0 %v223
    %367 = vmatprep.subr.mxu0 0.0
    %368 = vmatpush1.msra.mxu0 %v220
    %369 = vmatprep.subr.mxu0 0.0
    %370 = vmatpush1.msra.mxu0 %v217
    %371 = vmatprep.subr.mxu0 0.0
    %372 = vmatpush1.msra.mxu0 %v214
    %373 = vmatprep.subr.mxu0 0.0
    %374 = vmatpush1.msra.mxu0 %v211
    %375 = vmatprep.subr.mxu0 0.0
    %376 = vmatpush1.msra.mxu0 %v208
    %377 = vmatprep.subr.mxu0 0.0
    %378 = vmatpush1.msra.mxu0 %v205
    %379 = vmatprep.subr.mxu0 0.0
    %380 = vmatpush1.msra.mxu0 %v202
    %381 = vmatprep.subr.mxu0 0.0
    %382 = vmatpush2.msra.mxu0 0.0
    %383 = vmatprep.subr.mxu0 0.0
    %384 = vmatpush2.msra.mxu0 0.0
    %385 = vmatprep.subr.mxu0 0.0
    %386 = vmatpush2.msra.mxu0 0.0
    %387 = vmatprep.subr.mxu0 0.0
    %388 = vmatpush2.msra.mxu0 0.0
    %389 = vmatprep.subr.mxu0 0.0
    %390 = vmatpush2.msra.mxu0 0.0
    %391 = vmatprep.subr.mxu0 0.0
    %392 = vmatpush2.msra.mxu0 0.0
    %393 = vmatprep.subr.mxu0 0.0
    %394 = vmatpush2.msra.mxu0 0.0
    %395 = vmatprep.subr.mxu0 0.0
    %396 = vmatpush2.msra.mxu0 0.0
    %397 = vmatprep.subr.mxu0 0.0
    %398 = vmatpush2.msra.mxu0 0.0
    %399 = vmatprep.subr.mxu0 0.0
    %400 = vmatpush2.msra.mxu0 0.0
    %401 = vmatprep.subr.mxu0 0.0
    %402 = vmatpush2.msra.mxu0 0.0
    %403 = vmatprep.subr.mxu0 0.0
    %404 = vmatpush2.msra.mxu0 0.0
    %405 = vmatprep.subr.mxu0 0.0
    %406 = vmatpush2.msra.mxu0 0.0
    %407 = vmatprep.subr.mxu0 0.0
    %408 = vmatpush2.msra.mxu0 0.0
    %409 = vmatprep.subr.mxu0 0.0
    %410 = vmatpush2.msra.mxu0 0.0
    %411 = vmatprep.subr.mxu0 0.0
    %412 = vmatpush2.msra.mxu0 0.0
    %413 = vmatprep.mubr.f32.mxu0 0.0
    %414 = vmatmul.mubr.f32.gmra.mxu0 %v160
    %v415 = vpop.f32.mrf.mxu0
    %v416 = vadd.f32 %v259, %v415
    %v417 = vpop.f32.mrf.mxu0
    %418 = vmatprep.mubr.f32.mxu0 0.0
    %419 = vmatmul.mubr.f32.gmra.mxu0 %v161
    %v420 = vpop.f32.mrf.mxu0
    %v421 = vadd.f32 %v259, %v420
    %v422 = vpop.f32.mrf.mxu0
    %423 = vmatprep.mubr.f32.mxu0 0.0
    %424 = vmatmul.mubr.f32.gmra.mxu0 %v162
    %v425 = vpop.f32.mrf.mxu0
    %v426 = vadd.f32 %v259, %v425
    %v427 = vpop.f32.mrf.mxu0
    %428 = vmatprep.mubr.f32.mxu0 0.0
    %429 = vmatmul.mubr.f32.gmra.mxu0 %v163
    %v430 = vpop.f32.mrf.mxu0
    %v431 = vadd.f32 %v259, %v430
    %v432 = vpop.f32.mrf.mxu0
    %433 = vdwg.mxu0
    %v434 = vmul.f32 %v327, 0.25
    %v435 = vmul.f32 %v333, 0.25
    %v436 = vmul.f32 %v339, 0.25
    %v437 = vmul.f32 %v345, 0.25
    %v438 = vld [vmem:[%s4] sm:$0xf]
    %v439 = vld [vmem:[%s4 + $0x4] sm:$0xf]
    %v440 = vld [vmem:[%s4 + $0x8] sm:$0xf]
    %v441 = vld [vmem:[%s4 + $0xc] sm:$0xf]
    %v442 = vld [vmem:[%s4 + $0x10] sm:$0xf]
    %v443 = vld [vmem:[%s4 + $0x14] sm:$0xf]
    %v444 = vunpack.c.l.bf16 %v438
    %v445 = vunpack.c.l.bf16 %v439
    %v446 = vunpack.c.l.bf16 %v440
    %v447 = vunpack.c.l.bf16 %v441
    %v448 = vunpack.c.l.bf16 %v442
    %v449 = vunpack.c.l.bf16 %v443
    %vm450 = vcmask 130048
    %v452 = vsel %vm450, %v434, 0
    %v455 = vsel %vm450, %v435, 0
    %v458 = vsel %vm450, %v329, 0
    %v461 = vsel %vm450, %v335, 0
    %463 = vmatprep.subr.mxu0 0.0
    %464 = vmatpush1.xpose.msra.mxu0 0.0
    %465 = vmatprep.subr.mxu0 0.0
    %466 = vmatpush1.xpose.msra.mxu0 0.0
    %467 = vmatprep.subr.mxu0 0.0
    %468 = vmatpush1.xpose.msra.mxu0 0.0
    %469 = vmatprep.subr.mxu0 0.0
    %470 = vmatpush1.xpose.msra.mxu0 0.0
    %471 = vmatprep.subr.mxu0 0.0
    %472 = vmatpush1.xpose.msra.mxu0 0.0
    %473 = vmatprep.subr.mxu0 0.0
    %474 = vmatpush1.xpose.msra.mxu0 0.0
    %475 = vmatprep.subr.mxu0 0.0
    %476 = vmatpush1.xpose.msra.mxu0 0.0
    %477 = vmatprep.subr.mxu0 0.0
    %478 = vmatpush1.xpose.msra.mxu0 0.0
    %479 = vmatprep.subr.mxu0 0.0
    %480 = vmatpush1.xpose.msra.mxu0 0.0
    %481 = vmatprep.subr.mxu0 0.0
    %482 = vmatpush1.xpose.msra.mxu0 0.0
    %483 = vmatprep.subr.mxu0 0.0
    %484 = vmatpush1.xpose.msra.mxu0 0.0
    %485 = vmatprep.subr.mxu0 0.0
    %486 = vmatpush1.xpose.msra.mxu0 0.0
    %487 = vmatprep.subr.mxu0 0.0
    %488 = vmatpush1.xpose.msra.mxu0 0.0
    %489 = vmatprep.subr.mxu0 0.0
    %490 = vmatpush1.xpose.msra.mxu0 0.0
    %491 = vmatprep.subr.mxu0 0.0
    %492 = vmatpush1.xpose.msra.mxu0 %v461
    %493 = vmatprep.subr.mxu0 0.0
    %494 = vmatpush1.xpose.msra.mxu0 %v458
    %495 = vmatprep.subr.mxu0 0.0
    %496 = vmatpush2.xpose.msra.mxu0 0.0
    %497 = vmatprep.subr.mxu0 0.0
    %498 = vmatpush2.xpose.msra.mxu0 0.0
    %499 = vmatprep.subr.mxu0 0.0
    %500 = vmatpush2.xpose.msra.mxu0 0.0
    %501 = vmatprep.subr.mxu0 0.0
    %502 = vmatpush2.xpose.msra.mxu0 0.0
    %503 = vmatprep.subr.mxu0 0.0
    %504 = vmatpush2.xpose.msra.mxu0 0.0
    %505 = vmatprep.subr.mxu0 0.0
    %506 = vmatpush2.xpose.msra.mxu0 0.0
    %507 = vmatprep.subr.mxu0 0.0
    %508 = vmatpush2.xpose.msra.mxu0 0.0
    %509 = vmatprep.subr.mxu0 0.0
    %510 = vmatpush2.xpose.msra.mxu0 0.0
    %511 = vmatprep.subr.mxu0 0.0
    %512 = vmatpush2.xpose.msra.mxu0 0.0
    %513 = vmatprep.subr.mxu0 0.0
    %514 = vmatpush2.xpose.msra.mxu0 0.0
    %515 = vmatprep.subr.mxu0 0.0
    %516 = vmatpush2.xpose.msra.mxu0 0.0
    %517 = vmatprep.subr.mxu0 0.0
    %518 = vmatpush2.xpose.msra.mxu0 0.0
    %519 = vmatprep.subr.mxu0 0.0
    %520 = vmatpush2.xpose.msra.mxu0 0.0
    %521 = vmatprep.subr.mxu0 0.0
    %522 = vmatpush2.xpose.msra.mxu0 0.0
    %523 = vmatprep.subr.mxu0 0.0
    %524 = vmatpush2.xpose.msra.mxu0 0.0
    %525 = vmatprep.subr.mxu0 0.0
    %526 = vmatpush2.xpose.msra.mxu0 0.0
    %527 = vmatprep.mubr.f32.mxu0 0.0
    %528 = vmatmul.mubr.f32.gmra.mxu0 %v452
    %v529 = vpop.f32.mrf.mxu0
    %v530 = vadd.f32 0.0, %v529
    %v531 = vpop.f32.mrf.mxu0
    %532 = vmatprep.mubr.f32.mxu0 0.0
    %533 = vmatmul.mubr.f32.gmra.mxu0 %v455
    %v534 = vpop.f32.mrf.mxu0
    %v535 = vadd.f32 0.0, %v534
    %v536 = vpop.f32.mrf.mxu0
    %537 = vdwg.mxu0
    %v539 = vsel %vm450, %v436, 0
    %v542 = vsel %vm450, %v437, 0
    %v545 = vsel %vm450, %v341, 0
    %v548 = vsel %vm450, %v347, 0
    %550 = vmatprep.subr.mxu0 0.0
    %551 = vmatpush1.xpose.msra.mxu0 0.0
    %552 = vmatprep.subr.mxu0 0.0
    %553 = vmatpush1.xpose.msra.mxu0 0.0
    %554 = vmatprep.subr.mxu0 0.0
    %555 = vmatpush1.xpose.msra.mxu0 0.0
    %556 = vmatprep.subr.mxu0 0.0
    %557 = vmatpush1.xpose.msra.mxu0 0.0
    %558 = vmatprep.subr.mxu0 0.0
    %559 = vmatpush1.xpose.msra.mxu0 0.0
    %560 = vmatprep.subr.mxu0 0.0
    %561 = vmatpush1.xpose.msra.mxu0 0.0
    %562 = vmatprep.subr.mxu0 0.0
    %563 = vmatpush1.xpose.msra.mxu0 0.0
    %564 = vmatprep.subr.mxu0 0.0
    %565 = vmatpush1.xpose.msra.mxu0 0.0
    %566 = vmatprep.subr.mxu0 0.0
    %567 = vmatpush1.xpose.msra.mxu0 0.0
    %568 = vmatprep.subr.mxu0 0.0
    %569 = vmatpush1.xpose.msra.mxu0 0.0
    %570 = vmatprep.subr.mxu0 0.0
    %571 = vmatpush1.xpose.msra.mxu0 0.0
    %572 = vmatprep.subr.mxu0 0.0
    %573 = vmatpush1.xpose.msra.mxu0 0.0
    %574 = vmatprep.subr.mxu0 0.0
    %575 = vmatpush1.xpose.msra.mxu0 0.0
    %576 = vmatprep.subr.mxu0 0.0
    %577 = vmatpush1.xpose.msra.mxu0 0.0
    %578 = vmatprep.subr.mxu0 0.0
    %579 = vmatpush1.xpose.msra.mxu0 %v548
    %580 = vmatprep.subr.mxu0 0.0
    %581 = vmatpush1.xpose.msra.mxu0 %v545
    %582 = vmatprep.subr.mxu0 0.0
    %583 = vmatpush2.xpose.msra.mxu0 0.0
    %584 = vmatprep.subr.mxu0 0.0
    %585 = vmatpush2.xpose.msra.mxu0 0.0
    %586 = vmatprep.subr.mxu0 0.0
    %587 = vmatpush2.xpose.msra.mxu0 0.0
    %588 = vmatprep.subr.mxu0 0.0
    %589 = vmatpush2.xpose.msra.mxu0 0.0
    %590 = vmatprep.subr.mxu0 0.0
    %591 = vmatpush2.xpose.msra.mxu0 0.0
    %592 = vmatprep.subr.mxu0 0.0
    %593 = vmatpush2.xpose.msra.mxu0 0.0
    %594 = vmatprep.subr.mxu0 0.0
    %595 = vmatpush2.xpose.msra.mxu0 0.0
    %596 = vmatprep.subr.mxu0 0.0
    %597 = vmatpush2.xpose.msra.mxu0 0.0
    %598 = vmatprep.subr.mxu0 0.0
    %599 = vmatpush2.xpose.msra.mxu0 0.0
    %600 = vmatprep.subr.mxu0 0.0
    %601 = vmatpush2.xpose.msra.mxu0 0.0
    %602 = vmatprep.subr.mxu0 0.0
    %603 = vmatpush2.xpose.msra.mxu0 0.0
    %604 = vmatprep.subr.mxu0 0.0
    %605 = vmatpush2.xpose.msra.mxu0 0.0
    %606 = vmatprep.subr.mxu0 0.0
    %607 = vmatpush2.xpose.msra.mxu0 0.0
    %608 = vmatprep.subr.mxu0 0.0
    %609 = vmatpush2.xpose.msra.mxu0 0.0
    %610 = vmatprep.subr.mxu0 0.0
    %611 = vmatpush2.xpose.msra.mxu0 0.0
    %612 = vmatprep.subr.mxu0 0.0
    %613 = vmatpush2.xpose.msra.mxu0 0.0
    %614 = vmatprep.mubr.f32.mxu0 0.0
    %615 = vmatmul.mubr.f32.gmra.mxu0 %v539
    %v616 = vpop.f32.mrf.mxu0
    %v617 = vadd.f32 0.0, %v616
    %v618 = vpop.f32.mrf.mxu0
    %619 = vmatprep.mubr.f32.mxu0 0.0
    %620 = vmatmul.mubr.f32.gmra.mxu0 %v542
    %v621 = vpop.f32.mrf.mxu0
    %v622 = vadd.f32 0.0, %v621
    %v623 = vpop.f32.mrf.mxu0
    %624 = vdwg.mxu0
    %v625 = vsel %vm164, %v530, -1e+30
    %v626 = vsel %vm164, %v535, -1e+30
    %v627 = vsel %vm164, %v617, -1e+30
    %v628 = vsel %vm164, %v622, -1e+30
    %v629 = vsel %vm450, %v625, -inf
    %630 = vmax.xlane.f32.xlu0 %v629
    %v631 = vpop.xlane.xlu0 %630
    %v632 = vsel %vm450, %v626, -inf
    %633 = vmax.xlane.f32.xlu0 %v632
    %v634 = vpop.xlane.xlu0 %633
    %v635 = vsel %vm450, %v627, -inf
    %636 = vmax.xlane.f32.xlu0 %v635
    %v637 = vpop.xlane.xlu0 %636
    %v638 = vsel %vm450, %v628, -inf
    %639 = vmax.xlane.f32.xlu0 %v638
    %v640 = vpop.xlane.xlu0 %639
    %v641 = vsub.f32 %v625, %v631
    %v642 = vsub.f32 %v626, %v634
    %v643 = vsub.f32 %v627, %v637
    %v644 = vsub.f32 %v628, %v640
    %v645 = vmul.f32 %v641, 1.442695
    %v646 = vpow.pop %v645
    %v647 = vmul.f32 %v642, 1.442695
    %v648 = vpow.pop %v647
    %v649 = vmul.f32 %v643, 1.442695
    %v650 = vpow.pop %v649
    %v651 = vmul.f32 %v644, 1.442695
    %v652 = vpow.pop %v651
    %v653 = vsel %vm450, %v646, 0.0
    %654 = vadd.xlane.f32.xlu0 %v653
    %v655 = vpop.xlane.xlu0 %654
    %v656 = vsel %vm450, %v648, 0.0
    %657 = vadd.xlane.f32.xlu0 %v656
    %v658 = vpop.xlane.xlu0 %657
    %v659 = vsel %vm450, %v650, 0.0
    %660 = vadd.xlane.f32.xlu0 %v659
    %v661 = vpop.xlane.xlu0 %660
    %v662 = vsel %vm450, %v652, 0.0
    %663 = vadd.xlane.f32.xlu0 %v662
    %v664 = vpop.xlane.xlu0 %663
    %v665 = vrcp.pop %v655
    %v666 = vmul.f32 %v646, %v665
    %v667 = vrcp.pop %v658
    %v668 = vmul.f32 %v648, %v667
    %v669 = vrcp.pop %v661
    %v670 = vmul.f32 %v650, %v669
    %v671 = vrcp.pop %v664
    %v672 = vmul.f32 %v652, %v671
    %v674 = vsel %vm450, %v666, 0
    %v677 = vsel %vm450, %v668, 0
    %679 = vmatprep.subr.mxu0 0.0
    %680 = vmatpush1.msra.mxu0 0.0
    %681 = vmatprep.subr.mxu0 0.0
    %682 = vmatpush1.msra.mxu0 0.0
    %683 = vmatprep.subr.mxu0 0.0
    %684 = vmatpush1.msra.mxu0 0.0
    %685 = vmatprep.subr.mxu0 0.0
    %686 = vmatpush1.msra.mxu0 0.0
    %687 = vmatprep.subr.mxu0 0.0
    %688 = vmatpush1.msra.mxu0 0.0
    %689 = vmatprep.subr.mxu0 0.0
    %690 = vmatpush1.msra.mxu0 0.0
    %691 = vmatprep.subr.mxu0 0.0
    %692 = vmatpush1.msra.mxu0 0.0
    %693 = vmatprep.subr.mxu0 0.0
    %694 = vmatpush1.msra.mxu0 0.0
    %695 = vmatprep.subr.mxu0 0.0
    %696 = vmatpush1.msra.mxu0 0.0
    %697 = vmatprep.subr.mxu0 0.0
    %698 = vmatpush1.msra.mxu0 0.0
    %699 = vmatprep.subr.mxu0 0.0
    %700 = vmatpush1.msra.mxu0 0.0
    %701 = vmatprep.subr.mxu0 0.0
    %702 = vmatpush1.msra.mxu0 0.0
    %703 = vmatprep.subr.mxu0 0.0
    %704 = vmatpush1.msra.mxu0 0.0
    %705 = vmatprep.subr.mxu0 0.0
    %706 = vmatpush1.msra.mxu0 0.0
    %707 = vmatprep.subr.mxu0 0.0
    %708 = vmatpush1.msra.mxu0 %v421
    %709 = vmatprep.subr.mxu0 0.0
    %710 = vmatpush1.msra.mxu0 %v416
    %711 = vmatprep.subr.mxu0 0.0
    %712 = vmatpush2.msra.mxu0 0.0
    %713 = vmatprep.subr.mxu0 0.0
    %714 = vmatpush2.msra.mxu0 0.0
    %715 = vmatprep.subr.mxu0 0.0
    %716 = vmatpush2.msra.mxu0 0.0
    %717 = vmatprep.subr.mxu0 0.0
    %718 = vmatpush2.msra.mxu0 0.0
    %719 = vmatprep.subr.mxu0 0.0
    %720 = vmatpush2.msra.mxu0 0.0
    %721 = vmatprep.subr.mxu0 0.0
    %722 = vmatpush2.msra.mxu0 0.0
    %723 = vmatprep.subr.mxu0 0.0
    %724 = vmatpush2.msra.mxu0 0.0
    %725 = vmatprep.subr.mxu0 0.0
    %726 = vmatpush2.msra.mxu0 0.0
    %727 = vmatprep.subr.mxu0 0.0
    %728 = vmatpush2.msra.mxu0 0.0
    %729 = vmatprep.subr.mxu0 0.0
    %730 = vmatpush2.msra.mxu0 0.0
    %731 = vmatprep.subr.mxu0 0.0
    %732 = vmatpush2.msra.mxu0 0.0
    %733 = vmatprep.subr.mxu0 0.0
    %734 = vmatpush2.msra.mxu0 0.0
    %735 = vmatprep.subr.mxu0 0.0
    %736 = vmatpush2.msra.mxu0 0.0
    %737 = vmatprep.subr.mxu0 0.0
    %738 = vmatpush2.msra.mxu0 0.0
    %739 = vmatprep.subr.mxu0 0.0
    %740 = vmatpush2.msra.mxu0 0.0
    %741 = vmatprep.subr.mxu0 0.0
    %742 = vmatpush2.msra.mxu0 0.0
    %743 = vmatprep.mubr.f32.mxu0 0.0
    %744 = vmatmul.mubr.f32.gmra.mxu0 %v674
    %v745 = vpop.f32.mrf.mxu0
    %v746 = vadd.f32 0.0, %v745
    %v747 = vpop.f32.mrf.mxu0
    %748 = vmatprep.mubr.f32.mxu0 0.0
    %749 = vmatmul.mubr.f32.gmra.mxu0 %v677
    %v750 = vpop.f32.mrf.mxu0
    %v751 = vadd.f32 0.0, %v750
    %v752 = vpop.f32.mrf.mxu0
    %753 = vdwg.mxu0
    %v755 = vsel %vm450, %v670, 0
    %v758 = vsel %vm450, %v672, 0
    %760 = vmatprep.subr.mxu0 0.0
    %761 = vmatpush1.msra.mxu0 0.0
    %762 = vmatprep.subr.mxu0 0.0
    %763 = vmatpush1.msra.mxu0 0.0
    %764 = vmatprep.subr.mxu0 0.0
    %765 = vmatpush1.msra.mxu0 0.0
    %766 = vmatprep.subr.mxu0 0.0
    %767 = vmatpush1.msra.mxu0 0.0
    %768 = vmatprep.subr.mxu0 0.0
    %769 = vmatpush1.msra.mxu0 0.0
    %770 = vmatprep.subr.mxu0 0.0
    %771 = vmatpush1.msra.mxu0 0.0
    %772 = vmatprep.subr.mxu0 0.0
    %773 = vmatpush1.msra.mxu0 0.0
    %774 = vmatprep.subr.mxu0 0.0
    %775 = vmatpush1.msra.mxu0 0.0
    %776 = vmatprep.subr.mxu0 0.0
    %777 = vmatpush1.msra.mxu0 0.0
    %778 = vmatprep.subr.mxu0 0.0
    %779 = vmatpush1.msra.mxu0 0.0
    %780 = vmatprep.subr.mxu0 0.0
    %781 = vmatpush1.msra.mxu0 0.0
    %782 = vmatprep.subr.mxu0 0.0
    %783 = vmatpush1.msra.mxu0 0.0
    %784 = vmatprep.subr.mxu0 0.0
    %785 = vmatpush1.msra.mxu0 0.0
    %786 = vmatprep.subr.mxu0 0.0
    %787 = vmatpush1.msra.mxu0 0.0
    %788 = vmatprep.subr.mxu0 0.0
    %789 = vmatpush1.msra.mxu0 %v431
    %790 = vmatprep.subr.mxu0 0.0
    %791 = vmatpush1.msra.mxu0 %v426
    %792 = vmatprep.subr.mxu0 0.0
    %793 = vmatpush2.msra.mxu0 0.0
    %794 = vmatprep.subr.mxu0 0.0
    %795 = vmatpush2.msra.mxu0 0.0
    %796 = vmatprep.subr.mxu0 0.0
    %797 = vmatpush2.msra.mxu0 0.0
    %798 = vmatprep.subr.mxu0 0.0
    %799 = vmatpush2.msra.mxu0 0.0
    %800 = vmatprep.subr.mxu0 0.0
    %801 = vmatpush2.msra.mxu0 0.0
    %802 = vmatprep.subr.mxu0 0.0
    %803 = vmatpush2.msra.mxu0 0.0
    %804 = vmatprep.subr.mxu0 0.0
    %805 = vmatpush2.msra.mxu0 0.0
    %806 = vmatprep.subr.mxu0 0.0
    %807 = vmatpush2.msra.mxu0 0.0
    %808 = vmatprep.subr.mxu0 0.0
    %809 = vmatpush2.msra.mxu0 0.0
    %810 = vmatprep.subr.mxu0 0.0
    %811 = vmatpush2.msra.mxu0 0.0
    %812 = vmatprep.subr.mxu0 0.0
    %813 = vmatpush2.msra.mxu0 0.0
    %814 = vmatprep.subr.mxu0 0.0
    %815 = vmatpush2.msra.mxu0 0.0
    %816 = vmatprep.subr.mxu0 0.0
    %817 = vmatpush2.msra.mxu0 0.0
    %818 = vmatprep.subr.mxu0 0.0
    %819 = vmatpush2.msra.mxu0 0.0
    %820 = vmatprep.subr.mxu0 0.0
    %821 = vmatpush2.msra.mxu0 0.0
    %822 = vmatprep.subr.mxu0 0.0
    %823 = vmatpush2.msra.mxu0 0.0
    %824 = vmatprep.mubr.f32.mxu0 0.0
    %825 = vmatmul.mubr.f32.gmra.mxu0 %v755
    %v826 = vpop.f32.mrf.mxu0
    %v827 = vadd.f32 0.0, %v826
    %v828 = vpop.f32.mrf.mxu0
    %829 = vmatprep.mubr.f32.mxu0 0.0
    %830 = vmatmul.mubr.f32.gmra.mxu0 %v758
    %v831 = vpop.f32.mrf.mxu0
    %v832 = vadd.f32 0.0, %v831
    %v833 = vpop.f32.mrf.mxu0
    %834 = vdwg.mxu0
    %835 = vrot.lane.b32.xlu0 %v434, 112
    %v836 = vpop.permute.xlu0 %835
    %837 = vrot.lane.b32.xlu0 %v435, 112
    %v838 = vpop.permute.xlu0 %837
    %839 = vrot.lane.b32.xlu0 %v329, 112
    %v840 = vpop.permute.xlu0 %839
    %841 = vrot.lane.b32.xlu0 %v335, 112
    %v842 = vpop.permute.xlu0 %841
    %v843 = vsel %vm450, %v836, 0
    %v845 = vsel %vm450, %v838, 0
    %v847 = vsel %vm450, %v840, 0
    %v849 = vsel %vm450, %v842, 0
    %851 = vmatprep.subr.mxu0 0.0
    %852 = vmatpush1.xpose.msra.mxu0 0.0
    %853 = vmatprep.subr.mxu0 0.0
    %854 = vmatpush1.xpose.msra.mxu0 0.0
    %855 = vmatprep.subr.mxu0 0.0
    %856 = vmatpush1.xpose.msra.mxu0 0.0
    %857 = vmatprep.subr.mxu0 0.0
    %858 = vmatpush1.xpose.msra.mxu0 0.0
    %859 = vmatprep.subr.mxu0 0.0
    %860 = vmatpush1.xpose.msra.mxu0 0.0
    %861 = vmatprep.subr.mxu0 0.0
    %862 = vmatpush1.xpose.msra.mxu0 0.0
    %863 = vmatprep.subr.mxu0 0.0
    %864 = vmatpush1.xpose.msra.mxu0 0.0
    %865 = vmatprep.subr.mxu0 0.0
    %866 = vmatpush1.xpose.msra.mxu0 0.0
    %867 = vmatprep.subr.mxu0 0.0
    %868 = vmatpush1.xpose.msra.mxu0 0.0
    %869 = vmatprep.subr.mxu0 0.0
    %870 = vmatpush1.xpose.msra.mxu0 0.0
    %871 = vmatprep.subr.mxu0 0.0
    %872 = vmatpush1.xpose.msra.mxu0 0.0
    %873 = vmatprep.subr.mxu0 0.0
    %874 = vmatpush1.xpose.msra.mxu0 0.0
    %875 = vmatprep.subr.mxu0 0.0
    %876 = vmatpush1.xpose.msra.mxu0 0.0
    %877 = vmatprep.subr.mxu0 0.0
    %878 = vmatpush1.xpose.msra.mxu0 0.0
    %879 = vmatprep.subr.mxu0 0.0
    %880 = vmatpush1.xpose.msra.mxu0 %v849
    %881 = vmatprep.subr.mxu0 0.0
    %882 = vmatpush1.xpose.msra.mxu0 %v847
    %883 = vmatprep.subr.mxu0 0.0
    %884 = vmatpush2.xpose.msra.mxu0 0.0
    %885 = vmatprep.subr.mxu0 0.0
    %886 = vmatpush2.xpose.msra.mxu0 0.0
    %887 = vmatprep.subr.mxu0 0.0
    %888 = vmatpush2.xpose.msra.mxu0 0.0
    %889 = vmatprep.subr.mxu0 0.0
    %890 = vmatpush2.xpose.msra.mxu0 0.0
    %891 = vmatprep.subr.mxu0 0.0
    %892 = vmatpush2.xpose.msra.mxu0 0.0
    %893 = vmatprep.subr.mxu0 0.0
    %894 = vmatpush2.xpose.msra.mxu0 0.0
    %895 = vmatprep.subr.mxu0 0.0
    %896 = vmatpush2.xpose.msra.mxu0 0.0
    %897 = vmatprep.subr.mxu0 0.0
    %898 = vmatpush2.xpose.msra.mxu0 0.0
    %899 = vmatprep.subr.mxu0 0.0
    %900 = vmatpush2.xpose.msra.mxu0 0.0
    %901 = vmatprep.subr.mxu0 0.0
    %902 = vmatpush2.xpose.msra.mxu0 0.0
    %903 = vmatprep.subr.mxu0 0.0
    %904 = vmatpush2.xpose.msra.mxu0 0.0
    %905 = vmatprep.subr.mxu0 0.0
    %906 = vmatpush2.xpose.msra.mxu0 0.0
    %907 = vmatprep.subr.mxu0 0.0
    %908 = vmatpush2.xpose.msra.mxu0 0.0
    %909 = vmatprep.subr.mxu0 0.0
    %910 = vmatpush2.xpose.msra.mxu0 0.0
    %911 = vmatprep.subr.mxu0 0.0
    %912 = vmatpush2.xpose.msra.mxu0 0.0
    %913 = vmatprep.subr.mxu0 0.0
    %914 = vmatpush2.xpose.msra.mxu0 0.0
    %915 = vmatprep.mubr.f32.mxu0 0.0
    %916 = vmatmul.mubr.f32.gmra.mxu0 %v843
    %v917 = vpop.f32.mrf.mxu0
    %v918 = vadd.f32 0.0, %v917
    %v919 = vpop.f32.mrf.mxu0
    %920 = vmatprep.mubr.f32.mxu0 0.0
    %921 = vmatmul.mubr.f32.gmra.mxu0 %v845
    %v922 = vpop.f32.mrf.mxu0
    %v923 = vadd.f32 0.0, %v922
    %v924 = vpop.f32.mrf.mxu0
    %925 = vdwg.mxu0
    %926 = vrot.lane.b32.xlu0 %v436, 112
    %v927 = vpop.permute.xlu0 %926
    %928 = vrot.lane.b32.xlu0 %v437, 112
    %v929 = vpop.permute.xlu0 %928
    %930 = vrot.lane.b32.xlu0 %v341, 112
    %v931 = vpop.permute.xlu0 %930
    %932 = vrot.lane.b32.xlu0 %v347, 112
    %v933 = vpop.permute.xlu0 %932
    %v934 = vsel %vm450, %v927, 0
    %v936 = vsel %vm450, %v929, 0
    %v938 = vsel %vm450, %v931, 0
    %v940 = vsel %vm450, %v933, 0
    %942 = vmatprep.subr.mxu0 0.0
    %943 = vmatpush1.xpose.msra.mxu0 0.0
    %944 = vmatprep.subr.mxu0 0.0
    %945 = vmatpush1.xpose.msra.mxu0 0.0
    %946 = vmatprep.subr.mxu0 0.0
    %947 = vmatpush1.xpose.msra.mxu0 0.0
    %948 = vmatprep.subr.mxu0 0.0
    %949 = vmatpush1.xpose.msra.mxu0 0.0
    %950 = vmatprep.subr.mxu0 0.0
    %951 = vmatpush1.xpose.msra.mxu0 0.0
    %952 = vmatprep.subr.mxu0 0.0
    %953 = vmatpush1.xpose.msra.mxu0 0.0
    %954 = vmatprep.subr.mxu0 0.0
    %955 = vmatpush1.xpose.msra.mxu0 0.0
    %956 = vmatprep.subr.mxu0 0.0
    %957 = vmatpush1.xpose.msra.mxu0 0.0
    %958 = vmatprep.subr.mxu0 0.0
    %959 = vmatpush1.xpose.msra.mxu0 0.0
    %960 = vmatprep.subr.mxu0 0.0
    %961 = vmatpush1.xpose.msra.mxu0 0.0
    %962 = vmatprep.subr.mxu0 0.0
    %963 = vmatpush1.xpose.msra.mxu0 0.0
    %964 = vmatprep.subr.mxu0 0.0
    %965 = vmatpush1.xpose.msra.mxu0 0.0
    %966 = vmatprep.subr.mxu0 0.0
    %967 = vmatpush1.xpose.msra.mxu0 0.0
    %968 = vmatprep.subr.mxu0 0.0
    %969 = vmatpush1.xpose.msra.mxu0 0.0
    %970 = vmatprep.subr.mxu0 0.0
    %971 = vmatpush1.xpose.msra.mxu0 %v940
    %972 = vmatprep.subr.mxu0 0.0
    %973 = vmatpush1.xpose.msra.mxu0 %v938
    %974 = vmatprep.subr.mxu0 0.0
    %975 = vmatpush2.xpose.msra.mxu0 0.0
    %976 = vmatprep.subr.mxu0 0.0
    %977 = vmatpush2.xpose.msra.mxu0 0.0
    %978 = vmatprep.subr.mxu0 0.0
    %979 = vmatpush2.xpose.msra.mxu0 0.0
    %980 = vmatprep.subr.mxu0 0.0
    %981 = vmatpush2.xpose.msra.mxu0 0.0
    %982 = vmatprep.subr.mxu0 0.0
    %983 = vmatpush2.xpose.msra.mxu0 0.0
    %984 = vmatprep.subr.mxu0 0.0
    %985 = vmatpush2.xpose.msra.mxu0 0.0
    %986 = vmatprep.subr.mxu0 0.0
    %987 = vmatpush2.xpose.msra.mxu0 0.0
    %988 = vmatprep.subr.mxu0 0.0
    %989 = vmatpush2.xpose.msra.mxu0 0.0
    %990 = vmatprep.subr.mxu0 0.0
    %991 = vmatpush2.xpose.msra.mxu0 0.0
    %992 = vmatprep.subr.mxu0 0.0
    %993 = vmatpush2.xpose.msra.mxu0 0.0
    %994 = vmatprep.subr.mxu0 0.0
    %995 = vmatpush2.xpose.msra.mxu0 0.0
    %996 = vmatprep.subr.mxu0 0.0
    %997 = vmatpush2.xpose.msra.mxu0 0.0
    %998 = vmatprep.subr.mxu0 0.0
    %999 = vmatpush2.xpose.msra.mxu0 0.0
    %1000 = vmatprep.subr.mxu0 0.0
    %1001 = vmatpush2.xpose.msra.mxu0 0.0
    %1002 = vmatprep.subr.mxu0 0.0
    %1003 = vmatpush2.xpose.msra.mxu0 0.0
    %1004 = vmatprep.subr.mxu0 0.0
    %1005 = vmatpush2.xpose.msra.mxu0 0.0
    %1006 = vmatprep.mubr.f32.mxu0 0.0
    %1007 = vmatmul.mubr.f32.gmra.mxu0 %v934
    %v1008 = vpop.f32.mrf.mxu0
    %v1009 = vadd.f32 0.0, %v1008
    %v1010 = vpop.f32.mrf.mxu0
    %1011 = vmatprep.mubr.f32.mxu0 0.0
    %1012 = vmatmul.mubr.f32.gmra.mxu0 %v936
    %v1013 = vpop.f32.mrf.mxu0
    %v1014 = vadd.f32 0.0, %v1013
    %v1015 = vpop.f32.mrf.mxu0
    %1016 = vdwg.mxu0
    %v1017 = vsel %vm164, %v918, -1e+30
    %v1018 = vsel %vm164, %v923, -1e+30
    %v1019 = vsel %vm164, %v1009, -1e+30
    %v1020 = vsel %vm164, %v1014, -1e+30
    %v1021 = vsel %vm450, %v1017, -inf
    %1022 = vmax.xlane.f32.xlu0 %v1021
    %v1023 = vpop.xlane.xlu0 %1022
    %v1024 = vsel %vm450, %v1018, -inf
    %1025 = vmax.xlane.f32.xlu0 %v1024
    %v1026 = vpop.xlane.xlu0 %1025
    %v1027 = vsel %vm450, %v1019, -inf
    %1028 = vmax.xlane.f32.xlu0 %v1027
    %v1029 = vpop.xlane.xlu0 %1028
    %v1030 = vsel %vm450, %v1020, -inf
    %1031 = vmax.xlane.f32.xlu0 %v1030
    %v1032 = vpop.xlane.xlu0 %1031
    %v1033 = vsub.f32 %v1017, %v1023
    %v1034 = vsub.f32 %v1018, %v1026
    %v1035 = vsub.f32 %v1019, %v1029
    %v1036 = vsub.f32 %v1020, %v1032
    %v1037 = vmul.f32 %v1033, 1.442695
    %v1038 = vpow.pop %v1037
    %v1039 = vmul.f32 %v1034, 1.442695
    %v1040 = vpow.pop %v1039
    %v1041 = vmul.f32 %v1035, 1.442695
    %v1042 = vpow.pop %v1041
    %v1043 = vmul.f32 %v1036, 1.442695
    %v1044 = vpow.pop %v1043
    %v1045 = vsel %vm450, %v1038, 0.0
    %1046 = vadd.xlane.f32.xlu0 %v1045
    %v1047 = vpop.xlane.xlu0 %1046
    %v1048 = vsel %vm450, %v1040, 0.0
    %1049 = vadd.xlane.f32.xlu0 %v1048
    %v1050 = vpop.xlane.xlu0 %1049
    %v1051 = vsel %vm450, %v1042, 0.0
    %1052 = vadd.xlane.f32.xlu0 %v1051
    %v1053 = vpop.xlane.xlu0 %1052
    %v1054 = vsel %vm450, %v1044, 0.0
    %1055 = vadd.xlane.f32.xlu0 %v1054
    %v1056 = vpop.xlane.xlu0 %1055
    %v1057 = vrcp.pop %v1047
    %v1058 = vmul.f32 %v1038, %v1057
    %v1059 = vrcp.pop %v1050
    %v1060 = vmul.f32 %v1040, %v1059
    %v1061 = vrcp.pop %v1053
    %v1062 = vmul.f32 %v1042, %v1061
    %v1063 = vrcp.pop %v1056
    %v1064 = vmul.f32 %v1044, %v1063
    %1067 = vrot.lane.b32.xlu0 %v416, 112
    %v1068 = vpop.permute.xlu0 %1067
    %1069 = vrot.lane.b32.xlu0 %v421, 112
    %v1070 = vpop.permute.xlu0 %1069
    %v1074 = vsel %vm450, %v1058, 0
    %v1077 = vsel %vm450, %v1060, 0
    %1079 = vmatprep.subr.mxu0 0.0
    %1080 = vmatpush1.msra.mxu0 0.0
    %1081 = vmatprep.subr.mxu0 0.0
    %1082 = vmatpush1.msra.mxu0 0.0
    %1083 = vmatprep.subr.mxu0 0.0
    %1084 = vmatpush1.msra.mxu0 0.0
    %1085 = vmatprep.subr.mxu0 0.0
    %1086 = vmatpush1.msra.mxu0 0.0
    %1087 = vmatprep.subr.mxu0 0.0
    %1088 = vmatpush1.msra.mxu0 0.0
    %1089 = vmatprep.subr.mxu0 0.0
    %1090 = vmatpush1.msra.mxu0 0.0
    %1091 = vmatprep.subr.mxu0 0.0
    %1092 = vmatpush1.msra.mxu0 0.0
    %1093 = vmatprep.subr.mxu0 0.0
    %1094 = vmatpush1.msra.mxu0 0.0
    %1095 = vmatprep.subr.mxu0 0.0
    %1096 = vmatpush1.msra.mxu0 0.0
    %1097 = vmatprep.subr.mxu0 0.0
    %1098 = vmatpush1.msra.mxu0 0.0
    %1099 = vmatprep.subr.mxu0 0.0
    %1100 = vmatpush1.msra.mxu0 0.0
    %1101 = vmatprep.subr.mxu0 0.0
    %1102 = vmatpush1.msra.mxu0 0.0
    %1103 = vmatprep.subr.mxu0 0.0
    %1104 = vmatpush1.msra.mxu0 0.0
    %1105 = vmatprep.subr.mxu0 0.0
    %1106 = vmatpush1.msra.mxu0 0.0
    %1107 = vmatprep.subr.mxu0 0.0
    %1108 = vmatpush1.msra.mxu0 %v1070
    %1109 = vmatprep.subr.mxu0 0.0
    %1110 = vmatpush1.msra.mxu0 %v1068
    %1111 = vmatprep.subr.mxu0 0.0
    %1112 = vmatpush2.msra.mxu0 0.0
    %1113 = vmatprep.subr.mxu0 0.0
    %1114 = vmatpush2.msra.mxu0 0.0
    %1115 = vmatprep.subr.mxu0 0.0
    %1116 = vmatpush2.msra.mxu0 0.0
    %1117 = vmatprep.subr.mxu0 0.0
    %1118 = vmatpush2.msra.mxu0 0.0
    %1119 = vmatprep.subr.mxu0 0.0
    %1120 = vmatpush2.msra.mxu0 0.0
    %1121 = vmatprep.subr.mxu0 0.0
    %1122 = vmatpush2.msra.mxu0 0.0
    %1123 = vmatprep.subr.mxu0 0.0
    %1124 = vmatpush2.msra.mxu0 0.0
    %1125 = vmatprep.subr.mxu0 0.0
    %1126 = vmatpush2.msra.mxu0 0.0
    %1127 = vmatprep.subr.mxu0 0.0
    %1128 = vmatpush2.msra.mxu0 0.0
    %1129 = vmatprep.subr.mxu0 0.0
    %1130 = vmatpush2.msra.mxu0 0.0
    %1131 = vmatprep.subr.mxu0 0.0
    %1132 = vmatpush2.msra.mxu0 0.0
    %1133 = vmatprep.subr.mxu0 0.0
    %1134 = vmatpush2.msra.mxu0 0.0
    %1135 = vmatprep.subr.mxu0 0.0
    %1136 = vmatpush2.msra.mxu0 0.0
    %1137 = vmatprep.subr.mxu0 0.0
    %1138 = vmatpush2.msra.mxu0 0.0
    %1139 = vmatprep.subr.mxu0 0.0
    %1140 = vmatpush2.msra.mxu0 0.0
    %1141 = vmatprep.subr.mxu0 0.0
    %1142 = vmatpush2.msra.mxu0 0.0
    %1143 = vmatprep.mubr.f32.mxu0 0.0
    %1144 = vmatmul.mubr.f32.gmra.mxu0 %v1074
    %v1145 = vpop.f32.mrf.mxu0
    %v1146 = vadd.f32 0.0, %v1145
    %v1147 = vpop.f32.mrf.mxu0
    %1148 = vmatprep.mubr.f32.mxu0 0.0
    %1149 = vmatmul.mubr.f32.gmra.mxu0 %v1077
    %v1150 = vpop.f32.mrf.mxu0
    %v1151 = vadd.f32 0.0, %v1150
    %v1152 = vpop.f32.mrf.mxu0
    %1153 = vdwg.mxu0
    %1156 = vrot.lane.b32.xlu0 %v426, 112
    %v1157 = vpop.permute.xlu0 %1156
    %1158 = vrot.lane.b32.xlu0 %v431, 112
    %v1159 = vpop.permute.xlu0 %1158
    %v1163 = vsel %vm450, %v1062, 0
    %v1166 = vsel %vm450, %v1064, 0
    %1168 = vmatprep.subr.mxu0 0.0
    %1169 = vmatpush1.msra.mxu0 0.0
    %1170 = vmatprep.subr.mxu0 0.0
    %1171 = vmatpush1.msra.mxu0 0.0
    %1172 = vmatprep.subr.mxu0 0.0
    %1173 = vmatpush1.msra.mxu0 0.0
    %1174 = vmatprep.subr.mxu0 0.0
    %1175 = vmatpush1.msra.mxu0 0.0
    %1176 = vmatprep.subr.mxu0 0.0
    %1177 = vmatpush1.msra.mxu0 0.0
    %1178 = vmatprep.subr.mxu0 0.0
    %1179 = vmatpush1.msra.mxu0 0.0
    %1180 = vmatprep.subr.mxu0 0.0
    %1181 = vmatpush1.msra.mxu0 0.0
    %1182 = vmatprep.subr.mxu0 0.0
    %1183 = vmatpush1.msra.mxu0 0.0
    %1184 = vmatprep.subr.mxu0 0.0
    %1185 = vmatpush1.msra.mxu0 0.0
    %1186 = vmatprep.subr.mxu0 0.0
    %1187 = vmatpush1.msra.mxu0 0.0
    %1188 = vmatprep.subr.mxu0 0.0
    %1189 = vmatpush1.msra.mxu0 0.0
    %1190 = vmatprep.subr.mxu0 0.0
    %1191 = vmatpush1.msra.mxu0 0.0
    %1192 = vmatprep.subr.mxu0 0.0
    %1193 = vmatpush1.msra.mxu0 0.0
    %1194 = vmatprep.subr.mxu0 0.0
    %1195 = vmatpush1.msra.mxu0 0.0
    %1196 = vmatprep.subr.mxu0 0.0
    %1197 = vmatpush1.msra.mxu0 %v1159
    %1198 = vmatprep.subr.mxu0 0.0
    %1199 = vmatpush1.msra.mxu0 %v1157
    %1200 = vmatprep.subr.mxu0 0.0
    %1201 = vmatpush2.msra.mxu0 0.0
    %1202 = vmatprep.subr.mxu0 0.0
    %1203 = vmatpush2.msra.mxu0 0.0
    %1204 = vmatprep.subr.mxu0 0.0
    %1205 = vmatpush2.msra.mxu0 0.0
    %1206 = vmatprep.subr.mxu0 0.0
    %1207 = vmatpush2.msra.mxu0 0.0
    %1208 = vmatprep.subr.mxu0 0.0
    %1209 = vmatpush2.msra.mxu0 0.0
    %1210 = vmatprep.subr.mxu0 0.0
    %1211 = vmatpush2.msra.mxu0 0.0
    %1212 = vmatprep.subr.mxu0 0.0
    %1213 = vmatpush2.msra.mxu0 0.0
    %1214 = vmatprep.subr.mxu0 0.0
    %1215 = vmatpush2.msra.mxu0 0.0
    %1216 = vmatprep.subr.mxu0 0.0
    %1217 = vmatpush2.msra.mxu0 0.0
    %1218 = vmatprep.subr.mxu0 0.0
    %1219 = vmatpush2.msra.mxu0 0.0
    %1220 = vmatprep.subr.mxu0 0.0
    %1221 = vmatpush2.msra.mxu0 0.0
    %1222 = vmatprep.subr.mxu0 0.0
    %1223 = vmatpush2.msra.mxu0 0.0
    %1224 = vmatprep.subr.mxu0 0.0
    %1225 = vmatpush2.msra.mxu0 0.0
    %1226 = vmatprep.subr.mxu0 0.0
    %1227 = vmatpush2.msra.mxu0 0.0
    %1228 = vmatprep.subr.mxu0 0.0
    %1229 = vmatpush2.msra.mxu0 0.0
    %1230 = vmatprep.subr.mxu0 0.0
    %1231 = vmatpush2.msra.mxu0 0.0
    %1232 = vmatprep.mubr.f32.mxu0 0.0
    %1233 = vmatmul.mubr.f32.gmra.mxu0 %v1163
    %v1234 = vpop.f32.mrf.mxu0
    %v1235 = vadd.f32 0.0, %v1234
    %v1236 = vpop.f32.mrf.mxu0
    %1237 = vmatprep.mubr.f32.mxu0 0.0
    %1238 = vmatmul.mubr.f32.gmra.mxu0 %v1166
    %v1239 = vpop.f32.mrf.mxu0
    %v1240 = vadd.f32 0.0, %v1239
    %v1241 = vpop.f32.mrf.mxu0
    %1242 = vdwg.mxu0
    %v1244 = vsel %vm450, %v1146, 0
    %v1247 = vsel %vm450, %v1151, 0
    %v1250 = vsel %vm450, %v1235, 0
    %v1253 = vsel %vm450, %v1240, 0
    %1255 = vmatprep.subr.mxu0 0.0
    %1256 = vmatpush1.msra.mxu0 0.0
    %1257 = vmatprep.subr.mxu0 0.0
    %1258 = vmatpush1.msra.mxu0 0.0
    %1259 = vmatprep.subr.mxu0 0.0
    %1260 = vmatpush1.msra.mxu0 0.0
    %1261 = vmatprep.subr.mxu0 0.0
    %1262 = vmatpush1.msra.mxu0 0.0
    %1263 = vmatprep.subr.mxu0 0.0
    %1264 = vmatpush1.msra.mxu0 0.0
    %1265 = vmatprep.subr.mxu0 0.0
    %1266 = vmatpush1.msra.mxu0 0.0
    %1267 = vmatprep.subr.mxu0 0.0
    %1268 = vmatpush1.msra.mxu0 0.0
    %1269 = vmatprep.subr.mxu0 0.0
    %1270 = vmatpush1.msra.mxu0 0.0
    %1271 = vmatprep.subr.mxu0 0.0
    %1272 = vmatpush1.msra.mxu0 0.0
    %1273 = vmatprep.subr.mxu0 0.0
    %1274 = vmatpush1.msra.mxu0 0.0
    %1275 = vmatprep.subr.mxu0 0.0
    %1276 = vmatpush1.msra.mxu0 0.0
    %1277 = vmatprep.subr.mxu0 0.0
    %1278 = vmatpush1.msra.mxu0 0.0
    %1279 = vmatprep.subr.mxu0 0.0
    %1280 = vmatpush1.msra.mxu0 0.0
    %1281 = vmatprep.subr.mxu0 0.0
    %1282 = vmatpush1.msra.mxu0 0.0
    %1283 = vmatprep.subr.mxu0 0.0
    %1284 = vmatpush1.msra.mxu0 %v447
    %1285 = vmatprep.subr.mxu0 0.0
    %1286 = vmatpush1.msra.mxu0 %v446
    %1287 = vmatprep.subr.mxu0 0.0
    %1288 = vmatpush2.msra.mxu0 0.0
    %1289 = vmatprep.subr.mxu0 0.0
    %1290 = vmatpush2.msra.mxu0 0.0
    %1291 = vmatprep.subr.mxu0 0.0
    %1292 = vmatpush2.msra.mxu0 0.0
    %1293 = vmatprep.subr.mxu0 0.0
    %1294 = vmatpush2.msra.mxu0 0.0
    %1295 = vmatprep.subr.mxu0 0.0
    %1296 = vmatpush2.msra.mxu0 0.0
    %1297 = vmatprep.subr.mxu0 0.0
    %1298 = vmatpush2.msra.mxu0 0.0
    %1299 = vmatprep.subr.mxu0 0.0
    %1300 = vmatpush2.msra.mxu0 0.0
    %1301 = vmatprep.subr.mxu0 0.0
    %1302 = vmatpush2.msra.mxu0 0.0
    %1303 = vmatprep.subr.mxu0 0.0
    %1304 = vmatpush2.msra.mxu0 0.0
    %1305 = vmatprep.subr.mxu0 0.0
    %1306 = vmatpush2.msra.mxu0 0.0
    %1307 = vmatprep.subr.mxu0 0.0
    %1308 = vmatpush2.msra.mxu0 0.0
    %1309 = vmatprep.subr.mxu0 0.0
    %1310 = vmatpush2.msra.mxu0 0.0
    %1311 = vmatprep.subr.mxu0 0.0
    %1312 = vmatpush2.msra.mxu0 0.0
    %1313 = vmatprep.subr.mxu0 0.0
    %1314 = vmatpush2.msra.mxu0 0.0
    %1315 = vmatprep.subr.mxu0 0.0
    %1316 = vmatpush2.msra.mxu0 0.0
    %1317 = vmatprep.subr.mxu0 0.0
    %1318 = vmatpush2.msra.mxu0 0.0
    %1319 = vmatprep.mubr.f32.mxu0 0.0
    %1320 = vmatmul.mubr.f32.gmra.mxu0 %v1244
    %v1321 = vpop.f32.mrf.mxu0
    %v1322 = vadd.f32 0.0, %v1321
    %v1323 = vpop.f32.mrf.mxu0
    %1324 = vmatprep.mubr.f32.mxu0 0.0
    %1325 = vmatmul.mubr.f32.gmra.mxu0 %v1247
    %v1326 = vpop.f32.mrf.mxu0
    %v1327 = vadd.f32 0.0, %v1326
    %v1328 = vpop.f32.mrf.mxu0
    %1329 = vmatprep.mubr.f32.mxu0 0.0
    %1330 = vmatmul.mubr.f32.gmra.mxu0 %v1250
    %v1331 = vpop.f32.mrf.mxu0
    %v1332 = vadd.f32 0.0, %v1331
    %v1333 = vpop.f32.mrf.mxu0
    %1334 = vmatprep.mubr.f32.mxu0 0.0
    %1335 = vmatmul.mubr.f32.gmra.mxu0 %v1253
    %v1336 = vpop.f32.mrf.mxu0
    %v1337 = vadd.f32 0.0, %v1336
    %v1338 = vpop.f32.mrf.mxu0
    %1339 = vdwg.mxu0
    %v1341 = vsel %vm450, %v746, 0
    %v1344 = vsel %vm450, %v751, 0
    %v1347 = vsel %vm450, %v827, 0
    %v1350 = vsel %vm450, %v832, 0
    %1352 = vmatprep.subr.mxu0 0.0
    %1353 = vmatpush1.msra.mxu0 0.0
    %1354 = vmatprep.subr.mxu0 0.0
    %1355 = vmatpush1.msra.mxu0 0.0
    %1356 = vmatprep.subr.mxu0 0.0
    %1357 = vmatpush1.msra.mxu0 0.0
    %1358 = vmatprep.subr.mxu0 0.0
    %1359 = vmatpush1.msra.mxu0 0.0
    %1360 = vmatprep.subr.mxu0 0.0
    %1361 = vmatpush1.msra.mxu0 0.0
    %1362 = vmatprep.subr.mxu0 0.0
    %1363 = vmatpush1.msra.mxu0 0.0
    %1364 = vmatprep.subr.mxu0 0.0
    %1365 = vmatpush1.msra.mxu0 0.0
    %1366 = vmatprep.subr.mxu0 0.0
    %1367 = vmatpush1.msra.mxu0 0.0
    %1368 = vmatprep.subr.mxu0 0.0
    %1369 = vmatpush1.msra.mxu0 0.0
    %1370 = vmatprep.subr.mxu0 0.0
    %1371 = vmatpush1.msra.mxu0 0.0
    %1372 = vmatprep.subr.mxu0 0.0
    %1373 = vmatpush1.msra.mxu0 0.0
    %1374 = vmatprep.subr.mxu0 0.0
    %1375 = vmatpush1.msra.mxu0 0.0
    %1376 = vmatprep.subr.mxu0 0.0
    %1377 = vmatpush1.msra.mxu0 0.0
    %1378 = vmatprep.subr.mxu0 0.0
    %1379 = vmatpush1.msra.mxu0 0.0
    %1380 = vmatprep.subr.mxu0 0.0
    %1381 = vmatpush1.msra.mxu0 %v445
    %1382 = vmatprep.subr.mxu0 0.0
    %1383 = vmatpush1.msra.mxu0 %v444
    %1384 = vmatprep.subr.mxu0 0.0
    %1385 = vmatpush2.msra.mxu0 0.0
    %1386 = vmatprep.subr.mxu0 0.0
    %1387 = vmatpush2.msra.mxu0 0.0
    %1388 = vmatprep.subr.mxu0 0.0
    %1389 = vmatpush2.msra.mxu0 0.0
    %1390 = vmatprep.subr.mxu0 0.0
    %1391 = vmatpush2.msra.mxu0 0.0
    %1392 = vmatprep.subr.mxu0 0.0
    %1393 = vmatpush2.msra.mxu0 0.0
    %1394 = vmatprep.subr.mxu0 0.0
    %1395 = vmatpush2.msra.mxu0 0.0
    %1396 = vmatprep.subr.mxu0 0.0
    %1397 = vmatpush2.msra.mxu0 0.0
    %1398 = vmatprep.subr.mxu0 0.0
    %1399 = vmatpush2.msra.mxu0 0.0
    %1400 = vmatprep.subr.mxu0 0.0
    %1401 = vmatpush2.msra.mxu0 0.0
    %1402 = vmatprep.subr.mxu0 0.0
    %1403 = vmatpush2.msra.mxu0 0.0
    %1404 = vmatprep.subr.mxu0 0.0
    %1405 = vmatpush2.msra.mxu0 0.0
    %1406 = vmatprep.subr.mxu0 0.0
    %1407 = vmatpush2.msra.mxu0 0.0
    %1408 = vmatprep.subr.mxu0 0.0
    %1409 = vmatpush2.msra.mxu0 0.0
    %1410 = vmatprep.subr.mxu0 0.0
    %1411 = vmatpush2.msra.mxu0 0.0
    %1412 = vmatprep.subr.mxu0 0.0
    %1413 = vmatpush2.msra.mxu0 0.0
    %1414 = vmatprep.subr.mxu0 0.0
    %1415 = vmatpush2.msra.mxu0 0.0
    %1416 = vmatprep.mubr.f32.mxu0 0.0
    %1417 = vmatmul.mubr.f32.gmra.mxu0 %v1341
    %v1418 = vpop.f32.mrf.mxu0
    %v1419 = vadd.f32 %v1322, %v1418
    %v1420 = vpop.f32.mrf.mxu0
    %1421 = vmatprep.mubr.f32.mxu0 0.0
    %1422 = vmatmul.mubr.f32.gmra.mxu0 %v1344
    %v1423 = vpop.f32.mrf.mxu0
    %v1424 = vadd.f32 %v1327, %v1423
    %v1425 = vpop.f32.mrf.mxu0
    %1426 = vmatprep.mubr.f32.mxu0 0.0
    %1427 = vmatmul.mubr.f32.gmra.mxu0 %v1347
    %v1428 = vpop.f32.mrf.mxu0
    %v1429 = vadd.f32 %v1332, %v1428
    %v1430 = vpop.f32.mrf.mxu0
    %1431 = vmatprep.mubr.f32.mxu0 0.0
    %1432 = vmatmul.mubr.f32.gmra.mxu0 %v1350
    %v1433 = vpop.f32.mrf.mxu0
    %v1434 = vadd.f32 %v1337, %v1433
    %v1435 = vpop.f32.mrf.mxu0
    %1436 = vdwg.mxu0
    %1437 = vrot.lane.b32.xlu0 %v434, 96
    %v1438 = vpop.permute.xlu0 %1437
    %1439 = vrot.lane.b32.xlu0 %v435, 96
    %v1440 = vpop.permute.xlu0 %1439
    %1441 = vrot.lane.b32.xlu0 %v329, 96
    %v1442 = vpop.permute.xlu0 %1441
    %1443 = vrot.lane.b32.xlu0 %v335, 96
    %v1444 = vpop.permute.xlu0 %1443
    %v1445 = vsel %vm450, %v1438, 0
    %v1447 = vsel %vm450, %v1440, 0
    %v1449 = vsel %vm450, %v1442, 0
    %v1451 = vsel %vm450, %v1444, 0
    %1453 = vmatprep.subr.mxu0 0.0
    %1454 = vmatpush1.xpose.msra.mxu0 0.0
    %1455 = vmatprep.subr.mxu0 0.0
    %1456 = vmatpush1.xpose.msra.mxu0 0.0
    %1457 = vmatprep.subr.mxu0 0.0
    %1458 = vmatpush1.xpose.msra.mxu0 0.0
    %1459 = vmatprep.subr.mxu0 0.0
    %1460 = vmatpush1.xpose.msra.mxu0 0.0
    %1461 = vmatprep.subr.mxu0 0.0
    %1462 = vmatpush1.xpose.msra.mxu0 0.0
    %1463 = vmatprep.subr.mxu0 0.0
    %1464 = vmatpush1.xpose.msra.mxu0 0.0
    %1465 = vmatprep.subr.mxu0 0.0
    %1466 = vmatpush1.xpose.msra.mxu0 0.0
    %1467 = vmatprep.subr.mxu0 0.0
    %1468 = vmatpush1.xpose.msra.mxu0 0.0
    %1469 = vmatprep.subr.mxu0 0.0
    %1470 = vmatpush1.xpose.msra.mxu0 0.0
    %1471 = vmatprep.subr.mxu0 0.0
    %1472 = vmatpush1.xpose.msra.mxu0 0.0
    %1473 = vmatprep.subr.mxu0 0.0
    %1474 = vmatpush1.xpose.msra.mxu0 0.0
    %1475 = vmatprep.subr.mxu0 0.0
    %1476 = vmatpush1.xpose.msra.mxu0 0.0
    %1477 = vmatprep.subr.mxu0 0.0
    %1478 = vmatpush1.xpose.msra.mxu0 0.0
    %1479 = vmatprep.subr.mxu0 0.0
    %1480 = vmatpush1.xpose.msra.mxu0 0.0
    %1481 = vmatprep.subr.mxu0 0.0
    %1482 = vmatpush1.xpose.msra.mxu0 %v1451
    %1483 = vmatprep.subr.mxu0 0.0
    %1484 = vmatpush1.xpose.msra.mxu0 %v1449
    %1485 = vmatprep.subr.mxu0 0.0
    %1486 = vmatpush2.xpose.msra.mxu0 0.0
    %1487 = vmatprep.subr.mxu0 0.0
    %1488 = vmatpush2.xpose.msra.mxu0 0.0
    %1489 = vmatprep.subr.mxu0 0.0
    %1490 = vmatpush2.xpose.msra.mxu0 0.0
    %1491 = vmatprep.subr.mxu0 0.0
    %1492 = vmatpush2.xpose.msra.mxu0 0.0
    %1493 = vmatprep.subr.mxu0 0.0
    %1494 = vmatpush2.xpose.msra.mxu0 0.0
    %1495 = vmatprep.subr.mxu0 0.0
    %1496 = vmatpush2.xpose.msra.mxu0 0.0
    %1497 = vmatprep.subr.mxu0 0.0
    %1498 = vmatpush2.xpose.msra.mxu0 0.0
    %1499 = vmatprep.subr.mxu0 0.0
    %1500 = vmatpush2.xpose.msra.mxu0 0.0
    %1501 = vmatprep.subr.mxu0 0.0
    %1502 = vmatpush2.xpose.msra.mxu0 0.0
    %1503 = vmatprep.subr.mxu0 0.0
    %1504 = vmatpush2.xpose.msra.mxu0 0.0
    %1505 = vmatprep.subr.mxu0 0.0
    %1506 = vmatpush2.xpose.msra.mxu0 0.0
    %1507 = vmatprep.subr.mxu0 0.0
    %1508 = vmatpush2.xpose.msra.mxu0 0.0
    %1509 = vmatprep.subr.mxu0 0.0
    %1510 = vmatpush2.xpose.msra.mxu0 0.0
    %1511 = vmatprep.subr.mxu0 0.0
    %1512 = vmatpush2.xpose.msra.mxu0 0.0
    %1513 = vmatprep.subr.mxu0 0.0
    %1514 = vmatpush2.xpose.msra.mxu0 0.0
    %1515 = vmatprep.subr.mxu0 0.0
    %1516 = vmatpush2.xpose.msra.mxu0 0.0
    %1517 = vmatprep.mubr.f32.mxu0 0.0
    %1518 = vmatmul.mubr.f32.gmra.mxu0 %v1445
    %v1519 = vpop.f32.mrf.mxu0
    %v1520 = vadd.f32 0.0, %v1519
    %v1521 = vpop.f32.mrf.mxu0
    %1522 = vmatprep.mubr.f32.mxu0 0.0
    %1523 = vmatmul.mubr.f32.gmra.mxu0 %v1447
    %v1524 = vpop.f32.mrf.mxu0
    %v1525 = vadd.f32 0.0, %v1524
    %v1526 = vpop.f32.mrf.mxu0
    %1527 = vdwg.mxu0
    %1528 = vrot.lane.b32.xlu0 %v436, 96
    %v1529 = vpop.permute.xlu0 %1528
    %1530 = vrot.lane.b32.xlu0 %v437, 96
    %v1531 = vpop.permute.xlu0 %1530
    %1532 = vrot.lane.b32.xlu0 %v341, 96
    %v1533 = vpop.permute.xlu0 %1532
    %1534 = vrot.lane.b32.xlu0 %v347, 96
    %v1535 = vpop.permute.xlu0 %1534
    %v1536 = vsel %vm450, %v1529, 0
    %v1538 = vsel %vm450, %v1531, 0
    %v1540 = vsel %vm450, %v1533, 0
    %v1542 = vsel %vm450, %v1535, 0
    %1544 = vmatprep.subr.mxu0 0.0
    %1545 = vmatpush1.xpose.msra.mxu0 0.0
    %1546 = vmatprep.subr.mxu0 0.0
    %1547 = vmatpush1.xpose.msra.mxu0 0.0
    %1548 = vmatprep.subr.mxu0 0.0
    %1549 = vmatpush1.xpose.msra.mxu0 0.0
    %1550 = vmatprep.subr.mxu0 0.0
    %1551 = vmatpush1.xpose.msra.mxu0 0.0
    %1552 = vmatprep.subr.mxu0 0.0
    %1553 = vmatpush1.xpose.msra.mxu0 0.0
    %1554 = vmatprep.subr.mxu0 0.0
    %1555 = vmatpush1.xpose.msra.mxu0 0.0
    %1556 = vmatprep.subr.mxu0 0.0
    %1557 = vmatpush1.xpose.msra.mxu0 0.0
    %1558 = vmatprep.subr.mxu0 0.0
    %1559 = vmatpush1.xpose.msra.mxu0 0.0
    %1560 = vmatprep.subr.mxu0 0.0
    %1561 = vmatpush1.xpose.msra.mxu0 0.0
    %1562 = vmatprep.subr.mxu0 0.0
    %1563 = vmatpush1.xpose.msra.mxu0 0.0
    %1564 = vmatprep.subr.mxu0 0.0
    %1565 = vmatpush1.xpose.msra.mxu0 0.0
    %1566 = vmatprep.subr.mxu0 0.0
    %1567 = vmatpush1.xpose.msra.mxu0 0.0
    %1568 = vmatprep.subr.mxu0 0.0
    %1569 = vmatpush1.xpose.msra.mxu0 0.0
    %1570 = vmatprep.subr.mxu0 0.0
    %1571 = vmatpush1.xpose.msra.mxu0 0.0
    %1572 = vmatprep.subr.mxu0 0.0
    %1573 = vmatpush1.xpose.msra.mxu0 %v1542
    %1574 = vmatprep.subr.mxu0 0.0
    %1575 = vmatpush1.xpose.msra.mxu0 %v1540
    %1576 = vmatprep.subr.mxu0 0.0
    %1577 = vmatpush2.xpose.msra.mxu0 0.0
    %1578 = vmatprep.subr.mxu0 0.0
    %1579 = vmatpush2.xpose.msra.mxu0 0.0
    %1580 = vmatprep.subr.mxu0 0.0
    %1581 = vmatpush2.xpose.msra.mxu0 0.0
    %1582 = vmatprep.subr.mxu0 0.0
    %1583 = vmatpush2.xpose.msra.mxu0 0.0
    %1584 = vmatprep.subr.mxu0 0.0
    %1585 = vmatpush2.xpose.msra.mxu0 0.0
    %1586 = vmatprep.subr.mxu0 0.0
    %1587 = vmatpush2.xpose.msra.mxu0 0.0
    %1588 = vmatprep.subr.mxu0 0.0
    %1589 = vmatpush2.xpose.msra.mxu0 0.0
    %1590 = vmatprep.subr.mxu0 0.0
    %1591 = vmatpush2.xpose.msra.mxu0 0.0
    %1592 = vmatprep.subr.mxu0 0.0
    %1593 = vmatpush2.xpose.msra.mxu0 0.0
    %1594 = vmatprep.subr.mxu0 0.0
    %1595 = vmatpush2.xpose.msra.mxu0 0.0
    %1596 = vmatprep.subr.mxu0 0.0
    %1597 = vmatpush2.xpose.msra.mxu0 0.0
    %1598 = vmatprep.subr.mxu0 0.0
    %1599 = vmatpush2.xpose.msra.mxu0 0.0
    %1600 = vmatprep.subr.mxu0 0.0
    %1601 = vmatpush2.xpose.msra.mxu0 0.0
    %1602 = vmatprep.subr.mxu0 0.0
    %1603 = vmatpush2.xpose.msra.mxu0 0.0
    %1604 = vmatprep.subr.mxu0 0.0
    %1605 = vmatpush2.xpose.msra.mxu0 0.0
    %1606 = vmatprep.subr.mxu0 0.0
    %1607 = vmatpush2.xpose.msra.mxu0 0.0
    %1608 = vmatprep.mubr.f32.mxu0 0.0
    %1609 = vmatmul.mubr.f32.gmra.mxu0 %v1536
    %v1610 = vpop.f32.mrf.mxu0
    %v1611 = vadd.f32 0.0, %v1610
    %v1612 = vpop.f32.mrf.mxu0
    %1613 = vmatprep.mubr.f32.mxu0 0.0
    %1614 = vmatmul.mubr.f32.gmra.mxu0 %v1538
    %v1615 = vpop.f32.mrf.mxu0
    %v1616 = vadd.f32 0.0, %v1615
    %v1617 = vpop.f32.mrf.mxu0
    %1618 = vdwg.mxu0
    %v1619 = vsel %vm164, %v1520, -1e+30
    %v1620 = vsel %vm164, %v1525, -1e+30
    %v1621 = vsel %vm164, %v1611, -1e+30
    %v1622 = vsel %vm164, %v1616, -1e+30
    %v1623 = vsel %vm450, %v1619, -inf
    %1624 = vmax.xlane.f32.xlu0 %v1623
    %v1625 = vpop.xlane.xlu0 %1624
    %v1626 = vsel %vm450, %v1620, -inf
    %1627 = vmax.xlane.f32.xlu0 %v1626
    %v1628 = vpop.xlane.xlu0 %1627
    %v1629 = vsel %vm450, %v1621, -inf
    %1630 = vmax.xlane.f32.xlu0 %v1629
    %v1631 = vpop.xlane.xlu0 %1630
    %v1632 = vsel %vm450, %v1622, -inf
    %1633 = vmax.xlane.f32.xlu0 %v1632
    %v1634 = vpop.xlane.xlu0 %1633
    %v1635 = vsub.f32 %v1619, %v1625
    %v1636 = vsub.f32 %v1620, %v1628
    %v1637 = vsub.f32 %v1621, %v1631
    %v1638 = vsub.f32 %v1622, %v1634
    %v1639 = vmul.f32 %v1635, 1.442695
    %v1640 = vpow.pop %v1639
    %v1641 = vmul.f32 %v1636, 1.442695
    %v1642 = vpow.pop %v1641
    %v1643 = vmul.f32 %v1637, 1.442695
    %v1644 = vpow.pop %v1643
    %v1645 = vmul.f32 %v1638, 1.442695
    %v1646 = vpow.pop %v1645
    %v1647 = vsel %vm450, %v1640, 0.0
    %1648 = vadd.xlane.f32.xlu0 %v1647
    %v1649 = vpop.xlane.xlu0 %1648
    %v1650 = vsel %vm450, %v1642, 0.0
    %1651 = vadd.xlane.f32.xlu0 %v1650
    %v1652 = vpop.xlane.xlu0 %1651
    %v1653 = vsel %vm450, %v1644, 0.0
    %1654 = vadd.xlane.f32.xlu0 %v1653
    %v1655 = vpop.xlane.xlu0 %1654
    %v1656 = vsel %vm450, %v1646, 0.0
    %1657 = vadd.xlane.f32.xlu0 %v1656
    %v1658 = vpop.xlane.xlu0 %1657
    %v1659 = vrcp.pop %v1649
    %v1660 = vmul.f32 %v1640, %v1659
    %v1661 = vrcp.pop %v1652
    %v1662 = vmul.f32 %v1642, %v1661
    %v1663 = vrcp.pop %v1655
    %v1664 = vmul.f32 %v1644, %v1663
    %v1665 = vrcp.pop %v1658
    %v1666 = vmul.f32 %v1646, %v1665
    %1667 = vrot.lane.b32.xlu0 %v416, 96
    %v1668 = vpop.permute.xlu0 %1667
    %1669 = vrot.lane.b32.xlu0 %v421, 96
    %v1670 = vpop.permute.xlu0 %1669
    %v1674 = vsel %vm450, %v1660, 0
    %v1677 = vsel %vm450, %v1662, 0
    %1679 = vmatprep.subr.mxu0 0.0
    %1680 = vmatpush1.msra.mxu0 0.0
    %1681 = vmatprep.subr.mxu0 0.0
    %1682 = vmatpush1.msra.mxu0 0.0
    %1683 = vmatprep.subr.mxu0 0.0
    %1684 = vmatpush1.msra.mxu0 0.0
    %1685 = vmatprep.subr.mxu0 0.0
    %1686 = vmatpush1.msra.mxu0 0.0
    %1687 = vmatprep.subr.mxu0 0.0
    %1688 = vmatpush1.msra.mxu0 0.0
    %1689 = vmatprep.subr.mxu0 0.0
    %1690 = vmatpush1.msra.mxu0 0.0
    %1691 = vmatprep.subr.mxu0 0.0
    %1692 = vmatpush1.msra.mxu0 0.0
    %1693 = vmatprep.subr.mxu0 0.0
    %1694 = vmatpush1.msra.mxu0 0.0
    %1695 = vmatprep.subr.mxu0 0.0
    %1696 = vmatpush1.msra.mxu0 0.0
    %1697 = vmatprep.subr.mxu0 0.0
    %1698 = vmatpush1.msra.mxu0 0.0
    %1699 = vmatprep.subr.mxu0 0.0
    %1700 = vmatpush1.msra.mxu0 0.0
    %1701 = vmatprep.subr.mxu0 0.0
    %1702 = vmatpush1.msra.mxu0 0.0
    %1703 = vmatprep.subr.mxu0 0.0
    %1704 = vmatpush1.msra.mxu0 0.0
    %1705 = vmatprep.subr.mxu0 0.0
    %1706 = vmatpush1.msra.mxu0 0.0
    %1707 = vmatprep.subr.mxu0 0.0
    %1708 = vmatpush1.msra.mxu0 %v1670
    %1709 = vmatprep.subr.mxu0 0.0
    %1710 = vmatpush1.msra.mxu0 %v1668
    %1711 = vmatprep.subr.mxu0 0.0
    %1712 = vmatpush2.msra.mxu0 0.0
    %1713 = vmatprep.subr.mxu0 0.0
    %1714 = vmatpush2.msra.mxu0 0.0
    %1715 = vmatprep.subr.mxu0 0.0
    %1716 = vmatpush2.msra.mxu0 0.0
    %1717 = vmatprep.subr.mxu0 0.0
    %1718 = vmatpush2.msra.mxu0 0.0
    %1719 = vmatprep.subr.mxu0 0.0
    %1720 = vmatpush2.msra.mxu0 0.0
    %1721 = vmatprep.subr.mxu0 0.0
    %1722 = vmatpush2.msra.mxu0 0.0
    %1723 = vmatprep.subr.mxu0 0.0
    %1724 = vmatpush2.msra.mxu0 0.0
    %1725 = vmatprep.subr.mxu0 0.0
    %1726 = vmatpush2.msra.mxu0 0.0
    %1727 = vmatprep.subr.mxu0 0.0
    %1728 = vmatpush2.msra.mxu0 0.0
    %1729 = vmatprep.subr.mxu0 0.0
    %1730 = vmatpush2.msra.mxu0 0.0
    %1731 = vmatprep.subr.mxu0 0.0
    %1732 = vmatpush2.msra.mxu0 0.0
    %1733 = vmatprep.subr.mxu0 0.0
    %1734 = vmatpush2.msra.mxu0 0.0
    %1735 = vmatprep.subr.mxu0 0.0
    %1736 = vmatpush2.msra.mxu0 0.0
    %1737 = vmatprep.subr.mxu0 0.0
    %1738 = vmatpush2.msra.mxu0 0.0
    %1739 = vmatprep.subr.mxu0 0.0
    %1740 = vmatpush2.msra.mxu0 0.0
    %1741 = vmatprep.subr.mxu0 0.0
    %1742 = vmatpush2.msra.mxu0 0.0
    %1743 = vmatprep.mubr.f32.mxu0 0.0
    %1744 = vmatmul.mubr.f32.gmra.mxu0 %v1674
    %v1745 = vpop.f32.mrf.mxu0
    %v1746 = vadd.f32 0.0, %v1745
    %v1747 = vpop.f32.mrf.mxu0
    %1748 = vmatprep.mubr.f32.mxu0 0.0
    %1749 = vmatmul.mubr.f32.gmra.mxu0 %v1677
    %v1750 = vpop.f32.mrf.mxu0
    %v1751 = vadd.f32 0.0, %v1750
    %v1752 = vpop.f32.mrf.mxu0
    %1753 = vdwg.mxu0
    %1754 = vrot.lane.b32.xlu0 %v426, 96
    %v1755 = vpop.permute.xlu0 %1754
    %1756 = vrot.lane.b32.xlu0 %v431, 96
    %v1757 = vpop.permute.xlu0 %1756
    %v1761 = vsel %vm450, %v1664, 0
    %v1764 = vsel %vm450, %v1666, 0
    %1766 = vmatprep.subr.mxu0 0.0
    %1767 = vmatpush1.msra.mxu0 0.0
    %1768 = vmatprep.subr.mxu0 0.0
    %1769 = vmatpush1.msra.mxu0 0.0
    %1770 = vmatprep.subr.mxu0 0.0
    %1771 = vmatpush1.msra.mxu0 0.0
    %1772 = vmatprep.subr.mxu0 0.0
    %1773 = vmatpush1.msra.mxu0 0.0
    %1774 = vmatprep.subr.mxu0 0.0
    %1775 = vmatpush1.msra.mxu0 0.0
    %1776 = vmatprep.subr.mxu0 0.0
    %1777 = vmatpush1.msra.mxu0 0.0
    %1778 = vmatprep.subr.mxu0 0.0
    %1779 = vmatpush1.msra.mxu0 0.0
    %1780 = vmatprep.subr.mxu0 0.0
    %1781 = vmatpush1.msra.mxu0 0.0
    %1782 = vmatprep.subr.mxu0 0.0
    %1783 = vmatpush1.msra.mxu0 0.0
    %1784 = vmatprep.subr.mxu0 0.0
    %1785 = vmatpush1.msra.mxu0 0.0
    %1786 = vmatprep.subr.mxu0 0.0
    %1787 = vmatpush1.msra.mxu0 0.0
    %1788 = vmatprep.subr.mxu0 0.0
    %1789 = vmatpush1.msra.mxu0 0.0
    %1790 = vmatprep.subr.mxu0 0.0
    %1791 = vmatpush1.msra.mxu0 0.0
    %1792 = vmatprep.subr.mxu0 0.0
    %1793 = vmatpush1.msra.mxu0 0.0
    %1794 = vmatprep.subr.mxu0 0.0
    %1795 = vmatpush1.msra.mxu0 %v1757
    %1796 = vmatprep.subr.mxu0 0.0
    %1797 = vmatpush1.msra.mxu0 %v1755
    %1798 = vmatprep.subr.mxu0 0.0
    %1799 = vmatpush2.msra.mxu0 0.0
    %1800 = vmatprep.subr.mxu0 0.0
    %1801 = vmatpush2.msra.mxu0 0.0
    %1802 = vmatprep.subr.mxu0 0.0
    %1803 = vmatpush2.msra.mxu0 0.0
    %1804 = vmatprep.subr.mxu0 0.0
    %1805 = vmatpush2.msra.mxu0 0.0
    %1806 = vmatprep.subr.mxu0 0.0
    %1807 = vmatpush2.msra.mxu0 0.0
    %1808 = vmatprep.subr.mxu0 0.0
    %1809 = vmatpush2.msra.mxu0 0.0
    %1810 = vmatprep.subr.mxu0 0.0
    %1811 = vmatpush2.msra.mxu0 0.0
    %1812 = vmatprep.subr.mxu0 0.0
    %1813 = vmatpush2.msra.mxu0 0.0
    %1814 = vmatprep.subr.mxu0 0.0
    %1815 = vmatpush2.msra.mxu0 0.0
    %1816 = vmatprep.subr.mxu0 0.0
    %1817 = vmatpush2.msra.mxu0 0.0
    %1818 = vmatprep.subr.mxu0 0.0
    %1819 = vmatpush2.msra.mxu0 0.0
    %1820 = vmatprep.subr.mxu0 0.0
    %1821 = vmatpush2.msra.mxu0 0.0
    %1822 = vmatprep.subr.mxu0 0.0
    %1823 = vmatpush2.msra.mxu0 0.0
    %1824 = vmatprep.subr.mxu0 0.0
    %1825 = vmatpush2.msra.mxu0 0.0
    %1826 = vmatprep.subr.mxu0 0.0
    %1827 = vmatpush2.msra.mxu0 0.0
    %1828 = vmatprep.subr.mxu0 0.0
    %1829 = vmatpush2.msra.mxu0 0.0
    %1830 = vmatprep.mubr.f32.mxu0 0.0
    %1831 = vmatmul.mubr.f32.gmra.mxu0 %v1761
    %v1832 = vpop.f32.mrf.mxu0
    %v1833 = vadd.f32 0.0, %v1832
    %v1834 = vpop.f32.mrf.mxu0
    %1835 = vmatprep.mubr.f32.mxu0 0.0
    %1836 = vmatmul.mubr.f32.gmra.mxu0 %v1764
    %v1837 = vpop.f32.mrf.mxu0
    %v1838 = vadd.f32 0.0, %v1837
    %v1839 = vpop.f32.mrf.mxu0
    %1840 = vdwg.mxu0
    %v1842 = vsel %vm450, %v1746, 0
    %v1845 = vsel %vm450, %v1751, 0
    %v1848 = vsel %vm450, %v1833, 0
    %v1851 = vsel %vm450, %v1838, 0
    %1853 = vmatprep.subr.mxu0 0.0
    %1854 = vmatpush1.msra.mxu0 0.0
    %1855 = vmatprep.subr.mxu0 0.0
    %1856 = vmatpush1.msra.mxu0 0.0
    %1857 = vmatprep.subr.mxu0 0.0
    %1858 = vmatpush1.msra.mxu0 0.0
    %1859 = vmatprep.subr.mxu0 0.0
    %1860 = vmatpush1.msra.mxu0 0.0
    %1861 = vmatprep.subr.mxu0 0.0
    %1862 = vmatpush1.msra.mxu0 0.0
    %1863 = vmatprep.subr.mxu0 0.0
    %1864 = vmatpush1.msra.mxu0 0.0
    %1865 = vmatprep.subr.mxu0 0.0
    %1866 = vmatpush1.msra.mxu0 0.0
    %1867 = vmatprep.subr.mxu0 0.0
    %1868 = vmatpush1.msra.mxu0 0.0
    %1869 = vmatprep.subr.mxu0 0.0
    %1870 = vmatpush1.msra.mxu0 0.0
    %1871 = vmatprep.subr.mxu0 0.0
    %1872 = vmatpush1.msra.mxu0 0.0
    %1873 = vmatprep.subr.mxu0 0.0
    %1874 = vmatpush1.msra.mxu0 0.0
    %1875 = vmatprep.subr.mxu0 0.0
    %1876 = vmatpush1.msra.mxu0 0.0
    %1877 = vmatprep.subr.mxu0 0.0
    %1878 = vmatpush1.msra.mxu0 0.0
    %1879 = vmatprep.subr.mxu0 0.0
    %1880 = vmatpush1.msra.mxu0 0.0
    %1881 = vmatprep.subr.mxu0 0.0
    %1882 = vmatpush1.msra.mxu0 %v449
    %1883 = vmatprep.subr.mxu0 0.0
    %1884 = vmatpush1.msra.mxu0 %v448
    %1885 = vmatprep.subr.mxu0 0.0
    %1886 = vmatpush2.msra.mxu0 0.0
    %1887 = vmatprep.subr.mxu0 0.0
    %1888 = vmatpush2.msra.mxu0 0.0
    %1889 = vmatprep.subr.mxu0 0.0
    %1890 = vmatpush2.msra.mxu0 0.0
    %1891 = vmatprep.subr.mxu0 0.0
    %1892 = vmatpush2.msra.mxu0 0.0
    %1893 = vmatprep.subr.mxu0 0.0
    %1894 = vmatpush2.msra.mxu0 0.0
    %1895 = vmatprep.subr.mxu0 0.0
    %1896 = vmatpush2.msra.mxu0 0.0
    %1897 = vmatprep.subr.mxu0 0.0
    %1898 = vmatpush2.msra.mxu0 0.0
    %1899 = vmatprep.subr.mxu0 0.0
    %1900 = vmatpush2.msra.mxu0 0.0
    %1901 = vmatprep.subr.mxu0 0.0
    %1902 = vmatpush2.msra.mxu0 0.0
    %1903 = vmatprep.subr.mxu0 0.0
    %1904 = vmatpush2.msra.mxu0 0.0
    %1905 = vmatprep.subr.mxu0 0.0
    %1906 = vmatpush2.msra.mxu0 0.0
    %1907 = vmatprep.subr.mxu0 0.0
    %1908 = vmatpush2.msra.mxu0 0.0
    %1909 = vmatprep.subr.mxu0 0.0
    %1910 = vmatpush2.msra.mxu0 0.0
    %1911 = vmatprep.subr.mxu0 0.0
    %1912 = vmatpush2.msra.mxu0 0.0
    %1913 = vmatprep.subr.mxu0 0.0
    %1914 = vmatpush2.msra.mxu0 0.0
    %1915 = vmatprep.subr.mxu0 0.0
    %1916 = vmatpush2.msra.mxu0 0.0
    %1917 = vmatprep.mubr.f32.mxu0 0.0
    %1918 = vmatmul.mubr.f32.gmra.mxu0 %v1842
    %v1919 = vpop.f32.mrf.mxu0
    %v1920 = vadd.f32 0.0, %v1919
    %v1921 = vpop.f32.mrf.mxu0
    %1922 = vmatprep.mubr.f32.mxu0 0.0
    %1923 = vmatmul.mubr.f32.gmra.mxu0 %v1845
    %v1924 = vpop.f32.mrf.mxu0
    %v1925 = vadd.f32 0.0, %v1924
    %v1926 = vpop.f32.mrf.mxu0
    %1927 = vmatprep.mubr.f32.mxu0 0.0
    %1928 = vmatmul.mubr.f32.gmra.mxu0 %v1848
    %v1929 = vpop.f32.mrf.mxu0
    %v1930 = vadd.f32 0.0, %v1929
    %v1931 = vpop.f32.mrf.mxu0
    %1932 = vmatprep.mubr.f32.mxu0 0.0
    %1933 = vmatmul.mubr.f32.gmra.mxu0 %v1851
    %v1934 = vpop.f32.mrf.mxu0
    %v1935 = vadd.f32 0.0, %v1934
    %v1936 = vpop.f32.mrf.mxu0
    %1937 = vdwg.mxu0
    %v1938 = vadd.f32 %v1419, %v1920
    %v1939 = vadd.f32 %v1424, %v1925
    %v1940 = vadd.f32 %v1429, %v1930
    %v1941 = vadd.f32 %v1434, %v1935
    %v1942 = vlaneseq
    %v1943 = vshrl.u32 %v1942, 7
    %v1944 = vsub.s32 1, %v1943
    %v1945 = vrot.slane %v165, %v1944
    %v1946 = vadd.f32 %v1938, %v1945
    %v1947 = vadd.f32 %v1939, %v1945
    %v1948 = vadd.f32 %v1940, %v1945
    %v1949 = vadd.f32 %v1941, %v1945
    %v1950 = vadd.f32 %v160, %v1946
    %v1951 = vadd.f32 %v161, %v1947
    %v1952 = vadd.f32 %v162, %v1948
    %v1953 = vadd.f32 %v163, %v1949
    %1954 = vadd.xlane.f32.xlu0 %v1950
    %v1955 = vpop.xlane.xlu0 %1954
    %1956 = vadd.xlane.f32.xlu0 %v1951
    %v1957 = vpop.xlane.xlu0 %1956
    %1958 = vadd.xlane.f32.xlu0 %v1952
    %v1959 = vpop.xlane.xlu0 %1958
    %1960 = vadd.xlane.f32.xlu0 %v1953
    %v1961 = vpop.xlane.xlu0 %1960
    %v1962 = vmul.f32 %v1955, 0.020833334
    %v1963 = vmul.f32 %v1957, 0.020833334
    %v1964 = vmul.f32 %v1959, 0.020833334
    %v1965 = vmul.f32 %v1961, 0.020833334
    %v1966 = vsub.f32 %v1950, %v1962
    %v1967 = vsub.f32 %v1951, %v1963
    %v1968 = vsub.f32 %v1952, %v1964
    %v1969 = vsub.f32 %v1953, %v1965
    %v1970 = vsel %vm38, 1, 0
    %vm1971 = vcmp.eq.s32.totalorder %v1970, 1
    %v1972 = vsel %vm1971, %v1966, 0.0
    %v1973 = vsel %vm1971, %v1967, 0.0
    %v1974 = vsel %vm1971, %v1968, 0.0
    %v1975 = vsel %vm1971, %v1969, 0.0
    %v1976 = vmul.f32 %v1972, %v1972
    %v1977 = vmul.f32 %v1973, %v1973
    %v1978 = vmul.f32 %v1974, %v1974
    %v1979 = vmul.f32 %v1975, %v1975
    %1980 = vadd.xlane.f32.xlu0 %v1976
    %v1981 = vpop.xlane.xlu0 %1980
    %1982 = vadd.xlane.f32.xlu0 %v1977
    %v1983 = vpop.xlane.xlu0 %1982
    %1984 = vadd.xlane.f32.xlu0 %v1978
    %v1985 = vpop.xlane.xlu0 %1984
    %1986 = vadd.xlane.f32.xlu0 %v1979
    %v1987 = vpop.xlane.xlu0 %1986
    %v1988 = vmul.f32 %v1981, 0.020833334
    %v1989 = vmul.f32 %v1983, 0.020833334
    %v1990 = vmul.f32 %v1985, 0.020833334
    %v1991 = vmul.f32 %v1987, 0.020833334
    %v1992 = vadd.f32 %v1988, 1e-05
    %v1993 = vadd.f32 %v1989, 1e-05
    %v1994 = vadd.f32 %v1990, 1e-05
    %v1995 = vadd.f32 %v1991, 1e-05
    %v1996 = vrsqrt.pop %v1992
    %v1997 = vrsqrt.pop %v1993
    %v1998 = vrsqrt.pop %v1994
    %v1999 = vrsqrt.pop %v1995
    %v2000 = vmul.f32 %v1972, %v1996
    %v2001 = vmul.f32 %v1973, %v1997
    %v2002 = vmul.f32 %v1974, %v1998
    %v2003 = vmul.f32 %v1975, %v1999
    %v2004 = vlaneseq
    %v2005 = vshrl.u32 %v2004, 7
    %v2006 = vsub.s32 2, %v2005
    %v2007 = vrot.slane %v165, %v2006
    %v2008 = vmul.f32 %v2000, %v2007
    %v2009 = vmul.f32 %v2001, %v2007
    %v2010 = vmul.f32 %v2002, %v2007
    %v2011 = vmul.f32 %v2003, %v2007
    %v2012 = vlaneseq
    %v2013 = vshrl.u32 %v2012, 7
    %v2014 = vsub.s32 3, %v2013
    %v2015 = vrot.slane %v165, %v2014
    %v2016 = vadd.f32 %v2008, %v2015
    %v2017 = vadd.f32 %v2009, %v2015
    %v2018 = vadd.f32 %v2010, %v2015
    %v2019 = vadd.f32 %v2011, %v2015
    %v2020 = vld [vmem:[%s5] sm:$0xff]
    %v2021 = vld [vmem:[%s5 + $0x8] sm:$0xff]
    %v2022 = vld [vmem:[%s5 + $0x10] sm:$0xff]
    %v2023 = vld [vmem:[%s5 + $0x18] sm:$0xff]
    %v2024 = vld [vmem:[%s5 + $0x20] sm:$0xff]
    %v2025 = vld [vmem:[%s5 + $0x28] sm:$0xff]
    %v2026 = vld [vmem:[%s5 + $0x30] sm:$0xff]
    %v2027 = vld [vmem:[%s5 + $0x38] sm:$0xff]
    %v2028 = vld [vmem:[%s5 + $0x40] sm:$0xff]
    %v2029 = vld [vmem:[%s5 + $0x48] sm:$0xff]
    %v2030 = vld [vmem:[%s5 + $0x50] sm:$0xff]
    %v2031 = vld [vmem:[%s5 + $0x58] sm:$0xff]
    %v2032 = vld [vmem:[%s5 + $0x60] sm:$0xff]
    %v2033 = vld [vmem:[%s5 + $0x68] sm:$0xff]
    %v2034 = vld [vmem:[%s5 + $0x70] sm:$0xff]
    %v2035 = vld [vmem:[%s5 + $0x78] sm:$0xff]
    %v2036 = vunpack.c.l.bf16 %v2020
    %v2037 = vunpack.c.h.bf16 %v2020
    %v2038 = vunpack.c.l.bf16 %v2021
    %v2039 = vunpack.c.h.bf16 %v2021
    %v2040 = vunpack.c.l.bf16 %v2022
    %v2041 = vunpack.c.h.bf16 %v2022
    %v2042 = vunpack.c.l.bf16 %v2023
    %v2043 = vunpack.c.h.bf16 %v2023
    %v2044 = vunpack.c.l.bf16 %v2024
    %v2045 = vunpack.c.h.bf16 %v2024
    %v2046 = vunpack.c.l.bf16 %v2025
    %v2047 = vunpack.c.h.bf16 %v2025
    %v2048 = vunpack.c.l.bf16 %v2026
    %v2049 = vunpack.c.h.bf16 %v2026
    %v2050 = vunpack.c.l.bf16 %v2027
    %v2051 = vunpack.c.h.bf16 %v2027
    %v2052 = vunpack.c.l.bf16 %v2028
    %v2053 = vunpack.c.h.bf16 %v2028
    %v2054 = vunpack.c.l.bf16 %v2029
    %v2055 = vunpack.c.h.bf16 %v2029
    %v2056 = vunpack.c.l.bf16 %v2030
    %v2057 = vunpack.c.h.bf16 %v2030
    %v2058 = vunpack.c.l.bf16 %v2031
    %v2059 = vunpack.c.h.bf16 %v2031
    %v2060 = vunpack.c.l.bf16 %v2032
    %v2061 = vunpack.c.h.bf16 %v2032
    %v2062 = vunpack.c.l.bf16 %v2033
    %v2063 = vunpack.c.h.bf16 %v2033
    %v2064 = vunpack.c.l.bf16 %v2034
    %v2065 = vunpack.c.h.bf16 %v2034
    %v2066 = vunpack.c.l.bf16 %v2035
    %v2067 = vunpack.c.h.bf16 %v2035
    %v2068 = vlaneseq
    %v2069 = vshrl.u32 %v2068, 7
    %v2070 = vsub.s32 4, %v2069
    %v2071 = vrot.slane %v165, %v2070
    %v2072 = vlaneseq
    %v2073 = vshrl.u32 %v2072, 7
    %v2074 = vsub.s32 4, %v2073
    %v2075 = vrot.slane %v166, %v2074
    %2076 = vmatprep.subr.mxu0 %v2067
    %2077 = vmatpush1.msra.mxu0 %v2066
    %2078 = vmatprep.subr.mxu0 %v2065
    %2079 = vmatpush1.msra.mxu0 %v2064
    %2080 = vmatprep.subr.mxu0 %v2063
    %2081 = vmatpush1.msra.mxu0 %v2062
    %2082 = vmatprep.subr.mxu0 %v2061
    %2083 = vmatpush1.msra.mxu0 %v2060
    %2084 = vmatprep.subr.mxu0 %v2059
    %2085 = vmatpush1.msra.mxu0 %v2058
    %2086 = vmatprep.subr.mxu0 %v2057
    %2087 = vmatpush1.msra.mxu0 %v2056
    %2088 = vmatprep.subr.mxu0 %v2055
    %2089 = vmatpush1.msra.mxu0 %v2054
    %2090 = vmatprep.subr.mxu0 %v2053
    %2091 = vmatpush1.msra.mxu0 %v2052
    %2092 = vmatprep.subr.mxu0 %v2051
    %2093 = vmatpush1.msra.mxu0 %v2050
    %2094 = vmatprep.subr.mxu0 %v2049
    %2095 = vmatpush1.msra.mxu0 %v2048
    %2096 = vmatprep.subr.mxu0 %v2047
    %2097 = vmatpush1.msra.mxu0 %v2046
    %2098 = vmatprep.subr.mxu0 %v2045
    %2099 = vmatpush1.msra.mxu0 %v2044
    %2100 = vmatprep.subr.mxu0 %v2043
    %2101 = vmatpush1.msra.mxu0 %v2042
    %2102 = vmatprep.subr.mxu0 %v2041
    %2103 = vmatpush1.msra.mxu0 %v2040
    %2104 = vmatprep.subr.mxu0 %v2039
    %2105 = vmatpush1.msra.mxu0 %v2038
    %2106 = vmatprep.subr.mxu0 %v2037
    %2107 = vmatpush1.msra.mxu0 %v2036
    %2108 = vmatprep.subr.mxu0 0.0
    %2109 = vmatpush2.msra.mxu0 0.0
    %2110 = vmatprep.subr.mxu0 0.0
    %2111 = vmatpush2.msra.mxu0 0.0
    %2112 = vmatprep.subr.mxu0 0.0
    %2113 = vmatpush2.msra.mxu0 0.0
    %2114 = vmatprep.subr.mxu0 0.0
    %2115 = vmatpush2.msra.mxu0 0.0
    %2116 = vmatprep.subr.mxu0 0.0
    %2117 = vmatpush2.msra.mxu0 0.0
    %2118 = vmatprep.subr.mxu0 0.0
    %2119 = vmatpush2.msra.mxu0 0.0
    %2120 = vmatprep.subr.mxu0 0.0
    %2121 = vmatpush2.msra.mxu0 0.0
    %2122 = vmatprep.subr.mxu0 0.0
    %2123 = vmatpush2.msra.mxu0 0.0
    %2124 = vmatprep.subr.mxu0 0.0
    %2125 = vmatpush2.msra.mxu0 0.0
    %2126 = vmatprep.subr.mxu0 0.0
    %2127 = vmatpush2.msra.mxu0 0.0
    %2128 = vmatprep.subr.mxu0 0.0
    %2129 = vmatpush2.msra.mxu0 0.0
    %2130 = vmatprep.subr.mxu0 0.0
    %2131 = vmatpush2.msra.mxu0 0.0
    %2132 = vmatprep.subr.mxu0 0.0
    %2133 = vmatpush2.msra.mxu0 0.0
    %2134 = vmatprep.subr.mxu0 0.0
    %2135 = vmatpush2.msra.mxu0 0.0
    %2136 = vmatprep.subr.mxu0 0.0
    %2137 = vmatpush2.msra.mxu0 0.0
    %2138 = vmatprep.subr.mxu0 0.0
    %2139 = vmatpush2.msra.mxu0 0.0
    %2140 = vmatprep.mubr.f32.mxu0 0.0
    %2141 = vmatmul.mubr.f32.gmra.mxu0 %v2016
    %v2142 = vpop.f32.mrf.mxu0
    %v2143 = vadd.f32 %v2071, %v2142
    %v2144 = vpop.f32.mrf.mxu0
    %v2145 = vadd.f32 %v2075, %v2144
    %2146 = vmatprep.mubr.f32.mxu0 0.0
    %2147 = vmatmul.mubr.f32.gmra.mxu0 %v2017
    %v2148 = vpop.f32.mrf.mxu0
    %v2149 = vadd.f32 %v2071, %v2148
    %v2150 = vpop.f32.mrf.mxu0
    %v2151 = vadd.f32 %v2075, %v2150
    %2152 = vmatprep.mubr.f32.mxu0 0.0
    %2153 = vmatmul.mubr.f32.gmra.mxu0 %v2018
    %v2154 = vpop.f32.mrf.mxu0
    %v2155 = vadd.f32 %v2071, %v2154
    %v2156 = vpop.f32.mrf.mxu0
    %v2157 = vadd.f32 %v2075, %v2156
    %2158 = vmatprep.mubr.f32.mxu0 0.0
    %2159 = vmatmul.mubr.f32.gmra.mxu0 %v2019
    %v2160 = vpop.f32.mrf.mxu0
    %v2161 = vadd.f32 %v2071, %v2160
    %v2162 = vpop.f32.mrf.mxu0
    %v2163 = vadd.f32 %v2075, %v2162
    %2164 = vdwg.mxu0
    %v2165 = vmul.f32 %v2143, 0.5
    %v2166 = vmul.f32 %v2145, 0.5
    %v2167 = vmul.f32 %v2149, 0.5
    %v2168 = vmul.f32 %v2151, 0.5
    %v2169 = vmul.f32 %v2155, 0.5
    %v2170 = vmul.f32 %v2157, 0.5
    %v2171 = vmul.f32 %v2161, 0.5
    %v2172 = vmul.f32 %v2163, 0.5
    %v2173 = vmul.f32 %v2143, 0.70710677
    %v2174 = vmul.f32 %v2145, 0.70710677
    %v2175 = vmul.f32 %v2149, 0.70710677
    %v2176 = vmul.f32 %v2151, 0.70710677
    %v2177 = vmul.f32 %v2155, 0.70710677
    %v2178 = vmul.f32 %v2157, 0.70710677
    %v2179 = vmul.f32 %v2161, 0.70710677
    %v2180 = vmul.f32 %v2163, 0.70710677
    %v2181 = verf.f32.pop %v2173
    %v2182 = verf.f32.pop %v2174
    %v2183 = verf.f32.pop %v2175
    %v2184 = verf.f32.pop %v2176
    %v2185 = verf.f32.pop %v2177
    %v2186 = verf.f32.pop %v2178
    %v2187 = verf.f32.pop %v2179
    %v2188 = verf.f32.pop %v2180
    %v2189 = vadd.f32 %v2181, 1.0
    %v2190 = vadd.f32 %v2182, 1.0
    %v2191 = vadd.f32 %v2183, 1.0
    %v2192 = vadd.f32 %v2184, 1.0
    %v2193 = vadd.f32 %v2185, 1.0
    %v2194 = vadd.f32 %v2186, 1.0
    %v2195 = vadd.f32 %v2187, 1.0
    %v2196 = vadd.f32 %v2188, 1.0
    %v2197 = vmul.f32 %v2165, %v2189
    %v2198 = vmul.f32 %v2166, %v2190
    %v2199 = vmul.f32 %v2167, %v2191
    %v2200 = vmul.f32 %v2168, %v2192
    %v2201 = vmul.f32 %v2169, %v2193
    %v2202 = vmul.f32 %v2170, %v2194
    %v2203 = vmul.f32 %v2171, %v2195
    %v2204 = vmul.f32 %v2172, %v2196
    %v2205 = vld [vmem:[%s6] sm:$0xf]
    %v2206 = vld [vmem:[%s6 + $0x4] sm:$0xf]
    %v2207 = vld [vmem:[%s6 + $0x8] sm:$0xf]
    %v2208 = vld [vmem:[%s6 + $0xc] sm:$0xf]
    %v2209 = vld [vmem:[%s6 + $0x10] sm:$0xf]
    %v2210 = vld [vmem:[%s6 + $0x14] sm:$0xf]
    %v2211 = vld [vmem:[%s6 + $0x18] sm:$0xf]
    %v2212 = vld [vmem:[%s6 + $0x1c] sm:$0xf]
    %v2213 = vld [vmem:[%s6 + $0x20] sm:$0xf]
    %v2214 = vld [vmem:[%s6 + $0x24] sm:$0xf]
    %v2215 = vld [vmem:[%s6 + $0x28] sm:$0xf]
    %v2216 = vld [vmem:[%s6 + $0x2c] sm:$0xf]
    %v2217 = vld [vmem:[%s6 + $0x30] sm:$0xf]
    %v2218 = vld [vmem:[%s6 + $0x34] sm:$0xf]
    %v2219 = vld [vmem:[%s6 + $0x38] sm:$0xf]
    %v2220 = vld [vmem:[%s6 + $0x3c] sm:$0xf]
    %v2221 = vld [vmem:[%s6 + $0x40] sm:$0xf]
    %v2222 = vld [vmem:[%s6 + $0x44] sm:$0xf]
    %v2223 = vld [vmem:[%s6 + $0x48] sm:$0xf]
    %v2224 = vld [vmem:[%s6 + $0x4c] sm:$0xf]
    %v2225 = vld [vmem:[%s6 + $0x50] sm:$0xf]
    %v2226 = vld [vmem:[%s6 + $0x54] sm:$0xf]
    %v2227 = vld [vmem:[%s6 + $0x58] sm:$0xf]
    %v2228 = vld [vmem:[%s6 + $0x5c] sm:$0xf]
    %v2229 = vld [vmem:[%s6 + $0x60] sm:$0xf]
    %v2230 = vld [vmem:[%s6 + $0x64] sm:$0xf]
    %v2231 = vld [vmem:[%s6 + $0x68] sm:$0xf]
    %v2232 = vld [vmem:[%s6 + $0x6c] sm:$0xf]
    %v2233 = vld [vmem:[%s6 + $0x70] sm:$0xf]
    %v2234 = vld [vmem:[%s6 + $0x74] sm:$0xf]
    %v2235 = vld [vmem:[%s6 + $0x78] sm:$0xf]
    %v2236 = vld [vmem:[%s6 + $0x7c] sm:$0xf]
    %v2237 = vunpack.c.l.bf16 %v2205
    %v2238 = vunpack.c.l.bf16 %v2206
    %v2239 = vunpack.c.l.bf16 %v2207
    %v2240 = vunpack.c.l.bf16 %v2208
    %v2241 = vunpack.c.l.bf16 %v2209
    %v2242 = vunpack.c.l.bf16 %v2210
    %v2243 = vunpack.c.l.bf16 %v2211
    %v2244 = vunpack.c.l.bf16 %v2212
    %v2245 = vunpack.c.l.bf16 %v2213
    %v2246 = vunpack.c.l.bf16 %v2214
    %v2247 = vunpack.c.l.bf16 %v2215
    %v2248 = vunpack.c.l.bf16 %v2216
    %v2249 = vunpack.c.l.bf16 %v2217
    %v2250 = vunpack.c.l.bf16 %v2218
    %v2251 = vunpack.c.l.bf16 %v2219
    %v2252 = vunpack.c.l.bf16 %v2220
    %v2253 = vunpack.c.l.bf16 %v2221
    %v2254 = vunpack.c.l.bf16 %v2222
    %v2255 = vunpack.c.l.bf16 %v2223
    %v2256 = vunpack.c.l.bf16 %v2224
    %v2257 = vunpack.c.l.bf16 %v2225
    %v2258 = vunpack.c.l.bf16 %v2226
    %v2259 = vunpack.c.l.bf16 %v2227
    %v2260 = vunpack.c.l.bf16 %v2228
    %v2261 = vunpack.c.l.bf16 %v2229
    %v2262 = vunpack.c.l.bf16 %v2230
    %v2263 = vunpack.c.l.bf16 %v2231
    %v2264 = vunpack.c.l.bf16 %v2232
    %v2265 = vunpack.c.l.bf16 %v2233
    %v2266 = vunpack.c.l.bf16 %v2234
    %v2267 = vunpack.c.l.bf16 %v2235
    %v2268 = vunpack.c.l.bf16 %v2236
    %v2269 = vlaneseq
    %v2270 = vshrl.u32 %v2269, 7
    %v2271 = vsub.s32 5, %v2270
    %v2272 = vrot.slane %v165, %v2271
    %2273 = vmatprep.subr.mxu0 0.0
    %2274 = vmatpush1.msra.mxu0 %v2252
    %2275 = vmatprep.subr.mxu0 0.0
    %2276 = vmatpush1.msra.mxu0 %v2251
    %2277 = vmatprep.subr.mxu0 0.0
    %2278 = vmatpush1.msra.mxu0 %v2250
    %2279 = vmatprep.subr.mxu0 0.0
    %2280 = vmatpush1.msra.mxu0 %v2249
    %2281 = vmatprep.subr.mxu0 0.0
    %2282 = vmatpush1.msra.mxu0 %v2248
    %2283 = vmatprep.subr.mxu0 0.0
    %2284 = vmatpush1.msra.mxu0 %v2247
    %2285 = vmatprep.subr.mxu0 0.0
    %2286 = vmatpush1.msra.mxu0 %v2246
    %2287 = vmatprep.subr.mxu0 0.0
    %2288 = vmatpush1.msra.mxu0 %v2245
    %2289 = vmatprep.subr.mxu0 0.0
    %2290 = vmatpush1.msra.mxu0 %v2244
    %2291 = vmatprep.subr.mxu0 0.0
    %2292 = vmatpush1.msra.mxu0 %v2243
    %2293 = vmatprep.subr.mxu0 0.0
    %2294 = vmatpush1.msra.mxu0 %v2242
    %2295 = vmatprep.subr.mxu0 0.0
    %2296 = vmatpush1.msra.mxu0 %v2241
    %2297 = vmatprep.subr.mxu0 0.0
    %2298 = vmatpush1.msra.mxu0 %v2240
    %2299 = vmatprep.subr.mxu0 0.0
    %2300 = vmatpush1.msra.mxu0 %v2239
    %2301 = vmatprep.subr.mxu0 0.0
    %2302 = vmatpush1.msra.mxu0 %v2238
    %2303 = vmatprep.subr.mxu0 0.0
    %2304 = vmatpush1.msra.mxu0 %v2237
    %2305 = vmatprep.subr.mxu0 0.0
    %2306 = vmatpush2.msra.mxu0 %v2268
    %2307 = vmatprep.subr.mxu0 0.0
    %2308 = vmatpush2.msra.mxu0 %v2267
    %2309 = vmatprep.subr.mxu0 0.0
    %2310 = vmatpush2.msra.mxu0 %v2266
    %2311 = vmatprep.subr.mxu0 0.0
    %2312 = vmatpush2.msra.mxu0 %v2265
    %2313 = vmatprep.subr.mxu0 0.0
    %2314 = vmatpush2.msra.mxu0 %v2264
    %2315 = vmatprep.subr.mxu0 0.0
    %2316 = vmatpush2.msra.mxu0 %v2263
    %2317 = vmatprep.subr.mxu0 0.0
    %2318 = vmatpush2.msra.mxu0 %v2262
    %2319 = vmatprep.subr.mxu0 0.0
    %2320 = vmatpush2.msra.mxu0 %v2261
    %2321 = vmatprep.subr.mxu0 0.0
    %2322 = vmatpush2.msra.mxu0 %v2260
    %2323 = vmatprep.subr.mxu0 0.0
    %2324 = vmatpush2.msra.mxu0 %v2259
    %2325 = vmatprep.subr.mxu0 0.0
    %2326 = vmatpush2.msra.mxu0 %v2258
    %2327 = vmatprep.subr.mxu0 0.0
    %2328 = vmatpush2.msra.mxu0 %v2257
    %2329 = vmatprep.subr.mxu0 0.0
    %2330 = vmatpush2.msra.mxu0 %v2256
    %2331 = vmatprep.subr.mxu0 0.0
    %2332 = vmatpush2.msra.mxu0 %v2255
    %2333 = vmatprep.subr.mxu0 0.0
    %2334 = vmatpush2.msra.mxu0 %v2254
    %2335 = vmatprep.subr.mxu0 0.0
    %2336 = vmatpush2.msra.mxu0 %v2253
    %2337 = vmatprep.mubr.f32.mxu0 %v2198
    %2338 = vmatmul.mubr.f32.gmra.mxu0 %v2197
    %v2339 = vpop.f32.mrf.mxu0
    %v2340 = vadd.f32 %v2272, %v2339
    %v2341 = vpop.f32.mrf.mxu0
    %2342 = vmatprep.mubr.f32.mxu0 %v2200
    %2343 = vmatmul.mubr.f32.gmra.mxu0 %v2199
    %v2344 = vpop.f32.mrf.mxu0
    %v2345 = vadd.f32 %v2272, %v2344
    %v2346 = vpop.f32.mrf.mxu0
    %2347 = vmatprep.mubr.f32.mxu0 %v2202
    %2348 = vmatmul.mubr.f32.gmra.mxu0 %v2201
    %v2349 = vpop.f32.mrf.mxu0
    %v2350 = vadd.f32 %v2272, %v2349
    %v2351 = vpop.f32.mrf.mxu0
    %2352 = vmatprep.mubr.f32.mxu0 %v2204
    %2353 = vmatmul.mubr.f32.gmra.mxu0 %v2203
    %v2354 = vpop.f32.mrf.mxu0
    %v2355 = vadd.f32 %v2272, %v2354
    %v2356 = vpop.f32.mrf.mxu0
    %2357 = vdwg.mxu0
    %v2358 = vadd.f32 %v2016, %v2340
    %v2359 = vadd.f32 %v2017, %v2345
    %v2360 = vadd.f32 %v2018, %v2350
    %v2361 = vadd.f32 %v2019, %v2355
    %2362 = vadd.xlane.f32.xlu0 %v2358
    %v2363 = vpop.xlane.xlu0 %2362
    %2364 = vadd.xlane.f32.xlu0 %v2359
    %v2365 = vpop.xlane.xlu0 %2364
    %2366 = vadd.xlane.f32.xlu0 %v2360
    %v2367 = vpop.xlane.xlu0 %2366
    %2368 = vadd.xlane.f32.xlu0 %v2361
    %v2369 = vpop.xlane.xlu0 %2368
    %v2370 = vmul.f32 %v2363, 0.020833334
    %v2371 = vmul.f32 %v2365, 0.020833334
    %v2372 = vmul.f32 %v2367, 0.020833334
    %v2373 = vmul.f32 %v2369, 0.020833334
    %v2374 = vsub.f32 %v2358, %v2370
    %v2375 = vsub.f32 %v2359, %v2371
    %v2376 = vsub.f32 %v2360, %v2372
    %v2377 = vsub.f32 %v2361, %v2373
    %v2378 = vsel %vm1971, %v2374, 0.0
    %v2379 = vsel %vm1971, %v2375, 0.0
    %v2380 = vsel %vm1971, %v2376, 0.0
    %v2381 = vsel %vm1971, %v2377, 0.0
    %v2382 = vmul.f32 %v2378, %v2378
    %v2383 = vmul.f32 %v2379, %v2379
    %v2384 = vmul.f32 %v2380, %v2380
    %v2385 = vmul.f32 %v2381, %v2381
    %2386 = vadd.xlane.f32.xlu0 %v2382
    %v2387 = vpop.xlane.xlu0 %2386
    %2388 = vadd.xlane.f32.xlu0 %v2383
    %v2389 = vpop.xlane.xlu0 %2388
    %2390 = vadd.xlane.f32.xlu0 %v2384
    %v2391 = vpop.xlane.xlu0 %2390
    %2392 = vadd.xlane.f32.xlu0 %v2385
    %v2393 = vpop.xlane.xlu0 %2392
    %v2394 = vmul.f32 %v2387, 0.020833334
    %v2395 = vmul.f32 %v2389, 0.020833334
    %v2396 = vmul.f32 %v2391, 0.020833334
    %v2397 = vmul.f32 %v2393, 0.020833334
    %v2398 = vadd.f32 %v2394, 1e-05
    %v2399 = vadd.f32 %v2395, 1e-05
    %v2400 = vadd.f32 %v2396, 1e-05
    %v2401 = vadd.f32 %v2397, 1e-05
    %v2402 = vrsqrt.pop %v2398
    %v2403 = vrsqrt.pop %v2399
    %v2404 = vrsqrt.pop %v2400
    %v2405 = vrsqrt.pop %v2401
    %v2406 = vmul.f32 %v2378, %v2402
    %v2407 = vmul.f32 %v2379, %v2403
    %v2408 = vmul.f32 %v2380, %v2404
    %v2409 = vmul.f32 %v2381, %v2405
    %v2410 = vlaneseq
    %v2411 = vshrl.u32 %v2410, 7
    %v2412 = vsub.s32 6, %v2411
    %v2413 = vrot.slane %v165, %v2412
    %v2414 = vmul.f32 %v2406, %v2413
    %v2415 = vmul.f32 %v2407, %v2413
    %v2416 = vmul.f32 %v2408, %v2413
    %v2417 = vmul.f32 %v2409, %v2413
    %v2418 = vlaneseq
    %v2419 = vshrl.u32 %v2418, 7
    %v2420 = vsub.s32 7, %v2419
    %v2421 = vrot.slane %v165, %v2420
    %v2422 = vadd.f32 %v2414, %v2421
    %v2423 = vadd.f32 %v2415, %v2421
    %v2424 = vadd.f32 %v2416, %v2421
    %v2425 = vadd.f32 %v2417, %v2421
    %s2426 = scalar_lea.vmem %s7, 24
    %v2427 = vld [vmem:[%s2426] sm:$0xff]
    %v2428 = vld [vmem:[%s2426 + $0x8] sm:$0xff]
    %v2429 = vld [vmem:[%s2426 + $0x10] sm:$0xff]
    %s2430 = scalar_lea.vmem %s3, 192
    %v2431 = vld [vmem:[%s2430] sm:$0xff]
    %v2432 = vld [vmem:[%s2430 + $0x8] sm:$0xf]
    %v2433 = vld [vmem:[%s2430 + $0xc] sm:$0xff]
    %v2434 = vld [vmem:[%s2430 + $0x14] sm:$0xf]
    %v2435 = vld [vmem:[%s2430 + $0x18] sm:$0xff]
    %v2436 = vld [vmem:[%s2430 + $0x20] sm:$0xf]
    %v2437 = vld [vmem:[%s2430 + $0x24] sm:$0xff]
    %v2438 = vld [vmem:[%s2430 + $0x2c] sm:$0xf]
    %v2439 = vld [vmem:[%s2430 + $0x30] sm:$0xff]
    %v2440 = vld [vmem:[%s2430 + $0x38] sm:$0xf]
    %v2441 = vld [vmem:[%s2430 + $0x3c] sm:$0xff]
    %v2442 = vld [vmem:[%s2430 + $0x44] sm:$0xf]
    %v2443 = vld [vmem:[%s2430 + $0x48] sm:$0xff]
    %v2444 = vld [vmem:[%s2430 + $0x50] sm:$0xf]
    %v2445 = vld [vmem:[%s2430 + $0x54] sm:$0xff]
    %v2446 = vld [vmem:[%s2430 + $0x5c] sm:$0xf]
    %v2447 = vld [vmem:[%s2430 + $0x60] sm:$0xff]
    %v2448 = vld [vmem:[%s2430 + $0x68] sm:$0xf]
    %v2449 = vld [vmem:[%s2430 + $0x6c] sm:$0xff]
    %v2450 = vld [vmem:[%s2430 + $0x74] sm:$0xf]
    %v2451 = vld [vmem:[%s2430 + $0x78] sm:$0xff]
    %v2452 = vld [vmem:[%s2430 + $0x80] sm:$0xf]
    %v2453 = vld [vmem:[%s2430 + $0x84] sm:$0xff]
    %v2454 = vld [vmem:[%s2430 + $0x8c] sm:$0xf]
    %v2455 = vld [vmem:[%s2430 + $0x90] sm:$0xff]
    %v2456 = vld [vmem:[%s2430 + $0x98] sm:$0xf]
    %v2457 = vld [vmem:[%s2430 + $0x9c] sm:$0xff]
    %v2458 = vld [vmem:[%s2430 + $0xa4] sm:$0xf]
    %v2459 = vld [vmem:[%s2430 + $0xa8] sm:$0xff]
    %v2460 = vld [vmem:[%s2430 + $0xb0] sm:$0xf]
    %v2461 = vld [vmem:[%s2430 + $0xb4] sm:$0xff]
    %v2462 = vld [vmem:[%s2430 + $0xbc] sm:$0xf]
    %v2463 = vunpack.c.l.bf16 %v2431
    %v2464 = vunpack.c.h.bf16 %v2431
    %v2465 = vunpack.c.l.bf16 %v2432
    %v2466 = vunpack.c.l.bf16 %v2433
    %v2467 = vunpack.c.h.bf16 %v2433
    %v2468 = vunpack.c.l.bf16 %v2434
    %v2469 = vunpack.c.l.bf16 %v2435
    %v2470 = vunpack.c.h.bf16 %v2435
    %v2471 = vunpack.c.l.bf16 %v2436
    %v2472 = vunpack.c.l.bf16 %v2437
    %v2473 = vunpack.c.h.bf16 %v2437
    %v2474 = vunpack.c.l.bf16 %v2438
    %v2475 = vunpack.c.l.bf16 %v2439
    %v2476 = vunpack.c.h.bf16 %v2439
    %v2477 = vunpack.c.l.bf16 %v2440
    %v2478 = vunpack.c.l.bf16 %v2441
    %v2479 = vunpack.c.h.bf16 %v2441
    %v2480 = vunpack.c.l.bf16 %v2442
    %v2481 = vunpack.c.l.bf16 %v2443
    %v2482 = vunpack.c.h.bf16 %v2443
    %v2483 = vunpack.c.l.bf16 %v2444
    %v2484 = vunpack.c.l.bf16 %v2445
    %v2485 = vunpack.c.h.bf16 %v2445
    %v2486 = vunpack.c.l.bf16 %v2446
    %v2487 = vunpack.c.l.bf16 %v2447
    %v2488 = vunpack.c.h.bf16 %v2447
    %v2489 = vunpack.c.l.bf16 %v2448
    %v2490 = vunpack.c.l.bf16 %v2449
    %v2491 = vunpack.c.h.bf16 %v2449
    %v2492 = vunpack.c.l.bf16 %v2450
    %v2493 = vunpack.c.l.bf16 %v2451
    %v2494 = vunpack.c.h.bf16 %v2451
    %v2495 = vunpack.c.l.bf16 %v2452
    %v2496 = vunpack.c.l.bf16 %v2453
    %v2497 = vunpack.c.h.bf16 %v2453
    %v2498 = vunpack.c.l.bf16 %v2454
    %v2499 = vunpack.c.l.bf16 %v2455
    %v2500 = vunpack.c.h.bf16 %v2455
    %v2501 = vunpack.c.l.bf16 %v2456
    %v2502 = vunpack.c.l.bf16 %v2457
    %v2503 = vunpack.c.h.bf16 %v2457
    %v2504 = vunpack.c.l.bf16 %v2458
    %v2505 = vunpack.c.l.bf16 %v2459
    %v2506 = vunpack.c.h.bf16 %v2459
    %v2507 = vunpack.c.l.bf16 %v2460
    %v2508 = vunpack.c.l.bf16 %v2461
    %v2509 = vunpack.c.h.bf16 %v2461
    %v2510 = vunpack.c.l.bf16 %v2462
    %v2511 = vlaneseq
    %v2512 = vshrl.u32 %v2511, 7
    %v2513 = vsub.s32 0, %v2512
    %v2514 = vrot.slane %v2427, %v2513
    %v2515 = vlaneseq
    %v2516 = vshrl.u32 %v2515, 7
    %v2517 = vsub.s32 0, %v2516
    %v2518 = vrot.slane %v2428, %v2517
    %v2519 = vlaneseq
    %v2520 = vshrl.u32 %v2519, 7
    %v2521 = vsub.s32 0, %v2520
    %v2522 = vrot.slane %v2429, %v2521
    %2523 = vmatprep.subr.mxu0 %v2509
    %2524 = vmatpush1.msra.mxu0 %v2508
    %2525 = vmatprep.subr.mxu0 %v2506
    %2526 = vmatpush1.msra.mxu0 %v2505
    %2527 = vmatprep.subr.mxu0 %v2503
    %2528 = vmatpush1.msra.mxu0 %v2502
    %2529 = vmatprep.subr.mxu0 %v2500
    %2530 = vmatpush1.msra.mxu0 %v2499
    %2531 = vmatprep.subr.mxu0 %v2497
    %2532 = vmatpush1.msra.mxu0 %v2496
    %2533 = vmatprep.subr.mxu0 %v2494
    %2534 = vmatpush1.msra.mxu0 %v2493
    %2535 = vmatprep.subr.mxu0 %v2491
    %2536 = vmatpush1.msra.mxu0 %v2490
    %2537 = vmatprep.subr.mxu0 %v2488
    %2538 = vmatpush1.msra.mxu0 %v2487
    %2539 = vmatprep.subr.mxu0 %v2485
    %2540 = vmatpush1.msra.mxu0 %v2484
    %2541 = vmatprep.subr.mxu0 %v2482
    %2542 = vmatpush1.msra.mxu0 %v2481
    %2543 = vmatprep.subr.mxu0 %v2479
    %2544 = vmatpush1.msra.mxu0 %v2478
    %2545 = vmatprep.subr.mxu0 %v2476
    %2546 = vmatpush1.msra.mxu0 %v2475
    %2547 = vmatprep.subr.mxu0 %v2473
    %2548 = vmatpush1.msra.mxu0 %v2472
    %2549 = vmatprep.subr.mxu0 %v2470
    %2550 = vmatpush1.msra.mxu0 %v2469
    %2551 = vmatprep.subr.mxu0 %v2467
    %2552 = vmatpush1.msra.mxu0 %v2466
    %2553 = vmatprep.subr.mxu0 %v2464
    %2554 = vmatpush1.msra.mxu0 %v2463
    %2555 = vmatprep.subr.mxu0 0.0
    %2556 = vmatpush2.msra.mxu0 0.0
    %2557 = vmatprep.subr.mxu0 0.0
    %2558 = vmatpush2.msra.mxu0 0.0
    %2559 = vmatprep.subr.mxu0 0.0
    %2560 = vmatpush2.msra.mxu0 0.0
    %2561 = vmatprep.subr.mxu0 0.0
    %2562 = vmatpush2.msra.mxu0 0.0
    %2563 = vmatprep.subr.mxu0 0.0
    %2564 = vmatpush2.msra.mxu0 0.0
    %2565 = vmatprep.subr.mxu0 0.0
    %2566 = vmatpush2.msra.mxu0 0.0
    %2567 = vmatprep.subr.mxu0 0.0
    %2568 = vmatpush2.msra.mxu0 0.0
    %2569 = vmatprep.subr.mxu0 0.0
    %2570 = vmatpush2.msra.mxu0 0.0
    %2571 = vmatprep.subr.mxu0 0.0
    %2572 = vmatpush2.msra.mxu0 0.0
    %2573 = vmatprep.subr.mxu0 0.0
    %2574 = vmatpush2.msra.mxu0 0.0
    %2575 = vmatprep.subr.mxu0 0.0
    %2576 = vmatpush2.msra.mxu0 0.0
    %2577 = vmatprep.subr.mxu0 0.0
    %2578 = vmatpush2.msra.mxu0 0.0
    %2579 = vmatprep.subr.mxu0 0.0
    %2580 = vmatpush2.msra.mxu0 0.0
    %2581 = vmatprep.subr.mxu0 0.0
    %2582 = vmatpush2.msra.mxu0 0.0
    %2583 = vmatprep.subr.mxu0 0.0
    %2584 = vmatpush2.msra.mxu0 0.0
    %2585 = vmatprep.subr.mxu0 0.0
    %2586 = vmatpush2.msra.mxu0 0.0
    %2587 = vmatprep.mubr.f32.mxu0 0.0
    %2588 = vmatmul.mubr.f32.gmra.mxu0 %v2422
    %v2589 = vpop.f32.mrf.mxu0
    %v2590 = vadd.f32 %v2514, %v2589
    %v2591 = vpop.f32.mrf.mxu0
    %v2592 = vadd.f32 %v2518, %v2591
    %2593 = vmatprep.mubr.f32.mxu0 0.0
    %2594 = vmatmul.mubr.f32.gmra.mxu0 %v2423
    %v2595 = vpop.f32.mrf.mxu0
    %v2596 = vadd.f32 %v2514, %v2595
    %v2597 = vpop.f32.mrf.mxu0
    %v2598 = vadd.f32 %v2518, %v2597
    %2599 = vmatprep.mubr.f32.mxu0 0.0
    %2600 = vmatmul.mubr.f32.gmra.mxu0 %v2424
    %v2601 = vpop.f32.mrf.mxu0
    %v2602 = vadd.f32 %v2514, %v2601
    %v2603 = vpop.f32.mrf.mxu0
    %v2604 = vadd.f32 %v2518, %v2603
    %2605 = vmatprep.mubr.f32.mxu0 0.0
    %2606 = vmatmul.mubr.f32.gmra.mxu0 %v2425
    %v2607 = vpop.f32.mrf.mxu0
    %v2608 = vadd.f32 %v2514, %v2607
    %v2609 = vpop.f32.mrf.mxu0
    %v2610 = vadd.f32 %v2518, %v2609
    %2611 = vdwg.mxu0
    %2612 = vmatprep.subr.mxu0 0.0
    %2613 = vmatpush1.msra.mxu0 %v2510
    %2614 = vmatprep.subr.mxu0 0.0
    %2615 = vmatpush1.msra.mxu0 %v2507
    %2616 = vmatprep.subr.mxu0 0.0
    %2617 = vmatpush1.msra.mxu0 %v2504
    %2618 = vmatprep.subr.mxu0 0.0
    %2619 = vmatpush1.msra.mxu0 %v2501
    %2620 = vmatprep.subr.mxu0 0.0
    %2621 = vmatpush1.msra.mxu0 %v2498
    %2622 = vmatprep.subr.mxu0 0.0
    %2623 = vmatpush1.msra.mxu0 %v2495
    %2624 = vmatprep.subr.mxu0 0.0
    %2625 = vmatpush1.msra.mxu0 %v2492
    %2626 = vmatprep.subr.mxu0 0.0
    %2627 = vmatpush1.msra.mxu0 %v2489
    %2628 = vmatprep.subr.mxu0 0.0
    %2629 = vmatpush1.msra.mxu0 %v2486
    %2630 = vmatprep.subr.mxu0 0.0
    %2631 = vmatpush1.msra.mxu0 %v2483
    %2632 = vmatprep.subr.mxu0 0.0
    %2633 = vmatpush1.msra.mxu0 %v2480
    %2634 = vmatprep.subr.mxu0 0.0
    %2635 = vmatpush1.msra.mxu0 %v2477
    %2636 = vmatprep.subr.mxu0 0.0
    %2637 = vmatpush1.msra.mxu0 %v2474
    %2638 = vmatprep.subr.mxu0 0.0
    %2639 = vmatpush1.msra.mxu0 %v2471
    %2640 = vmatprep.subr.mxu0 0.0
    %2641 = vmatpush1.msra.mxu0 %v2468
    %2642 = vmatprep.subr.mxu0 0.0
    %2643 = vmatpush1.msra.mxu0 %v2465
    %2644 = vmatprep.subr.mxu0 0.0
    %2645 = vmatpush2.msra.mxu0 0.0
    %2646 = vmatprep.subr.mxu0 0.0
    %2647 = vmatpush2.msra.mxu0 0.0
    %2648 = vmatprep.subr.mxu0 0.0
    %2649 = vmatpush2.msra.mxu0 0.0
    %2650 = vmatprep.subr.mxu0 0.0
    %2651 = vmatpush2.msra.mxu0 0.0
    %2652 = vmatprep.subr.mxu0 0.0
    %2653 = vmatpush2.msra.mxu0 0.0
    %2654 = vmatprep.subr.mxu0 0.0
    %2655 = vmatpush2.msra.mxu0 0.0
    %2656 = vmatprep.subr.mxu0 0.0
    %2657 = vmatpush2.msra.mxu0 0.0
    %2658 = vmatprep.subr.mxu0 0.0
    %2659 = vmatpush2.msra.mxu0 0.0
    %2660 = vmatprep.subr.mxu0 0.0
    %2661 = vmatpush2.msra.mxu0 0.0
    %2662 = vmatprep.subr.mxu0 0.0
    %2663 = vmatpush2.msra.mxu0 0.0
    %2664 = vmatprep.subr.mxu0 0.0
    %2665 = vmatpush2.msra.mxu0 0.0
    %2666 = vmatprep.subr.mxu0 0.0
    %2667 = vmatpush2.msra.mxu0 0.0
    %2668 = vmatprep.subr.mxu0 0.0
    %2669 = vmatpush2.msra.mxu0 0.0
    %2670 = vmatprep.subr.mxu0 0.0
    %2671 = vmatpush2.msra.mxu0 0.0
    %2672 = vmatprep.subr.mxu0 0.0
    %2673 = vmatpush2.msra.mxu0 0.0
    %2674 = vmatprep.subr.mxu0 0.0
    %2675 = vmatpush2.msra.mxu0 0.0
    %2676 = vmatprep.mubr.f32.mxu0 0.0
    %2677 = vmatmul.mubr.f32.gmra.mxu0 %v2422
    %v2678 = vpop.f32.mrf.mxu0
    %v2679 = vadd.f32 %v2522, %v2678
    %v2680 = vpop.f32.mrf.mxu0
    %2681 = vmatprep.mubr.f32.mxu0 0.0
    %2682 = vmatmul.mubr.f32.gmra.mxu0 %v2423
    %v2683 = vpop.f32.mrf.mxu0
    %v2684 = vadd.f32 %v2522, %v2683
    %v2685 = vpop.f32.mrf.mxu0
    %2686 = vmatprep.mubr.f32.mxu0 0.0
    %2687 = vmatmul.mubr.f32.gmra.mxu0 %v2424
    %v2688 = vpop.f32.mrf.mxu0
    %v2689 = vadd.f32 %v2522, %v2688
    %v2690 = vpop.f32.mrf.mxu0
    %2691 = vmatprep.mubr.f32.mxu0 0.0
    %2692 = vmatmul.mubr.f32.gmra.mxu0 %v2425
    %v2693 = vpop.f32.mrf.mxu0
    %v2694 = vadd.f32 %v2522, %v2693
    %v2695 = vpop.f32.mrf.mxu0
    %2696 = vdwg.mxu0
    %v2697 = vmul.f32 %v2590, 0.25
    %v2698 = vmul.f32 %v2596, 0.25
    %v2699 = vmul.f32 %v2602, 0.25
    %v2700 = vmul.f32 %v2608, 0.25
    %s2701 = scalar_lea.vmem %s4, 64
    %v2702 = vld [vmem:[%s2701] sm:$0xf]
    %v2703 = vld [vmem:[%s2701 + $0x4] sm:$0xf]
    %v2704 = vld [vmem:[%s2701 + $0x8] sm:$0xf]
    %v2705 = vld [vmem:[%s2701 + $0xc] sm:$0xf]
    %v2706 = vld [vmem:[%s2701 + $0x10] sm:$0xf]
    %v2707 = vld [vmem:[%s2701 + $0x14] sm:$0xf]
    %v2708 = vunpack.c.l.bf16 %v2702
    %v2709 = vunpack.c.l.bf16 %v2703
    %v2710 = vunpack.c.l.bf16 %v2704
    %v2711 = vunpack.c.l.bf16 %v2705
    %v2712 = vunpack.c.l.bf16 %v2706
    %v2713 = vunpack.c.l.bf16 %v2707
    %v2715 = vsel %vm450, %v2697, 0
    %v2718 = vsel %vm450, %v2698, 0
    %v2721 = vsel %vm450, %v2592, 0
    %v2724 = vsel %vm450, %v2598, 0
    %2726 = vmatprep.subr.mxu0 0.0
    %2727 = vmatpush1.xpose.msra.mxu0 0.0
    %2728 = vmatprep.subr.mxu0 0.0
    %2729 = vmatpush1.xpose.msra.mxu0 0.0
    %2730 = vmatprep.subr.mxu0 0.0
    %2731 = vmatpush1.xpose.msra.mxu0 0.0
    %2732 = vmatprep.subr.mxu0 0.0
    %2733 = vmatpush1.xpose.msra.mxu0 0.0
    %2734 = vmatprep.subr.mxu0 0.0
    %2735 = vmatpush1.xpose.msra.mxu0 0.0
    %2736 = vmatprep.subr.mxu0 0.0
    %2737 = vmatpush1.xpose.msra.mxu0 0.0
    %2738 = vmatprep.subr.mxu0 0.0
    %2739 = vmatpush1.xpose.msra.mxu0 0.0
    %2740 = vmatprep.subr.mxu0 0.0
    %2741 = vmatpush1.xpose.msra.mxu0 0.0
    %2742 = vmatprep.subr.mxu0 0.0
    %2743 = vmatpush1.xpose.msra.mxu0 0.0
    %2744 = vmatprep.subr.mxu0 0.0
    %2745 = vmatpush1.xpose.msra.mxu0 0.0
    %2746 = vmatprep.subr.mxu0 0.0
    %2747 = vmatpush1.xpose.msra.mxu0 0.0
    %2748 = vmatprep.subr.mxu0 0.0
    %2749 = vmatpush1.xpose.msra.mxu0 0.0
    %2750 = vmatprep.subr.mxu0 0.0
    %2751 = vmatpush1.xpose.msra.mxu0 0.0
    %2752 = vmatprep.subr.mxu0 0.0
    %2753 = vmatpush1.xpose.msra.mxu0 0.0
    %2754 = vmatprep.subr.mxu0 0.0
    %2755 = vmatpush1.xpose.msra.mxu0 %v2724
    %2756 = vmatprep.subr.mxu0 0.0
    %2757 = vmatpush1.xpose.msra.mxu0 %v2721
    %2758 = vmatprep.subr.mxu0 0.0
    %2759 = vmatpush2.xpose.msra.mxu0 0.0
    %2760 = vmatprep.subr.mxu0 0.0
    %2761 = vmatpush2.xpose.msra.mxu0 0.0
    %2762 = vmatprep.subr.mxu0 0.0
    %2763 = vmatpush2.xpose.msra.mxu0 0.0
    %2764 = vmatprep.subr.mxu0 0.0
    %2765 = vmatpush2.xpose.msra.mxu0 0.0
    %2766 = vmatprep.subr.mxu0 0.0
    %2767 = vmatpush2.xpose.msra.mxu0 0.0
    %2768 = vmatprep.subr.mxu0 0.0
    %2769 = vmatpush2.xpose.msra.mxu0 0.0
    %2770 = vmatprep.subr.mxu0 0.0
    %2771 = vmatpush2.xpose.msra.mxu0 0.0
    %2772 = vmatprep.subr.mxu0 0.0
    %2773 = vmatpush2.xpose.msra.mxu0 0.0
    %2774 = vmatprep.subr.mxu0 0.0
    %2775 = vmatpush2.xpose.msra.mxu0 0.0
    %2776 = vmatprep.subr.mxu0 0.0
    %2777 = vmatpush2.xpose.msra.mxu0 0.0
    %2778 = vmatprep.subr.mxu0 0.0
    %2779 = vmatpush2.xpose.msra.mxu0 0.0
    %2780 = vmatprep.subr.mxu0 0.0
    %2781 = vmatpush2.xpose.msra.mxu0 0.0
    %2782 = vmatprep.subr.mxu0 0.0
    %2783 = vmatpush2.xpose.msra.mxu0 0.0
    %2784 = vmatprep.subr.mxu0 0.0
    %2785 = vmatpush2.xpose.msra.mxu0 0.0
    %2786 = vmatprep.subr.mxu0 0.0
    %2787 = vmatpush2.xpose.msra.mxu0 0.0
    %2788 = vmatprep.subr.mxu0 0.0
    %2789 = vmatpush2.xpose.msra.mxu0 0.0
    %2790 = vmatprep.mubr.f32.mxu0 0.0
    %2791 = vmatmul.mubr.f32.gmra.mxu0 %v2715
    %v2792 = vpop.f32.mrf.mxu0
    %v2793 = vadd.f32 0.0, %v2792
    %v2794 = vpop.f32.mrf.mxu0
    %2795 = vmatprep.mubr.f32.mxu0 0.0
    %2796 = vmatmul.mubr.f32.gmra.mxu0 %v2718
    %v2797 = vpop.f32.mrf.mxu0
    %v2798 = vadd.f32 0.0, %v2797
    %v2799 = vpop.f32.mrf.mxu0
    %2800 = vdwg.mxu0
    %v2802 = vsel %vm450, %v2699, 0
    %v2805 = vsel %vm450, %v2700, 0
    %v2808 = vsel %vm450, %v2604, 0
    %v2811 = vsel %vm450, %v2610, 0
    %2813 = vmatprep.subr.mxu0 0.0
    %2814 = vmatpush1.xpose.msra.mxu0 0.0
    %2815 = vmatprep.subr.mxu0 0.0
    %2816 = vmatpush1.xpose.msra.mxu0 0.0
    %2817 = vmatprep.subr.mxu0 0.0
    %2818 = vmatpush1.xpose.msra.mxu0 0.0
    %2819 = vmatprep.subr.mxu0 0.0
    %2820 = vmatpush1.xpose.msra.mxu0 0.0
    %2821 = vmatprep.subr.mxu0 0.0
    %2822 = vmatpush1.xpose.msra.mxu0 0.0
    %2823 = vmatprep.subr.mxu0 0.0
    %2824 = vmatpush1.xpose.msra.mxu0 0.0
    %2825 = vmatprep.subr.mxu0 0.0
    %2826 = vmatpush1.xpose.msra.mxu0 0.0
    %2827 = vmatprep.subr.mxu0 0.0
    %2828 = vmatpush1.xpose.msra.mxu0 0.0
    %2829 = vmatprep.subr.mxu0 0.0
    %2830 = vmatpush1.xpose.msra.mxu0 0.0
    %2831 = vmatprep.subr.mxu0 0.0
    %2832 = vmatpush1.xpose.msra.mxu0 0.0
    %2833 = vmatprep.subr.mxu0 0.0
    %2834 = vmatpush1.xpose.msra.mxu0 0.0
    %2835 = vmatprep.subr.mxu0 0.0
    %2836 = vmatpush1.xpose.msra.mxu0 0.0
    %2837 = vmatprep.subr.mxu0 0.0
    %2838 = vmatpush1.xpose.msra.mxu0 0.0
    %2839 = vmatprep.subr.mxu0 0.0
    %2840 = vmatpush1.xpose.msra.mxu0 0.0
    %2841 = vmatprep.subr.mxu0 0.0
    %2842 = vmatpush1.xpose.msra.mxu0 %v2811
    %2843 = vmatprep.subr.mxu0 0.0
    %2844 = vmatpush1.xpose.msra.mxu0 %v2808
    %2845 = vmatprep.subr.mxu0 0.0
    %2846 = vmatpush2.xpose.msra.mxu0 0.0
    %2847 = vmatprep.subr.mxu0 0.0
    %2848 = vmatpush2.xpose.msra.mxu0 0.0
    %2849 = vmatprep.subr.mxu0 0.0
    %2850 = vmatpush2.xpose.msra.mxu0 0.0
    %2851 = vmatprep.subr.mxu0 0.0
    %2852 = vmatpush2.xpose.msra.mxu0 0.0
    %2853 = vmatprep.subr.mxu0 0.0
    %2854 = vmatpush2.xpose.msra.mxu0 0.0
    %2855 = vmatprep.subr.mxu0 0.0
    %2856 = vmatpush2.xpose.msra.mxu0 0.0
    %2857 = vmatprep.subr.mxu0 0.0
    %2858 = vmatpush2.xpose.msra.mxu0 0.0
    %2859 = vmatprep.subr.mxu0 0.0
    %2860 = vmatpush2.xpose.msra.mxu0 0.0
    %2861 = vmatprep.subr.mxu0 0.0
    %2862 = vmatpush2.xpose.msra.mxu0 0.0
    %2863 = vmatprep.subr.mxu0 0.0
    %2864 = vmatpush2.xpose.msra.mxu0 0.0
    %2865 = vmatprep.subr.mxu0 0.0
    %2866 = vmatpush2.xpose.msra.mxu0 0.0
    %2867 = vmatprep.subr.mxu0 0.0
    %2868 = vmatpush2.xpose.msra.mxu0 0.0
    %2869 = vmatprep.subr.mxu0 0.0
    %2870 = vmatpush2.xpose.msra.mxu0 0.0
    %2871 = vmatprep.subr.mxu0 0.0
    %2872 = vmatpush2.xpose.msra.mxu0 0.0
    %2873 = vmatprep.subr.mxu0 0.0
    %2874 = vmatpush2.xpose.msra.mxu0 0.0
    %2875 = vmatprep.subr.mxu0 0.0
    %2876 = vmatpush2.xpose.msra.mxu0 0.0
    %2877 = vmatprep.mubr.f32.mxu0 0.0
    %2878 = vmatmul.mubr.f32.gmra.mxu0 %v2802
    %v2879 = vpop.f32.mrf.mxu0
    %v2880 = vadd.f32 0.0, %v2879
    %v2881 = vpop.f32.mrf.mxu0
    %2882 = vmatprep.mubr.f32.mxu0 0.0
    %2883 = vmatmul.mubr.f32.gmra.mxu0 %v2805
    %v2884 = vpop.f32.mrf.mxu0
    %v2885 = vadd.f32 0.0, %v2884
    %v2886 = vpop.f32.mrf.mxu0
    %2887 = vdwg.mxu0
    %v2888 = vsel %vm164, %v2793, -1e+30
    %v2889 = vsel %vm164, %v2798, -1e+30
    %v2890 = vsel %vm164, %v2880, -1e+30
    %v2891 = vsel %vm164, %v2885, -1e+30
    %v2892 = vsel %vm450, %v2888, -inf
    %2893 = vmax.xlane.f32.xlu0 %v2892
    %v2894 = vpop.xlane.xlu0 %2893
    %v2895 = vsel %vm450, %v2889, -inf
    %2896 = vmax.xlane.f32.xlu0 %v2895
    %v2897 = vpop.xlane.xlu0 %2896
    %v2898 = vsel %vm450, %v2890, -inf
    %2899 = vmax.xlane.f32.xlu0 %v2898
    %v2900 = vpop.xlane.xlu0 %2899
    %v2901 = vsel %vm450, %v2891, -inf
    %2902 = vmax.xlane.f32.xlu0 %v2901
    %v2903 = vpop.xlane.xlu0 %2902
    %v2904 = vsub.f32 %v2888, %v2894
    %v2905 = vsub.f32 %v2889, %v2897
    %v2906 = vsub.f32 %v2890, %v2900
    %v2907 = vsub.f32 %v2891, %v2903
    %v2908 = vmul.f32 %v2904, 1.442695
    %v2909 = vpow.pop %v2908
    %v2910 = vmul.f32 %v2905, 1.442695
    %v2911 = vpow.pop %v2910
    %v2912 = vmul.f32 %v2906, 1.442695
    %v2913 = vpow.pop %v2912
    %v2914 = vmul.f32 %v2907, 1.442695
    %v2915 = vpow.pop %v2914
    %v2916 = vsel %vm450, %v2909, 0.0
    %2917 = vadd.xlane.f32.xlu0 %v2916
    %v2918 = vpop.xlane.xlu0 %2917
    %v2919 = vsel %vm450, %v2911, 0.0
    %2920 = vadd.xlane.f32.xlu0 %v2919
    %v2921 = vpop.xlane.xlu0 %2920
    %v2922 = vsel %vm450, %v2913, 0.0
    %2923 = vadd.xlane.f32.xlu0 %v2922
    %v2924 = vpop.xlane.xlu0 %2923
    %v2925 = vsel %vm450, %v2915, 0.0
    %2926 = vadd.xlane.f32.xlu0 %v2925
    %v2927 = vpop.xlane.xlu0 %2926
    %v2928 = vrcp.pop %v2918
    %v2929 = vmul.f32 %v2909, %v2928
    %v2930 = vrcp.pop %v2921
    %v2931 = vmul.f32 %v2911, %v2930
    %v2932 = vrcp.pop %v2924
    %v2933 = vmul.f32 %v2913, %v2932
    %v2934 = vrcp.pop %v2927
    %v2935 = vmul.f32 %v2915, %v2934
    %v2937 = vsel %vm450, %v2929, 0
    %v2940 = vsel %vm450, %v2931, 0
    %2942 = vmatprep.subr.mxu0 0.0
    %2943 = vmatpush1.msra.mxu0 0.0
    %2944 = vmatprep.subr.mxu0 0.0
    %2945 = vmatpush1.msra.mxu0 0.0
    %2946 = vmatprep.subr.mxu0 0.0
    %2947 = vmatpush1.msra.mxu0 0.0
    %2948 = vmatprep.subr.mxu0 0.0
    %2949 = vmatpush1.msra.mxu0 0.0
    %2950 = vmatprep.subr.mxu0 0.0
    %2951 = vmatpush1.msra.mxu0 0.0
    %2952 = vmatprep.subr.mxu0 0.0
    %2953 = vmatpush1.msra.mxu0 0.0
    %2954 = vmatprep.subr.mxu0 0.0
    %2955 = vmatpush1.msra.mxu0 0.0
    %2956 = vmatprep.subr.mxu0 0.0
    %2957 = vmatpush1.msra.mxu0 0.0
    %2958 = vmatprep.subr.mxu0 0.0
    %2959 = vmatpush1.msra.mxu0 0.0
    %2960 = vmatprep.subr.mxu0 0.0
    %2961 = vmatpush1.msra.mxu0 0.0
    %2962 = vmatprep.subr.mxu0 0.0
    %2963 = vmatpush1.msra.mxu0 0.0
    %2964 = vmatprep.subr.mxu0 0.0
    %2965 = vmatpush1.msra.mxu0 0.0
    %2966 = vmatprep.subr.mxu0 0.0
    %2967 = vmatpush1.msra.mxu0 0.0
    %2968 = vmatprep.subr.mxu0 0.0
    %2969 = vmatpush1.msra.mxu0 0.0
    %2970 = vmatprep.subr.mxu0 0.0
    %2971 = vmatpush1.msra.mxu0 %v2684
    %2972 = vmatprep.subr.mxu0 0.0
    %2973 = vmatpush1.msra.mxu0 %v2679
    %2974 = vmatprep.subr.mxu0 0.0
    %2975 = vmatpush2.msra.mxu0 0.0
    %2976 = vmatprep.subr.mxu0 0.0
    %2977 = vmatpush2.msra.mxu0 0.0
    %2978 = vmatprep.subr.mxu0 0.0
    %2979 = vmatpush2.msra.mxu0 0.0
    %2980 = vmatprep.subr.mxu0 0.0
    %2981 = vmatpush2.msra.mxu0 0.0
    %2982 = vmatprep.subr.mxu0 0.0
    %2983 = vmatpush2.msra.mxu0 0.0
    %2984 = vmatprep.subr.mxu0 0.0
    %2985 = vmatpush2.msra.mxu0 0.0
    %2986 = vmatprep.subr.mxu0 0.0
    %2987 = vmatpush2.msra.mxu0 0.0
    %2988 = vmatprep.subr.mxu0 0.0
    %2989 = vmatpush2.msra.mxu0 0.0
    %2990 = vmatprep.subr.mxu0 0.0
    %2991 = vmatpush2.msra.mxu0 0.0
    %2992 = vmatprep.subr.mxu0 0.0
    %2993 = vmatpush2.msra.mxu0 0.0
    %2994 = vmatprep.subr.mxu0 0.0
    %2995 = vmatpush2.msra.mxu0 0.0
    %2996 = vmatprep.subr.mxu0 0.0
    %2997 = vmatpush2.msra.mxu0 0.0
    %2998 = vmatprep.subr.mxu0 0.0
    %2999 = vmatpush2.msra.mxu0 0.0
    %3000 = vmatprep.subr.mxu0 0.0
    %3001 = vmatpush2.msra.mxu0 0.0
    %3002 = vmatprep.subr.mxu0 0.0
    %3003 = vmatpush2.msra.mxu0 0.0
    %3004 = vmatprep.subr.mxu0 0.0
    %3005 = vmatpush2.msra.mxu0 0.0
    %3006 = vmatprep.mubr.f32.mxu0 0.0
    %3007 = vmatmul.mubr.f32.gmra.mxu0 %v2937
    %v3008 = vpop.f32.mrf.mxu0
    %v3009 = vadd.f32 0.0, %v3008
    %v3010 = vpop.f32.mrf.mxu0
    %3011 = vmatprep.mubr.f32.mxu0 0.0
    %3012 = vmatmul.mubr.f32.gmra.mxu0 %v2940
    %v3013 = vpop.f32.mrf.mxu0
    %v3014 = vadd.f32 0.0, %v3013
    %v3015 = vpop.f32.mrf.mxu0
    %3016 = vdwg.mxu0
    %v3018 = vsel %vm450, %v2933, 0
    %v3021 = vsel %vm450, %v2935, 0
    %3023 = vmatprep.subr.mxu0 0.0
    %3024 = vmatpush1.msra.mxu0 0.0
    %3025 = vmatprep.subr.mxu0 0.0
    %3026 = vmatpush1.msra.mxu0 0.0
    %3027 = vmatprep.subr.mxu0 0.0
    %3028 = vmatpush1.msra.mxu0 0.0
    %3029 = vmatprep.subr.mxu0 0.0
    %3030 = vmatpush1.msra.mxu0 0.0
    %3031 = vmatprep.subr.mxu0 0.0
    %3032 = vmatpush1.msra.mxu0 0.0
    %3033 = vmatprep.subr.mxu0 0.0
    %3034 = vmatpush1.msra.mxu0 0.0
    %3035 = vmatprep.subr.mxu0 0.0
    %3036 = vmatpush1.msra.mxu0 0.0
    %3037 = vmatprep.subr.mxu0 0.0
    %3038 = vmatpush1.msra.mxu0 0.0
    %3039 = vmatprep.subr.mxu0 0.0
    %3040 = vmatpush1.msra.mxu0 0.0
    %3041 = vmatprep.subr.mxu0 0.0
    %3042 = vmatpush1.msra.mxu0 0.0
    %3043 = vmatprep.subr.mxu0 0.0
    %3044 = vmatpush1.msra.mxu0 0.0
    %3045 = vmatprep.subr.mxu0 0.0
    %3046 = vmatpush1.msra.mxu0 0.0
    %3047 = vmatprep.subr.mxu0 0.0
    %3048 = vmatpush1.msra.mxu0 0.0
    %3049 = vmatprep.subr.mxu0 0.0
    %3050 = vmatpush1.msra.mxu0 0.0
    %3051 = vmatprep.subr.mxu0 0.0
    %3052 = vmatpush1.msra.mxu0 %v2694
    %3053 = vmatprep.subr.mxu0 0.0
    %3054 = vmatpush1.msra.mxu0 %v2689
    %3055 = vmatprep.subr.mxu0 0.0
    %3056 = vmatpush2.msra.mxu0 0.0
    %3057 = vmatprep.subr.mxu0 0.0
    %3058 = vmatpush2.msra.mxu0 0.0
    %3059 = vmatprep.subr.mxu0 0.0
    %3060 = vmatpush2.msra.mxu0 0.0
    %3061 = vmatprep.subr.mxu0 0.0
    %3062 = vmatpush2.msra.mxu0 0.0
    %3063 = vmatprep.subr.mxu0 0.0
    %3064 = vmatpush2.msra.mxu0 0.0
    %3065 = vmatprep.subr.mxu0 0.0
    %3066 = vmatpush2.msra.mxu0 0.0
    %3067 = vmatprep.subr.mxu0 0.0
    %3068 = vmatpush2.msra.mxu0 0.0
    %3069 = vmatprep.subr.mxu0 0.0
    %3070 = vmatpush2.msra.mxu0 0.0
    %3071 = vmatprep.subr.mxu0 0.0
    %3072 = vmatpush2.msra.mxu0 0.0
    %3073 = vmatprep.subr.mxu0 0.0
    %3074 = vmatpush2.msra.mxu0 0.0
    %3075 = vmatprep.subr.mxu0 0.0
    %3076 = vmatpush2.msra.mxu0 0.0
    %3077 = vmatprep.subr.mxu0 0.0
    %3078 = vmatpush2.msra.mxu0 0.0
    %3079 = vmatprep.subr.mxu0 0.0
    %3080 = vmatpush2.msra.mxu0 0.0
    %3081 = vmatprep.subr.mxu0 0.0
    %3082 = vmatpush2.msra.mxu0 0.0
    %3083 = vmatprep.subr.mxu0 0.0
    %3084 = vmatpush2.msra.mxu0 0.0
    %3085 = vmatprep.subr.mxu0 0.0
    %3086 = vmatpush2.msra.mxu0 0.0
    %3087 = vmatprep.mubr.f32.mxu0 0.0
    %3088 = vmatmul.mubr.f32.gmra.mxu0 %v3018
    %v3089 = vpop.f32.mrf.mxu0
    %v3090 = vadd.f32 0.0, %v3089
    %v3091 = vpop.f32.mrf.mxu0
    %3092 = vmatprep.mubr.f32.mxu0 0.0
    %3093 = vmatmul.mubr.f32.gmra.mxu0 %v3021
    %v3094 = vpop.f32.mrf.mxu0
    %v3095 = vadd.f32 0.0, %v3094
    %v3096 = vpop.f32.mrf.mxu0
    %3097 = vdwg.mxu0
    %3098 = vrot.lane.b32.xlu0 %v2697, 112
    %v3099 = vpop.permute.xlu0 %3098
    %3100 = vrot.lane.b32.xlu0 %v2698, 112
    %v3101 = vpop.permute.xlu0 %3100
    %3102 = vrot.lane.b32.xlu0 %v2592, 112
    %v3103 = vpop.permute.xlu0 %3102
    %3104 = vrot.lane.b32.xlu0 %v2598, 112
    %v3105 = vpop.permute.xlu0 %3104
    %v3106 = vsel %vm450, %v3099, 0
    %v3108 = vsel %vm450, %v3101, 0
    %v3110 = vsel %vm450, %v3103, 0
    %v3112 = vsel %vm450, %v3105, 0
    %3114 = vmatprep.subr.mxu0 0.0
    %3115 = vmatpush1.xpose.msra.mxu0 0.0
    %3116 = vmatprep.subr.mxu0 0.0
    %3117 = vmatpush1.xpose.msra.mxu0 0.0
    %3118 = vmatprep.subr.mxu0 0.0
    %3119 = vmatpush1.xpose.msra.mxu0 0.0
    %3120 = vmatprep.subr.mxu0 0.0
    %3121 = vmatpush1.xpose.msra.mxu0 0.0
    %3122 = vmatprep.subr.mxu0 0.0
    %3123 = vmatpush1.xpose.msra.mxu0 0.0
    %3124 = vmatprep.subr.mxu0 0.0
    %3125 = vmatpush1.xpose.msra.mxu0 0.0
    %3126 = vmatprep.subr.mxu0 0.0
    %3127 = vmatpush1.xpose.msra.mxu0 0.0
    %3128 = vmatprep.subr.mxu0 0.0
    %3129 = vmatpush1.xpose.msra.mxu0 0.0
    %3130 = vmatprep.subr.mxu0 0.0
    %3131 = vmatpush1.xpose.msra.mxu0 0.0
    %3132 = vmatprep.subr.mxu0 0.0
    %3133 = vmatpush1.xpose.msra.mxu0 0.0
    %3134 = vmatprep.subr.mxu0 0.0
    %3135 = vmatpush1.xpose.msra.mxu0 0.0
    %3136 = vmatprep.subr.mxu0 0.0
    %3137 = vmatpush1.xpose.msra.mxu0 0.0
    %3138 = vmatprep.subr.mxu0 0.0
    %3139 = vmatpush1.xpose.msra.mxu0 0.0
    %3140 = vmatprep.subr.mxu0 0.0
    %3141 = vmatpush1.xpose.msra.mxu0 0.0
    %3142 = vmatprep.subr.mxu0 0.0
    %3143 = vmatpush1.xpose.msra.mxu0 %v3112
    %3144 = vmatprep.subr.mxu0 0.0
    %3145 = vmatpush1.xpose.msra.mxu0 %v3110
    %3146 = vmatprep.subr.mxu0 0.0
    %3147 = vmatpush2.xpose.msra.mxu0 0.0
    %3148 = vmatprep.subr.mxu0 0.0
    %3149 = vmatpush2.xpose.msra.mxu0 0.0
    %3150 = vmatprep.subr.mxu0 0.0
    %3151 = vmatpush2.xpose.msra.mxu0 0.0
    %3152 = vmatprep.subr.mxu0 0.0
    %3153 = vmatpush2.xpose.msra.mxu0 0.0
    %3154 = vmatprep.subr.mxu0 0.0
    %3155 = vmatpush2.xpose.msra.mxu0 0.0
    %3156 = vmatprep.subr.mxu0 0.0
    %3157 = vmatpush2.xpose.msra.mxu0 0.0
    %3158 = vmatprep.subr.mxu0 0.0
    %3159 = vmatpush2.xpose.msra.mxu0 0.0
    %3160 = vmatprep.subr.mxu0 0.0
    %3161 = vmatpush2.xpose.msra.mxu0 0.0
    %3162 = vmatprep.subr.mxu0 0.0
    %3163 = vmatpush2.xpose.msra.mxu0 0.0
    %3164 = vmatprep.subr.mxu0 0.0
    %3165 = vmatpush2.xpose.msra.mxu0 0.0
    %3166 = vmatprep.subr.mxu0 0.0
    %3167 = vmatpush2.xpose.msra.mxu0 0.0
    %3168 = vmatprep.subr.mxu0 0.0
    %3169 = vmatpush2.xpose.msra.mxu0 0.0
    %3170 = vmatprep.subr.mxu0 0.0
    %3171 = vmatpush2.xpose.msra.mxu0 0.0
    %3172 = vmatprep.subr.mxu0 0.0
    %3173 = vmatpush2.xpose.msra.mxu0 0.0
    %3174 = vmatprep.subr.mxu0 0.0
    %3175 = vmatpush2.xpose.msra.mxu0 0.0
    %3176 = vmatprep.subr.mxu0 0.0
    %3177 = vmatpush2.xpose.msra.mxu0 0.0
    %3178 = vmatprep.mubr.f32.mxu0 0.0
    %3179 = vmatmul.mubr.f32.gmra.mxu0 %v3106
    %v3180 = vpop.f32.mrf.mxu0
    %v3181 = vadd.f32 0.0, %v3180
    %v3182 = vpop.f32.mrf.mxu0
    %3183 = vmatprep.mubr.f32.mxu0 0.0
    %3184 = vmatmul.mubr.f32.gmra.mxu0 %v3108
    %v3185 = vpop.f32.mrf.mxu0
    %v3186 = vadd.f32 0.0, %v3185
    %v3187 = vpop.f32.mrf.mxu0
    %3188 = vdwg.mxu0
    %3189 = vrot.lane.b32.xlu0 %v2699, 112
    %v3190 = vpop.permute.xlu0 %3189
    %3191 = vrot.lane.b32.xlu0 %v2700, 112
    %v3192 = vpop.permute.xlu0 %3191
    %3193 = vrot.lane.b32.xlu0 %v2604, 112
    %v3194 = vpop.permute.xlu0 %3193
    %3195 = vrot.lane.b32.xlu0 %v2610, 112
    %v3196 = vpop.permute.xlu0 %3195
    %v3197 = vsel %vm450, %v3190, 0
    %v3199 = vsel %vm450, %v3192, 0
    %v3201 = vsel %vm450, %v3194, 0
    %v3203 = vsel %vm450, %v3196, 0
    %3205 = vmatprep.subr.mxu0 0.0
    %3206 = vmatpush1.xpose.msra.mxu0 0.0
    %3207 = vmatprep.subr.mxu0 0.0
    %3208 = vmatpush1.xpose.msra.mxu0 0.0
    %3209 = vmatprep.subr.mxu0 0.0
    %3210 = vmatpush1.xpose.msra.mxu0 0.0
    %3211 = vmatprep.subr.mxu0 0.0
    %3212 = vmatpush1.xpose.msra.mxu0 0.0
    %3213 = vmatprep.subr.mxu0 0.0
    %3214 = vmatpush1.xpose.msra.mxu0 0.0
    %3215 = vmatprep.subr.mxu0 0.0
    %3216 = vmatpush1.xpose.msra.mxu0 0.0
    %3217 = vmatprep.subr.mxu0 0.0
    %3218 = vmatpush1.xpose.msra.mxu0 0.0
    %3219 = vmatprep.subr.mxu0 0.0
    %3220 = vmatpush1.xpose.msra.mxu0 0.0
    %3221 = vmatprep.subr.mxu0 0.0
    %3222 = vmatpush1.xpose.msra.mxu0 0.0
    %3223 = vmatprep.subr.mxu0 0.0
    %3224 = vmatpush1.xpose.msra.mxu0 0.0
    %3225 = vmatprep.subr.mxu0 0.0
    %3226 = vmatpush1.xpose.msra.mxu0 0.0
    %3227 = vmatprep.subr.mxu0 0.0
    %3228 = vmatpush1.xpose.msra.mxu0 0.0
    %3229 = vmatprep.subr.mxu0 0.0
    %3230 = vmatpush1.xpose.msra.mxu0 0.0
    %3231 = vmatprep.subr.mxu0 0.0
    %3232 = vmatpush1.xpose.msra.mxu0 0.0
    %3233 = vmatprep.subr.mxu0 0.0
    %3234 = vmatpush1.xpose.msra.mxu0 %v3203
    %3235 = vmatprep.subr.mxu0 0.0
    %3236 = vmatpush1.xpose.msra.mxu0 %v3201
    %3237 = vmatprep.subr.mxu0 0.0
    %3238 = vmatpush2.xpose.msra.mxu0 0.0
    %3239 = vmatprep.subr.mxu0 0.0
    %3240 = vmatpush2.xpose.msra.mxu0 0.0
    %3241 = vmatprep.subr.mxu0 0.0
    %3242 = vmatpush2.xpose.msra.mxu0 0.0
    %3243 = vmatprep.subr.mxu0 0.0
    %3244 = vmatpush2.xpose.msra.mxu0 0.0
    %3245 = vmatprep.subr.mxu0 0.0
    %3246 = vmatpush2.xpose.msra.mxu0 0.0
    %3247 = vmatprep.subr.mxu0 0.0
    %3248 = vmatpush2.xpose.msra.mxu0 0.0
    %3249 = vmatprep.subr.mxu0 0.0
    %3250 = vmatpush2.xpose.msra.mxu0 0.0
    %3251 = vmatprep.subr.mxu0 0.0
    %3252 = vmatpush2.xpose.msra.mxu0 0.0
    %3253 = vmatprep.subr.mxu0 0.0
    %3254 = vmatpush2.xpose.msra.mxu0 0.0
    %3255 = vmatprep.subr.mxu0 0.0
    %3256 = vmatpush2.xpose.msra.mxu0 0.0
    %3257 = vmatprep.subr.mxu0 0.0
    %3258 = vmatpush2.xpose.msra.mxu0 0.0
    %3259 = vmatprep.subr.mxu0 0.0
    %3260 = vmatpush2.xpose.msra.mxu0 0.0
    %3261 = vmatprep.subr.mxu0 0.0
    %3262 = vmatpush2.xpose.msra.mxu0 0.0
    %3263 = vmatprep.subr.mxu0 0.0
    %3264 = vmatpush2.xpose.msra.mxu0 0.0
    %3265 = vmatprep.subr.mxu0 0.0
    %3266 = vmatpush2.xpose.msra.mxu0 0.0
    %3267 = vmatprep.subr.mxu0 0.0
    %3268 = vmatpush2.xpose.msra.mxu0 0.0
    %3269 = vmatprep.mubr.f32.mxu0 0.0
    %3270 = vmatmul.mubr.f32.gmra.mxu0 %v3197
    %v3271 = vpop.f32.mrf.mxu0
    %v3272 = vadd.f32 0.0, %v3271
    %v3273 = vpop.f32.mrf.mxu0
    %3274 = vmatprep.mubr.f32.mxu0 0.0
    %3275 = vmatmul.mubr.f32.gmra.mxu0 %v3199
    %v3276 = vpop.f32.mrf.mxu0
    %v3277 = vadd.f32 0.0, %v3276
    %v3278 = vpop.f32.mrf.mxu0
    %3279 = vdwg.mxu0
    %v3280 = vsel %vm164, %v3181, -1e+30
    %v3281 = vsel %vm164, %v3186, -1e+30
    %v3282 = vsel %vm164, %v3272, -1e+30
    %v3283 = vsel %vm164, %v3277, -1e+30
    %v3284 = vsel %vm450, %v3280, -inf
    %3285 = vmax.xlane.f32.xlu0 %v3284
    %v3286 = vpop.xlane.xlu0 %3285
    %v3287 = vsel %vm450, %v3281, -inf
    %3288 = vmax.xlane.f32.xlu0 %v3287
    %v3289 = vpop.xlane.xlu0 %3288
    %v3290 = vsel %vm450, %v3282, -inf
    %3291 = vmax.xlane.f32.xlu0 %v3290
    %v3292 = vpop.xlane.xlu0 %3291
    %v3293 = vsel %vm450, %v3283, -inf
    %3294 = vmax.xlane.f32.xlu0 %v3293
    %v3295 = vpop.xlane.xlu0 %3294
    %v3296 = vsub.f32 %v3280, %v3286
    %v3297 = vsub.f32 %v3281, %v3289
    %v3298 = vsub.f32 %v3282, %v3292
    %v3299 = vsub.f32 %v3283, %v3295
    %v3300 = vmul.f32 %v3296, 1.442695
    %v3301 = vpow.pop %v3300
    %v3302 = vmul.f32 %v3297, 1.442695
    %v3303 = vpow.pop %v3302
    %v3304 = vmul.f32 %v3298, 1.442695
    %v3305 = vpow.pop %v3304
    %v3306 = vmul.f32 %v3299, 1.442695
    %v3307 = vpow.pop %v3306
    %v3308 = vsel %vm450, %v3301, 0.0
    %3309 = vadd.xlane.f32.xlu0 %v3308
    %v3310 = vpop.xlane.xlu0 %3309
    %v3311 = vsel %vm450, %v3303, 0.0
    %3312 = vadd.xlane.f32.xlu0 %v3311
    %v3313 = vpop.xlane.xlu0 %3312
    %v3314 = vsel %vm450, %v3305, 0.0
    %3315 = vadd.xlane.f32.xlu0 %v3314
    %v3316 = vpop.xlane.xlu0 %3315
    %v3317 = vsel %vm450, %v3307, 0.0
    %3318 = vadd.xlane.f32.xlu0 %v3317
    %v3319 = vpop.xlane.xlu0 %3318
    %v3320 = vrcp.pop %v3310
    %v3321 = vmul.f32 %v3301, %v3320
    %v3322 = vrcp.pop %v3313
    %v3323 = vmul.f32 %v3303, %v3322
    %v3324 = vrcp.pop %v3316
    %v3325 = vmul.f32 %v3305, %v3324
    %v3326 = vrcp.pop %v3319
    %v3327 = vmul.f32 %v3307, %v3326
    %3330 = vrot.lane.b32.xlu0 %v2679, 112
    %v3331 = vpop.permute.xlu0 %3330
    %3332 = vrot.lane.b32.xlu0 %v2684, 112
    %v3333 = vpop.permute.xlu0 %3332
    %v3337 = vsel %vm450, %v3321, 0
    %v3340 = vsel %vm450, %v3323, 0
    %3342 = vmatprep.subr.mxu0 0.0
    %3343 = vmatpush1.msra.mxu0 0.0
    %3344 = vmatprep.subr.mxu0 0.0
    %3345 = vmatpush1.msra.mxu0 0.0
    %3346 = vmatprep.subr.mxu0 0.0
    %3347 = vmatpush1.msra.mxu0 0.0
    %3348 = vmatprep.subr.mxu0 0.0
    %3349 = vmatpush1.msra.mxu0 0.0
    %3350 = vmatprep.subr.mxu0 0.0
    %3351 = vmatpush1.msra.mxu0 0.0
    %3352 = vmatprep.subr.mxu0 0.0
    %3353 = vmatpush1.msra.mxu0 0.0
    %3354 = vmatprep.subr.mxu0 0.0
    %3355 = vmatpush1.msra.mxu0 0.0
    %3356 = vmatprep.subr.mxu0 0.0
    %3357 = vmatpush1.msra.mxu0 0.0
    %3358 = vmatprep.subr.mxu0 0.0
    %3359 = vmatpush1.msra.mxu0 0.0
    %3360 = vmatprep.subr.mxu0 0.0
    %3361 = vmatpush1.msra.mxu0 0.0
    %3362 = vmatprep.subr.mxu0 0.0
    %3363 = vmatpush1.msra.mxu0 0.0
    %3364 = vmatprep.subr.mxu0 0.0
    %3365 = vmatpush1.msra.mxu0 0.0
    %3366 = vmatprep.subr.mxu0 0.0
    %3367 = vmatpush1.msra.mxu0 0.0
    %3368 = vmatprep.subr.mxu0 0.0
    %3369 = vmatpush1.msra.mxu0 0.0
    %3370 = vmatprep.subr.mxu0 0.0
    %3371 = vmatpush1.msra.mxu0 %v3333
    %3372 = vmatprep.subr.mxu0 0.0
    %3373 = vmatpush1.msra.mxu0 %v3331
    %3374 = vmatprep.subr.mxu0 0.0
    %3375 = vmatpush2.msra.mxu0 0.0
    %3376 = vmatprep.subr.mxu0 0.0
    %3377 = vmatpush2.msra.mxu0 0.0
    %3378 = vmatprep.subr.mxu0 0.0
    %3379 = vmatpush2.msra.mxu0 0.0
    %3380 = vmatprep.subr.mxu0 0.0
    %3381 = vmatpush2.msra.mxu0 0.0
    %3382 = vmatprep.subr.mxu0 0.0
    %3383 = vmatpush2.msra.mxu0 0.0
    %3384 = vmatprep.subr.mxu0 0.0
    %3385 = vmatpush2.msra.mxu0 0.0
    %3386 = vmatprep.subr.mxu0 0.0
    %3387 = vmatpush2.msra.mxu0 0.0
    %3388 = vmatprep.subr.mxu0 0.0
    %3389 = vmatpush2.msra.mxu0 0.0
    %3390 = vmatprep.subr.mxu0 0.0
    %3391 = vmatpush2.msra.mxu0 0.0
    %3392 = vmatprep.subr.mxu0 0.0
    %3393 = vmatpush2.msra.mxu0 0.0
    %3394 = vmatprep.subr.mxu0 0.0
    %3395 = vmatpush2.msra.mxu0 0.0
    %3396 = vmatprep.subr.mxu0 0.0
    %3397 = vmatpush2.msra.mxu0 0.0
    %3398 = vmatprep.subr.mxu0 0.0
    %3399 = vmatpush2.msra.mxu0 0.0
    %3400 = vmatprep.subr.mxu0 0.0
    %3401 = vmatpush2.msra.mxu0 0.0
    %3402 = vmatprep.subr.mxu0 0.0
    %3403 = vmatpush2.msra.mxu0 0.0
    %3404 = vmatprep.subr.mxu0 0.0
    %3405 = vmatpush2.msra.mxu0 0.0
    %3406 = vmatprep.mubr.f32.mxu0 0.0
    %3407 = vmatmul.mubr.f32.gmra.mxu0 %v3337
    %v3408 = vpop.f32.mrf.mxu0
    %v3409 = vadd.f32 0.0, %v3408
    %v3410 = vpop.f32.mrf.mxu0
    %3411 = vmatprep.mubr.f32.mxu0 0.0
    %3412 = vmatmul.mubr.f32.gmra.mxu0 %v3340
    %v3413 = vpop.f32.mrf.mxu0
    %v3414 = vadd.f32 0.0, %v3413
    %v3415 = vpop.f32.mrf.mxu0
    %3416 = vdwg.mxu0
    %3419 = vrot.lane.b32.xlu0 %v2689, 112
    %v3420 = vpop.permute.xlu0 %3419
    %3421 = vrot.lane.b32.xlu0 %v2694, 112
    %v3422 = vpop.permute.xlu0 %3421
    %v3426 = vsel %vm450, %v3325, 0
    %v3429 = vsel %vm450, %v3327, 0
    %3431 = vmatprep.subr.mxu0 0.0
    %3432 = vmatpush1.msra.mxu0 0.0
    %3433 = vmatprep.subr.mxu0 0.0
    %3434 = vmatpush1.msra.mxu0 0.0
    %3435 = vmatprep.subr.mxu0 0.0
    %3436 = vmatpush1.msra.mxu0 0.0
    %3437 = vmatprep.subr.mxu0 0.0
    %3438 = vmatpush1.msra.mxu0 0.0
    %3439 = vmatprep.subr.mxu0 0.0
    %3440 = vmatpush1.msra.mxu0 0.0
    %3441 = vmatprep.subr.mxu0 0.0
    %3442 = vmatpush1.msra.mxu0 0.0
    %3443 = vmatprep.subr.mxu0 0.0
    %3444 = vmatpush1.msra.mxu0 0.0
    %3445 = vmatprep.subr.mxu0 0.0
    %3446 = vmatpush1.msra.mxu0 0.0
    %3447 = vmatprep.subr.mxu0 0.0
    %3448 = vmatpush1.msra.mxu0 0.0
    %3449 = vmatprep.subr.mxu0 0.0
    %3450 = vmatpush1.msra.mxu0 0.0
    %3451 = vmatprep.subr.mxu0 0.0
    %3452 = vmatpush1.msra.mxu0 0.0
    %3453 = vmatprep.subr.mxu0 0.0
    %3454 = vmatpush1.msra.mxu0 0.0
    %3455 = vmatprep.subr.mxu0 0.0
    %3456 = vmatpush1.msra.mxu0 0.0
    %3457 = vmatprep.subr.mxu0 0.0
    %3458 = vmatpush1.msra.mxu0 0.0
    %3459 = vmatprep.subr.mxu0 0.0
    %3460 = vmatpush1.msra.mxu0 %v3422
    %3461 = vmatprep.subr.mxu0 0.0
    %3462 = vmatpush1.msra.mxu0 %v3420
    %3463 = vmatprep.subr.mxu0 0.0
    %3464 = vmatpush2.msra.mxu0 0.0
    %3465 = vmatprep.subr.mxu0 0.0
    %3466 = vmatpush2.msra.mxu0 0.0
    %3467 = vmatprep.subr.mxu0 0.0
    %3468 = vmatpush2.msra.mxu0 0.0
    %3469 = vmatprep.subr.mxu0 0.0
    %3470 = vmatpush2.msra.mxu0 0.0
    %3471 = vmatprep.subr.mxu0 0.0
    %3472 = vmatpush2.msra.mxu0 0.0
    %3473 = vmatprep.subr.mxu0 0.0
    %3474 = vmatpush2.msra.mxu0 0.0
    %3475 = vmatprep.subr.mxu0 0.0
    %3476 = vmatpush2.msra.mxu0 0.0
    %3477 = vmatprep.subr.mxu0 0.0
    %3478 = vmatpush2.msra.mxu0 0.0
    %3479 = vmatprep.subr.mxu0 0.0
    %3480 = vmatpush2.msra.mxu0 0.0
    %3481 = vmatprep.subr.mxu0 0.0
    %3482 = vmatpush2.msra.mxu0 0.0
    %3483 = vmatprep.subr.mxu0 0.0
    %3484 = vmatpush2.msra.mxu0 0.0
    %3485 = vmatprep.subr.mxu0 0.0
    %3486 = vmatpush2.msra.mxu0 0.0
    %3487 = vmatprep.subr.mxu0 0.0
    %3488 = vmatpush2.msra.mxu0 0.0
    %3489 = vmatprep.subr.mxu0 0.0
    %3490 = vmatpush2.msra.mxu0 0.0
    %3491 = vmatprep.subr.mxu0 0.0
    %3492 = vmatpush2.msra.mxu0 0.0
    %3493 = vmatprep.subr.mxu0 0.0
    %3494 = vmatpush2.msra.mxu0 0.0
    %3495 = vmatprep.mubr.f32.mxu0 0.0
    %3496 = vmatmul.mubr.f32.gmra.mxu0 %v3426
    %v3497 = vpop.f32.mrf.mxu0
    %v3498 = vadd.f32 0.0, %v3497
    %v3499 = vpop.f32.mrf.mxu0
    %3500 = vmatprep.mubr.f32.mxu0 0.0
    %3501 = vmatmul.mubr.f32.gmra.mxu0 %v3429
    %v3502 = vpop.f32.mrf.mxu0
    %v3503 = vadd.f32 0.0, %v3502
    %v3504 = vpop.f32.mrf.mxu0
    %3505 = vdwg.mxu0
    %v3507 = vsel %vm450, %v3409, 0
    %v3510 = vsel %vm450, %v3414, 0
    %v3513 = vsel %vm450, %v3498, 0
    %v3516 = vsel %vm450, %v3503, 0
    %3518 = vmatprep.subr.mxu0 0.0
    %3519 = vmatpush1.msra.mxu0 0.0
    %3520 = vmatprep.subr.mxu0 0.0
    %3521 = vmatpush1.msra.mxu0 0.0
    %3522 = vmatprep.subr.mxu0 0.0
    %3523 = vmatpush1.msra.mxu0 0.0
    %3524 = vmatprep.subr.mxu0 0.0
    %3525 = vmatpush1.msra.mxu0 0.0
    %3526 = vmatprep.subr.mxu0 0.0
    %3527 = vmatpush1.msra.mxu0 0.0
    %3528 = vmatprep.subr.mxu0 0.0
    %3529 = vmatpush1.msra.mxu0 0.0
    %3530 = vmatprep.subr.mxu0 0.0
    %3531 = vmatpush1.msra.mxu0 0.0
    %3532 = vmatprep.subr.mxu0 0.0
    %3533 = vmatpush1.msra.mxu0 0.0
    %3534 = vmatprep.subr.mxu0 0.0
    %3535 = vmatpush1.msra.mxu0 0.0
    %3536 = vmatprep.subr.mxu0 0.0
    %3537 = vmatpush1.msra.mxu0 0.0
    %3538 = vmatprep.subr.mxu0 0.0
    %3539 = vmatpush1.msra.mxu0 0.0
    %3540 = vmatprep.subr.mxu0 0.0
    %3541 = vmatpush1.msra.mxu0 0.0
    %3542 = vmatprep.subr.mxu0 0.0
    %3543 = vmatpush1.msra.mxu0 0.0
    %3544 = vmatprep.subr.mxu0 0.0
    %3545 = vmatpush1.msra.mxu0 0.0
    %3546 = vmatprep.subr.mxu0 0.0
    %3547 = vmatpush1.msra.mxu0 %v2711
    %3548 = vmatprep.subr.mxu0 0.0
    %3549 = vmatpush1.msra.mxu0 %v2710
    %3550 = vmatprep.subr.mxu0 0.0
    %3551 = vmatpush2.msra.mxu0 0.0
    %3552 = vmatprep.subr.mxu0 0.0
    %3553 = vmatpush2.msra.mxu0 0.0
    %3554 = vmatprep.subr.mxu0 0.0
    %3555 = vmatpush2.msra.mxu0 0.0
    %3556 = vmatprep.subr.mxu0 0.0
    %3557 = vmatpush2.msra.mxu0 0.0
    %3558 = vmatprep.subr.mxu0 0.0
    %3559 = vmatpush2.msra.mxu0 0.0
    %3560 = vmatprep.subr.mxu0 0.0
    %3561 = vmatpush2.msra.mxu0 0.0
    %3562 = vmatprep.subr.mxu0 0.0
    %3563 = vmatpush2.msra.mxu0 0.0
    %3564 = vmatprep.subr.mxu0 0.0
    %3565 = vmatpush2.msra.mxu0 0.0
    %3566 = vmatprep.subr.mxu0 0.0
    %3567 = vmatpush2.msra.mxu0 0.0
    %3568 = vmatprep.subr.mxu0 0.0
    %3569 = vmatpush2.msra.mxu0 0.0
    %3570 = vmatprep.subr.mxu0 0.0
    %3571 = vmatpush2.msra.mxu0 0.0
    %3572 = vmatprep.subr.mxu0 0.0
    %3573 = vmatpush2.msra.mxu0 0.0
    %3574 = vmatprep.subr.mxu0 0.0
    %3575 = vmatpush2.msra.mxu0 0.0
    %3576 = vmatprep.subr.mxu0 0.0
    %3577 = vmatpush2.msra.mxu0 0.0
    %3578 = vmatprep.subr.mxu0 0.0
    %3579 = vmatpush2.msra.mxu0 0.0
    %3580 = vmatprep.subr.mxu0 0.0
    %3581 = vmatpush2.msra.mxu0 0.0
    %3582 = vmatprep.mubr.f32.mxu0 0.0
    %3583 = vmatmul.mubr.f32.gmra.mxu0 %v3507
    %v3584 = vpop.f32.mrf.mxu0
    %v3585 = vadd.f32 0.0, %v3584
    %v3586 = vpop.f32.mrf.mxu0
    %3587 = vmatprep.mubr.f32.mxu0 0.0
    %3588 = vmatmul.mubr.f32.gmra.mxu0 %v3510
    %v3589 = vpop.f32.mrf.mxu0
    %v3590 = vadd.f32 0.0, %v3589
    %v3591 = vpop.f32.mrf.mxu0
    %3592 = vmatprep.mubr.f32.mxu0 0.0
    %3593 = vmatmul.mubr.f32.gmra.mxu0 %v3513
    %v3594 = vpop.f32.mrf.mxu0
    %v3595 = vadd.f32 0.0, %v3594
    %v3596 = vpop.f32.mrf.mxu0
    %3597 = vmatprep.mubr.f32.mxu0 0.0
    %3598 = vmatmul.mubr.f32.gmra.mxu0 %v3516
    %v3599 = vpop.f32.mrf.mxu0
    %v3600 = vadd.f32 0.0, %v3599
    %v3601 = vpop.f32.mrf.mxu0
    %3602 = vdwg.mxu0
    %v3604 = vsel %vm450, %v3009, 0
    %v3607 = vsel %vm450, %v3014, 0
    %v3610 = vsel %vm450, %v3090, 0
    %v3613 = vsel %vm450, %v3095, 0
    %3615 = vmatprep.subr.mxu0 0.0
    %3616 = vmatpush1.msra.mxu0 0.0
    %3617 = vmatprep.subr.mxu0 0.0
    %3618 = vmatpush1.msra.mxu0 0.0
    %3619 = vmatprep.subr.mxu0 0.0
    %3620 = vmatpush1.msra.mxu0 0.0
    %3621 = vmatprep.subr.mxu0 0.0
    %3622 = vmatpush1.msra.mxu0 0.0
    %3623 = vmatprep.subr.mxu0 0.0
    %3624 = vmatpush1.msra.mxu0 0.0
    %3625 = vmatprep.subr.mxu0 0.0
    %3626 = vmatpush1.msra.mxu0 0.0
    %3627 = vmatprep.subr.mxu0 0.0
    %3628 = vmatpush1.msra.mxu0 0.0
    %3629 = vmatprep.subr.mxu0 0.0
    %3630 = vmatpush1.msra.mxu0 0.0
    %3631 = vmatprep.subr.mxu0 0.0
    %3632 = vmatpush1.msra.mxu0 0.0
    %3633 = vmatprep.subr.mxu0 0.0
    %3634 = vmatpush1.msra.mxu0 0.0
    %3635 = vmatprep.subr.mxu0 0.0
    %3636 = vmatpush1.msra.mxu0 0.0
    %3637 = vmatprep.subr.mxu0 0.0
    %3638 = vmatpush1.msra.mxu0 0.0
    %3639 = vmatprep.subr.mxu0 0.0
    %3640 = vmatpush1.msra.mxu0 0.0
    %3641 = vmatprep.subr.mxu0 0.0
    %3642 = vmatpush1.msra.mxu0 0.0
    %3643 = vmatprep.subr.mxu0 0.0
    %3644 = vmatpush1.msra.mxu0 %v2709
    %3645 = vmatprep.subr.mxu0 0.0
    %3646 = vmatpush1.msra.mxu0 %v2708
    %3647 = vmatprep.subr.mxu0 0.0
    %3648 = vmatpush2.msra.mxu0 0.0
    %3649 = vmatprep.subr.mxu0 0.0
    %3650 = vmatpush2.msra.mxu0 0.0
    %3651 = vmatprep.subr.mxu0 0.0
    %3652 = vmatpush2.msra.mxu0 0.0
    %3653 = vmatprep.subr.mxu0 0.0
    %3654 = vmatpush2.msra.mxu0 0.0
    %3655 = vmatprep.subr.mxu0 0.0
    %3656 = vmatpush2.msra.mxu0 0.0
    %3657 = vmatprep.subr.mxu0 0.0
    %3658 = vmatpush2.msra.mxu0 0.0
    %3659 = vmatprep.subr.mxu0 0.0
    %3660 = vmatpush2.msra.mxu0 0.0
    %3661 = vmatprep.subr.mxu0 0.0
    %3662 = vmatpush2.msra.mxu0 0.0
    %3663 = vmatprep.subr.mxu0 0.0
    %3664 = vmatpush2.msra.mxu0 0.0
    %3665 = vmatprep.subr.mxu0 0.0
    %3666 = vmatpush2.msra.mxu0 0.0
    %3667 = vmatprep.subr.mxu0 0.0
    %3668 = vmatpush2.msra.mxu0 0.0
    %3669 = vmatprep.subr.mxu0 0.0
    %3670 = vmatpush2.msra.mxu0 0.0
    %3671 = vmatprep.subr.mxu0 0.0
    %3672 = vmatpush2.msra.mxu0 0.0
    %3673 = vmatprep.subr.mxu0 0.0
    %3674 = vmatpush2.msra.mxu0 0.0
    %3675 = vmatprep.subr.mxu0 0.0
    %3676 = vmatpush2.msra.mxu0 0.0
    %3677 = vmatprep.subr.mxu0 0.0
    %3678 = vmatpush2.msra.mxu0 0.0
    %3679 = vmatprep.mubr.f32.mxu0 0.0
    %3680 = vmatmul.mubr.f32.gmra.mxu0 %v3604
    %v3681 = vpop.f32.mrf.mxu0
    %v3682 = vadd.f32 %v3585, %v3681
    %v3683 = vpop.f32.mrf.mxu0
    %3684 = vmatprep.mubr.f32.mxu0 0.0
    %3685 = vmatmul.mubr.f32.gmra.mxu0 %v3607
    %v3686 = vpop.f32.mrf.mxu0
    %v3687 = vadd.f32 %v3590, %v3686
    %v3688 = vpop.f32.mrf.mxu0
    %3689 = vmatprep.mubr.f32.mxu0 0.0
    %3690 = vmatmul.mubr.f32.gmra.mxu0 %v3610
    %v3691 = vpop.f32.mrf.mxu0
    %v3692 = vadd.f32 %v3595, %v3691
    %v3693 = vpop.f32.mrf.mxu0
    %3694 = vmatprep.mubr.f32.mxu0 0.0
    %3695 = vmatmul.mubr.f32.gmra.mxu0 %v3613
    %v3696 = vpop.f32.mrf.mxu0
    %v3697 = vadd.f32 %v3600, %v3696
    %v3698 = vpop.f32.mrf.mxu0
    %3699 = vdwg.mxu0
    %3700 = vrot.lane.b32.xlu0 %v2697, 96
    %v3701 = vpop.permute.xlu0 %3700
    %3702 = vrot.lane.b32.xlu0 %v2698, 96
    %v3703 = vpop.permute.xlu0 %3702
    %3704 = vrot.lane.b32.xlu0 %v2592, 96
    %v3705 = vpop.permute.xlu0 %3704
    %3706 = vrot.lane.b32.xlu0 %v2598, 96
    %v3707 = vpop.permute.xlu0 %3706
    %v3708 = vsel %vm450, %v3701, 0
    %v3710 = vsel %vm450, %v3703, 0
    %v3712 = vsel %vm450, %v3705, 0
    %v3714 = vsel %vm450, %v3707, 0
    %3716 = vmatprep.subr.mxu0 0.0
    %3717 = vmatpush1.xpose.msra.mxu0 0.0
    %3718 = vmatprep.subr.mxu0 0.0
    %3719 = vmatpush1.xpose.msra.mxu0 0.0
    %3720 = vmatprep.subr.mxu0 0.0
    %3721 = vmatpush1.xpose.msra.mxu0 0.0
    %3722 = vmatprep.subr.mxu0 0.0
    %3723 = vmatpush1.xpose.msra.mxu0 0.0
    %3724 = vmatprep.subr.mxu0 0.0
    %3725 = vmatpush1.xpose.msra.mxu0 0.0
    %3726 = vmatprep.subr.mxu0 0.0
    %3727 = vmatpush1.xpose.msra.mxu0 0.0
    %3728 = vmatprep.subr.mxu0 0.0
    %3729 = vmatpush1.xpose.msra.mxu0 0.0
    %3730 = vmatprep.subr.mxu0 0.0
    %3731 = vmatpush1.xpose.msra.mxu0 0.0
    %3732 = vmatprep.subr.mxu0 0.0
    %3733 = vmatpush1.xpose.msra.mxu0 0.0
    %3734 = vmatprep.subr.mxu0 0.0
    %3735 = vmatpush1.xpose.msra.mxu0 0.0
    %3736 = vmatprep.subr.mxu0 0.0
    %3737 = vmatpush1.xpose.msra.mxu0 0.0
    %3738 = vmatprep.subr.mxu0 0.0
    %3739 = vmatpush1.xpose.msra.mxu0 0.0
    %3740 = vmatprep.subr.mxu0 0.0
    %3741 = vmatpush1.xpose.msra.mxu0 0.0
    %3742 = vmatprep.subr.mxu0 0.0
    %3743 = vmatpush1.xpose.msra.mxu0 0.0
    %3744 = vmatprep.subr.mxu0 0.0
    %3745 = vmatpush1.xpose.msra.mxu0 %v3714
    %3746 = vmatprep.subr.mxu0 0.0
    %3747 = vmatpush1.xpose.msra.mxu0 %v3712
    %3748 = vmatprep.subr.mxu0 0.0
    %3749 = vmatpush2.xpose.msra.mxu0 0.0
    %3750 = vmatprep.subr.mxu0 0.0
    %3751 = vmatpush2.xpose.msra.mxu0 0.0
    %3752 = vmatprep.subr.mxu0 0.0
    %3753 = vmatpush2.xpose.msra.mxu0 0.0
    %3754 = vmatprep.subr.mxu0 0.0
    %3755 = vmatpush2.xpose.msra.mxu0 0.0
    %3756 = vmatprep.subr.mxu0 0.0
    %3757 = vmatpush2.xpose.msra.mxu0 0.0
    %3758 = vmatprep.subr.mxu0 0.0
    %3759 = vmatpush2.xpose.msra.mxu0 0.0
    %3760 = vmatprep.subr.mxu0 0.0
    %3761 = vmatpush2.xpose.msra.mxu0 0.0
    %3762 = vmatprep.subr.mxu0 0.0
    %3763 = vmatpush2.xpose.msra.mxu0 0.0
    %3764 = vmatprep.subr.mxu0 0.0
    %3765 = vmatpush2.xpose.msra.mxu0 0.0
    %3766 = vmatprep.subr.mxu0 0.0
    %3767 = vmatpush2.xpose.msra.mxu0 0.0
    %3768 = vmatprep.subr.mxu0 0.0
    %3769 = vmatpush2.xpose.msra.mxu0 0.0
    %3770 = vmatprep.subr.mxu0 0.0
    %3771 = vmatpush2.xpose.msra.mxu0 0.0
    %3772 = vmatprep.subr.mxu0 0.0
    %3773 = vmatpush2.xpose.msra.mxu0 0.0
    %3774 = vmatprep.subr.mxu0 0.0
    %3775 = vmatpush2.xpose.msra.mxu0 0.0
    %3776 = vmatprep.subr.mxu0 0.0
    %3777 = vmatpush2.xpose.msra.mxu0 0.0
    %3778 = vmatprep.subr.mxu0 0.0
    %3779 = vmatpush2.xpose.msra.mxu0 0.0
    %3780 = vmatprep.mubr.f32.mxu0 0.0
    %3781 = vmatmul.mubr.f32.gmra.mxu0 %v3708
    %v3782 = vpop.f32.mrf.mxu0
    %v3783 = vadd.f32 0.0, %v3782
    %v3784 = vpop.f32.mrf.mxu0
    %3785 = vmatprep.mubr.f32.mxu0 0.0
    %3786 = vmatmul.mubr.f32.gmra.mxu0 %v3710
    %v3787 = vpop.f32.mrf.mxu0
    %v3788 = vadd.f32 0.0, %v3787
    %v3789 = vpop.f32.mrf.mxu0
    %3790 = vdwg.mxu0
    %3791 = vrot.lane.b32.xlu0 %v2699, 96
    %v3792 = vpop.permute.xlu0 %3791
    %3793 = vrot.lane.b32.xlu0 %v2700, 96
    %v3794 = vpop.permute.xlu0 %3793
    %3795 = vrot.lane.b32.xlu0 %v2604, 96
    %v3796 = vpop.permute.xlu0 %3795
    %3797 = vrot.lane.b32.xlu0 %v2610, 96
    %v3798 = vpop.permute.xlu0 %3797
    %v3799 = vsel %vm450, %v3792, 0
    %v3801 = vsel %vm450, %v3794, 0
    %v3803 = vsel %vm450, %v3796, 0
    %v3805 = vsel %vm450, %v3798, 0
    %3807 = vmatprep.subr.mxu0 0.0
    %3808 = vmatpush1.xpose.msra.mxu0 0.0
    %3809 = vmatprep.subr.mxu0 0.0
    %3810 = vmatpush1.xpose.msra.mxu0 0.0
    %3811 = vmatprep.subr.mxu0 0.0
    %3812 = vmatpush1.xpose.msra.mxu0 0.0
    %3813 = vmatprep.subr.mxu0 0.0
    %3814 = vmatpush1.xpose.msra.mxu0 0.0
    %3815 = vmatprep.subr.mxu0 0.0
    %3816 = vmatpush1.xpose.msra.mxu0 0.0
    %3817 = vmatprep.subr.mxu0 0.0
    %3818 = vmatpush1.xpose.msra.mxu0 0.0
    %3819 = vmatprep.subr.mxu0 0.0
    %3820 = vmatpush1.xpose.msra.mxu0 0.0
    %3821 = vmatprep.subr.mxu0 0.0
    %3822 = vmatpush1.xpose.msra.mxu0 0.0
    %3823 = vmatprep.subr.mxu0 0.0
    %3824 = vmatpush1.xpose.msra.mxu0 0.0
    %3825 = vmatprep.subr.mxu0 0.0
    %3826 = vmatpush1.xpose.msra.mxu0 0.0
    %3827 = vmatprep.subr.mxu0 0.0
    %3828 = vmatpush1.xpose.msra.mxu0 0.0
    %3829 = vmatprep.subr.mxu0 0.0
    %3830 = vmatpush1.xpose.msra.mxu0 0.0
    %3831 = vmatprep.subr.mxu0 0.0
    %3832 = vmatpush1.xpose.msra.mxu0 0.0
    %3833 = vmatprep.subr.mxu0 0.0
    %3834 = vmatpush1.xpose.msra.mxu0 0.0
    %3835 = vmatprep.subr.mxu0 0.0
    %3836 = vmatpush1.xpose.msra.mxu0 %v3805
    %3837 = vmatprep.subr.mxu0 0.0
    %3838 = vmatpush1.xpose.msra.mxu0 %v3803
    %3839 = vmatprep.subr.mxu0 0.0
    %3840 = vmatpush2.xpose.msra.mxu0 0.0
    %3841 = vmatprep.subr.mxu0 0.0
    %3842 = vmatpush2.xpose.msra.mxu0 0.0
    %3843 = vmatprep.subr.mxu0 0.0
    %3844 = vmatpush2.xpose.msra.mxu0 0.0
    %3845 = vmatprep.subr.mxu0 0.0
    %3846 = vmatpush2.xpose.msra.mxu0 0.0
    %3847 = vmatprep.subr.mxu0 0.0
    %3848 = vmatpush2.xpose.msra.mxu0 0.0
    %3849 = vmatprep.subr.mxu0 0.0
    %3850 = vmatpush2.xpose.msra.mxu0 0.0
    %3851 = vmatprep.subr.mxu0 0.0
    %3852 = vmatpush2.xpose.msra.mxu0 0.0
    %3853 = vmatprep.subr.mxu0 0.0
    %3854 = vmatpush2.xpose.msra.mxu0 0.0
    %3855 = vmatprep.subr.mxu0 0.0
    %3856 = vmatpush2.xpose.msra.mxu0 0.0
    %3857 = vmatprep.subr.mxu0 0.0
    %3858 = vmatpush2.xpose.msra.mxu0 0.0
    %3859 = vmatprep.subr.mxu0 0.0
    %3860 = vmatpush2.xpose.msra.mxu0 0.0
    %3861 = vmatprep.subr.mxu0 0.0
    %3862 = vmatpush2.xpose.msra.mxu0 0.0
    %3863 = vmatprep.subr.mxu0 0.0
    %3864 = vmatpush2.xpose.msra.mxu0 0.0
    %3865 = vmatprep.subr.mxu0 0.0
    %3866 = vmatpush2.xpose.msra.mxu0 0.0
    %3867 = vmatprep.subr.mxu0 0.0
    %3868 = vmatpush2.xpose.msra.mxu0 0.0
    %3869 = vmatprep.subr.mxu0 0.0
    %3870 = vmatpush2.xpose.msra.mxu0 0.0
    %3871 = vmatprep.mubr.f32.mxu0 0.0
    %3872 = vmatmul.mubr.f32.gmra.mxu0 %v3799
    %v3873 = vpop.f32.mrf.mxu0
    %v3874 = vadd.f32 0.0, %v3873
    %v3875 = vpop.f32.mrf.mxu0
    %3876 = vmatprep.mubr.f32.mxu0 0.0
    %3877 = vmatmul.mubr.f32.gmra.mxu0 %v3801
    %v3878 = vpop.f32.mrf.mxu0
    %v3879 = vadd.f32 0.0, %v3878
    %v3880 = vpop.f32.mrf.mxu0
    %3881 = vdwg.mxu0
    %v3882 = vsel %vm164, %v3783, -1e+30
    %v3883 = vsel %vm164, %v3788, -1e+30
    %v3884 = vsel %vm164, %v3874, -1e+30
    %v3885 = vsel %vm164, %v3879, -1e+30
    %v3886 = vsel %vm450, %v3882, -inf
    %3887 = vmax.xlane.f32.xlu0 %v3886
    %v3888 = vpop.xlane.xlu0 %3887
    %v3889 = vsel %vm450, %v3883, -inf
    %3890 = vmax.xlane.f32.xlu0 %v3889
    %v3891 = vpop.xlane.xlu0 %3890
    %v3892 = vsel %vm450, %v3884, -inf
    %3893 = vmax.xlane.f32.xlu0 %v3892
    %v3894 = vpop.xlane.xlu0 %3893
    %v3895 = vsel %vm450, %v3885, -inf
    %3896 = vmax.xlane.f32.xlu0 %v3895
    %v3897 = vpop.xlane.xlu0 %3896
    %v3898 = vsub.f32 %v3882, %v3888
    %v3899 = vsub.f32 %v3883, %v3891
    %v3900 = vsub.f32 %v3884, %v3894
    %v3901 = vsub.f32 %v3885, %v3897
    %v3902 = vmul.f32 %v3898, 1.442695
    %v3903 = vpow.pop %v3902
    %v3904 = vmul.f32 %v3899, 1.442695
    %v3905 = vpow.pop %v3904
    %v3906 = vmul.f32 %v3900, 1.442695
    %v3907 = vpow.pop %v3906
    %v3908 = vmul.f32 %v3901, 1.442695
    %v3909 = vpow.pop %v3908
    %v3910 = vsel %vm450, %v3903, 0.0
    %3911 = vadd.xlane.f32.xlu0 %v3910
    %v3912 = vpop.xlane.xlu0 %3911
    %v3913 = vsel %vm450, %v3905, 0.0
    %3914 = vadd.xlane.f32.xlu0 %v3913
    %v3915 = vpop.xlane.xlu0 %3914
    %v3916 = vsel %vm450, %v3907, 0.0
    %3917 = vadd.xlane.f32.xlu0 %v3916
    %v3918 = vpop.xlane.xlu0 %3917
    %v3919 = vsel %vm450, %v3909, 0.0
    %3920 = vadd.xlane.f32.xlu0 %v3919
    %v3921 = vpop.xlane.xlu0 %3920
    %v3922 = vrcp.pop %v3912
    %v3923 = vmul.f32 %v3903, %v3922
    %v3924 = vrcp.pop %v3915
    %v3925 = vmul.f32 %v3905, %v3924
    %v3926 = vrcp.pop %v3918
    %v3927 = vmul.f32 %v3907, %v3926
    %v3928 = vrcp.pop %v3921
    %v3929 = vmul.f32 %v3909, %v3928
    %3930 = vrot.lane.b32.xlu0 %v2679, 96
    %v3931 = vpop.permute.xlu0 %3930
    %3932 = vrot.lane.b32.xlu0 %v2684, 96
    %v3933 = vpop.permute.xlu0 %3932
    %v3937 = vsel %vm450, %v3923, 0
    %v3940 = vsel %vm450, %v3925, 0
    %3942 = vmatprep.subr.mxu0 0.0
    %3943 = vmatpush1.msra.mxu0 0.0
    %3944 = vmatprep.subr.mxu0 0.0
    %3945 = vmatpush1.msra.mxu0 0.0
    %3946 = vmatprep.subr.mxu0 0.0
    %3947 = vmatpush1.msra.mxu0 0.0
    %3948 = vmatprep.subr.mxu0 0.0
    %3949 = vmatpush1.msra.mxu0 0.0
    %3950 = vmatprep.subr.mxu0 0.0
    %3951 = vmatpush1.msra.mxu0 0.0
    %3952 = vmatprep.subr.mxu0 0.0
    %3953 = vmatpush1.msra.mxu0 0.0
    %3954 = vmatprep.subr.mxu0 0.0
    %3955 = vmatpush1.msra.mxu0 0.0
    %3956 = vmatprep.subr.mxu0 0.0
    %3957 = vmatpush1.msra.mxu0 0.0
    %3958 = vmatprep.subr.mxu0 0.0
    %3959 = vmatpush1.msra.mxu0 0.0
    %3960 = vmatprep.subr.mxu0 0.0
    %3961 = vmatpush1.msra.mxu0 0.0
    %3962 = vmatprep.subr.mxu0 0.0
    %3963 = vmatpush1.msra.mxu0 0.0
    %3964 = vmatprep.subr.mxu0 0.0
    %3965 = vmatpush1.msra.mxu0 0.0
    %3966 = vmatprep.subr.mxu0 0.0
    %3967 = vmatpush1.msra.mxu0 0.0
    %3968 = vmatprep.subr.mxu0 0.0
    %3969 = vmatpush1.msra.mxu0 0.0
    %3970 = vmatprep.subr.mxu0 0.0
    %3971 = vmatpush1.msra.mxu0 %v3933
    %3972 = vmatprep.subr.mxu0 0.0
    %3973 = vmatpush1.msra.mxu0 %v3931
    %3974 = vmatprep.subr.mxu0 0.0
    %3975 = vmatpush2.msra.mxu0 0.0
    %3976 = vmatprep.subr.mxu0 0.0
    %3977 = vmatpush2.msra.mxu0 0.0
    %3978 = vmatprep.subr.mxu0 0.0
    %3979 = vmatpush2.msra.mxu0 0.0
    %3980 = vmatprep.subr.mxu0 0.0
    %3981 = vmatpush2.msra.mxu0 0.0
    %3982 = vmatprep.subr.mxu0 0.0
    %3983 = vmatpush2.msra.mxu0 0.0
    %3984 = vmatprep.subr.mxu0 0.0
    %3985 = vmatpush2.msra.mxu0 0.0
    %3986 = vmatprep.subr.mxu0 0.0
    %3987 = vmatpush2.msra.mxu0 0.0
    %3988 = vmatprep.subr.mxu0 0.0
    %3989 = vmatpush2.msra.mxu0 0.0
    %3990 = vmatprep.subr.mxu0 0.0
    %3991 = vmatpush2.msra.mxu0 0.0
    %3992 = vmatprep.subr.mxu0 0.0
    %3993 = vmatpush2.msra.mxu0 0.0
    %3994 = vmatprep.subr.mxu0 0.0
    %3995 = vmatpush2.msra.mxu0 0.0
    %3996 = vmatprep.subr.mxu0 0.0
    %3997 = vmatpush2.msra.mxu0 0.0
    %3998 = vmatprep.subr.mxu0 0.0
    %3999 = vmatpush2.msra.mxu0 0.0
    %4000 = vmatprep.subr.mxu0 0.0
    %4001 = vmatpush2.msra.mxu0 0.0
    %4002 = vmatprep.subr.mxu0 0.0
    %4003 = vmatpush2.msra.mxu0 0.0
    %4004 = vmatprep.subr.mxu0 0.0
    %4005 = vmatpush2.msra.mxu0 0.0
    %4006 = vmatprep.mubr.f32.mxu0 0.0
    %4007 = vmatmul.mubr.f32.gmra.mxu0 %v3937
    %v4008 = vpop.f32.mrf.mxu0
    %v4009 = vadd.f32 0.0, %v4008
    %v4010 = vpop.f32.mrf.mxu0
    %4011 = vmatprep.mubr.f32.mxu0 0.0
    %4012 = vmatmul.mubr.f32.gmra.mxu0 %v3940
    %v4013 = vpop.f32.mrf.mxu0
    %v4014 = vadd.f32 0.0, %v4013
    %v4015 = vpop.f32.mrf.mxu0
    %4016 = vdwg.mxu0
    %4017 = vrot.lane.b32.xlu0 %v2689, 96
    %v4018 = vpop.permute.xlu0 %4017
    %4019 = vrot.lane.b32.xlu0 %v2694, 96
    %v4020 = vpop.permute.xlu0 %4019
    %v4024 = vsel %vm450, %v3927, 0
    %v4027 = vsel %vm450, %v3929, 0
    %4029 = vmatprep.subr.mxu0 0.0
    %4030 = vmatpush1.msra.mxu0 0.0
    %4031 = vmatprep.subr.mxu0 0.0
    %4032 = vmatpush1.msra.mxu0 0.0
    %4033 = vmatprep.subr.mxu0 0.0
    %4034 = vmatpush1.msra.mxu0 0.0
    %4035 = vmatprep.subr.mxu0 0.0
    %4036 = vmatpush1.msra.mxu0 0.0
    %4037 = vmatprep.subr.mxu0 0.0
    %4038 = vmatpush1.msra.mxu0 0.0
    %4039 = vmatprep.subr.mxu0 0.0
    %4040 = vmatpush1.msra.mxu0 0.0
    %4041 = vmatprep.subr.mxu0 0.0
    %4042 = vmatpush1.msra.mxu0 0.0
    %4043 = vmatprep.subr.mxu0 0.0
    %4044 = vmatpush1.msra.mxu0 0.0
    %4045 = vmatprep.subr.mxu0 0.0
    %4046 = vmatpush1.msra.mxu0 0.0
    %4047 = vmatprep.subr.mxu0 0.0
    %4048 = vmatpush1.msra.mxu0 0.0
    %4049 = vmatprep.subr.mxu0 0.0
    %4050 = vmatpush1.msra.mxu0 0.0
    %4051 = vmatprep.subr.mxu0 0.0
    %4052 = vmatpush1.msra.mxu0 0.0
    %4053 = vmatprep.subr.mxu0 0.0
    %4054 = vmatpush1.msra.mxu0 0.0
    %4055 = vmatprep.subr.mxu0 0.0
    %4056 = vmatpush1.msra.mxu0 0.0
    %4057 = vmatprep.subr.mxu0 0.0
    %4058 = vmatpush1.msra.mxu0 %v4020
    %4059 = vmatprep.subr.mxu0 0.0
    %4060 = vmatpush1.msra.mxu0 %v4018
    %4061 = vmatprep.subr.mxu0 0.0
    %4062 = vmatpush2.msra.mxu0 0.0
    %4063 = vmatprep.subr.mxu0 0.0
    %4064 = vmatpush2.msra.mxu0 0.0
    %4065 = vmatprep.subr.mxu0 0.0
    %4066 = vmatpush2.msra.mxu0 0.0
    %4067 = vmatprep.subr.mxu0 0.0
    %4068 = vmatpush2.msra.mxu0 0.0
    %4069 = vmatprep.subr.mxu0 0.0
    %4070 = vmatpush2.msra.mxu0 0.0
    %4071 = vmatprep.subr.mxu0 0.0
    %4072 = vmatpush2.msra.mxu0 0.0
    %4073 = vmatprep.subr.mxu0 0.0
    %4074 = vmatpush2.msra.mxu0 0.0
    %4075 = vmatprep.subr.mxu0 0.0
    %4076 = vmatpush2.msra.mxu0 0.0
    %4077 = vmatprep.subr.mxu0 0.0
    %4078 = vmatpush2.msra.mxu0 0.0
    %4079 = vmatprep.subr.mxu0 0.0
    %4080 = vmatpush2.msra.mxu0 0.0
    %4081 = vmatprep.subr.mxu0 0.0
    %4082 = vmatpush2.msra.mxu0 0.0
    %4083 = vmatprep.subr.mxu0 0.0
    %4084 = vmatpush2.msra.mxu0 0.0
    %4085 = vmatprep.subr.mxu0 0.0
    %4086 = vmatpush2.msra.mxu0 0.0
    %4087 = vmatprep.subr.mxu0 0.0
    %4088 = vmatpush2.msra.mxu0 0.0
    %4089 = vmatprep.subr.mxu0 0.0
    %4090 = vmatpush2.msra.mxu0 0.0
    %4091 = vmatprep.subr.mxu0 0.0
    %4092 = vmatpush2.msra.mxu0 0.0
    %4093 = vmatprep.mubr.f32.mxu0 0.0
    %4094 = vmatmul.mubr.f32.gmra.mxu0 %v4024
    %v4095 = vpop.f32.mrf.mxu0
    %v4096 = vadd.f32 0.0, %v4095
    %v4097 = vpop.f32.mrf.mxu0
    %4098 = vmatprep.mubr.f32.mxu0 0.0
    %4099 = vmatmul.mubr.f32.gmra.mxu0 %v4027
    %v4100 = vpop.f32.mrf.mxu0
    %v4101 = vadd.f32 0.0, %v4100
    %v4102 = vpop.f32.mrf.mxu0
    %4103 = vdwg.mxu0
    %v4105 = vsel %vm450, %v4009, 0
    %v4108 = vsel %vm450, %v4014, 0
    %v4111 = vsel %vm450, %v4096, 0
    %v4114 = vsel %vm450, %v4101, 0
    %4116 = vmatprep.subr.mxu0 0.0
    %4117 = vmatpush1.msra.mxu0 0.0
    %4118 = vmatprep.subr.mxu0 0.0
    %4119 = vmatpush1.msra.mxu0 0.0
    %4120 = vmatprep.subr.mxu0 0.0
    %4121 = vmatpush1.msra.mxu0 0.0
    %4122 = vmatprep.subr.mxu0 0.0
    %4123 = vmatpush1.msra.mxu0 0.0
    %4124 = vmatprep.subr.mxu0 0.0
    %4125 = vmatpush1.msra.mxu0 0.0
    %4126 = vmatprep.subr.mxu0 0.0
    %4127 = vmatpush1.msra.mxu0 0.0
    %4128 = vmatprep.subr.mxu0 0.0
    %4129 = vmatpush1.msra.mxu0 0.0
    %4130 = vmatprep.subr.mxu0 0.0
    %4131 = vmatpush1.msra.mxu0 0.0
    %4132 = vmatprep.subr.mxu0 0.0
    %4133 = vmatpush1.msra.mxu0 0.0
    %4134 = vmatprep.subr.mxu0 0.0
    %4135 = vmatpush1.msra.mxu0 0.0
    %4136 = vmatprep.subr.mxu0 0.0
    %4137 = vmatpush1.msra.mxu0 0.0
    %4138 = vmatprep.subr.mxu0 0.0
    %4139 = vmatpush1.msra.mxu0 0.0
    %4140 = vmatprep.subr.mxu0 0.0
    %4141 = vmatpush1.msra.mxu0 0.0
    %4142 = vmatprep.subr.mxu0 0.0
    %4143 = vmatpush1.msra.mxu0 0.0
    %4144 = vmatprep.subr.mxu0 0.0
    %4145 = vmatpush1.msra.mxu0 %v2713
    %4146 = vmatprep.subr.mxu0 0.0
    %4147 = vmatpush1.msra.mxu0 %v2712
    %4148 = vmatprep.subr.mxu0 0.0
    %4149 = vmatpush2.msra.mxu0 0.0
    %4150 = vmatprep.subr.mxu0 0.0
    %4151 = vmatpush2.msra.mxu0 0.0
    %4152 = vmatprep.subr.mxu0 0.0
    %4153 = vmatpush2.msra.mxu0 0.0
    %4154 = vmatprep.subr.mxu0 0.0
    %4155 = vmatpush2.msra.mxu0 0.0
    %4156 = vmatprep.subr.mxu0 0.0
    %4157 = vmatpush2.msra.mxu0 0.0
    %4158 = vmatprep.subr.mxu0 0.0
    %4159 = vmatpush2.msra.mxu0 0.0
    %4160 = vmatprep.subr.mxu0 0.0
    %4161 = vmatpush2.msra.mxu0 0.0
    %4162 = vmatprep.subr.mxu0 0.0
    %4163 = vmatpush2.msra.mxu0 0.0
    %4164 = vmatprep.subr.mxu0 0.0
    %4165 = vmatpush2.msra.mxu0 0.0
    %4166 = vmatprep.subr.mxu0 0.0
    %4167 = vmatpush2.msra.mxu0 0.0
    %4168 = vmatprep.subr.mxu0 0.0
    %4169 = vmatpush2.msra.mxu0 0.0
    %4170 = vmatprep.subr.mxu0 0.0
    %4171 = vmatpush2.msra.mxu0 0.0
    %4172 = vmatprep.subr.mxu0 0.0
    %4173 = vmatpush2.msra.mxu0 0.0
    %4174 = vmatprep.subr.mxu0 0.0
    %4175 = vmatpush2.msra.mxu0 0.0
    %4176 = vmatprep.subr.mxu0 0.0
    %4177 = vmatpush2.msra.mxu0 0.0
    %4178 = vmatprep.subr.mxu0 0.0
    %4179 = vmatpush2.msra.mxu0 0.0
    %4180 = vmatprep.mubr.f32.mxu0 0.0
    %4181 = vmatmul.mubr.f32.gmra.mxu0 %v4105
    %v4182 = vpop.f32.mrf.mxu0
    %v4183 = vadd.f32 0.0, %v4182
    %v4184 = vpop.f32.mrf.mxu0
    %4185 = vmatprep.mubr.f32.mxu0 0.0
    %4186 = vmatmul.mubr.f32.gmra.mxu0 %v4108
    %v4187 = vpop.f32.mrf.mxu0
    %v4188 = vadd.f32 0.0, %v4187
    %v4189 = vpop.f32.mrf.mxu0
    %4190 = vmatprep.mubr.f32.mxu0 0.0
    %4191 = vmatmul.mubr.f32.gmra.mxu0 %v4111
    %v4192 = vpop.f32.mrf.mxu0
    %v4193 = vadd.f32 0.0, %v4192
    %v4194 = vpop.f32.mrf.mxu0
    %4195 = vmatprep.mubr.f32.mxu0 0.0
    %4196 = vmatmul.mubr.f32.gmra.mxu0 %v4114
    %v4197 = vpop.f32.mrf.mxu0
    %v4198 = vadd.f32 0.0, %v4197
    %v4199 = vpop.f32.mrf.mxu0
    %4200 = vdwg.mxu0
    %v4201 = vadd.f32 %v3682, %v4183
    %v4202 = vadd.f32 %v3687, %v4188
    %v4203 = vadd.f32 %v3692, %v4193
    %v4204 = vadd.f32 %v3697, %v4198
    %v4205 = vlaneseq
    %v4206 = vshrl.u32 %v4205, 7
    %v4207 = vsub.s32 1, %v4206
    %v4208 = vrot.slane %v2427, %v4207
    %v4209 = vadd.f32 %v4201, %v4208
    %v4210 = vadd.f32 %v4202, %v4208
    %v4211 = vadd.f32 %v4203, %v4208
    %v4212 = vadd.f32 %v4204, %v4208
    %v4213 = vadd.f32 %v2422, %v4209
    %v4214 = vadd.f32 %v2423, %v4210
    %v4215 = vadd.f32 %v2424, %v4211
    %v4216 = vadd.f32 %v2425, %v4212
    %4217 = vadd.xlane.f32.xlu0 %v4213
    %v4218 = vpop.xlane.xlu0 %4217
    %4219 = vadd.xlane.f32.xlu0 %v4214
    %v4220 = vpop.xlane.xlu0 %4219
    %4221 = vadd.xlane.f32.xlu0 %v4215
    %v4222 = vpop.xlane.xlu0 %4221
    %4223 = vadd.xlane.f32.xlu0 %v4216
    %v4224 = vpop.xlane.xlu0 %4223
    %v4225 = vmul.f32 %v4218, 0.020833334
    %v4226 = vmul.f32 %v4220, 0.020833334
    %v4227 = vmul.f32 %v4222, 0.020833334
    %v4228 = vmul.f32 %v4224, 0.020833334
    %v4229 = vsub.f32 %v4213, %v4225
    %v4230 = vsub.f32 %v4214, %v4226
    %v4231 = vsub.f32 %v4215, %v4227
    %v4232 = vsub.f32 %v4216, %v4228
    %v4233 = vsel %vm1971, %v4229, 0.0
    %v4234 = vsel %vm1971, %v4230, 0.0
    %v4235 = vsel %vm1971, %v4231, 0.0
    %v4236 = vsel %vm1971, %v4232, 0.0
    %v4237 = vmul.f32 %v4233, %v4233
    %v4238 = vmul.f32 %v4234, %v4234
    %v4239 = vmul.f32 %v4235, %v4235
    %v4240 = vmul.f32 %v4236, %v4236
    %4241 = vadd.xlane.f32.xlu0 %v4237
    %v4242 = vpop.xlane.xlu0 %4241
    %4243 = vadd.xlane.f32.xlu0 %v4238
    %v4244 = vpop.xlane.xlu0 %4243
    %4245 = vadd.xlane.f32.xlu0 %v4239
    %v4246 = vpop.xlane.xlu0 %4245
    %4247 = vadd.xlane.f32.xlu0 %v4240
    %v4248 = vpop.xlane.xlu0 %4247
    %v4249 = vmul.f32 %v4242, 0.020833334
    %v4250 = vmul.f32 %v4244, 0.020833334
    %v4251 = vmul.f32 %v4246, 0.020833334
    %v4252 = vmul.f32 %v4248, 0.020833334
    %v4253 = vadd.f32 %v4249, 1e-05
    %v4254 = vadd.f32 %v4250, 1e-05
    %v4255 = vadd.f32 %v4251, 1e-05
    %v4256 = vadd.f32 %v4252, 1e-05
    %v4257 = vrsqrt.pop %v4253
    %v4258 = vrsqrt.pop %v4254
    %v4259 = vrsqrt.pop %v4255
    %v4260 = vrsqrt.pop %v4256
    %v4261 = vmul.f32 %v4233, %v4257
    %v4262 = vmul.f32 %v4234, %v4258
    %v4263 = vmul.f32 %v4235, %v4259
    %v4264 = vmul.f32 %v4236, %v4260
    %v4265 = vlaneseq
    %v4266 = vshrl.u32 %v4265, 7
    %v4267 = vsub.s32 2, %v4266
    %v4268 = vrot.slane %v2427, %v4267
    %v4269 = vmul.f32 %v4261, %v4268
    %v4270 = vmul.f32 %v4262, %v4268
    %v4271 = vmul.f32 %v4263, %v4268
    %v4272 = vmul.f32 %v4264, %v4268
    %v4273 = vlaneseq
    %v4274 = vshrl.u32 %v4273, 7
    %v4275 = vsub.s32 3, %v4274
    %v4276 = vrot.slane %v2427, %v4275
    %v4277 = vadd.f32 %v4269, %v4276
    %v4278 = vadd.f32 %v4270, %v4276
    %v4279 = vadd.f32 %v4271, %v4276
    %v4280 = vadd.f32 %v4272, %v4276
    %s4281 = scalar_lea.vmem %s5, 128
    %v4282 = vld [vmem:[%s4281] sm:$0xff]
    %v4283 = vld [vmem:[%s4281 + $0x8] sm:$0xff]
    %v4284 = vld [vmem:[%s4281 + $0x10] sm:$0xff]
    %v4285 = vld [vmem:[%s4281 + $0x18] sm:$0xff]
    %v4286 = vld [vmem:[%s4281 + $0x20] sm:$0xff]
    %v4287 = vld [vmem:[%s4281 + $0x28] sm:$0xff]
    %v4288 = vld [vmem:[%s4281 + $0x30] sm:$0xff]
    %v4289 = vld [vmem:[%s4281 + $0x38] sm:$0xff]
    %v4290 = vld [vmem:[%s4281 + $0x40] sm:$0xff]
    %v4291 = vld [vmem:[%s4281 + $0x48] sm:$0xff]
    %v4292 = vld [vmem:[%s4281 + $0x50] sm:$0xff]
    %v4293 = vld [vmem:[%s4281 + $0x58] sm:$0xff]
    %v4294 = vld [vmem:[%s4281 + $0x60] sm:$0xff]
    %v4295 = vld [vmem:[%s4281 + $0x68] sm:$0xff]
    %v4296 = vld [vmem:[%s4281 + $0x70] sm:$0xff]
    %v4297 = vld [vmem:[%s4281 + $0x78] sm:$0xff]
    %v4298 = vunpack.c.l.bf16 %v4282
    %v4299 = vunpack.c.h.bf16 %v4282
    %v4300 = vunpack.c.l.bf16 %v4283
    %v4301 = vunpack.c.h.bf16 %v4283
    %v4302 = vunpack.c.l.bf16 %v4284
    %v4303 = vunpack.c.h.bf16 %v4284
    %v4304 = vunpack.c.l.bf16 %v4285
    %v4305 = vunpack.c.h.bf16 %v4285
    %v4306 = vunpack.c.l.bf16 %v4286
    %v4307 = vunpack.c.h.bf16 %v4286
    %v4308 = vunpack.c.l.bf16 %v4287
    %v4309 = vunpack.c.h.bf16 %v4287
    %v4310 = vunpack.c.l.bf16 %v4288
    %v4311 = vunpack.c.h.bf16 %v4288
    %v4312 = vunpack.c.l.bf16 %v4289
    %v4313 = vunpack.c.h.bf16 %v4289
    %v4314 = vunpack.c.l.bf16 %v4290
    %v4315 = vunpack.c.h.bf16 %v4290
    %v4316 = vunpack.c.l.bf16 %v4291
    %v4317 = vunpack.c.h.bf16 %v4291
    %v4318 = vunpack.c.l.bf16 %v4292
    %v4319 = vunpack.c.h.bf16 %v4292
    %v4320 = vunpack.c.l.bf16 %v4293
    %v4321 = vunpack.c.h.bf16 %v4293
    %v4322 = vunpack.c.l.bf16 %v4294
    %v4323 = vunpack.c.h.bf16 %v4294
    %v4324 = vunpack.c.l.bf16 %v4295
    %v4325 = vunpack.c.h.bf16 %v4295
    %v4326 = vunpack.c.l.bf16 %v4296
    %v4327 = vunpack.c.h.bf16 %v4296
    %v4328 = vunpack.c.l.bf16 %v4297
    %v4329 = vunpack.c.h.bf16 %v4297
    %v4330 = vlaneseq
    %v4331 = vshrl.u32 %v4330, 7
    %v4332 = vsub.s32 4, %v4331
    %v4333 = vrot.slane %v2427, %v4332
    %v4334 = vlaneseq
    %v4335 = vshrl.u32 %v4334, 7
    %v4336 = vsub.s32 4, %v4335
    %v4337 = vrot.slane %v2428, %v4336
    %4338 = vmatprep.subr.mxu0 %v4329
    %4339 = vmatpush1.msra.mxu0 %v4328
    %4340 = vmatprep.subr.mxu0 %v4327
    %4341 = vmatpush1.msra.mxu0 %v4326
    %4342 = vmatprep.subr.mxu0 %v4325
    %4343 = vmatpush1.msra.mxu0 %v4324
    %4344 = vmatprep.subr.mxu0 %v4323
    %4345 = vmatpush1.msra.mxu0 %v4322
    %4346 = vmatprep.subr.mxu0 %v4321
    %4347 = vmatpush1.msra.mxu0 %v4320
    %4348 = vmatprep.subr.mxu0 %v4319
    %4349 = vmatpush1.msra.mxu0 %v4318
    %4350 = vmatprep.subr.mxu0 %v4317
    %4351 = vmatpush1.msra.mxu0 %v4316
    %4352 = vmatprep.subr.mxu0 %v4315
    %4353 = vmatpush1.msra.mxu0 %v4314
    %4354 = vmatprep.subr.mxu0 %v4313
    %4355 = vmatpush1.msra.mxu0 %v4312
    %4356 = vmatprep.subr.mxu0 %v4311
    %4357 = vmatpush1.msra.mxu0 %v4310
    %4358 = vmatprep.subr.mxu0 %v4309
    %4359 = vmatpush1.msra.mxu0 %v4308
    %4360 = vmatprep.subr.mxu0 %v4307
    %4361 = vmatpush1.msra.mxu0 %v4306
    %4362 = vmatprep.subr.mxu0 %v4305
    %4363 = vmatpush1.msra.mxu0 %v4304
    %4364 = vmatprep.subr.mxu0 %v4303
    %4365 = vmatpush1.msra.mxu0 %v4302
    %4366 = vmatprep.subr.mxu0 %v4301
    %4367 = vmatpush1.msra.mxu0 %v4300
    %4368 = vmatprep.subr.mxu0 %v4299
    %4369 = vmatpush1.msra.mxu0 %v4298
    %4370 = vmatprep.subr.mxu0 0.0
    %4371 = vmatpush2.msra.mxu0 0.0
    %4372 = vmatprep.subr.mxu0 0.0
    %4373 = vmatpush2.msra.mxu0 0.0
    %4374 = vmatprep.subr.mxu0 0.0
    %4375 = vmatpush2.msra.mxu0 0.0
    %4376 = vmatprep.subr.mxu0 0.0
    %4377 = vmatpush2.msra.mxu0 0.0
    %4378 = vmatprep.subr.mxu0 0.0
    %4379 = vmatpush2.msra.mxu0 0.0
    %4380 = vmatprep.subr.mxu0 0.0
    %4381 = vmatpush2.msra.mxu0 0.0
    %4382 = vmatprep.subr.mxu0 0.0
    %4383 = vmatpush2.msra.mxu0 0.0
    %4384 = vmatprep.subr.mxu0 0.0
    %4385 = vmatpush2.msra.mxu0 0.0
    %4386 = vmatprep.subr.mxu0 0.0
    %4387 = vmatpush2.msra.mxu0 0.0
    %4388 = vmatprep.subr.mxu0 0.0
    %4389 = vmatpush2.msra.mxu0 0.0
    %4390 = vmatprep.subr.mxu0 0.0
    %4391 = vmatpush2.msra.mxu0 0.0
    %4392 = vmatprep.subr.mxu0 0.0
    %4393 = vmatpush2.msra.mxu0 0.0
    %4394 = vmatprep.subr.mxu0 0.0
    %4395 = vmatpush2.msra.mxu0 0.0
    %4396 = vmatprep.subr.mxu0 0.0
    %4397 = vmatpush2.msra.mxu0 0.0
    %4398 = vmatprep.subr.mxu0 0.0
    %4399 = vmatpush2.msra.mxu0 0.0
    %4400 = vmatprep.subr.mxu0 0.0
    %4401 = vmatpush2.msra.mxu0 0.0
    %4402 = vmatprep.mubr.f32.mxu0 0.0
    %4403 = vmatmul.mubr.f32.gmra.mxu0 %v4277
    %v4404 = vpop.f32.mrf.mxu0
    %v4405 = vadd.f32 %v4333, %v4404
    %v4406 = vpop.f32.mrf.mxu0
    %v4407 = vadd.f32 %v4337, %v4406
    %4408 = vmatprep.mubr.f32.mxu0 0.0
    %4409 = vmatmul.mubr.f32.gmra.mxu0 %v4278
    %v4410 = vpop.f32.mrf.mxu0
    %v4411 = vadd.f32 %v4333, %v4410
    %v4412 = vpop.f32.mrf.mxu0
    %v4413 = vadd.f32 %v4337, %v4412
    %4414 = vmatprep.mubr.f32.mxu0 0.0
    %4415 = vmatmul.mubr.f32.gmra.mxu0 %v4279
    %v4416 = vpop.f32.mrf.mxu0
    %v4417 = vadd.f32 %v4333, %v4416
    %v4418 = vpop.f32.mrf.mxu0
    %v4419 = vadd.f32 %v4337, %v4418
    %4420 = vmatprep.mubr.f32.mxu0 0.0
    %4421 = vmatmul.mubr.f32.gmra.mxu0 %v4280
    %v4422 = vpop.f32.mrf.mxu0
    %v4423 = vadd.f32 %v4333, %v4422
    %v4424 = vpop.f32.mrf.mxu0
    %v4425 = vadd.f32 %v4337, %v4424
    %4426 = vdwg.mxu0
    %v4427 = vmul.f32 %v4405, 0.5
    %v4428 = vmul.f32 %v4407, 0.5
    %v4429 = vmul.f32 %v4411, 0.5
    %v4430 = vmul.f32 %v4413, 0.5
    %v4431 = vmul.f32 %v4417, 0.5
    %v4432 = vmul.f32 %v4419, 0.5
    %v4433 = vmul.f32 %v4423, 0.5
    %v4434 = vmul.f32 %v4425, 0.5
    %v4435 = vmul.f32 %v4405, 0.70710677
    %v4436 = vmul.f32 %v4407, 0.70710677
    %v4437 = vmul.f32 %v4411, 0.70710677
    %v4438 = vmul.f32 %v4413, 0.70710677
    %v4439 = vmul.f32 %v4417, 0.70710677
    %v4440 = vmul.f32 %v4419, 0.70710677
    %v4441 = vmul.f32 %v4423, 0.70710677
    %v4442 = vmul.f32 %v4425, 0.70710677
    %v4443 = verf.f32.pop %v4435
    %v4444 = verf.f32.pop %v4436
    %v4445 = verf.f32.pop %v4437
    %v4446 = verf.f32.pop %v4438
    %v4447 = verf.f32.pop %v4439
    %v4448 = verf.f32.pop %v4440
    %v4449 = verf.f32.pop %v4441
    %v4450 = verf.f32.pop %v4442
    %v4451 = vadd.f32 %v4443, 1.0
    %v4452 = vadd.f32 %v4444, 1.0
    %v4453 = vadd.f32 %v4445, 1.0
    %v4454 = vadd.f32 %v4446, 1.0
    %v4455 = vadd.f32 %v4447, 1.0
    %v4456 = vadd.f32 %v4448, 1.0
    %v4457 = vadd.f32 %v4449, 1.0
    %v4458 = vadd.f32 %v4450, 1.0
    %v4459 = vmul.f32 %v4427, %v4451
    %v4460 = vmul.f32 %v4428, %v4452
    %v4461 = vmul.f32 %v4429, %v4453
    %v4462 = vmul.f32 %v4430, %v4454
    %v4463 = vmul.f32 %v4431, %v4455
    %v4464 = vmul.f32 %v4432, %v4456
    %v4465 = vmul.f32 %v4433, %v4457
    %v4466 = vmul.f32 %v4434, %v4458
    %s4467 = scalar_lea.vmem %s6, 128
    %v4468 = vld [vmem:[%s4467] sm:$0xf]
    %v4469 = vld [vmem:[%s4467 + $0x4] sm:$0xf]
    %v4470 = vld [vmem:[%s4467 + $0x8] sm:$0xf]
    %v4471 = vld [vmem:[%s4467 + $0xc] sm:$0xf]
    %v4472 = vld [vmem:[%s4467 + $0x10] sm:$0xf]
    %v4473 = vld [vmem:[%s4467 + $0x14] sm:$0xf]
    %v4474 = vld [vmem:[%s4467 + $0x18] sm:$0xf]
    %v4475 = vld [vmem:[%s4467 + $0x1c] sm:$0xf]
    %v4476 = vld [vmem:[%s4467 + $0x20] sm:$0xf]
    %v4477 = vld [vmem:[%s4467 + $0x24] sm:$0xf]
    %v4478 = vld [vmem:[%s4467 + $0x28] sm:$0xf]
    %v4479 = vld [vmem:[%s4467 + $0x2c] sm:$0xf]
    %v4480 = vld [vmem:[%s4467 + $0x30] sm:$0xf]
    %v4481 = vld [vmem:[%s4467 + $0x34] sm:$0xf]
    %v4482 = vld [vmem:[%s4467 + $0x38] sm:$0xf]
    %v4483 = vld [vmem:[%s4467 + $0x3c] sm:$0xf]
    %v4484 = vld [vmem:[%s4467 + $0x40] sm:$0xf]
    %v4485 = vld [vmem:[%s4467 + $0x44] sm:$0xf]
    %v4486 = vld [vmem:[%s4467 + $0x48] sm:$0xf]
    %v4487 = vld [vmem:[%s4467 + $0x4c] sm:$0xf]
    %v4488 = vld [vmem:[%s4467 + $0x50] sm:$0xf]
    %v4489 = vld [vmem:[%s4467 + $0x54] sm:$0xf]
    %v4490 = vld [vmem:[%s4467 + $0x58] sm:$0xf]
    %v4491 = vld [vmem:[%s4467 + $0x5c] sm:$0xf]
    %v4492 = vld [vmem:[%s4467 + $0x60] sm:$0xf]
    %v4493 = vld [vmem:[%s4467 + $0x64] sm:$0xf]
    %v4494 = vld [vmem:[%s4467 + $0x68] sm:$0xf]
    %v4495 = vld [vmem:[%s4467 + $0x6c] sm:$0xf]
    %v4496 = vld [vmem:[%s4467 + $0x70] sm:$0xf]
    %v4497 = vld [vmem:[%s4467 + $0x74] sm:$0xf]
    %v4498 = vld [vmem:[%s4467 + $0x78] sm:$0xf]
    %v4499 = vld [vmem:[%s4467 + $0x7c] sm:$0xf]
    %v4500 = vunpack.c.l.bf16 %v4468
    %v4501 = vunpack.c.l.bf16 %v4469
    %v4502 = vunpack.c.l.bf16 %v4470
    %v4503 = vunpack.c.l.bf16 %v4471
    %v4504 = vunpack.c.l.bf16 %v4472
    %v4505 = vunpack.c.l.bf16 %v4473
    %v4506 = vunpack.c.l.bf16 %v4474
    %v4507 = vunpack.c.l.bf16 %v4475
    %v4508 = vunpack.c.l.bf16 %v4476
    %v4509 = vunpack.c.l.bf16 %v4477
    %v4510 = vunpack.c.l.bf16 %v4478
    %v4511 = vunpack.c.l.bf16 %v4479
    %v4512 = vunpack.c.l.bf16 %v4480
    %v4513 = vunpack.c.l.bf16 %v4481
    %v4514 = vunpack.c.l.bf16 %v4482
    %v4515 = vunpack.c.l.bf16 %v4483
    %v4516 = vunpack.c.l.bf16 %v4484
    %v4517 = vunpack.c.l.bf16 %v4485
    %v4518 = vunpack.c.l.bf16 %v4486
    %v4519 = vunpack.c.l.bf16 %v4487
    %v4520 = vunpack.c.l.bf16 %v4488
    %v4521 = vunpack.c.l.bf16 %v4489
    %v4522 = vunpack.c.l.bf16 %v4490
    %v4523 = vunpack.c.l.bf16 %v4491
    %v4524 = vunpack.c.l.bf16 %v4492
    %v4525 = vunpack.c.l.bf16 %v4493
    %v4526 = vunpack.c.l.bf16 %v4494
    %v4527 = vunpack.c.l.bf16 %v4495
    %v4528 = vunpack.c.l.bf16 %v4496
    %v4529 = vunpack.c.l.bf16 %v4497
    %v4530 = vunpack.c.l.bf16 %v4498
    %v4531 = vunpack.c.l.bf16 %v4499
    %v4532 = vlaneseq
    %v4533 = vshrl.u32 %v4532, 7
    %v4534 = vsub.s32 5, %v4533
    %v4535 = vrot.slane %v2427, %v4534
    %4536 = vmatprep.subr.mxu0 0.0
    %4537 = vmatpush1.msra.mxu0 %v4515
    %4538 = vmatprep.subr.mxu0 0.0
    %4539 = vmatpush1.msra.mxu0 %v4514
    %4540 = vmatprep.subr.mxu0 0.0
    %4541 = vmatpush1.msra.mxu0 %v4513
    %4542 = vmatprep.subr.mxu0 0.0
    %4543 = vmatpush1.msra.mxu0 %v4512
    %4544 = vmatprep.subr.mxu0 0.0
    %4545 = vmatpush1.msra.mxu0 %v4511
    %4546 = vmatprep.subr.mxu0 0.0
    %4547 = vmatpush1.msra.mxu0 %v4510
    %4548 = vmatprep.subr.mxu0 0.0
    %4549 = vmatpush1.msra.mxu0 %v4509
    %4550 = vmatprep.subr.mxu0 0.0
    %4551 = vmatpush1.msra.mxu0 %v4508
    %4552 = vmatprep.subr.mxu0 0.0
    %4553 = vmatpush1.msra.mxu0 %v4507
    %4554 = vmatprep.subr.mxu0 0.0
    %4555 = vmatpush1.msra.mxu0 %v4506
    %4556 = vmatprep.subr.mxu0 0.0
    %4557 = vmatpush1.msra.mxu0 %v4505
    %4558 = vmatprep.subr.mxu0 0.0
    %4559 = vmatpush1.msra.mxu0 %v4504
    %4560 = vmatprep.subr.mxu0 0.0
    %4561 = vmatpush1.msra.mxu0 %v4503
    %4562 = vmatprep.subr.mxu0 0.0
    %4563 = vmatpush1.msra.mxu0 %v4502
    %4564 = vmatprep.subr.mxu0 0.0
    %4565 = vmatpush1.msra.mxu0 %v4501
    %4566 = vmatprep.subr.mxu0 0.0
    %4567 = vmatpush1.msra.mxu0 %v4500
    %4568 = vmatprep.subr.mxu0 0.0
    %4569 = vmatpush2.msra.mxu0 %v4531
    %4570 = vmatprep.subr.mxu0 0.0
    %4571 = vmatpush2.msra.mxu0 %v4530
    %4572 = vmatprep.subr.mxu0 0.0
    %4573 = vmatpush2.msra.mxu0 %v4529
    %4574 = vmatprep.subr.mxu0 0.0
    %4575 = vmatpush2.msra.mxu0 %v4528
    %4576 = vmatprep.subr.mxu0 0.0
    %4577 = vmatpush2.msra.mxu0 %v4527
    %4578 = vmatprep.subr.mxu0 0.0
    %4579 = vmatpush2.msra.mxu0 %v4526
    %4580 = vmatprep.subr.mxu0 0.0
    %4581 = vmatpush2.msra.mxu0 %v4525
    %4582 = vmatprep.subr.mxu0 0.0
    %4583 = vmatpush2.msra.mxu0 %v4524
    %4584 = vmatprep.subr.mxu0 0.0
    %4585 = vmatpush2.msra.mxu0 %v4523
    %4586 = vmatprep.subr.mxu0 0.0
    %4587 = vmatpush2.msra.mxu0 %v4522
    %4588 = vmatprep.subr.mxu0 0.0
    %4589 = vmatpush2.msra.mxu0 %v4521
    %4590 = vmatprep.subr.mxu0 0.0
    %4591 = vmatpush2.msra.mxu0 %v4520
    %4592 = vmatprep.subr.mxu0 0.0
    %4593 = vmatpush2.msra.mxu0 %v4519
    %4594 = vmatprep.subr.mxu0 0.0
    %4595 = vmatpush2.msra.mxu0 %v4518
    %4596 = vmatprep.subr.mxu0 0.0
    %4597 = vmatpush2.msra.mxu0 %v4517
    %4598 = vmatprep.subr.mxu0 0.0
    %4599 = vmatpush2.msra.mxu0 %v4516
    %4600 = vmatprep.mubr.f32.mxu0 %v4460
    %4601 = vmatmul.mubr.f32.gmra.mxu0 %v4459
    %v4602 = vpop.f32.mrf.mxu0
    %v4603 = vadd.f32 %v4535, %v4602
    %v4604 = vpop.f32.mrf.mxu0
    %4605 = vmatprep.mubr.f32.mxu0 %v4462
    %4606 = vmatmul.mubr.f32.gmra.mxu0 %v4461
    %v4607 = vpop.f32.mrf.mxu0
    %v4608 = vadd.f32 %v4535, %v4607
    %v4609 = vpop.f32.mrf.mxu0
    %4610 = vmatprep.mubr.f32.mxu0 %v4464
    %4611 = vmatmul.mubr.f32.gmra.mxu0 %v4463
    %v4612 = vpop.f32.mrf.mxu0
    %v4613 = vadd.f32 %v4535, %v4612
    %v4614 = vpop.f32.mrf.mxu0
    %4615 = vmatprep.mubr.f32.mxu0 %v4466
    %4616 = vmatmul.mubr.f32.gmra.mxu0 %v4465
    %v4617 = vpop.f32.mrf.mxu0
    %v4618 = vadd.f32 %v4535, %v4617
    %v4619 = vpop.f32.mrf.mxu0
    %4620 = vdwg.mxu0
    %v4621 = vadd.f32 %v4277, %v4603
    %v4622 = vadd.f32 %v4278, %v4608
    %v4623 = vadd.f32 %v4279, %v4613
    %v4624 = vadd.f32 %v4280, %v4618
    %4625 = vadd.xlane.f32.xlu0 %v4621
    %v4626 = vpop.xlane.xlu0 %4625
    %4627 = vadd.xlane.f32.xlu0 %v4622
    %v4628 = vpop.xlane.xlu0 %4627
    %4629 = vadd.xlane.f32.xlu0 %v4623
    %v4630 = vpop.xlane.xlu0 %4629
    %4631 = vadd.xlane.f32.xlu0 %v4624
    %v4632 = vpop.xlane.xlu0 %4631
    %v4633 = vmul.f32 %v4626, 0.020833334
    %v4634 = vmul.f32 %v4628, 0.020833334
    %v4635 = vmul.f32 %v4630, 0.020833334
    %v4636 = vmul.f32 %v4632, 0.020833334
    %v4637 = vsub.f32 %v4621, %v4633
    %v4638 = vsub.f32 %v4622, %v4634
    %v4639 = vsub.f32 %v4623, %v4635
    %v4640 = vsub.f32 %v4624, %v4636
    %v4641 = vsel %vm1971, %v4637, 0.0
    %v4642 = vsel %vm1971, %v4638, 0.0
    %v4643 = vsel %vm1971, %v4639, 0.0
    %v4644 = vsel %vm1971, %v4640, 0.0
    %v4645 = vmul.f32 %v4641, %v4641
    %v4646 = vmul.f32 %v4642, %v4642
    %v4647 = vmul.f32 %v4643, %v4643
    %v4648 = vmul.f32 %v4644, %v4644
    %4649 = vadd.xlane.f32.xlu0 %v4645
    %v4650 = vpop.xlane.xlu0 %4649
    %4651 = vadd.xlane.f32.xlu0 %v4646
    %v4652 = vpop.xlane.xlu0 %4651
    %4653 = vadd.xlane.f32.xlu0 %v4647
    %v4654 = vpop.xlane.xlu0 %4653
    %4655 = vadd.xlane.f32.xlu0 %v4648
    %v4656 = vpop.xlane.xlu0 %4655
    %v4657 = vmul.f32 %v4650, 0.020833334
    %v4658 = vmul.f32 %v4652, 0.020833334
    %v4659 = vmul.f32 %v4654, 0.020833334
    %v4660 = vmul.f32 %v4656, 0.020833334
    %v4661 = vadd.f32 %v4657, 1e-05
    %v4662 = vadd.f32 %v4658, 1e-05
    %v4663 = vadd.f32 %v4659, 1e-05
    %v4664 = vadd.f32 %v4660, 1e-05
    %v4665 = vrsqrt.pop %v4661
    %v4666 = vrsqrt.pop %v4662
    %v4667 = vrsqrt.pop %v4663
    %v4668 = vrsqrt.pop %v4664
    %v4669 = vmul.f32 %v4641, %v4665
    %v4670 = vmul.f32 %v4642, %v4666
    %v4671 = vmul.f32 %v4643, %v4667
    %v4672 = vmul.f32 %v4644, %v4668
    %v4673 = vlaneseq
    %v4674 = vshrl.u32 %v4673, 7
    %v4675 = vsub.s32 6, %v4674
    %v4676 = vrot.slane %v2427, %v4675
    %v4677 = vmul.f32 %v4669, %v4676
    %v4678 = vmul.f32 %v4670, %v4676
    %v4679 = vmul.f32 %v4671, %v4676
    %v4680 = vmul.f32 %v4672, %v4676
    %v4681 = vlaneseq
    %v4682 = vshrl.u32 %v4681, 7
    %v4683 = vsub.s32 7, %v4682
    %v4684 = vrot.slane %v2427, %v4683
    %v4685 = vadd.f32 %v4677, %v4684
    %v4686 = vadd.f32 %v4678, %v4684
    %v4687 = vadd.f32 %v4679, %v4684
    %v4688 = vadd.f32 %v4680, %v4684
    %s4689 = scalar_lea.vmem %s7, 48
    %v4690 = vld [vmem:[%s4689] sm:$0xff]
    %v4691 = vld [vmem:[%s4689 + $0x8] sm:$0xff]
    %v4692 = vld [vmem:[%s4689 + $0x10] sm:$0xff]
    %s4693 = scalar_lea.vmem %s3, 384
    %v4694 = vld [vmem:[%s4693] sm:$0xff]
    %v4695 = vld [vmem:[%s4693 + $0x8] sm:$0xf]
    %v4696 = vld [vmem:[%s4693 + $0xc] sm:$0xff]
    %v4697 = vld [vmem:[%s4693 + $0x14] sm:$0xf]
    %v4698 = vld [vmem:[%s4693 + $0x18] sm:$0xff]
    %v4699 = vld [vmem:[%s4693 + $0x20] sm:$0xf]
    %v4700 = vld [vmem:[%s4693 + $0x24] sm:$0xff]
    %v4701 = vld [vmem:[%s4693 + $0x2c] sm:$0xf]
    %v4702 = vld [vmem:[%s4693 + $0x30] sm:$0xff]
    %v4703 = vld [vmem:[%s4693 + $0x38] sm:$0xf]
    %v4704 = vld [vmem:[%s4693 + $0x3c] sm:$0xff]
    %v4705 = vld [vmem:[%s4693 + $0x44] sm:$0xf]
    %v4706 = vld [vmem:[%s4693 + $0x48] sm:$0xff]
    %v4707 = vld [vmem:[%s4693 + $0x50] sm:$0xf]
    %v4708 = vld [vmem:[%s4693 + $0x54] sm:$0xff]
    %v4709 = vld [vmem:[%s4693 + $0x5c] sm:$0xf]
    %v4710 = vld [vmem:[%s4693 + $0x60] sm:$0xff]
    %v4711 = vld [vmem:[%s4693 + $0x68] sm:$0xf]
    %v4712 = vld [vmem:[%s4693 + $0x6c] sm:$0xff]
    %v4713 = vld [vmem:[%s4693 + $0x74] sm:$0xf]
    %v4714 = vld [vmem:[%s4693 + $0x78] sm:$0xff]
    %v4715 = vld [vmem:[%s4693 + $0x80] sm:$0xf]
    %v4716 = vld [vmem:[%s4693 + $0x84] sm:$0xff]
    %v4717 = vld [vmem:[%s4693 + $0x8c] sm:$0xf]
    %v4718 = vld [vmem:[%s4693 + $0x90] sm:$0xff]
    %v4719 = vld [vmem:[%s4693 + $0x98] sm:$0xf]
    %v4720 = vld [vmem:[%s4693 + $0x9c] sm:$0xff]
    %v4721 = vld [vmem:[%s4693 + $0xa4] sm:$0xf]
    %v4722 = vld [vmem:[%s4693 + $0xa8] sm:$0xff]
    %v4723 = vld [vmem:[%s4693 + $0xb0] sm:$0xf]
    %v4724 = vld [vmem:[%s4693 + $0xb4] sm:$0xff]
    %v4725 = vld [vmem:[%s4693 + $0xbc] sm:$0xf]
    %v4726 = vunpack.c.l.bf16 %v4694
    %v4727 = vunpack.c.h.bf16 %v4694
    %v4728 = vunpack.c.l.bf16 %v4695
    %v4729 = vunpack.c.l.bf16 %v4696
    %v4730 = vunpack.c.h.bf16 %v4696
    %v4731 = vunpack.c.l.bf16 %v4697
    %v4732 = vunpack.c.l.bf16 %v4698
    %v4733 = vunpack.c.h.bf16 %v4698
    %v4734 = vunpack.c.l.bf16 %v4699
    %v4735 = vunpack.c.l.bf16 %v4700
    %v4736 = vunpack.c.h.bf16 %v4700
    %v4737 = vunpack.c.l.bf16 %v4701
    %v4738 = vunpack.c.l.bf16 %v4702
    %v4739 = vunpack.c.h.bf16 %v4702
    %v4740 = vunpack.c.l.bf16 %v4703
    %v4741 = vunpack.c.l.bf16 %v4704
    %v4742 = vunpack.c.h.bf16 %v4704
    %v4743 = vunpack.c.l.bf16 %v4705
    %v4744 = vunpack.c.l.bf16 %v4706
    %v4745 = vunpack.c.h.bf16 %v4706
    %v4746 = vunpack.c.l.bf16 %v4707
    %v4747 = vunpack.c.l.bf16 %v4708
    %v4748 = vunpack.c.h.bf16 %v4708
    %v4749 = vunpack.c.l.bf16 %v4709
    %v4750 = vunpack.c.l.bf16 %v4710
    %v4751 = vunpack.c.h.bf16 %v4710
    %v4752 = vunpack.c.l.bf16 %v4711
    %v4753 = vunpack.c.l.bf16 %v4712
    %v4754 = vunpack.c.h.bf16 %v4712
    %v4755 = vunpack.c.l.bf16 %v4713
    %v4756 = vunpack.c.l.bf16 %v4714
    %v4757 = vunpack.c.h.bf16 %v4714
    %v4758 = vunpack.c.l.bf16 %v4715
    %v4759 = vunpack.c.l.bf16 %v4716
    %v4760 = vunpack.c.h.bf16 %v4716
    %v4761 = vunpack.c.l.bf16 %v4717
    %v4762 = vunpack.c.l.bf16 %v4718
    %v4763 = vunpack.c.h.bf16 %v4718
    %v4764 = vunpack.c.l.bf16 %v4719
    %v4765 = vunpack.c.l.bf16 %v4720
    %v4766 = vunpack.c.h.bf16 %v4720
    %v4767 = vunpack.c.l.bf16 %v4721
    %v4768 = vunpack.c.l.bf16 %v4722
    %v4769 = vunpack.c.h.bf16 %v4722
    %v4770 = vunpack.c.l.bf16 %v4723
    %v4771 = vunpack.c.l.bf16 %v4724
    %v4772 = vunpack.c.h.bf16 %v4724
    %v4773 = vunpack.c.l.bf16 %v4725
    %v4774 = vlaneseq
    %v4775 = vshrl.u32 %v4774, 7
    %v4776 = vsub.s32 0, %v4775
    %v4777 = vrot.slane %v4690, %v4776
    %v4778 = vlaneseq
    %v4779 = vshrl.u32 %v4778, 7
    %v4780 = vsub.s32 0, %v4779
    %v4781 = vrot.slane %v4691, %v4780
    %v4782 = vlaneseq
    %v4783 = vshrl.u32 %v4782, 7
    %v4784 = vsub.s32 0, %v4783
    %v4785 = vrot.slane %v4692, %v4784
    %4786 = vmatprep.subr.mxu0 %v4772
    %4787 = vmatpush1.msra.mxu0 %v4771
    %4788 = vmatprep.subr.mxu0 %v4769
    %4789 = vmatpush1.msra.mxu0 %v4768
    %4790 = vmatprep.subr.mxu0 %v4766
    %4791 = vmatpush1.msra.mxu0 %v4765
    %4792 = vmatprep.subr.mxu0 %v4763
    %4793 = vmatpush1.msra.mxu0 %v4762
    %4794 = vmatprep.subr.mxu0 %v4760
    %4795 = vmatpush1.msra.mxu0 %v4759
    %4796 = vmatprep.subr.mxu0 %v4757
    %4797 = vmatpush1.msra.mxu0 %v4756
    %4798 = vmatprep.subr.mxu0 %v4754
    %4799 = vmatpush1.msra.mxu0 %v4753
    %4800 = vmatprep.subr.mxu0 %v4751
    %4801 = vmatpush1.msra.mxu0 %v4750
    %4802 = vmatprep.subr.mxu0 %v4748
    %4803 = vmatpush1.msra.mxu0 %v4747
    %4804 = vmatprep.subr.mxu0 %v4745
    %4805 = vmatpush1.msra.mxu0 %v4744
    %4806 = vmatprep.subr.mxu0 %v4742
    %4807 = vmatpush1.msra.mxu0 %v4741
    %4808 = vmatprep.subr.mxu0 %v4739
    %4809 = vmatpush1.msra.mxu0 %v4738
    %4810 = vmatprep.subr.mxu0 %v4736
    %4811 = vmatpush1.msra.mxu0 %v4735
    %4812 = vmatprep.subr.mxu0 %v4733
    %4813 = vmatpush1.msra.mxu0 %v4732
    %4814 = vmatprep.subr.mxu0 %v4730
    %4815 = vmatpush1.msra.mxu0 %v4729
    %4816 = vmatprep.subr.mxu0 %v4727
    %4817 = vmatpush1.msra.mxu0 %v4726
    %4818 = vmatprep.subr.mxu0 0.0
    %4819 = vmatpush2.msra.mxu0 0.0
    %4820 = vmatprep.subr.mxu0 0.0
    %4821 = vmatpush2.msra.mxu0 0.0
    %4822 = vmatprep.subr.mxu0 0.0
    %4823 = vmatpush2.msra.mxu0 0.0
    %4824 = vmatprep.subr.mxu0 0.0
    %4825 = vmatpush2.msra.mxu0 0.0
    %4826 = vmatprep.subr.mxu0 0.0
    %4827 = vmatpush2.msra.mxu0 0.0
    %4828 = vmatprep.subr.mxu0 0.0
    %4829 = vmatpush2.msra.mxu0 0.0
    %4830 = vmatprep.subr.mxu0 0.0
    %4831 = vmatpush2.msra.mxu0 0.0
    %4832 = vmatprep.subr.mxu0 0.0
    %4833 = vmatpush2.msra.mxu0 0.0
    %4834 = vmatprep.subr.mxu0 0.0
    %4835 = vmatpush2.msra.mxu0 0.0
    %4836 = vmatprep.subr.mxu0 0.0
    %4837 = vmatpush2.msra.mxu0 0.0
    %4838 = vmatprep.subr.mxu0 0.0
    %4839 = vmatpush2.msra.mxu0 0.0
    %4840 = vmatprep.subr.mxu0 0.0
    %4841 = vmatpush2.msra.mxu0 0.0
    %4842 = vmatprep.subr.mxu0 0.0
    %4843 = vmatpush2.msra.mxu0 0.0
    %4844 = vmatprep.subr.mxu0 0.0
    %4845 = vmatpush2.msra.mxu0 0.0
    %4846 = vmatprep.subr.mxu0 0.0
    %4847 = vmatpush2.msra.mxu0 0.0
    %4848 = vmatprep.subr.mxu0 0.0
    %4849 = vmatpush2.msra.mxu0 0.0
    %4850 = vmatprep.mubr.f32.mxu0 0.0
    %4851 = vmatmul.mubr.f32.gmra.mxu0 %v4685
    %v4852 = vpop.f32.mrf.mxu0
    %v4853 = vadd.f32 %v4777, %v4852
    %v4854 = vpop.f32.mrf.mxu0
    %v4855 = vadd.f32 %v4781, %v4854
    %4856 = vmatprep.mubr.f32.mxu0 0.0
    %4857 = vmatmul.mubr.f32.gmra.mxu0 %v4686
    %v4858 = vpop.f32.mrf.mxu0
    %v4859 = vadd.f32 %v4777, %v4858
    %v4860 = vpop.f32.mrf.mxu0
    %v4861 = vadd.f32 %v4781, %v4860
    %4862 = vmatprep.mubr.f32.mxu0 0.0
    %4863 = vmatmul.mubr.f32.gmra.mxu0 %v4687
    %v4864 = vpop.f32.mrf.mxu0
    %v4865 = vadd.f32 %v4777, %v4864
    %v4866 = vpop.f32.mrf.mxu0
    %v4867 = vadd.f32 %v4781, %v4866
    %4868 = vmatprep.mubr.f32.mxu0 0.0
    %4869 = vmatmul.mubr.f32.gmra.mxu0 %v4688
    %v4870 = vpop.f32.mrf.mxu0
    %v4871 = vadd.f32 %v4777, %v4870
    %v4872 = vpop.f32.mrf.mxu0
    %v4873 = vadd.f32 %v4781, %v4872
    %4874 = vdwg.mxu0
    %4875 = vmatprep.subr.mxu0 0.0
    %4876 = vmatpush1.msra.mxu0 %v4773
    %4877 = vmatprep.subr.mxu0 0.0
    %4878 = vmatpush1.msra.mxu0 %v4770
    %4879 = vmatprep.subr.mxu0 0.0
    %4880 = vmatpush1.msra.mxu0 %v4767
    %4881 = vmatprep.subr.mxu0 0.0
    %4882 = vmatpush1.msra.mxu0 %v4764
    %4883 = vmatprep.subr.mxu0 0.0
    %4884 = vmatpush1.msra.mxu0 %v4761
    %4885 = vmatprep.subr.mxu0 0.0
    %4886 = vmatpush1.msra.mxu0 %v4758
    %4887 = vmatprep.subr.mxu0 0.0
    %4888 = vmatpush1.msra.mxu0 %v4755
    %4889 = vmatprep.subr.mxu0 0.0
    %4890 = vmatpush1.msra.mxu0 %v4752
    %4891 = vmatprep.subr.mxu0 0.0
    %4892 = vmatpush1.msra.mxu0 %v4749
    %4893 = vmatprep.subr.mxu0 0.0
    %4894 = vmatpush1.msra.mxu0 %v4746
    %4895 = vmatprep.subr.mxu0 0.0
    %4896 = vmatpush1.msra.mxu0 %v4743
    %4897 = vmatprep.subr.mxu0 0.0
    %4898 = vmatpush1.msra.mxu0 %v4740
    %4899 = vmatprep.subr.mxu0 0.0
    %4900 = vmatpush1.msra.mxu0 %v4737
    %4901 = vmatprep.subr.mxu0 0.0
    %4902 = vmatpush1.msra.mxu0 %v4734
    %4903 = vmatprep.subr.mxu0 0.0
    %4904 = vmatpush1.msra.mxu0 %v4731
    %4905 = vmatprep.subr.mxu0 0.0
    %4906 = vmatpush1.msra.mxu0 %v4728
    %4907 = vmatprep.subr.mxu0 0.0
    %4908 = vmatpush2.msra.mxu0 0.0
    %4909 = vmatprep.subr.mxu0 0.0
    %4910 = vmatpush2.msra.mxu0 0.0
    %4911 = vmatprep.subr.mxu0 0.0
    %4912 = vmatpush2.msra.mxu0 0.0
    %4913 = vmatprep.subr.mxu0 0.0
    %4914 = vmatpush2.msra.mxu0 0.0
    %4915 = vmatprep.subr.mxu0 0.0
    %4916 = vmatpush2.msra.mxu0 0.0
    %4917 = vmatprep.subr.mxu0 0.0
    %4918 = vmatpush2.msra.mxu0 0.0
    %4919 = vmatprep.subr.mxu0 0.0
    %4920 = vmatpush2.msra.mxu0 0.0
    %4921 = vmatprep.subr.mxu0 0.0
    %4922 = vmatpush2.msra.mxu0 0.0
    %4923 = vmatprep.subr.mxu0 0.0
    %4924 = vmatpush2.msra.mxu0 0.0
    %4925 = vmatprep.subr.mxu0 0.0
    %4926 = vmatpush2.msra.mxu0 0.0
    %4927 = vmatprep.subr.mxu0 0.0
    %4928 = vmatpush2.msra.mxu0 0.0
    %4929 = vmatprep.subr.mxu0 0.0
    %4930 = vmatpush2.msra.mxu0 0.0
    %4931 = vmatprep.subr.mxu0 0.0
    %4932 = vmatpush2.msra.mxu0 0.0
    %4933 = vmatprep.subr.mxu0 0.0
    %4934 = vmatpush2.msra.mxu0 0.0
    %4935 = vmatprep.subr.mxu0 0.0
    %4936 = vmatpush2.msra.mxu0 0.0
    %4937 = vmatprep.subr.mxu0 0.0
    %4938 = vmatpush2.msra.mxu0 0.0
    %4939 = vmatprep.mubr.f32.mxu0 0.0
    %4940 = vmatmul.mubr.f32.gmra.mxu0 %v4685
    %v4941 = vpop.f32.mrf.mxu0
    %v4942 = vadd.f32 %v4785, %v4941
    %v4943 = vpop.f32.mrf.mxu0
    %4944 = vmatprep.mubr.f32.mxu0 0.0
    %4945 = vmatmul.mubr.f32.gmra.mxu0 %v4686
    %v4946 = vpop.f32.mrf.mxu0
    %v4947 = vadd.f32 %v4785, %v4946
    %v4948 = vpop.f32.mrf.mxu0
    %4949 = vmatprep.mubr.f32.mxu0 0.0
    %4950 = vmatmul.mubr.f32.gmra.mxu0 %v4687
    %v4951 = vpop.f32.mrf.mxu0
    %v4952 = vadd.f32 %v4785, %v4951
    %v4953 = vpop.f32.mrf.mxu0
    %4954 = vmatprep.mubr.f32.mxu0 0.0
    %4955 = vmatmul.mubr.f32.gmra.mxu0 %v4688
    %v4956 = vpop.f32.mrf.mxu0
    %v4957 = vadd.f32 %v4785, %v4956
    %v4958 = vpop.f32.mrf.mxu0
    %4959 = vdwg.mxu0
    %v4960 = vmul.f32 %v4853, 0.25
    %v4961 = vmul.f32 %v4859, 0.25
    %v4962 = vmul.f32 %v4865, 0.25
    %v4963 = vmul.f32 %v4871, 0.25
    %s4964 = scalar_lea.vmem %s4, 128
    %v4965 = vld [vmem:[%s4964] sm:$0xf]
    %v4966 = vld [vmem:[%s4964 + $0x4] sm:$0xf]
    %v4967 = vld [vmem:[%s4964 + $0x8] sm:$0xf]
    %v4968 = vld [vmem:[%s4964 + $0xc] sm:$0xf]
    %v4969 = vld [vmem:[%s4964 + $0x10] sm:$0xf]
    %v4970 = vld [vmem:[%s4964 + $0x14] sm:$0xf]
    %v4971 = vunpack.c.l.bf16 %v4965
    %v4972 = vunpack.c.l.bf16 %v4966
    %v4973 = vunpack.c.l.bf16 %v4967
    %v4974 = vunpack.c.l.bf16 %v4968
    %v4975 = vunpack.c.l.bf16 %v4969
    %v4976 = vunpack.c.l.bf16 %v4970
    %v4978 = vsel %vm450, %v4960, 0
    %v4981 = vsel %vm450, %v4961, 0
    %v4984 = vsel %vm450, %v4855, 0
    %v4987 = vsel %vm450, %v4861, 0
    %4989 = vmatprep.subr.mxu0 0.0
    %4990 = vmatpush1.xpose.msra.mxu0 0.0
    %4991 = vmatprep.subr.mxu0 0.0
    %4992 = vmatpush1.xpose.msra.mxu0 0.0
    %4993 = vmatprep.subr.mxu0 0.0
    %4994 = vmatpush1.xpose.msra.mxu0 0.0
    %4995 = vmatprep.subr.mxu0 0.0
    %4996 = vmatpush1.xpose.msra.mxu0 0.0
    %4997 = vmatprep.subr.mxu0 0.0
    %4998 = vmatpush1.xpose.msra.mxu0 0.0
    %4999 = vmatprep.subr.mxu0 0.0
    %5000 = vmatpush1.xpose.msra.mxu0 0.0
    %5001 = vmatprep.subr.mxu0 0.0
    %5002 = vmatpush1.xpose.msra.mxu0 0.0
    %5003 = vmatprep.subr.mxu0 0.0
    %5004 = vmatpush1.xpose.msra.mxu0 0.0
    %5005 = vmatprep.subr.mxu0 0.0
    %5006 = vmatpush1.xpose.msra.mxu0 0.0
    %5007 = vmatprep.subr.mxu0 0.0
    %5008 = vmatpush1.xpose.msra.mxu0 0.0
    %5009 = vmatprep.subr.mxu0 0.0
    %5010 = vmatpush1.xpose.msra.mxu0 0.0
    %5011 = vmatprep.subr.mxu0 0.0
    %5012 = vmatpush1.xpose.msra.mxu0 0.0
    %5013 = vmatprep.subr.mxu0 0.0
    %5014 = vmatpush1.xpose.msra.mxu0 0.0
    %5015 = vmatprep.subr.mxu0 0.0
    %5016 = vmatpush1.xpose.msra.mxu0 0.0
    %5017 = vmatprep.subr.mxu0 0.0
    %5018 = vmatpush1.xpose.msra.mxu0 %v4987
    %5019 = vmatprep.subr.mxu0 0.0
    %5020 = vmatpush1.xpose.msra.mxu0 %v4984
    %5021 = vmatprep.subr.mxu0 0.0
    %5022 = vmatpush2.xpose.msra.mxu0 0.0
    %5023 = vmatprep.subr.mxu0 0.0
    %5024 = vmatpush2.xpose.msra.mxu0 0.0
    %5025 = vmatprep.subr.mxu0 0.0
    %5026 = vmatpush2.xpose.msra.mxu0 0.0
    %5027 = vmatprep.subr.mxu0 0.0
    %5028 = vmatpush2.xpose.msra.mxu0 0.0
    %5029 = vmatprep.subr.mxu0 0.0
    %5030 = vmatpush2.xpose.msra.mxu0 0.0
    %5031 = vmatprep.subr.mxu0 0.0
    %5032 = vmatpush2.xpose.msra.mxu0 0.0
    %5033 = vmatprep.subr.mxu0 0.0
    %5034 = vmatpush2.xpose.msra.mxu0 0.0
    %5035 = vmatprep.subr.mxu0 0.0
    %5036 = vmatpush2.xpose.msra.mxu0 0.0
    %5037 = vmatprep.subr.mxu0 0.0
    %5038 = vmatpush2.xpose.msra.mxu0 0.0
    %5039 = vmatprep.subr.mxu0 0.0
    %5040 = vmatpush2.xpose.msra.mxu0 0.0
    %5041 = vmatprep.subr.mxu0 0.0
    %5042 = vmatpush2.xpose.msra.mxu0 0.0
    %5043 = vmatprep.subr.mxu0 0.0
    %5044 = vmatpush2.xpose.msra.mxu0 0.0
    %5045 = vmatprep.subr.mxu0 0.0
    %5046 = vmatpush2.xpose.msra.mxu0 0.0
    %5047 = vmatprep.subr.mxu0 0.0
    %5048 = vmatpush2.xpose.msra.mxu0 0.0
    %5049 = vmatprep.subr.mxu0 0.0
    %5050 = vmatpush2.xpose.msra.mxu0 0.0
    %5051 = vmatprep.subr.mxu0 0.0
    %5052 = vmatpush2.xpose.msra.mxu0 0.0
    %5053 = vmatprep.mubr.f32.mxu0 0.0
    %5054 = vmatmul.mubr.f32.gmra.mxu0 %v4978
    %v5055 = vpop.f32.mrf.mxu0
    %v5056 = vadd.f32 0.0, %v5055
    %v5057 = vpop.f32.mrf.mxu0
    %5058 = vmatprep.mubr.f32.mxu0 0.0
    %5059 = vmatmul.mubr.f32.gmra.mxu0 %v4981
    %v5060 = vpop.f32.mrf.mxu0
    %v5061 = vadd.f32 0.0, %v5060
    %v5062 = vpop.f32.mrf.mxu0
    %5063 = vdwg.mxu0
    %v5065 = vsel %vm450, %v4962, 0
    %v5068 = vsel %vm450, %v4963, 0
    %v5071 = vsel %vm450, %v4867, 0
    %v5074 = vsel %vm450, %v4873, 0
    %5076 = vmatprep.subr.mxu0 0.0
    %5077 = vmatpush1.xpose.msra.mxu0 0.0
    %5078 = vmatprep.subr.mxu0 0.0
    %5079 = vmatpush1.xpose.msra.mxu0 0.0
    %5080 = vmatprep.subr.mxu0 0.0
    %5081 = vmatpush1.xpose.msra.mxu0 0.0
    %5082 = vmatprep.subr.mxu0 0.0
    %5083 = vmatpush1.xpose.msra.mxu0 0.0
    %5084 = vmatprep.subr.mxu0 0.0
    %5085 = vmatpush1.xpose.msra.mxu0 0.0
    %5086 = vmatprep.subr.mxu0 0.0
    %5087 = vmatpush1.xpose.msra.mxu0 0.0
    %5088 = vmatprep.subr.mxu0 0.0
    %5089 = vmatpush1.xpose.msra.mxu0 0.0
    %5090 = vmatprep.subr.mxu0 0.0
    %5091 = vmatpush1.xpose.msra.mxu0 0.0
    %5092 = vmatprep.subr.mxu0 0.0
    %5093 = vmatpush1.xpose.msra.mxu0 0.0
    %5094 = vmatprep.subr.mxu0 0.0
    %5095 = vmatpush1.xpose.msra.mxu0 0.0
    %5096 = vmatprep.subr.mxu0 0.0
    %5097 = vmatpush1.xpose.msra.mxu0 0.0
    %5098 = vmatprep.subr.mxu0 0.0
    %5099 = vmatpush1.xpose.msra.mxu0 0.0
    %5100 = vmatprep.subr.mxu0 0.0
    %5101 = vmatpush1.xpose.msra.mxu0 0.0
    %5102 = vmatprep.subr.mxu0 0.0
    %5103 = vmatpush1.xpose.msra.mxu0 0.0
    %5104 = vmatprep.subr.mxu0 0.0
    %5105 = vmatpush1.xpose.msra.mxu0 %v5074
    %5106 = vmatprep.subr.mxu0 0.0
    %5107 = vmatpush1.xpose.msra.mxu0 %v5071
    %5108 = vmatprep.subr.mxu0 0.0
    %5109 = vmatpush2.xpose.msra.mxu0 0.0
    %5110 = vmatprep.subr.mxu0 0.0
    %5111 = vmatpush2.xpose.msra.mxu0 0.0
    %5112 = vmatprep.subr.mxu0 0.0
    %5113 = vmatpush2.xpose.msra.mxu0 0.0
    %5114 = vmatprep.subr.mxu0 0.0
    %5115 = vmatpush2.xpose.msra.mxu0 0.0
    %5116 = vmatprep.subr.mxu0 0.0
    %5117 = vmatpush2.xpose.msra.mxu0 0.0
    %5118 = vmatprep.subr.mxu0 0.0
    %5119 = vmatpush2.xpose.msra.mxu0 0.0
    %5120 = vmatprep.subr.mxu0 0.0
    %5121 = vmatpush2.xpose.msra.mxu0 0.0
    %5122 = vmatprep.subr.mxu0 0.0
    %5123 = vmatpush2.xpose.msra.mxu0 0.0
    %5124 = vmatprep.subr.mxu0 0.0
    %5125 = vmatpush2.xpose.msra.mxu0 0.0
    %5126 = vmatprep.subr.mxu0 0.0
    %5127 = vmatpush2.xpose.msra.mxu0 0.0
    %5128 = vmatprep.subr.mxu0 0.0
    %5129 = vmatpush2.xpose.msra.mxu0 0.0
    %5130 = vmatprep.subr.mxu0 0.0
    %5131 = vmatpush2.xpose.msra.mxu0 0.0
    %5132 = vmatprep.subr.mxu0 0.0
    %5133 = vmatpush2.xpose.msra.mxu0 0.0
    %5134 = vmatprep.subr.mxu0 0.0
    %5135 = vmatpush2.xpose.msra.mxu0 0.0
    %5136 = vmatprep.subr.mxu0 0.0
    %5137 = vmatpush2.xpose.msra.mxu0 0.0
    %5138 = vmatprep.subr.mxu0 0.0
    %5139 = vmatpush2.xpose.msra.mxu0 0.0
    %5140 = vmatprep.mubr.f32.mxu0 0.0
    %5141 = vmatmul.mubr.f32.gmra.mxu0 %v5065
    %v5142 = vpop.f32.mrf.mxu0
    %v5143 = vadd.f32 0.0, %v5142
    %v5144 = vpop.f32.mrf.mxu0
    %5145 = vmatprep.mubr.f32.mxu0 0.0
    %5146 = vmatmul.mubr.f32.gmra.mxu0 %v5068
    %v5147 = vpop.f32.mrf.mxu0
    %v5148 = vadd.f32 0.0, %v5147
    %v5149 = vpop.f32.mrf.mxu0
    %5150 = vdwg.mxu0
    %v5151 = vsel %vm164, %v5056, -1e+30
    %v5152 = vsel %vm164, %v5061, -1e+30
    %v5153 = vsel %vm164, %v5143, -1e+30
    %v5154 = vsel %vm164, %v5148, -1e+30
    %v5155 = vsel %vm450, %v5151, -inf
    %5156 = vmax.xlane.f32.xlu0 %v5155
    %v5157 = vpop.xlane.xlu0 %5156
    %v5158 = vsel %vm450, %v5152, -inf
    %5159 = vmax.xlane.f32.xlu0 %v5158
    %v5160 = vpop.xlane.xlu0 %5159
    %v5161 = vsel %vm450, %v5153, -inf
    %5162 = vmax.xlane.f32.xlu0 %v5161
    %v5163 = vpop.xlane.xlu0 %5162
    %v5164 = vsel %vm450, %v5154, -inf
    %5165 = vmax.xlane.f32.xlu0 %v5164
    %v5166 = vpop.xlane.xlu0 %5165
    %v5167 = vsub.f32 %v5151, %v5157
    %v5168 = vsub.f32 %v5152, %v5160
    %v5169 = vsub.f32 %v5153, %v5163
    %v5170 = vsub.f32 %v5154, %v5166
    %v5171 = vmul.f32 %v5167, 1.442695
    %v5172 = vpow.pop %v5171
    %v5173 = vmul.f32 %v5168, 1.442695
    %v5174 = vpow.pop %v5173
    %v5175 = vmul.f32 %v5169, 1.442695
    %v5176 = vpow.pop %v5175
    %v5177 = vmul.f32 %v5170, 1.442695
    %v5178 = vpow.pop %v5177
    %v5179 = vsel %vm450, %v5172, 0.0
    %5180 = vadd.xlane.f32.xlu0 %v5179
    %v5181 = vpop.xlane.xlu0 %5180
    %v5182 = vsel %vm450, %v5174, 0.0
    %5183 = vadd.xlane.f32.xlu0 %v5182
    %v5184 = vpop.xlane.xlu0 %5183
    %v5185 = vsel %vm450, %v5176, 0.0
    %5186 = vadd.xlane.f32.xlu0 %v5185
    %v5187 = vpop.xlane.xlu0 %5186
    %v5188 = vsel %vm450, %v5178, 0.0
    %5189 = vadd.xlane.f32.xlu0 %v5188
    %v5190 = vpop.xlane.xlu0 %5189
    %v5191 = vrcp.pop %v5181
    %v5192 = vmul.f32 %v5172, %v5191
    %v5193 = vrcp.pop %v5184
    %v5194 = vmul.f32 %v5174, %v5193
    %v5195 = vrcp.pop %v5187
    %v5196 = vmul.f32 %v5176, %v5195
    %v5197 = vrcp.pop %v5190
    %v5198 = vmul.f32 %v5178, %v5197
    %v5200 = vsel %vm450, %v5192, 0
    %v5203 = vsel %vm450, %v5194, 0
    %5205 = vmatprep.subr.mxu0 0.0
    %5206 = vmatpush1.msra.mxu0 0.0
    %5207 = vmatprep.subr.mxu0 0.0
    %5208 = vmatpush1.msra.mxu0 0.0
    %5209 = vmatprep.subr.mxu0 0.0
    %5210 = vmatpush1.msra.mxu0 0.0
    %5211 = vmatprep.subr.mxu0 0.0
    %5212 = vmatpush1.msra.mxu0 0.0
    %5213 = vmatprep.subr.mxu0 0.0
    %5214 = vmatpush1.msra.mxu0 0.0
    %5215 = vmatprep.subr.mxu0 0.0
    %5216 = vmatpush1.msra.mxu0 0.0
    %5217 = vmatprep.subr.mxu0 0.0
    %5218 = vmatpush1.msra.mxu0 0.0
    %5219 = vmatprep.subr.mxu0 0.0
    %5220 = vmatpush1.msra.mxu0 0.0
    %5221 = vmatprep.subr.mxu0 0.0
    %5222 = vmatpush1.msra.mxu0 0.0
    %5223 = vmatprep.subr.mxu0 0.0
    %5224 = vmatpush1.msra.mxu0 0.0
    %5225 = vmatprep.subr.mxu0 0.0
    %5226 = vmatpush1.msra.mxu0 0.0
    %5227 = vmatprep.subr.mxu0 0.0
    %5228 = vmatpush1.msra.mxu0 0.0
    %5229 = vmatprep.subr.mxu0 0.0
    %5230 = vmatpush1.msra.mxu0 0.0
    %5231 = vmatprep.subr.mxu0 0.0
    %5232 = vmatpush1.msra.mxu0 0.0
    %5233 = vmatprep.subr.mxu0 0.0
    %5234 = vmatpush1.msra.mxu0 %v4947
    %5235 = vmatprep.subr.mxu0 0.0
    %5236 = vmatpush1.msra.mxu0 %v4942
    %5237 = vmatprep.subr.mxu0 0.0
    %5238 = vmatpush2.msra.mxu0 0.0
    %5239 = vmatprep.subr.mxu0 0.0
    %5240 = vmatpush2.msra.mxu0 0.0
    %5241 = vmatprep.subr.mxu0 0.0
    %5242 = vmatpush2.msra.mxu0 0.0
    %5243 = vmatprep.subr.mxu0 0.0
    %5244 = vmatpush2.msra.mxu0 0.0
    %5245 = vmatprep.subr.mxu0 0.0
    %5246 = vmatpush2.msra.mxu0 0.0
    %5247 = vmatprep.subr.mxu0 0.0
    %5248 = vmatpush2.msra.mxu0 0.0
    %5249 = vmatprep.subr.mxu0 0.0
    %5250 = vmatpush2.msra.mxu0 0.0
    %5251 = vmatprep.subr.mxu0 0.0
    %5252 = vmatpush2.msra.mxu0 0.0
    %5253 = vmatprep.subr.mxu0 0.0
    %5254 = vmatpush2.msra.mxu0 0.0
    %5255 = vmatprep.subr.mxu0 0.0
    %5256 = vmatpush2.msra.mxu0 0.0
    %5257 = vmatprep.subr.mxu0 0.0
    %5258 = vmatpush2.msra.mxu0 0.0
    %5259 = vmatprep.subr.mxu0 0.0
    %5260 = vmatpush2.msra.mxu0 0.0
    %5261 = vmatprep.subr.mxu0 0.0
    %5262 = vmatpush2.msra.mxu0 0.0
    %5263 = vmatprep.subr.mxu0 0.0
    %5264 = vmatpush2.msra.mxu0 0.0
    %5265 = vmatprep.subr.mxu0 0.0
    %5266 = vmatpush2.msra.mxu0 0.0
    %5267 = vmatprep.subr.mxu0 0.0
    %5268 = vmatpush2.msra.mxu0 0.0
    %5269 = vmatprep.mubr.f32.mxu0 0.0
    %5270 = vmatmul.mubr.f32.gmra.mxu0 %v5200
    %v5271 = vpop.f32.mrf.mxu0
    %v5272 = vadd.f32 0.0, %v5271
    %v5273 = vpop.f32.mrf.mxu0
    %5274 = vmatprep.mubr.f32.mxu0 0.0
    %5275 = vmatmul.mubr.f32.gmra.mxu0 %v5203
    %v5276 = vpop.f32.mrf.mxu0
    %v5277 = vadd.f32 0.0, %v5276
    %v5278 = vpop.f32.mrf.mxu0
    %5279 = vdwg.mxu0
    %v5281 = vsel %vm450, %v5196, 0
    %v5284 = vsel %vm450, %v5198, 0
    %5286 = vmatprep.subr.mxu0 0.0
    %5287 = vmatpush1.msra.mxu0 0.0
    %5288 = vmatprep.subr.mxu0 0.0
    %5289 = vmatpush1.msra.mxu0 0.0
    %5290 = vmatprep.subr.mxu0 0.0
    %5291 = vmatpush1.msra.mxu0 0.0
    %5292 = vmatprep.subr.mxu0 0.0
    %5293 = vmatpush1.msra.mxu0 0.0
    %5294 = vmatprep.subr.mxu0 0.0
    %5295 = vmatpush1.msra.mxu0 0.0
    %5296 = vmatprep.subr.mxu0 0.0
    %5297 = vmatpush1.msra.mxu0 0.0
    %5298 = vmatprep.subr.mxu0 0.0
    %5299 = vmatpush1.msra.mxu0 0.0
    %5300 = vmatprep.subr.mxu0 0.0
    %5301 = vmatpush1.msra.mxu0 0.0
    %5302 = vmatprep.subr.mxu0 0.0
    %5303 = vmatpush1.msra.mxu0 0.0
    %5304 = vmatprep.subr.mxu0 0.0
    %5305 = vmatpush1.msra.mxu0 0.0
    %5306 = vmatprep.subr.mxu0 0.0
    %5307 = vmatpush1.msra.mxu0 0.0
    %5308 = vmatprep.subr.mxu0 0.0
    %5309 = vmatpush1.msra.mxu0 0.0
    %5310 = vmatprep.subr.mxu0 0.0
    %5311 = vmatpush1.msra.mxu0 0.0
    %5312 = vmatprep.subr.mxu0 0.0
    %5313 = vmatpush1.msra.mxu0 0.0
    %5314 = vmatprep.subr.mxu0 0.0
    %5315 = vmatpush1.msra.mxu0 %v4957
    %5316 = vmatprep.subr.mxu0 0.0
    %5317 = vmatpush1.msra.mxu0 %v4952
    %5318 = vmatprep.subr.mxu0 0.0
    %5319 = vmatpush2.msra.mxu0 0.0
    %5320 = vmatprep.subr.mxu0 0.0
    %5321 = vmatpush2.msra.mxu0 0.0
    %5322 = vmatprep.subr.mxu0 0.0
    %5323 = vmatpush2.msra.mxu0 0.0
    %5324 = vmatprep.subr.mxu0 0.0
    %5325 = vmatpush2.msra.mxu0 0.0
    %5326 = vmatprep.subr.mxu0 0.0
    %5327 = vmatpush2.msra.mxu0 0.0
    %5328 = vmatprep.subr.mxu0 0.0
    %5329 = vmatpush2.msra.mxu0 0.0
    %5330 = vmatprep.subr.mxu0 0.0
    %5331 = vmatpush2.msra.mxu0 0.0
    %5332 = vmatprep.subr.mxu0 0.0
    %5333 = vmatpush2.msra.mxu0 0.0
    %5334 = vmatprep.subr.mxu0 0.0
    %5335 = vmatpush2.msra.mxu0 0.0
    %5336 = vmatprep.subr.mxu0 0.0
    %5337 = vmatpush2.msra.mxu0 0.0
    %5338 = vmatprep.subr.mxu0 0.0
    %5339 = vmatpush2.msra.mxu0 0.0
    %5340 = vmatprep.subr.mxu0 0.0
    %5341 = vmatpush2.msra.mxu0 0.0
    %5342 = vmatprep.subr.mxu0 0.0
    %5343 = vmatpush2.msra.mxu0 0.0
    %5344 = vmatprep.subr.mxu0 0.0
    %5345 = vmatpush2.msra.mxu0 0.0
    %5346 = vmatprep.subr.mxu0 0.0
    %5347 = vmatpush2.msra.mxu0 0.0
    %5348 = vmatprep.subr.mxu0 0.0
    %5349 = vmatpush2.msra.mxu0 0.0
    %5350 = vmatprep.mubr.f32.mxu0 0.0
    %5351 = vmatmul.mubr.f32.gmra.mxu0 %v5281
    %v5352 = vpop.f32.mrf.mxu0
    %v5353 = vadd.f32 0.0, %v5352
    %v5354 = vpop.f32.mrf.mxu0
    %5355 = vmatprep.mubr.f32.mxu0 0.0
    %5356 = vmatmul.mubr.f32.gmra.mxu0 %v5284
    %v5357 = vpop.f32.mrf.mxu0
    %v5358 = vadd.f32 0.0, %v5357
    %v5359 = vpop.f32.mrf.mxu0
    %5360 = vdwg.mxu0
    %5361 = vrot.lane.b32.xlu0 %v4960, 112
    %v5362 = vpop.permute.xlu0 %5361
    %5363 = vrot.lane.b32.xlu0 %v4961, 112
    %v5364 = vpop.permute.xlu0 %5363
    %5365 = vrot.lane.b32.xlu0 %v4855, 112
    %v5366 = vpop.permute.xlu0 %5365
    %5367 = vrot.lane.b32.xlu0 %v4861, 112
    %v5368 = vpop.permute.xlu0 %5367
    %v5369 = vsel %vm450, %v5362, 0
    %v5371 = vsel %vm450, %v5364, 0
    %v5373 = vsel %vm450, %v5366, 0
    %v5375 = vsel %vm450, %v5368, 0
    %5377 = vmatprep.subr.mxu0 0.0
    %5378 = vmatpush1.xpose.msra.mxu0 0.0
    %5379 = vmatprep.subr.mxu0 0.0
    %5380 = vmatpush1.xpose.msra.mxu0 0.0
    %5381 = vmatprep.subr.mxu0 0.0
    %5382 = vmatpush1.xpose.msra.mxu0 0.0
    %5383 = vmatprep.subr.mxu0 0.0
    %5384 = vmatpush1.xpose.msra.mxu0 0.0
    %5385 = vmatprep.subr.mxu0 0.0
    %5386 = vmatpush1.xpose.msra.mxu0 0.0
    %5387 = vmatprep.subr.mxu0 0.0
    %5388 = vmatpush1.xpose.msra.mxu0 0.0
    %5389 = vmatprep.subr.mxu0 0.0
    %5390 = vmatpush1.xpose.msra.mxu0 0.0
    %5391 = vmatprep.subr.mxu0 0.0
    %5392 = vmatpush1.xpose.msra.mxu0 0.0
    %5393 = vmatprep.subr.mxu0 0.0
    %5394 = vmatpush1.xpose.msra.mxu0 0.0
    %5395 = vmatprep.subr.mxu0 0.0
    %5396 = vmatpush1.xpose.msra.mxu0 0.0
    %5397 = vmatprep.subr.mxu0 0.0
    %5398 = vmatpush1.xpose.msra.mxu0 0.0
    %5399 = vmatprep.subr.mxu0 0.0
    %5400 = vmatpush1.xpose.msra.mxu0 0.0
    %5401 = vmatprep.subr.mxu0 0.0
    %5402 = vmatpush1.xpose.msra.mxu0 0.0
    %5403 = vmatprep.subr.mxu0 0.0
    %5404 = vmatpush1.xpose.msra.mxu0 0.0
    %5405 = vmatprep.subr.mxu0 0.0
    %5406 = vmatpush1.xpose.msra.mxu0 %v5375
    %5407 = vmatprep.subr.mxu0 0.0
    %5408 = vmatpush1.xpose.msra.mxu0 %v5373
    %5409 = vmatprep.subr.mxu0 0.0
    %5410 = vmatpush2.xpose.msra.mxu0 0.0
    %5411 = vmatprep.subr.mxu0 0.0
    %5412 = vmatpush2.xpose.msra.mxu0 0.0
    %5413 = vmatprep.subr.mxu0 0.0
    %5414 = vmatpush2.xpose.msra.mxu0 0.0
    %5415 = vmatprep.subr.mxu0 0.0
    %5416 = vmatpush2.xpose.msra.mxu0 0.0
    %5417 = vmatprep.subr.mxu0 0.0
    %5418 = vmatpush2.xpose.msra.mxu0 0.0
    %5419 = vmatprep.subr.mxu0 0.0
    %5420 = vmatpush2.xpose.msra.mxu0 0.0
    %5421 = vmatprep.subr.mxu0 0.0
    %5422 = vmatpush2.xpose.msra.mxu0 0.0
    %5423 = vmatprep.subr.mxu0 0.0
    %5424 = vmatpush2.xpose.msra.mxu0 0.0
    %5425 = vmatprep.subr.mxu0 0.0
    %5426 = vmatpush2.xpose.msra.mxu0 0.0
    %5427 = vmatprep.subr.mxu0 0.0
    %5428 = vmatpush2.xpose.msra.mxu0 0.0
    %5429 = vmatprep.subr.mxu0 0.0
    %5430 = vmatpush2.xpose.msra.mxu0 0.0
    %5431 = vmatprep.subr.mxu0 0.0
    %5432 = vmatpush2.xpose.msra.mxu0 0.0
    %5433 = vmatprep.subr.mxu0 0.0
    %5434 = vmatpush2.xpose.msra.mxu0 0.0
    %5435 = vmatprep.subr.mxu0 0.0
    %5436 = vmatpush2.xpose.msra.mxu0 0.0
    %5437 = vmatprep.subr.mxu0 0.0
    %5438 = vmatpush2.xpose.msra.mxu0 0.0
    %5439 = vmatprep.subr.mxu0 0.0
    %5440 = vmatpush2.xpose.msra.mxu0 0.0
    %5441 = vmatprep.mubr.f32.mxu0 0.0
    %5442 = vmatmul.mubr.f32.gmra.mxu0 %v5369
    %v5443 = vpop.f32.mrf.mxu0
    %v5444 = vadd.f32 0.0, %v5443
    %v5445 = vpop.f32.mrf.mxu0
    %5446 = vmatprep.mubr.f32.mxu0 0.0
    %5447 = vmatmul.mubr.f32.gmra.mxu0 %v5371
    %v5448 = vpop.f32.mrf.mxu0
    %v5449 = vadd.f32 0.0, %v5448
    %v5450 = vpop.f32.mrf.mxu0
    %5451 = vdwg.mxu0
    %5452 = vrot.lane.b32.xlu0 %v4962, 112
    %v5453 = vpop.permute.xlu0 %5452
    %5454 = vrot.lane.b32.xlu0 %v4963, 112
    %v5455 = vpop.permute.xlu0 %5454
    %5456 = vrot.lane.b32.xlu0 %v4867, 112
    %v5457 = vpop.permute.xlu0 %5456
    %5458 = vrot.lane.b32.xlu0 %v4873, 112
    %v5459 = vpop.permute.xlu0 %5458
    %v5460 = vsel %vm450, %v5453, 0
    %v5462 = vsel %vm450, %v5455, 0
    %v5464 = vsel %vm450, %v5457, 0
    %v5466 = vsel %vm450, %v5459, 0
    %5468 = vmatprep.subr.mxu0 0.0
    %5469 = vmatpush1.xpose.msra.mxu0 0.0
    %5470 = vmatprep.subr.mxu0 0.0
    %5471 = vmatpush1.xpose.msra.mxu0 0.0
    %5472 = vmatprep.subr.mxu0 0.0
    %5473 = vmatpush1.xpose.msra.mxu0 0.0
    %5474 = vmatprep.subr.mxu0 0.0
    %5475 = vmatpush1.xpose.msra.mxu0 0.0
    %5476 = vmatprep.subr.mxu0 0.0
    %5477 = vmatpush1.xpose.msra.mxu0 0.0
    %5478 = vmatprep.subr.mxu0 0.0
    %5479 = vmatpush1.xpose.msra.mxu0 0.0
    %5480 = vmatprep.subr.mxu0 0.0
    %5481 = vmatpush1.xpose.msra.mxu0 0.0
    %5482 = vmatprep.subr.mxu0 0.0
    %5483 = vmatpush1.xpose.msra.mxu0 0.0
    %5484 = vmatprep.subr.mxu0 0.0
    %5485 = vmatpush1.xpose.msra.mxu0 0.0
    %5486 = vmatprep.subr.mxu0 0.0
    %5487 = vmatpush1.xpose.msra.mxu0 0.0
    %5488 = vmatprep.subr.mxu0 0.0
    %5489 = vmatpush1.xpose.msra.mxu0 0.0
    %5490 = vmatprep.subr.mxu0 0.0
    %5491 = vmatpush1.xpose.msra.mxu0 0.0
    %5492 = vmatprep.subr.mxu0 0.0
    %5493 = vmatpush1.xpose.msra.mxu0 0.0
    %5494 = vmatprep.subr.mxu0 0.0
    %5495 = vmatpush1.xpose.msra.mxu0 0.0
    %5496 = vmatprep.subr.mxu0 0.0
    %5497 = vmatpush1.xpose.msra.mxu0 %v5466
    %5498 = vmatprep.subr.mxu0 0.0
    %5499 = vmatpush1.xpose.msra.mxu0 %v5464
    %5500 = vmatprep.subr.mxu0 0.0
    %5501 = vmatpush2.xpose.msra.mxu0 0.0
    %5502 = vmatprep.subr.mxu0 0.0
    %5503 = vmatpush2.xpose.msra.mxu0 0.0
    %5504 = vmatprep.subr.mxu0 0.0
    %5505 = vmatpush2.xpose.msra.mxu0 0.0
    %5506 = vmatprep.subr.mxu0 0.0
    %5507 = vmatpush2.xpose.msra.mxu0 0.0
    %5508 = vmatprep.subr.mxu0 0.0
    %5509 = vmatpush2.xpose.msra.mxu0 0.0
    %5510 = vmatprep.subr.mxu0 0.0
    %5511 = vmatpush2.xpose.msra.mxu0 0.0
    %5512 = vmatprep.subr.mxu0 0.0
    %5513 = vmatpush2.xpose.msra.mxu0 0.0
    %5514 = vmatprep.subr.mxu0 0.0
    %5515 = vmatpush2.xpose.msra.mxu0 0.0
    %5516 = vmatprep.subr.mxu0 0.0
    %5517 = vmatpush2.xpose.msra.mxu0 0.0
    %5518 = vmatprep.subr.mxu0 0.0
    %5519 = vmatpush2.xpose.msra.mxu0 0.0
    %5520 = vmatprep.subr.mxu0 0.0
    %5521 = vmatpush2.xpose.msra.mxu0 0.0
    %5522 = vmatprep.subr.mxu0 0.0
    %5523 = vmatpush2.xpose.msra.mxu0 0.0
    %5524 = vmatprep.subr.mxu0 0.0
    %5525 = vmatpush2.xpose.msra.mxu0 0.0
    %5526 = vmatprep.subr.mxu0 0.0
    %5527 = vmatpush2.xpose.msra.mxu0 0.0
    %5528 = vmatprep.subr.mxu0 0.0
    %5529 = vmatpush2.xpose.msra.mxu0 0.0
    %5530 = vmatprep.subr.mxu0 0.0
    %5531 = vmatpush2.xpose.msra.mxu0 0.0
    %5532 = vmatprep.mubr.f32.mxu0 0.0
    %5533 = vmatmul.mubr.f32.gmra.mxu0 %v5460
    %v5534 = vpop.f32.mrf.mxu0
    %v5535 = vadd.f32 0.0, %v5534
    %v5536 = vpop.f32.mrf.mxu0
    %5537 = vmatprep.mubr.f32.mxu0 0.0
    %5538 = vmatmul.mubr.f32.gmra.mxu0 %v5462
    %v5539 = vpop.f32.mrf.mxu0
    %v5540 = vadd.f32 0.0, %v5539
    %v5541 = vpop.f32.mrf.mxu0
    %5542 = vdwg.mxu0
    %v5543 = vsel %vm164, %v5444, -1e+30
    %v5544 = vsel %vm164, %v5449, -1e+30
    %v5545 = vsel %vm164, %v5535, -1e+30
    %v5546 = vsel %vm164, %v5540, -1e+30
    %v5547 = vsel %vm450, %v5543, -inf
    %5548 = vmax.xlane.f32.xlu0 %v5547
    %v5549 = vpop.xlane.xlu0 %5548
    %v5550 = vsel %vm450, %v5544, -inf
    %5551 = vmax.xlane.f32.xlu0 %v5550
    %v5552 = vpop.xlane.xlu0 %5551
    %v5553 = vsel %vm450, %v5545, -inf
    %5554 = vmax.xlane.f32.xlu0 %v5553
    %v5555 = vpop.xlane.xlu0 %5554
    %v5556 = vsel %vm450, %v5546, -inf
    %5557 = vmax.xlane.f32.xlu0 %v5556
    %v5558 = vpop.xlane.xlu0 %5557
    %v5559 = vsub.f32 %v5543, %v5549
    %v5560 = vsub.f32 %v5544, %v5552
    %v5561 = vsub.f32 %v5545, %v5555
    %v5562 = vsub.f32 %v5546, %v5558
    %v5563 = vmul.f32 %v5559, 1.442695
    %v5564 = vpow.pop %v5563
    %v5565 = vmul.f32 %v5560, 1.442695
    %v5566 = vpow.pop %v5565
    %v5567 = vmul.f32 %v5561, 1.442695
    %v5568 = vpow.pop %v5567
    %v5569 = vmul.f32 %v5562, 1.442695
    %v5570 = vpow.pop %v5569
    %v5571 = vsel %vm450, %v5564, 0.0
    %5572 = vadd.xlane.f32.xlu0 %v5571
    %v5573 = vpop.xlane.xlu0 %5572
    %v5574 = vsel %vm450, %v5566, 0.0
    %5575 = vadd.xlane.f32.xlu0 %v5574
    %v5576 = vpop.xlane.xlu0 %5575
    %v5577 = vsel %vm450, %v5568, 0.0
    %5578 = vadd.xlane.f32.xlu0 %v5577
    %v5579 = vpop.xlane.xlu0 %5578
    %v5580 = vsel %vm450, %v5570, 0.0
    %5581 = vadd.xlane.f32.xlu0 %v5580
    %v5582 = vpop.xlane.xlu0 %5581
    %v5583 = vrcp.pop %v5573
    %v5584 = vmul.f32 %v5564, %v5583
    %v5585 = vrcp.pop %v5576
    %v5586 = vmul.f32 %v5566, %v5585
    %v5587 = vrcp.pop %v5579
    %v5588 = vmul.f32 %v5568, %v5587
    %v5589 = vrcp.pop %v5582
    %v5590 = vmul.f32 %v5570, %v5589
    %5593 = vrot.lane.b32.xlu0 %v4942, 112
    %v5594 = vpop.permute.xlu0 %5593
    %5595 = vrot.lane.b32.xlu0 %v4947, 112
    %v5596 = vpop.permute.xlu0 %5595
    %v5600 = vsel %vm450, %v5584, 0
    %v5603 = vsel %vm450, %v5586, 0
    %5605 = vmatprep.subr.mxu0 0.0
    %5606 = vmatpush1.msra.mxu0 0.0
    %5607 = vmatprep.subr.mxu0 0.0
    %5608 = vmatpush1.msra.mxu0 0.0
    %5609 = vmatprep.subr.mxu0 0.0
    %5610 = vmatpush1.msra.mxu0 0.0
    %5611 = vmatprep.subr.mxu0 0.0
    %5612 = vmatpush1.msra.mxu0 0.0
    %5613 = vmatprep.subr.mxu0 0.0
    %5614 = vmatpush1.msra.mxu0 0.0
    %5615 = vmatprep.subr.mxu0 0.0
    %5616 = vmatpush1.msra.mxu0 0.0
    %5617 = vmatprep.subr.mxu0 0.0
    %5618 = vmatpush1.msra.mxu0 0.0
    %5619 = vmatprep.subr.mxu0 0.0
    %5620 = vmatpush1.msra.mxu0 0.0
    %5621 = vmatprep.subr.mxu0 0.0
    %5622 = vmatpush1.msra.mxu0 0.0
    %5623 = vmatprep.subr.mxu0 0.0
    %5624 = vmatpush1.msra.mxu0 0.0
    %5625 = vmatprep.subr.mxu0 0.0
    %5626 = vmatpush1.msra.mxu0 0.0
    %5627 = vmatprep.subr.mxu0 0.0
    %5628 = vmatpush1.msra.mxu0 0.0
    %5629 = vmatprep.subr.mxu0 0.0
    %5630 = vmatpush1.msra.mxu0 0.0
    %5631 = vmatprep.subr.mxu0 0.0
    %5632 = vmatpush1.msra.mxu0 0.0
    %5633 = vmatprep.subr.mxu0 0.0
    %5634 = vmatpush1.msra.mxu0 %v5596
    %5635 = vmatprep.subr.mxu0 0.0
    %5636 = vmatpush1.msra.mxu0 %v5594
    %5637 = vmatprep.subr.mxu0 0.0
    %5638 = vmatpush2.msra.mxu0 0.0
    %5639 = vmatprep.subr.mxu0 0.0
    %5640 = vmatpush2.msra.mxu0 0.0
    %5641 = vmatprep.subr.mxu0 0.0
    %5642 = vmatpush2.msra.mxu0 0.0
    %5643 = vmatprep.subr.mxu0 0.0
    %5644 = vmatpush2.msra.mxu0 0.0
    %5645 = vmatprep.subr.mxu0 0.0
    %5646 = vmatpush2.msra.mxu0 0.0
    %5647 = vmatprep.subr.mxu0 0.0
    %5648 = vmatpush2.msra.mxu0 0.0
    %5649 = vmatprep.subr.mxu0 0.0
    %5650 = vmatpush2.msra.mxu0 0.0
    %5651 = vmatprep.subr.mxu0 0.0
    %5652 = vmatpush2.msra.mxu0 0.0
    %5653 = vmatprep.subr.mxu0 0.0
    %5654 = vmatpush2.msra.mxu0 0.0
    %5655 = vmatprep.subr.mxu0 0.0
    %5656 = vmatpush2.msra.mxu0 0.0
    %5657 = vmatprep.subr.mxu0 0.0
    %5658 = vmatpush2.msra.mxu0 0.0
    %5659 = vmatprep.subr.mxu0 0.0
    %5660 = vmatpush2.msra.mxu0 0.0
    %5661 = vmatprep.subr.mxu0 0.0
    %5662 = vmatpush2.msra.mxu0 0.0
    %5663 = vmatprep.subr.mxu0 0.0
    %5664 = vmatpush2.msra.mxu0 0.0
    %5665 = vmatprep.subr.mxu0 0.0
    %5666 = vmatpush2.msra.mxu0 0.0
    %5667 = vmatprep.subr.mxu0 0.0
    %5668 = vmatpush2.msra.mxu0 0.0
    %5669 = vmatprep.mubr.f32.mxu0 0.0
    %5670 = vmatmul.mubr.f32.gmra.mxu0 %v5600
    %v5671 = vpop.f32.mrf.mxu0
    %v5672 = vadd.f32 0.0, %v5671
    %v5673 = vpop.f32.mrf.mxu0
    %5674 = vmatprep.mubr.f32.mxu0 0.0
    %5675 = vmatmul.mubr.f32.gmra.mxu0 %v5603
    %v5676 = vpop.f32.mrf.mxu0
    %v5677 = vadd.f32 0.0, %v5676
    %v5678 = vpop.f32.mrf.mxu0
    %5679 = vdwg.mxu0
    %5682 = vrot.lane.b32.xlu0 %v4952, 112
    %v5683 = vpop.permute.xlu0 %5682
    %5684 = vrot.lane.b32.xlu0 %v4957, 112
    %v5685 = vpop.permute.xlu0 %5684
    %v5689 = vsel %vm450, %v5588, 0
    %v5692 = vsel %vm450, %v5590, 0
    %5694 = vmatprep.subr.mxu0 0.0
    %5695 = vmatpush1.msra.mxu0 0.0
    %5696 = vmatprep.subr.mxu0 0.0
    %5697 = vmatpush1.msra.mxu0 0.0
    %5698 = vmatprep.subr.mxu0 0.0
    %5699 = vmatpush1.msra.mxu0 0.0
    %5700 = vmatprep.subr.mxu0 0.0
    %5701 = vmatpush1.msra.mxu0 0.0
    %5702 = vmatprep.subr.mxu0 0.0
    %5703 = vmatpush1.msra.mxu0 0.0
    %5704 = vmatprep.subr.mxu0 0.0
    %5705 = vmatpush1.msra.mxu0 0.0
    %5706 = vmatprep.subr.mxu0 0.0
    %5707 = vmatpush1.msra.mxu0 0.0
    %5708 = vmatprep.subr.mxu0 0.0
    %5709 = vmatpush1.msra.mxu0 0.0
    %5710 = vmatprep.subr.mxu0 0.0
    %5711 = vmatpush1.msra.mxu0 0.0
    %5712 = vmatprep.subr.mxu0 0.0
    %5713 = vmatpush1.msra.mxu0 0.0
    %5714 = vmatprep.subr.mxu0 0.0
    %5715 = vmatpush1.msra.mxu0 0.0
    %5716 = vmatprep.subr.mxu0 0.0
    %5717 = vmatpush1.msra.mxu0 0.0
    %5718 = vmatprep.subr.mxu0 0.0
    %5719 = vmatpush1.msra.mxu0 0.0
    %5720 = vmatprep.subr.mxu0 0.0
    %5721 = vmatpush1.msra.mxu0 0.0
    %5722 = vmatprep.subr.mxu0 0.0
    %5723 = vmatpush1.msra.mxu0 %v5685
    %5724 = vmatprep.subr.mxu0 0.0
    %5725 = vmatpush1.msra.mxu0 %v5683
    %5726 = vmatprep.subr.mxu0 0.0
    %5727 = vmatpush2.msra.mxu0 0.0
    %5728 = vmatprep.subr.mxu0 0.0
    %5729 = vmatpush2.msra.mxu0 0.0
    %5730 = vmatprep.subr.mxu0 0.0
    %5731 = vmatpush2.msra.mxu0 0.0
    %5732 = vmatprep.subr.mxu0 0.0
    %5733 = vmatpush2.msra.mxu0 0.0
    %5734 = vmatprep.subr.mxu0 0.0
    %5735 = vmatpush2.msra.mxu0 0.0
    %5736 = vmatprep.subr.mxu0 0.0
    %5737 = vmatpush2.msra.mxu0 0.0
    %5738 = vmatprep.subr.mxu0 0.0
    %5739 = vmatpush2.msra.mxu0 0.0
    %5740 = vmatprep.subr.mxu0 0.0
    %5741 = vmatpush2.msra.mxu0 0.0
    %5742 = vmatprep.subr.mxu0 0.0
    %5743 = vmatpush2.msra.mxu0 0.0
    %5744 = vmatprep.subr.mxu0 0.0
    %5745 = vmatpush2.msra.mxu0 0.0
    %5746 = vmatprep.subr.mxu0 0.0
    %5747 = vmatpush2.msra.mxu0 0.0
    %5748 = vmatprep.subr.mxu0 0.0
    %5749 = vmatpush2.msra.mxu0 0.0
    %5750 = vmatprep.subr.mxu0 0.0
    %5751 = vmatpush2.msra.mxu0 0.0
    %5752 = vmatprep.subr.mxu0 0.0
    %5753 = vmatpush2.msra.mxu0 0.0
    %5754 = vmatprep.subr.mxu0 0.0
    %5755 = vmatpush2.msra.mxu0 0.0
    %5756 = vmatprep.subr.mxu0 0.0
    %5757 = vmatpush2.msra.mxu0 0.0
    %5758 = vmatprep.mubr.f32.mxu0 0.0
    %5759 = vmatmul.mubr.f32.gmra.mxu0 %v5689
    %v5760 = vpop.f32.mrf.mxu0
    %v5761 = vadd.f32 0.0, %v5760
    %v5762 = vpop.f32.mrf.mxu0
    %5763 = vmatprep.mubr.f32.mxu0 0.0
    %5764 = vmatmul.mubr.f32.gmra.mxu0 %v5692
    %v5765 = vpop.f32.mrf.mxu0
    %v5766 = vadd.f32 0.0, %v5765
    %v5767 = vpop.f32.mrf.mxu0
    %5768 = vdwg.mxu0
    %v5770 = vsel %vm450, %v5672, 0
    %v5773 = vsel %vm450, %v5677, 0
    %v5776 = vsel %vm450, %v5761, 0
    %v5779 = vsel %vm450, %v5766, 0
    %5781 = vmatprep.subr.mxu0 0.0
    %5782 = vmatpush1.msra.mxu0 0.0
    %5783 = vmatprep.subr.mxu0 0.0
    %5784 = vmatpush1.msra.mxu0 0.0
    %5785 = vmatprep.subr.mxu0 0.0
    %5786 = vmatpush1.msra.mxu0 0.0
    %5787 = vmatprep.subr.mxu0 0.0
    %5788 = vmatpush1.msra.mxu0 0.0
    %5789 = vmatprep.subr.mxu0 0.0
    %5790 = vmatpush1.msra.mxu0 0.0
    %5791 = vmatprep.subr.mxu0 0.0
    %5792 = vmatpush1.msra.mxu0 0.0
    %5793 = vmatprep.subr.mxu0 0.0
    %5794 = vmatpush1.msra.mxu0 0.0
    %5795 = vmatprep.subr.mxu0 0.0
    %5796 = vmatpush1.msra.mxu0 0.0
    %5797 = vmatprep.subr.mxu0 0.0
    %5798 = vmatpush1.msra.mxu0 0.0
    %5799 = vmatprep.subr.mxu0 0.0
    %5800 = vmatpush1.msra.mxu0 0.0
    %5801 = vmatprep.subr.mxu0 0.0
    %5802 = vmatpush1.msra.mxu0 0.0
    %5803 = vmatprep.subr.mxu0 0.0
    %5804 = vmatpush1.msra.mxu0 0.0
    %5805 = vmatprep.subr.mxu0 0.0
    %5806 = vmatpush1.msra.mxu0 0.0
    %5807 = vmatprep.subr.mxu0 0.0
    %5808 = vmatpush1.msra.mxu0 0.0
    %5809 = vmatprep.subr.mxu0 0.0
    %5810 = vmatpush1.msra.mxu0 %v4974
    %5811 = vmatprep.subr.mxu0 0.0
    %5812 = vmatpush1.msra.mxu0 %v4973
    %5813 = vmatprep.subr.mxu0 0.0
    %5814 = vmatpush2.msra.mxu0 0.0
    %5815 = vmatprep.subr.mxu0 0.0
    %5816 = vmatpush2.msra.mxu0 0.0
    %5817 = vmatprep.subr.mxu0 0.0
    %5818 = vmatpush2.msra.mxu0 0.0
    %5819 = vmatprep.subr.mxu0 0.0
    %5820 = vmatpush2.msra.mxu0 0.0
    %5821 = vmatprep.subr.mxu0 0.0
    %5822 = vmatpush2.msra.mxu0 0.0
    %5823 = vmatprep.subr.mxu0 0.0
    %5824 = vmatpush2.msra.mxu0 0.0
    %5825 = vmatprep.subr.mxu0 0.0
    %5826 = vmatpush2.msra.mxu0 0.0
    %5827 = vmatprep.subr.mxu0 0.0
    %5828 = vmatpush2.msra.mxu0 0.0
    %5829 = vmatprep.subr.mxu0 0.0
    %5830 = vmatpush2.msra.mxu0 0.0
    %5831 = vmatprep.subr.mxu0 0.0
    %5832 = vmatpush2.msra.mxu0 0.0
    %5833 = vmatprep.subr.mxu0 0.0
    %5834 = vmatpush2.msra.mxu0 0.0
    %5835 = vmatprep.subr.mxu0 0.0
    %5836 = vmatpush2.msra.mxu0 0.0
    %5837 = vmatprep.subr.mxu0 0.0
    %5838 = vmatpush2.msra.mxu0 0.0
    %5839 = vmatprep.subr.mxu0 0.0
    %5840 = vmatpush2.msra.mxu0 0.0
    %5841 = vmatprep.subr.mxu0 0.0
    %5842 = vmatpush2.msra.mxu0 0.0
    %5843 = vmatprep.subr.mxu0 0.0
    %5844 = vmatpush2.msra.mxu0 0.0
    %5845 = vmatprep.mubr.f32.mxu0 0.0
    %5846 = vmatmul.mubr.f32.gmra.mxu0 %v5770
    %v5847 = vpop.f32.mrf.mxu0
    %v5848 = vadd.f32 0.0, %v5847
    %v5849 = vpop.f32.mrf.mxu0
    %5850 = vmatprep.mubr.f32.mxu0 0.0
    %5851 = vmatmul.mubr.f32.gmra.mxu0 %v5773
    %v5852 = vpop.f32.mrf.mxu0
    %v5853 = vadd.f32 0.0, %v5852
    %v5854 = vpop.f32.mrf.mxu0
    %5855 = vmatprep.mubr.f32.mxu0 0.0
    %5856 = vmatmul.mubr.f32.gmra.mxu0 %v5776
    %v5857 = vpop.f32.mrf.mxu0
    %v5858 = vadd.f32 0.0, %v5857
    %v5859 = vpop.f32.mrf.mxu0
    %5860 = vmatprep.mubr.f32.mxu0 0.0
    %5861 = vmatmul.mubr.f32.gmra.mxu0 %v5779
    %v5862 = vpop.f32.mrf.mxu0
    %v5863 = vadd.f32 0.0, %v5862
    %v5864 = vpop.f32.mrf.mxu0
    %5865 = vdwg.mxu0
    %v5867 = vsel %vm450, %v5272, 0
    %v5870 = vsel %vm450, %v5277, 0
    %v5873 = vsel %vm450, %v5353, 0
    %v5876 = vsel %vm450, %v5358, 0
    %5878 = vmatprep.subr.mxu0 0.0
    %5879 = vmatpush1.msra.mxu0 0.0
    %5880 = vmatprep.subr.mxu0 0.0
    %5881 = vmatpush1.msra.mxu0 0.0
    %5882 = vmatprep.subr.mxu0 0.0
    %5883 = vmatpush1.msra.mxu0 0.0
    %5884 = vmatprep.subr.mxu0 0.0
    %5885 = vmatpush1.msra.mxu0 0.0
    %5886 = vmatprep.subr.mxu0 0.0
    %5887 = vmatpush1.msra.mxu0 0.0
    %5888 = vmatprep.subr.mxu0 0.0
    %5889 = vmatpush1.msra.mxu0 0.0
    %5890 = vmatprep.subr.mxu0 0.0
    %5891 = vmatpush1.msra.mxu0 0.0
    %5892 = vmatprep.subr.mxu0 0.0
    %5893 = vmatpush1.msra.mxu0 0.0
    %5894 = vmatprep.subr.mxu0 0.0
    %5895 = vmatpush1.msra.mxu0 0.0
    %5896 = vmatprep.subr.mxu0 0.0
    %5897 = vmatpush1.msra.mxu0 0.0
    %5898 = vmatprep.subr.mxu0 0.0
    %5899 = vmatpush1.msra.mxu0 0.0
    %5900 = vmatprep.subr.mxu0 0.0
    %5901 = vmatpush1.msra.mxu0 0.0
    %5902 = vmatprep.subr.mxu0 0.0
    %5903 = vmatpush1.msra.mxu0 0.0
    %5904 = vmatprep.subr.mxu0 0.0
    %5905 = vmatpush1.msra.mxu0 0.0
    %5906 = vmatprep.subr.mxu0 0.0
    %5907 = vmatpush1.msra.mxu0 %v4972
    %5908 = vmatprep.subr.mxu0 0.0
    %5909 = vmatpush1.msra.mxu0 %v4971
    %5910 = vmatprep.subr.mxu0 0.0
    %5911 = vmatpush2.msra.mxu0 0.0
    %5912 = vmatprep.subr.mxu0 0.0
    %5913 = vmatpush2.msra.mxu0 0.0
    %5914 = vmatprep.subr.mxu0 0.0
    %5915 = vmatpush2.msra.mxu0 0.0
    %5916 = vmatprep.subr.mxu0 0.0
    %5917 = vmatpush2.msra.mxu0 0.0
    %5918 = vmatprep.subr.mxu0 0.0
    %5919 = vmatpush2.msra.mxu0 0.0
    %5920 = vmatprep.subr.mxu0 0.0
    %5921 = vmatpush2.msra.mxu0 0.0
    %5922 = vmatprep.subr.mxu0 0.0
    %5923 = vmatpush2.msra.mxu0 0.0
    %5924 = vmatprep.subr.mxu0 0.0
    %5925 = vmatpush2.msra.mxu0 0.0
    %5926 = vmatprep.subr.mxu0 0.0
    %5927 = vmatpush2.msra.mxu0 0.0
    %5928 = vmatprep.subr.mxu0 0.0
    %5929 = vmatpush2.msra.mxu0 0.0
    %5930 = vmatprep.subr.mxu0 0.0
    %5931 = vmatpush2.msra.mxu0 0.0
    %5932 = vmatprep.subr.mxu0 0.0
    %5933 = vmatpush2.msra.mxu0 0.0
    %5934 = vmatprep.subr.mxu0 0.0
    %5935 = vmatpush2.msra.mxu0 0.0
    %5936 = vmatprep.subr.mxu0 0.0
    %5937 = vmatpush2.msra.mxu0 0.0
    %5938 = vmatprep.subr.mxu0 0.0
    %5939 = vmatpush2.msra.mxu0 0.0
    %5940 = vmatprep.subr.mxu0 0.0
    %5941 = vmatpush2.msra.mxu0 0.0
    %5942 = vmatprep.mubr.f32.mxu0 0.0
    %5943 = vmatmul.mubr.f32.gmra.mxu0 %v5867
    %v5944 = vpop.f32.mrf.mxu0
    %v5945 = vadd.f32 %v5848, %v5944
    %v5946 = vpop.f32.mrf.mxu0
    %5947 = vmatprep.mubr.f32.mxu0 0.0
    %5948 = vmatmul.mubr.f32.gmra.mxu0 %v5870
    %v5949 = vpop.f32.mrf.mxu0
    %v5950 = vadd.f32 %v5853, %v5949
    %v5951 = vpop.f32.mrf.mxu0
    %5952 = vmatprep.mubr.f32.mxu0 0.0
    %5953 = vmatmul.mubr.f32.gmra.mxu0 %v5873
    %v5954 = vpop.f32.mrf.mxu0
    %v5955 = vadd.f32 %v5858, %v5954
    %v5956 = vpop.f32.mrf.mxu0
    %5957 = vmatprep.mubr.f32.mxu0 0.0
    %5958 = vmatmul.mubr.f32.gmra.mxu0 %v5876
    %v5959 = vpop.f32.mrf.mxu0
    %v5960 = vadd.f32 %v5863, %v5959
    %v5961 = vpop.f32.mrf.mxu0
    %5962 = vdwg.mxu0
    %5963 = vrot.lane.b32.xlu0 %v4960, 96
    %v5964 = vpop.permute.xlu0 %5963
    %5965 = vrot.lane.b32.xlu0 %v4961, 96
    %v5966 = vpop.permute.xlu0 %5965
    %5967 = vrot.lane.b32.xlu0 %v4855, 96
    %v5968 = vpop.permute.xlu0 %5967
    %5969 = vrot.lane.b32.xlu0 %v4861, 96
    %v5970 = vpop.permute.xlu0 %5969
    %v5971 = vsel %vm450, %v5964, 0
    %v5973 = vsel %vm450, %v5966, 0
    %v5975 = vsel %vm450, %v5968, 0
    %v5977 = vsel %vm450, %v5970, 0
    %5979 = vmatprep.subr.mxu0 0.0
    %5980 = vmatpush1.xpose.msra.mxu0 0.0
    %5981 = vmatprep.subr.mxu0 0.0
    %5982 = vmatpush1.xpose.msra.mxu0 0.0
    %5983 = vmatprep.subr.mxu0 0.0
    %5984 = vmatpush1.xpose.msra.mxu0 0.0
    %5985 = vmatprep.subr.mxu0 0.0
    %5986 = vmatpush1.xpose.msra.mxu0 0.0
    %5987 = vmatprep.subr.mxu0 0.0
    %5988 = vmatpush1.xpose.msra.mxu0 0.0
    %5989 = vmatprep.subr.mxu0 0.0
    %5990 = vmatpush1.xpose.msra.mxu0 0.0
    %5991 = vmatprep.subr.mxu0 0.0
    %5992 = vmatpush1.xpose.msra.mxu0 0.0
    %5993 = vmatprep.subr.mxu0 0.0
    %5994 = vmatpush1.xpose.msra.mxu0 0.0
    %5995 = vmatprep.subr.mxu0 0.0
    %5996 = vmatpush1.xpose.msra.mxu0 0.0
    %5997 = vmatprep.subr.mxu0 0.0
    %5998 = vmatpush1.xpose.msra.mxu0 0.0
    %5999 = vmatprep.subr.mxu0 0.0
    %6000 = vmatpush1.xpose.msra.mxu0 0.0
    %6001 = vmatprep.subr.mxu0 0.0
    %6002 = vmatpush1.xpose.msra.mxu0 0.0
    %6003 = vmatprep.subr.mxu0 0.0
    %6004 = vmatpush1.xpose.msra.mxu0 0.0
    %6005 = vmatprep.subr.mxu0 0.0
    %6006 = vmatpush1.xpose.msra.mxu0 0.0
    %6007 = vmatprep.subr.mxu0 0.0
    %6008 = vmatpush1.xpose.msra.mxu0 %v5977
    %6009 = vmatprep.subr.mxu0 0.0
    %6010 = vmatpush1.xpose.msra.mxu0 %v5975
    %6011 = vmatprep.subr.mxu0 0.0
    %6012 = vmatpush2.xpose.msra.mxu0 0.0
    %6013 = vmatprep.subr.mxu0 0.0
    %6014 = vmatpush2.xpose.msra.mxu0 0.0
    %6015 = vmatprep.subr.mxu0 0.0
    %6016 = vmatpush2.xpose.msra.mxu0 0.0
    %6017 = vmatprep.subr.mxu0 0.0
    %6018 = vmatpush2.xpose.msra.mxu0 0.0
    %6019 = vmatprep.subr.mxu0 0.0
    %6020 = vmatpush2.xpose.msra.mxu0 0.0
    %6021 = vmatprep.subr.mxu0 0.0
    %6022 = vmatpush2.xpose.msra.mxu0 0.0
    %6023 = vmatprep.subr.mxu0 0.0
    %6024 = vmatpush2.xpose.msra.mxu0 0.0
    %6025 = vmatprep.subr.mxu0 0.0
    %6026 = vmatpush2.xpose.msra.mxu0 0.0
    %6027 = vmatprep.subr.mxu0 0.0
    %6028 = vmatpush2.xpose.msra.mxu0 0.0
    %6029 = vmatprep.subr.mxu0 0.0
    %6030 = vmatpush2.xpose.msra.mxu0 0.0
    %6031 = vmatprep.subr.mxu0 0.0
    %6032 = vmatpush2.xpose.msra.mxu0 0.0
    %6033 = vmatprep.subr.mxu0 0.0
    %6034 = vmatpush2.xpose.msra.mxu0 0.0
    %6035 = vmatprep.subr.mxu0 0.0
    %6036 = vmatpush2.xpose.msra.mxu0 0.0
    %6037 = vmatprep.subr.mxu0 0.0
    %6038 = vmatpush2.xpose.msra.mxu0 0.0
    %6039 = vmatprep.subr.mxu0 0.0
    %6040 = vmatpush2.xpose.msra.mxu0 0.0
    %6041 = vmatprep.subr.mxu0 0.0
    %6042 = vmatpush2.xpose.msra.mxu0 0.0
    %6043 = vmatprep.mubr.f32.mxu0 0.0
    %6044 = vmatmul.mubr.f32.gmra.mxu0 %v5971
    %v6045 = vpop.f32.mrf.mxu0
    %v6046 = vadd.f32 0.0, %v6045
    %v6047 = vpop.f32.mrf.mxu0
    %6048 = vmatprep.mubr.f32.mxu0 0.0
    %6049 = vmatmul.mubr.f32.gmra.mxu0 %v5973
    %v6050 = vpop.f32.mrf.mxu0
    %v6051 = vadd.f32 0.0, %v6050
    %v6052 = vpop.f32.mrf.mxu0
    %6053 = vdwg.mxu0
    %6054 = vrot.lane.b32.xlu0 %v4962, 96
    %v6055 = vpop.permute.xlu0 %6054
    %6056 = vrot.lane.b32.xlu0 %v4963, 96
    %v6057 = vpop.permute.xlu0 %6056
    %6058 = vrot.lane.b32.xlu0 %v4867, 96
    %v6059 = vpop.permute.xlu0 %6058
    %6060 = vrot.lane.b32.xlu0 %v4873, 96
    %v6061 = vpop.permute.xlu0 %6060
    %v6062 = vsel %vm450, %v6055, 0
    %v6064 = vsel %vm450, %v6057, 0
    %v6066 = vsel %vm450, %v6059, 0
    %v6068 = vsel %vm450, %v6061, 0
    %6070 = vmatprep.subr.mxu0 0.0
    %6071 = vmatpush1.xpose.msra.mxu0 0.0
    %6072 = vmatprep.subr.mxu0 0.0
    %6073 = vmatpush1.xpose.msra.mxu0 0.0
    %6074 = vmatprep.subr.mxu0 0.0
    %6075 = vmatpush1.xpose.msra.mxu0 0.0
    %6076 = vmatprep.subr.mxu0 0.0
    %6077 = vmatpush1.xpose.msra.mxu0 0.0
    %6078 = vmatprep.subr.mxu0 0.0
    %6079 = vmatpush1.xpose.msra.mxu0 0.0
    %6080 = vmatprep.subr.mxu0 0.0
    %6081 = vmatpush1.xpose.msra.mxu0 0.0
    %6082 = vmatprep.subr.mxu0 0.0
    %6083 = vmatpush1.xpose.msra.mxu0 0.0
    %6084 = vmatprep.subr.mxu0 0.0
    %6085 = vmatpush1.xpose.msra.mxu0 0.0
    %6086 = vmatprep.subr.mxu0 0.0
    %6087 = vmatpush1.xpose.msra.mxu0 0.0
    %6088 = vmatprep.subr.mxu0 0.0
    %6089 = vmatpush1.xpose.msra.mxu0 0.0
    %6090 = vmatprep.subr.mxu0 0.0
    %6091 = vmatpush1.xpose.msra.mxu0 0.0
    %6092 = vmatprep.subr.mxu0 0.0
    %6093 = vmatpush1.xpose.msra.mxu0 0.0
    %6094 = vmatprep.subr.mxu0 0.0
    %6095 = vmatpush1.xpose.msra.mxu0 0.0
    %6096 = vmatprep.subr.mxu0 0.0
    %6097 = vmatpush1.xpose.msra.mxu0 0.0
    %6098 = vmatprep.subr.mxu0 0.0
    %6099 = vmatpush1.xpose.msra.mxu0 %v6068
    %6100 = vmatprep.subr.mxu0 0.0
    %6101 = vmatpush1.xpose.msra.mxu0 %v6066
    %6102 = vmatprep.subr.mxu0 0.0
    %6103 = vmatpush2.xpose.msra.mxu0 0.0
    %6104 = vmatprep.subr.mxu0 0.0
    %6105 = vmatpush2.xpose.msra.mxu0 0.0
    %6106 = vmatprep.subr.mxu0 0.0
    %6107 = vmatpush2.xpose.msra.mxu0 0.0
    %6108 = vmatprep.subr.mxu0 0.0
    %6109 = vmatpush2.xpose.msra.mxu0 0.0
    %6110 = vmatprep.subr.mxu0 0.0
    %6111 = vmatpush2.xpose.msra.mxu0 0.0
    %6112 = vmatprep.subr.mxu0 0.0
    %6113 = vmatpush2.xpose.msra.mxu0 0.0
    %6114 = vmatprep.subr.mxu0 0.0
    %6115 = vmatpush2.xpose.msra.mxu0 0.0
    %6116 = vmatprep.subr.mxu0 0.0
    %6117 = vmatpush2.xpose.msra.mxu0 0.0
    %6118 = vmatprep.subr.mxu0 0.0
    %6119 = vmatpush2.xpose.msra.mxu0 0.0
    %6120 = vmatprep.subr.mxu0 0.0
    %6121 = vmatpush2.xpose.msra.mxu0 0.0
    %6122 = vmatprep.subr.mxu0 0.0
    %6123 = vmatpush2.xpose.msra.mxu0 0.0
    %6124 = vmatprep.subr.mxu0 0.0
    %6125 = vmatpush2.xpose.msra.mxu0 0.0
    %6126 = vmatprep.subr.mxu0 0.0
    %6127 = vmatpush2.xpose.msra.mxu0 0.0
    %6128 = vmatprep.subr.mxu0 0.0
    %6129 = vmatpush2.xpose.msra.mxu0 0.0
    %6130 = vmatprep.subr.mxu0 0.0
    %6131 = vmatpush2.xpose.msra.mxu0 0.0
    %6132 = vmatprep.subr.mxu0 0.0
    %6133 = vmatpush2.xpose.msra.mxu0 0.0
    %6134 = vmatprep.mubr.f32.mxu0 0.0
    %6135 = vmatmul.mubr.f32.gmra.mxu0 %v6062
    %v6136 = vpop.f32.mrf.mxu0
    %v6137 = vadd.f32 0.0, %v6136
    %v6138 = vpop.f32.mrf.mxu0
    %6139 = vmatprep.mubr.f32.mxu0 0.0
    %6140 = vmatmul.mubr.f32.gmra.mxu0 %v6064
    %v6141 = vpop.f32.mrf.mxu0
    %v6142 = vadd.f32 0.0, %v6141
    %v6143 = vpop.f32.mrf.mxu0
    %6144 = vdwg.mxu0
    %v6145 = vsel %vm164, %v6046, -1e+30
    %v6146 = vsel %vm164, %v6051, -1e+30
    %v6147 = vsel %vm164, %v6137, -1e+30
    %v6148 = vsel %vm164, %v6142, -1e+30
    %v6149 = vsel %vm450, %v6145, -inf
    %6150 = vmax.xlane.f32.xlu0 %v6149
    %v6151 = vpop.xlane.xlu0 %6150
    %v6152 = vsel %vm450, %v6146, -inf
    %6153 = vmax.xlane.f32.xlu0 %v6152
    %v6154 = vpop.xlane.xlu0 %6153
    %v6155 = vsel %vm450, %v6147, -inf
    %6156 = vmax.xlane.f32.xlu0 %v6155
    %v6157 = vpop.xlane.xlu0 %6156
    %v6158 = vsel %vm450, %v6148, -inf
    %6159 = vmax.xlane.f32.xlu0 %v6158
    %v6160 = vpop.xlane.xlu0 %6159
    %v6161 = vsub.f32 %v6145, %v6151
    %v6162 = vsub.f32 %v6146, %v6154
    %v6163 = vsub.f32 %v6147, %v6157
    %v6164 = vsub.f32 %v6148, %v6160
    %v6165 = vmul.f32 %v6161, 1.442695
    %v6166 = vpow.pop %v6165
    %v6167 = vmul.f32 %v6162, 1.442695
    %v6168 = vpow.pop %v6167
    %v6169 = vmul.f32 %v6163, 1.442695
    %v6170 = vpow.pop %v6169
    %v6171 = vmul.f32 %v6164, 1.442695
    %v6172 = vpow.pop %v6171
    %v6173 = vsel %vm450, %v6166, 0.0
    %6174 = vadd.xlane.f32.xlu0 %v6173
    %v6175 = vpop.xlane.xlu0 %6174
    %v6176 = vsel %vm450, %v6168, 0.0
    %6177 = vadd.xlane.f32.xlu0 %v6176
    %v6178 = vpop.xlane.xlu0 %6177
    %v6179 = vsel %vm450, %v6170, 0.0
    %6180 = vadd.xlane.f32.xlu0 %v6179
    %v6181 = vpop.xlane.xlu0 %6180
    %v6182 = vsel %vm450, %v6172, 0.0
    %6183 = vadd.xlane.f32.xlu0 %v6182
    %v6184 = vpop.xlane.xlu0 %6183
    %v6185 = vrcp.pop %v6175
    %v6186 = vmul.f32 %v6166, %v6185
    %v6187 = vrcp.pop %v6178
    %v6188 = vmul.f32 %v6168, %v6187
    %v6189 = vrcp.pop %v6181
    %v6190 = vmul.f32 %v6170, %v6189
    %v6191 = vrcp.pop %v6184
    %v6192 = vmul.f32 %v6172, %v6191
    %6193 = vrot.lane.b32.xlu0 %v4942, 96
    %v6194 = vpop.permute.xlu0 %6193
    %6195 = vrot.lane.b32.xlu0 %v4947, 96
    %v6196 = vpop.permute.xlu0 %6195
    %v6200 = vsel %vm450, %v6186, 0
    %v6203 = vsel %vm450, %v6188, 0
    %6205 = vmatprep.subr.mxu0 0.0
    %6206 = vmatpush1.msra.mxu0 0.0
    %6207 = vmatprep.subr.mxu0 0.0
    %6208 = vmatpush1.msra.mxu0 0.0
    %6209 = vmatprep.subr.mxu0 0.0
    %6210 = vmatpush1.msra.mxu0 0.0
    %6211 = vmatprep.subr.mxu0 0.0
    %6212 = vmatpush1.msra.mxu0 0.0
    %6213 = vmatprep.subr.mxu0 0.0
    %6214 = vmatpush1.msra.mxu0 0.0
    %6215 = vmatprep.subr.mxu0 0.0
    %6216 = vmatpush1.msra.mxu0 0.0
    %6217 = vmatprep.subr.mxu0 0.0
    %6218 = vmatpush1.msra.mxu0 0.0
    %6219 = vmatprep.subr.mxu0 0.0
    %6220 = vmatpush1.msra.mxu0 0.0
    %6221 = vmatprep.subr.mxu0 0.0
    %6222 = vmatpush1.msra.mxu0 0.0
    %6223 = vmatprep.subr.mxu0 0.0
    %6224 = vmatpush1.msra.mxu0 0.0
    %6225 = vmatprep.subr.mxu0 0.0
    %6226 = vmatpush1.msra.mxu0 0.0
    %6227 = vmatprep.subr.mxu0 0.0
    %6228 = vmatpush1.msra.mxu0 0.0
    %6229 = vmatprep.subr.mxu0 0.0
    %6230 = vmatpush1.msra.mxu0 0.0
    %6231 = vmatprep.subr.mxu0 0.0
    %6232 = vmatpush1.msra.mxu0 0.0
    %6233 = vmatprep.subr.mxu0 0.0
    %6234 = vmatpush1.msra.mxu0 %v6196
    %6235 = vmatprep.subr.mxu0 0.0
    %6236 = vmatpush1.msra.mxu0 %v6194
    %6237 = vmatprep.subr.mxu0 0.0
    %6238 = vmatpush2.msra.mxu0 0.0
    %6239 = vmatprep.subr.mxu0 0.0
    %6240 = vmatpush2.msra.mxu0 0.0
    %6241 = vmatprep.subr.mxu0 0.0
    %6242 = vmatpush2.msra.mxu0 0.0
    %6243 = vmatprep.subr.mxu0 0.0
    %6244 = vmatpush2.msra.mxu0 0.0
    %6245 = vmatprep.subr.mxu0 0.0
    %6246 = vmatpush2.msra.mxu0 0.0
    %6247 = vmatprep.subr.mxu0 0.0
    %6248 = vmatpush2.msra.mxu0 0.0
    %6249 = vmatprep.subr.mxu0 0.0
    %6250 = vmatpush2.msra.mxu0 0.0
    %6251 = vmatprep.subr.mxu0 0.0
    %6252 = vmatpush2.msra.mxu0 0.0
    %6253 = vmatprep.subr.mxu0 0.0
    %6254 = vmatpush2.msra.mxu0 0.0
    %6255 = vmatprep.subr.mxu0 0.0
    %6256 = vmatpush2.msra.mxu0 0.0
    %6257 = vmatprep.subr.mxu0 0.0
    %6258 = vmatpush2.msra.mxu0 0.0
    %6259 = vmatprep.subr.mxu0 0.0
    %6260 = vmatpush2.msra.mxu0 0.0
    %6261 = vmatprep.subr.mxu0 0.0
    %6262 = vmatpush2.msra.mxu0 0.0
    %6263 = vmatprep.subr.mxu0 0.0
    %6264 = vmatpush2.msra.mxu0 0.0
    %6265 = vmatprep.subr.mxu0 0.0
    %6266 = vmatpush2.msra.mxu0 0.0
    %6267 = vmatprep.subr.mxu0 0.0
    %6268 = vmatpush2.msra.mxu0 0.0
    %6269 = vmatprep.mubr.f32.mxu0 0.0
    %6270 = vmatmul.mubr.f32.gmra.mxu0 %v6200
    %v6271 = vpop.f32.mrf.mxu0
    %v6272 = vadd.f32 0.0, %v6271
    %v6273 = vpop.f32.mrf.mxu0
    %6274 = vmatprep.mubr.f32.mxu0 0.0
    %6275 = vmatmul.mubr.f32.gmra.mxu0 %v6203
    %v6276 = vpop.f32.mrf.mxu0
    %v6277 = vadd.f32 0.0, %v6276
    %v6278 = vpop.f32.mrf.mxu0
    %6279 = vdwg.mxu0
    %6280 = vrot.lane.b32.xlu0 %v4952, 96
    %v6281 = vpop.permute.xlu0 %6280
    %6282 = vrot.lane.b32.xlu0 %v4957, 96
    %v6283 = vpop.permute.xlu0 %6282
    %v6287 = vsel %vm450, %v6190, 0
    %v6290 = vsel %vm450, %v6192, 0
    %6292 = vmatprep.subr.mxu0 0.0
    %6293 = vmatpush1.msra.mxu0 0.0
    %6294 = vmatprep.subr.mxu0 0.0
    %6295 = vmatpush1.msra.mxu0 0.0
    %6296 = vmatprep.subr.mxu0 0.0
    %6297 = vmatpush1.msra.mxu0 0.0
    %6298 = vmatprep.subr.mxu0 0.0
    %6299 = vmatpush1.msra.mxu0 0.0
    %6300 = vmatprep.subr.mxu0 0.0
    %6301 = vmatpush1.msra.mxu0 0.0
    %6302 = vmatprep.subr.mxu0 0.0
    %6303 = vmatpush1.msra.mxu0 0.0
    %6304 = vmatprep.subr.mxu0 0.0
    %6305 = vmatpush1.msra.mxu0 0.0
    %6306 = vmatprep.subr.mxu0 0.0
    %6307 = vmatpush1.msra.mxu0 0.0
    %6308 = vmatprep.subr.mxu0 0.0
    %6309 = vmatpush1.msra.mxu0 0.0
    %6310 = vmatprep.subr.mxu0 0.0
    %6311 = vmatpush1.msra.mxu0 0.0
    %6312 = vmatprep.subr.mxu0 0.0
    %6313 = vmatpush1.msra.mxu0 0.0
    %6314 = vmatprep.subr.mxu0 0.0
    %6315 = vmatpush1.msra.mxu0 0.0
    %6316 = vmatprep.subr.mxu0 0.0
    %6317 = vmatpush1.msra.mxu0 0.0
    %6318 = vmatprep.subr.mxu0 0.0
    %6319 = vmatpush1.msra.mxu0 0.0
    %6320 = vmatprep.subr.mxu0 0.0
    %6321 = vmatpush1.msra.mxu0 %v6283
    %6322 = vmatprep.subr.mxu0 0.0
    %6323 = vmatpush1.msra.mxu0 %v6281
    %6324 = vmatprep.subr.mxu0 0.0
    %6325 = vmatpush2.msra.mxu0 0.0
    %6326 = vmatprep.subr.mxu0 0.0
    %6327 = vmatpush2.msra.mxu0 0.0
    %6328 = vmatprep.subr.mxu0 0.0
    %6329 = vmatpush2.msra.mxu0 0.0
    %6330 = vmatprep.subr.mxu0 0.0
    %6331 = vmatpush2.msra.mxu0 0.0
    %6332 = vmatprep.subr.mxu0 0.0
    %6333 = vmatpush2.msra.mxu0 0.0
    %6334 = vmatprep.subr.mxu0 0.0
    %6335 = vmatpush2.msra.mxu0 0.0
    %6336 = vmatprep.subr.mxu0 0.0
    %6337 = vmatpush2.msra.mxu0 0.0
    %6338 = vmatprep.subr.mxu0 0.0
    %6339 = vmatpush2.msra.mxu0 0.0
    %6340 = vmatprep.subr.mxu0 0.0
    %6341 = vmatpush2.msra.mxu0 0.0
    %6342 = vmatprep.subr.mxu0 0.0
    %6343 = vmatpush2.msra.mxu0 0.0
    %6344 = vmatprep.subr.mxu0 0.0
    %6345 = vmatpush2.msra.mxu0 0.0
    %6346 = vmatprep.subr.mxu0 0.0
    %6347 = vmatpush2.msra.mxu0 0.0
    %6348 = vmatprep.subr.mxu0 0.0
    %6349 = vmatpush2.msra.mxu0 0.0
    %6350 = vmatprep.subr.mxu0 0.0
    %6351 = vmatpush2.msra.mxu0 0.0
    %6352 = vmatprep.subr.mxu0 0.0
    %6353 = vmatpush2.msra.mxu0 0.0
    %6354 = vmatprep.subr.mxu0 0.0
    %6355 = vmatpush2.msra.mxu0 0.0
    %6356 = vmatprep.mubr.f32.mxu0 0.0
    %6357 = vmatmul.mubr.f32.gmra.mxu0 %v6287
    %v6358 = vpop.f32.mrf.mxu0
    %v6359 = vadd.f32 0.0, %v6358
    %v6360 = vpop.f32.mrf.mxu0
    %6361 = vmatprep.mubr.f32.mxu0 0.0
    %6362 = vmatmul.mubr.f32.gmra.mxu0 %v6290
    %v6363 = vpop.f32.mrf.mxu0
    %v6364 = vadd.f32 0.0, %v6363
    %v6365 = vpop.f32.mrf.mxu0
    %6366 = vdwg.mxu0
    %v6368 = vsel %vm450, %v6272, 0
    %v6371 = vsel %vm450, %v6277, 0
    %v6374 = vsel %vm450, %v6359, 0
    %v6377 = vsel %vm450, %v6364, 0
    %6379 = vmatprep.subr.mxu0 0.0
    %6380 = vmatpush1.msra.mxu0 0.0
    %6381 = vmatprep.subr.mxu0 0.0
    %6382 = vmatpush1.msra.mxu0 0.0
    %6383 = vmatprep.subr.mxu0 0.0
    %6384 = vmatpush1.msra.mxu0 0.0
    %6385 = vmatprep.subr.mxu0 0.0
    %6386 = vmatpush1.msra.mxu0 0.0
    %6387 = vmatprep.subr.mxu0 0.0
    %6388 = vmatpush1.msra.mxu0 0.0
    %6389 = vmatprep.subr.mxu0 0.0
    %6390 = vmatpush1.msra.mxu0 0.0
    %6391 = vmatprep.subr.mxu0 0.0
    %6392 = vmatpush1.msra.mxu0 0.0
    %6393 = vmatprep.subr.mxu0 0.0
    %6394 = vmatpush1.msra.mxu0 0.0
    %6395 = vmatprep.subr.mxu0 0.0
    %6396 = vmatpush1.msra.mxu0 0.0
    %6397 = vmatprep.subr.mxu0 0.0
    %6398 = vmatpush1.msra.mxu0 0.0
    %6399 = vmatprep.subr.mxu0 0.0
    %6400 = vmatpush1.msra.mxu0 0.0
    %6401 = vmatprep.subr.mxu0 0.0
    %6402 = vmatpush1.msra.mxu0 0.0
    %6403 = vmatprep.subr.mxu0 0.0
    %6404 = vmatpush1.msra.mxu0 0.0
    %6405 = vmatprep.subr.mxu0 0.0
    %6406 = vmatpush1.msra.mxu0 0.0
    %6407 = vmatprep.subr.mxu0 0.0
    %6408 = vmatpush1.msra.mxu0 %v4976
    %6409 = vmatprep.subr.mxu0 0.0
    %6410 = vmatpush1.msra.mxu0 %v4975
    %6411 = vmatprep.subr.mxu0 0.0
    %6412 = vmatpush2.msra.mxu0 0.0
    %6413 = vmatprep.subr.mxu0 0.0
    %6414 = vmatpush2.msra.mxu0 0.0
    %6415 = vmatprep.subr.mxu0 0.0
    %6416 = vmatpush2.msra.mxu0 0.0
    %6417 = vmatprep.subr.mxu0 0.0
    %6418 = vmatpush2.msra.mxu0 0.0
    %6419 = vmatprep.subr.mxu0 0.0
    %6420 = vmatpush2.msra.mxu0 0.0
    %6421 = vmatprep.subr.mxu0 0.0
    %6422 = vmatpush2.msra.mxu0 0.0
    %6423 = vmatprep.subr.mxu0 0.0
    %6424 = vmatpush2.msra.mxu0 0.0
    %6425 = vmatprep.subr.mxu0 0.0
    %6426 = vmatpush2.msra.mxu0 0.0
    %6427 = vmatprep.subr.mxu0 0.0
    %6428 = vmatpush2.msra.mxu0 0.0
    %6429 = vmatprep.subr.mxu0 0.0
    %6430 = vmatpush2.msra.mxu0 0.0
    %6431 = vmatprep.subr.mxu0 0.0
    %6432 = vmatpush2.msra.mxu0 0.0
    %6433 = vmatprep.subr.mxu0 0.0
    %6434 = vmatpush2.msra.mxu0 0.0
    %6435 = vmatprep.subr.mxu0 0.0
    %6436 = vmatpush2.msra.mxu0 0.0
    %6437 = vmatprep.subr.mxu0 0.0
    %6438 = vmatpush2.msra.mxu0 0.0
    %6439 = vmatprep.subr.mxu0 0.0
    %6440 = vmatpush2.msra.mxu0 0.0
    %6441 = vmatprep.subr.mxu0 0.0
    %6442 = vmatpush2.msra.mxu0 0.0
    %6443 = vmatprep.mubr.f32.mxu0 0.0
    %6444 = vmatmul.mubr.f32.gmra.mxu0 %v6368
    %v6445 = vpop.f32.mrf.mxu0
    %v6446 = vadd.f32 0.0, %v6445
    %v6447 = vpop.f32.mrf.mxu0
    %6448 = vmatprep.mubr.f32.mxu0 0.0
    %6449 = vmatmul.mubr.f32.gmra.mxu0 %v6371
    %v6450 = vpop.f32.mrf.mxu0
    %v6451 = vadd.f32 0.0, %v6450
    %v6452 = vpop.f32.mrf.mxu0
    %6453 = vmatprep.mubr.f32.mxu0 0.0
    %6454 = vmatmul.mubr.f32.gmra.mxu0 %v6374
    %v6455 = vpop.f32.mrf.mxu0
    %v6456 = vadd.f32 0.0, %v6455
    %v6457 = vpop.f32.mrf.mxu0
    %6458 = vmatprep.mubr.f32.mxu0 0.0
    %6459 = vmatmul.mubr.f32.gmra.mxu0 %v6377
    %v6460 = vpop.f32.mrf.mxu0
    %v6461 = vadd.f32 0.0, %v6460
    %v6462 = vpop.f32.mrf.mxu0
    %6463 = vdwg.mxu0
    %v6464 = vadd.f32 %v5945, %v6446
    %v6465 = vadd.f32 %v5950, %v6451
    %v6466 = vadd.f32 %v5955, %v6456
    %v6467 = vadd.f32 %v5960, %v6461
    %v6468 = vlaneseq
    %v6469 = vshrl.u32 %v6468, 7
    %v6470 = vsub.s32 1, %v6469
    %v6471 = vrot.slane %v4690, %v6470
    %v6472 = vadd.f32 %v6464, %v6471
    %v6473 = vadd.f32 %v6465, %v6471
    %v6474 = vadd.f32 %v6466, %v6471
    %v6475 = vadd.f32 %v6467, %v6471
    %v6476 = vadd.f32 %v4685, %v6472
    %v6477 = vadd.f32 %v4686, %v6473
    %v6478 = vadd.f32 %v4687, %v6474
    %v6479 = vadd.f32 %v4688, %v6475
    %6480 = vadd.xlane.f32.xlu0 %v6476
    %v6481 = vpop.xlane.xlu0 %6480
    %6482 = vadd.xlane.f32.xlu0 %v6477
    %v6483 = vpop.xlane.xlu0 %6482
    %6484 = vadd.xlane.f32.xlu0 %v6478
    %v6485 = vpop.xlane.xlu0 %6484
    %6486 = vadd.xlane.f32.xlu0 %v6479
    %v6487 = vpop.xlane.xlu0 %6486
    %v6488 = vmul.f32 %v6481, 0.020833334
    %v6489 = vmul.f32 %v6483, 0.020833334
    %v6490 = vmul.f32 %v6485, 0.020833334
    %v6491 = vmul.f32 %v6487, 0.020833334
    %v6492 = vsub.f32 %v6476, %v6488
    %v6493 = vsub.f32 %v6477, %v6489
    %v6494 = vsub.f32 %v6478, %v6490
    %v6495 = vsub.f32 %v6479, %v6491
    %v6496 = vsel %vm1971, %v6492, 0.0
    %v6497 = vsel %vm1971, %v6493, 0.0
    %v6498 = vsel %vm1971, %v6494, 0.0
    %v6499 = vsel %vm1971, %v6495, 0.0
    %v6500 = vmul.f32 %v6496, %v6496
    %v6501 = vmul.f32 %v6497, %v6497
    %v6502 = vmul.f32 %v6498, %v6498
    %v6503 = vmul.f32 %v6499, %v6499
    %6504 = vadd.xlane.f32.xlu0 %v6500
    %v6505 = vpop.xlane.xlu0 %6504
    %6506 = vadd.xlane.f32.xlu0 %v6501
    %v6507 = vpop.xlane.xlu0 %6506
    %6508 = vadd.xlane.f32.xlu0 %v6502
    %v6509 = vpop.xlane.xlu0 %6508
    %6510 = vadd.xlane.f32.xlu0 %v6503
    %v6511 = vpop.xlane.xlu0 %6510
    %v6512 = vmul.f32 %v6505, 0.020833334
    %v6513 = vmul.f32 %v6507, 0.020833334
    %v6514 = vmul.f32 %v6509, 0.020833334
    %v6515 = vmul.f32 %v6511, 0.020833334
    %v6516 = vadd.f32 %v6512, 1e-05
    %v6517 = vadd.f32 %v6513, 1e-05
    %v6518 = vadd.f32 %v6514, 1e-05
    %v6519 = vadd.f32 %v6515, 1e-05
    %v6520 = vrsqrt.pop %v6516
    %v6521 = vrsqrt.pop %v6517
    %v6522 = vrsqrt.pop %v6518
    %v6523 = vrsqrt.pop %v6519
    %v6524 = vmul.f32 %v6496, %v6520
    %v6525 = vmul.f32 %v6497, %v6521
    %v6526 = vmul.f32 %v6498, %v6522
    %v6527 = vmul.f32 %v6499, %v6523
    %v6528 = vlaneseq
    %v6529 = vshrl.u32 %v6528, 7
    %v6530 = vsub.s32 2, %v6529
    %v6531 = vrot.slane %v4690, %v6530
    %v6532 = vmul.f32 %v6524, %v6531
    %v6533 = vmul.f32 %v6525, %v6531
    %v6534 = vmul.f32 %v6526, %v6531
    %v6535 = vmul.f32 %v6527, %v6531
    %v6536 = vlaneseq
    %v6537 = vshrl.u32 %v6536, 7
    %v6538 = vsub.s32 3, %v6537
    %v6539 = vrot.slane %v4690, %v6538
    %v6540 = vadd.f32 %v6532, %v6539
    %v6541 = vadd.f32 %v6533, %v6539
    %v6542 = vadd.f32 %v6534, %v6539
    %v6543 = vadd.f32 %v6535, %v6539
    %s6544 = scalar_lea.vmem %s5, 256
    %v6545 = vld [vmem:[%s6544] sm:$0xff]
    %v6546 = vld [vmem:[%s6544 + $0x8] sm:$0xff]
    %v6547 = vld [vmem:[%s6544 + $0x10] sm:$0xff]
    %v6548 = vld [vmem:[%s6544 + $0x18] sm:$0xff]
    %v6549 = vld [vmem:[%s6544 + $0x20] sm:$0xff]
    %v6550 = vld [vmem:[%s6544 + $0x28] sm:$0xff]
    %v6551 = vld [vmem:[%s6544 + $0x30] sm:$0xff]
    %v6552 = vld [vmem:[%s6544 + $0x38] sm:$0xff]
    %v6553 = vld [vmem:[%s6544 + $0x40] sm:$0xff]
    %v6554 = vld [vmem:[%s6544 + $0x48] sm:$0xff]
    %v6555 = vld [vmem:[%s6544 + $0x50] sm:$0xff]
    %v6556 = vld [vmem:[%s6544 + $0x58] sm:$0xff]
    %v6557 = vld [vmem:[%s6544 + $0x60] sm:$0xff]
    %v6558 = vld [vmem:[%s6544 + $0x68] sm:$0xff]
    %v6559 = vld [vmem:[%s6544 + $0x70] sm:$0xff]
    %v6560 = vld [vmem:[%s6544 + $0x78] sm:$0xff]
    %v6561 = vunpack.c.l.bf16 %v6545
    %v6562 = vunpack.c.h.bf16 %v6545
    %v6563 = vunpack.c.l.bf16 %v6546
    %v6564 = vunpack.c.h.bf16 %v6546
    %v6565 = vunpack.c.l.bf16 %v6547
    %v6566 = vunpack.c.h.bf16 %v6547
    %v6567 = vunpack.c.l.bf16 %v6548
    %v6568 = vunpack.c.h.bf16 %v6548
    %v6569 = vunpack.c.l.bf16 %v6549
    %v6570 = vunpack.c.h.bf16 %v6549
    %v6571 = vunpack.c.l.bf16 %v6550
    %v6572 = vunpack.c.h.bf16 %v6550
    %v6573 = vunpack.c.l.bf16 %v6551
    %v6574 = vunpack.c.h.bf16 %v6551
    %v6575 = vunpack.c.l.bf16 %v6552
    %v6576 = vunpack.c.h.bf16 %v6552
    %v6577 = vunpack.c.l.bf16 %v6553
    %v6578 = vunpack.c.h.bf16 %v6553
    %v6579 = vunpack.c.l.bf16 %v6554
    %v6580 = vunpack.c.h.bf16 %v6554
    %v6581 = vunpack.c.l.bf16 %v6555
    %v6582 = vunpack.c.h.bf16 %v6555
    %v6583 = vunpack.c.l.bf16 %v6556
    %v6584 = vunpack.c.h.bf16 %v6556
    %v6585 = vunpack.c.l.bf16 %v6557
    %v6586 = vunpack.c.h.bf16 %v6557
    %v6587 = vunpack.c.l.bf16 %v6558
    %v6588 = vunpack.c.h.bf16 %v6558
    %v6589 = vunpack.c.l.bf16 %v6559
    %v6590 = vunpack.c.h.bf16 %v6559
    %v6591 = vunpack.c.l.bf16 %v6560
    %v6592 = vunpack.c.h.bf16 %v6560
    %v6593 = vlaneseq
    %v6594 = vshrl.u32 %v6593, 7
    %v6595 = vsub.s32 4, %v6594
    %v6596 = vrot.slane %v4690, %v6595
    %v6597 = vlaneseq
    %v6598 = vshrl.u32 %v6597, 7
    %v6599 = vsub.s32 4, %v6598
    %v6600 = vrot.slane %v4691, %v6599
    %6601 = vmatprep.subr.mxu0 %v6592
    %6602 = vmatpush1.msra.mxu0 %v6591
    %6603 = vmatprep.subr.mxu0 %v6590
    %6604 = vmatpush1.msra.mxu0 %v6589
    %6605 = vmatprep.subr.mxu0 %v6588
    %6606 = vmatpush1.msra.mxu0 %v6587
    %6607 = vmatprep.subr.mxu0 %v6586
    %6608 = vmatpush1.msra.mxu0 %v6585
    %6609 = vmatprep.subr.mxu0 %v6584
    %6610 = vmatpush1.msra.mxu0 %v6583
    %6611 = vmatprep.subr.mxu0 %v6582
    %6612 = vmatpush1.msra.mxu0 %v6581
    %6613 = vmatprep.subr.mxu0 %v6580
    %6614 = vmatpush1.msra.mxu0 %v6579
    %6615 = vmatprep.subr.mxu0 %v6578
    %6616 = vmatpush1.msra.mxu0 %v6577
    %6617 = vmatprep.subr.mxu0 %v6576
    %6618 = vmatpush1.msra.mxu0 %v6575
    %6619 = vmatprep.subr.mxu0 %v6574
    %6620 = vmatpush1.msra.mxu0 %v6573
    %6621 = vmatprep.subr.mxu0 %v6572
    %6622 = vmatpush1.msra.mxu0 %v6571
    %6623 = vmatprep.subr.mxu0 %v6570
    %6624 = vmatpush1.msra.mxu0 %v6569
    %6625 = vmatprep.subr.mxu0 %v6568
    %6626 = vmatpush1.msra.mxu0 %v6567
    %6627 = vmatprep.subr.mxu0 %v6566
    %6628 = vmatpush1.msra.mxu0 %v6565
    %6629 = vmatprep.subr.mxu0 %v6564
    %6630 = vmatpush1.msra.mxu0 %v6563
    %6631 = vmatprep.subr.mxu0 %v6562
    %6632 = vmatpush1.msra.mxu0 %v6561
    %6633 = vmatprep.subr.mxu0 0.0
    %6634 = vmatpush2.msra.mxu0 0.0
    %6635 = vmatprep.subr.mxu0 0.0
    %6636 = vmatpush2.msra.mxu0 0.0
    %6637 = vmatprep.subr.mxu0 0.0
    %6638 = vmatpush2.msra.mxu0 0.0
    %6639 = vmatprep.subr.mxu0 0.0
    %6640 = vmatpush2.msra.mxu0 0.0
    %6641 = vmatprep.subr.mxu0 0.0
    %6642 = vmatpush2.msra.mxu0 0.0
    %6643 = vmatprep.subr.mxu0 0.0
    %6644 = vmatpush2.msra.mxu0 0.0
    %6645 = vmatprep.subr.mxu0 0.0
    %6646 = vmatpush2.msra.mxu0 0.0
    %6647 = vmatprep.subr.mxu0 0.0
    %6648 = vmatpush2.msra.mxu0 0.0
    %6649 = vmatprep.subr.mxu0 0.0
    %6650 = vmatpush2.msra.mxu0 0.0
    %6651 = vmatprep.subr.mxu0 0.0
    %6652 = vmatpush2.msra.mxu0 0.0
    %6653 = vmatprep.subr.mxu0 0.0
    %6654 = vmatpush2.msra.mxu0 0.0
    %6655 = vmatprep.subr.mxu0 0.0
    %6656 = vmatpush2.msra.mxu0 0.0
    %6657 = vmatprep.subr.mxu0 0.0
    %6658 = vmatpush2.msra.mxu0 0.0
    %6659 = vmatprep.subr.mxu0 0.0
    %6660 = vmatpush2.msra.mxu0 0.0
    %6661 = vmatprep.subr.mxu0 0.0
    %6662 = vmatpush2.msra.mxu0 0.0
    %6663 = vmatprep.subr.mxu0 0.0
    %6664 = vmatpush2.msra.mxu0 0.0
    %6665 = vmatprep.mubr.f32.mxu0 0.0
    %6666 = vmatmul.mubr.f32.gmra.mxu0 %v6540
    %v6667 = vpop.f32.mrf.mxu0
    %v6668 = vadd.f32 %v6596, %v6667
    %v6669 = vpop.f32.mrf.mxu0
    %v6670 = vadd.f32 %v6600, %v6669
    %6671 = vmatprep.mubr.f32.mxu0 0.0
    %6672 = vmatmul.mubr.f32.gmra.mxu0 %v6541
    %v6673 = vpop.f32.mrf.mxu0
    %v6674 = vadd.f32 %v6596, %v6673
    %v6675 = vpop.f32.mrf.mxu0
    %v6676 = vadd.f32 %v6600, %v6675
    %6677 = vmatprep.mubr.f32.mxu0 0.0
    %6678 = vmatmul.mubr.f32.gmra.mxu0 %v6542
    %v6679 = vpop.f32.mrf.mxu0
    %v6680 = vadd.f32 %v6596, %v6679
    %v6681 = vpop.f32.mrf.mxu0
    %v6682 = vadd.f32 %v6600, %v6681
    %6683 = vmatprep.mubr.f32.mxu0 0.0
    %6684 = vmatmul.mubr.f32.gmra.mxu0 %v6543
    %v6685 = vpop.f32.mrf.mxu0
    %v6686 = vadd.f32 %v6596, %v6685
    %v6687 = vpop.f32.mrf.mxu0
    %v6688 = vadd.f32 %v6600, %v6687
    %6689 = vdwg.mxu0
    %v6690 = vmul.f32 %v6668, 0.5
    %v6691 = vmul.f32 %v6670, 0.5
    %v6692 = vmul.f32 %v6674, 0.5
    %v6693 = vmul.f32 %v6676, 0.5
    %v6694 = vmul.f32 %v6680, 0.5
    %v6695 = vmul.f32 %v6682, 0.5
    %v6696 = vmul.f32 %v6686, 0.5
    %v6697 = vmul.f32 %v6688, 0.5
    %v6698 = vmul.f32 %v6668, 0.70710677
    %v6699 = vmul.f32 %v6670, 0.70710677
    %v6700 = vmul.f32 %v6674, 0.70710677
    %v6701 = vmul.f32 %v6676, 0.70710677
    %v6702 = vmul.f32 %v6680, 0.70710677
    %v6703 = vmul.f32 %v6682, 0.70710677
    %v6704 = vmul.f32 %v6686, 0.70710677
    %v6705 = vmul.f32 %v6688, 0.70710677
    %v6706 = verf.f32.pop %v6698
    %v6707 = verf.f32.pop %v6699
    %v6708 = verf.f32.pop %v6700
    %v6709 = verf.f32.pop %v6701
    %v6710 = verf.f32.pop %v6702
    %v6711 = verf.f32.pop %v6703
    %v6712 = verf.f32.pop %v6704
    %v6713 = verf.f32.pop %v6705
    %v6714 = vadd.f32 %v6706, 1.0
    %v6715 = vadd.f32 %v6707, 1.0
    %v6716 = vadd.f32 %v6708, 1.0
    %v6717 = vadd.f32 %v6709, 1.0
    %v6718 = vadd.f32 %v6710, 1.0
    %v6719 = vadd.f32 %v6711, 1.0
    %v6720 = vadd.f32 %v6712, 1.0
    %v6721 = vadd.f32 %v6713, 1.0
    %v6722 = vmul.f32 %v6690, %v6714
    %v6723 = vmul.f32 %v6691, %v6715
    %v6724 = vmul.f32 %v6692, %v6716
    %v6725 = vmul.f32 %v6693, %v6717
    %v6726 = vmul.f32 %v6694, %v6718
    %v6727 = vmul.f32 %v6695, %v6719
    %v6728 = vmul.f32 %v6696, %v6720
    %v6729 = vmul.f32 %v6697, %v6721
    %s6730 = scalar_lea.vmem %s6, 256
    %v6731 = vld [vmem:[%s6730] sm:$0xf]
    %v6732 = vld [vmem:[%s6730 + $0x4] sm:$0xf]
    %v6733 = vld [vmem:[%s6730 + $0x8] sm:$0xf]
    %v6734 = vld [vmem:[%s6730 + $0xc] sm:$0xf]
    %v6735 = vld [vmem:[%s6730 + $0x10] sm:$0xf]
    %v6736 = vld [vmem:[%s6730 + $0x14] sm:$0xf]
    %v6737 = vld [vmem:[%s6730 + $0x18] sm:$0xf]
    %v6738 = vld [vmem:[%s6730 + $0x1c] sm:$0xf]
    %v6739 = vld [vmem:[%s6730 + $0x20] sm:$0xf]
    %v6740 = vld [vmem:[%s6730 + $0x24] sm:$0xf]
    %v6741 = vld [vmem:[%s6730 + $0x28] sm:$0xf]
    %v6742 = vld [vmem:[%s6730 + $0x2c] sm:$0xf]
    %v6743 = vld [vmem:[%s6730 + $0x30] sm:$0xf]
    %v6744 = vld [vmem:[%s6730 + $0x34] sm:$0xf]
    %v6745 = vld [vmem:[%s6730 + $0x38] sm:$0xf]
    %v6746 = vld [vmem:[%s6730 + $0x3c] sm:$0xf]
    %v6747 = vld [vmem:[%s6730 + $0x40] sm:$0xf]
    %v6748 = vld [vmem:[%s6730 + $0x44] sm:$0xf]
    %v6749 = vld [vmem:[%s6730 + $0x48] sm:$0xf]
    %v6750 = vld [vmem:[%s6730 + $0x4c] sm:$0xf]
    %v6751 = vld [vmem:[%s6730 + $0x50] sm:$0xf]
    %v6752 = vld [vmem:[%s6730 + $0x54] sm:$0xf]
    %v6753 = vld [vmem:[%s6730 + $0x58] sm:$0xf]
    %v6754 = vld [vmem:[%s6730 + $0x5c] sm:$0xf]
    %v6755 = vld [vmem:[%s6730 + $0x60] sm:$0xf]
    %v6756 = vld [vmem:[%s6730 + $0x64] sm:$0xf]
    %v6757 = vld [vmem:[%s6730 + $0x68] sm:$0xf]
    %v6758 = vld [vmem:[%s6730 + $0x6c] sm:$0xf]
    %v6759 = vld [vmem:[%s6730 + $0x70] sm:$0xf]
    %v6760 = vld [vmem:[%s6730 + $0x74] sm:$0xf]
    %v6761 = vld [vmem:[%s6730 + $0x78] sm:$0xf]
    %v6762 = vld [vmem:[%s6730 + $0x7c] sm:$0xf]
    %v6763 = vunpack.c.l.bf16 %v6731
    %v6764 = vunpack.c.l.bf16 %v6732
    %v6765 = vunpack.c.l.bf16 %v6733
    %v6766 = vunpack.c.l.bf16 %v6734
    %v6767 = vunpack.c.l.bf16 %v6735
    %v6768 = vunpack.c.l.bf16 %v6736
    %v6769 = vunpack.c.l.bf16 %v6737
    %v6770 = vunpack.c.l.bf16 %v6738
    %v6771 = vunpack.c.l.bf16 %v6739
    %v6772 = vunpack.c.l.bf16 %v6740
    %v6773 = vunpack.c.l.bf16 %v6741
    %v6774 = vunpack.c.l.bf16 %v6742
    %v6775 = vunpack.c.l.bf16 %v6743
    %v6776 = vunpack.c.l.bf16 %v6744
    %v6777 = vunpack.c.l.bf16 %v6745
    %v6778 = vunpack.c.l.bf16 %v6746
    %v6779 = vunpack.c.l.bf16 %v6747
    %v6780 = vunpack.c.l.bf16 %v6748
    %v6781 = vunpack.c.l.bf16 %v6749
    %v6782 = vunpack.c.l.bf16 %v6750
    %v6783 = vunpack.c.l.bf16 %v6751
    %v6784 = vunpack.c.l.bf16 %v6752
    %v6785 = vunpack.c.l.bf16 %v6753
    %v6786 = vunpack.c.l.bf16 %v6754
    %v6787 = vunpack.c.l.bf16 %v6755
    %v6788 = vunpack.c.l.bf16 %v6756
    %v6789 = vunpack.c.l.bf16 %v6757
    %v6790 = vunpack.c.l.bf16 %v6758
    %v6791 = vunpack.c.l.bf16 %v6759
    %v6792 = vunpack.c.l.bf16 %v6760
    %v6793 = vunpack.c.l.bf16 %v6761
    %v6794 = vunpack.c.l.bf16 %v6762
    %v6795 = vlaneseq
    %v6796 = vshrl.u32 %v6795, 7
    %v6797 = vsub.s32 5, %v6796
    %v6798 = vrot.slane %v4690, %v6797
    %6799 = vmatprep.subr.mxu0 0.0
    %6800 = vmatpush1.msra.mxu0 %v6778
    %6801 = vmatprep.subr.mxu0 0.0
    %6802 = vmatpush1.msra.mxu0 %v6777
    %6803 = vmatprep.subr.mxu0 0.0
    %6804 = vmatpush1.msra.mxu0 %v6776
    %6805 = vmatprep.subr.mxu0 0.0
    %6806 = vmatpush1.msra.mxu0 %v6775
    %6807 = vmatprep.subr.mxu0 0.0
    %6808 = vmatpush1.msra.mxu0 %v6774
    %6809 = vmatprep.subr.mxu0 0.0
    %6810 = vmatpush1.msra.mxu0 %v6773
    %6811 = vmatprep.subr.mxu0 0.0
    %6812 = vmatpush1.msra.mxu0 %v6772
    %6813 = vmatprep.subr.mxu0 0.0
    %6814 = vmatpush1.msra.mxu0 %v6771
    %6815 = vmatprep.subr.mxu0 0.0
    %6816 = vmatpush1.msra.mxu0 %v6770
    %6817 = vmatprep.subr.mxu0 0.0
    %6818 = vmatpush1.msra.mxu0 %v6769
    %6819 = vmatprep.subr.mxu0 0.0
    %6820 = vmatpush1.msra.mxu0 %v6768
    %6821 = vmatprep.subr.mxu0 0.0
    %6822 = vmatpush1.msra.mxu0 %v6767
    %6823 = vmatprep.subr.mxu0 0.0
    %6824 = vmatpush1.msra.mxu0 %v6766
    %6825 = vmatprep.subr.mxu0 0.0
    %6826 = vmatpush1.msra.mxu0 %v6765
    %6827 = vmatprep.subr.mxu0 0.0
    %6828 = vmatpush1.msra.mxu0 %v6764
    %6829 = vmatprep.subr.mxu0 0.0
    %6830 = vmatpush1.msra.mxu0 %v6763
    %6831 = vmatprep.subr.mxu0 0.0
    %6832 = vmatpush2.msra.mxu0 %v6794
    %6833 = vmatprep.subr.mxu0 0.0
    %6834 = vmatpush2.msra.mxu0 %v6793
    %6835 = vmatprep.subr.mxu0 0.0
    %6836 = vmatpush2.msra.mxu0 %v6792
    %6837 = vmatprep.subr.mxu0 0.0
    %6838 = vmatpush2.msra.mxu0 %v6791
    %6839 = vmatprep.subr.mxu0 0.0
    %6840 = vmatpush2.msra.mxu0 %v6790
    %6841 = vmatprep.subr.mxu0 0.0
    %6842 = vmatpush2.msra.mxu0 %v6789
    %6843 = vmatprep.subr.mxu0 0.0
    %6844 = vmatpush2.msra.mxu0 %v6788
    %6845 = vmatprep.subr.mxu0 0.0
    %6846 = vmatpush2.msra.mxu0 %v6787
    %6847 = vmatprep.subr.mxu0 0.0
    %6848 = vmatpush2.msra.mxu0 %v6786
    %6849 = vmatprep.subr.mxu0 0.0
    %6850 = vmatpush2.msra.mxu0 %v6785
    %6851 = vmatprep.subr.mxu0 0.0
    %6852 = vmatpush2.msra.mxu0 %v6784
    %6853 = vmatprep.subr.mxu0 0.0
    %6854 = vmatpush2.msra.mxu0 %v6783
    %6855 = vmatprep.subr.mxu0 0.0
    %6856 = vmatpush2.msra.mxu0 %v6782
    %6857 = vmatprep.subr.mxu0 0.0
    %6858 = vmatpush2.msra.mxu0 %v6781
    %6859 = vmatprep.subr.mxu0 0.0
    %6860 = vmatpush2.msra.mxu0 %v6780
    %6861 = vmatprep.subr.mxu0 0.0
    %6862 = vmatpush2.msra.mxu0 %v6779
    %6863 = vmatprep.mubr.f32.mxu0 %v6723
    %6864 = vmatmul.mubr.f32.gmra.mxu0 %v6722
    %v6865 = vpop.f32.mrf.mxu0
    %v6866 = vadd.f32 %v6798, %v6865
    %v6867 = vpop.f32.mrf.mxu0
    %6868 = vmatprep.mubr.f32.mxu0 %v6725
    %6869 = vmatmul.mubr.f32.gmra.mxu0 %v6724
    %v6870 = vpop.f32.mrf.mxu0
    %v6871 = vpop.f32.mrf.mxu0
    %6872 = vmatprep.mubr.f32.mxu0 %v6727
    %6873 = vmatmul.mubr.f32.gmra.mxu0 %v6726
    %v6874 = vpop.f32.mrf.mxu0
    %v6875 = vadd.f32 %v6798, %v6874
    %v6876 = vpop.f32.mrf.mxu0
    %6877 = vmatprep.mubr.f32.mxu0 %v6729
    %6878 = vmatmul.mubr.f32.gmra.mxu0 %v6728
    %v6879 = vpop.f32.mrf.mxu0
    %v6880 = vpop.f32.mrf.mxu0
    %6881 = vdwg.mxu0
    %v6882 = vadd.f32 %v6540, %v6866
    %v6883 = vadd.f32 %v6542, %v6875
    %6884 = vadd.xlane.f32.xlu0 %v6882
    %v6885 = vpop.xlane.xlu0 %6884
    %6886 = vadd.xlane.f32.xlu0 %v6883
    %v6887 = vpop.xlane.xlu0 %6886
    %v6888 = vmul.f32 %v6885, 0.020833334
    %v6889 = vmul.f32 %v6887, 0.020833334
    %v6890 = vsub.f32 %v6882, %v6888
    %v6891 = vsub.f32 %v6883, %v6889
    %v6892 = vsel %vm1971, %v6890, 0.0
    %v6893 = vsel %vm1971, %v6891, 0.0
    %v6894 = vmul.f32 %v6892, %v6892
    %v6895 = vmul.f32 %v6893, %v6893
    %6896 = vadd.xlane.f32.xlu0 %v6894
    %v6897 = vpop.xlane.xlu0 %6896
    %6898 = vadd.xlane.f32.xlu0 %v6895
    %v6899 = vpop.xlane.xlu0 %6898
    %v6900 = vmul.f32 %v6897, 0.020833334
    %v6901 = vmul.f32 %v6899, 0.020833334
    %v6902 = vadd.f32 %v6900, 1e-05
    %v6903 = vadd.f32 %v6901, 1e-05
    %v6904 = vrsqrt.pop %v6902
    %v6905 = vrsqrt.pop %v6903
    %v6906 = vmul.f32 %v6892, %v6904
    %v6907 = vmul.f32 %v6893, %v6905
    %v6908 = vlaneseq
    %v6909 = vshrl.u32 %v6908, 7
    %v6910 = vsub.s32 6, %v6909
    %v6911 = vrot.slane %v4690, %v6910
    %v6912 = vmul.f32 %v6906, %v6911
    %v6913 = vmul.f32 %v6907, %v6911
    %v6914 = vlaneseq
    %v6915 = vshrl.u32 %v6914, 7
    %v6916 = vsub.s32 7, %v6915
    %v6917 = vrot.slane %v4690, %v6916
    %v6918 = vadd.f32 %v6912, %v6917
    %v6919 = vadd.f32 %v6913, %v6917
    %v6922 = vrot.slane %v6919, 7
    %vm6923 = vcmask 1041409
    %v6924 = vsel %vm6923, %v6922, %v6918
    %vm6926 = vcmask 1041408
    %v6927 = vsel %vm6926, %v6924, 0.0
    %6928 = vadd.xlane.f32.xlu0 %v6927
    %v6929 = vpop.xlane.xlu0 %6928
    %v6930 = vmul.f32 %v6929, 0.020833334
    %v6932 = vrot.slane %v6930, 1
    %v6935 = vsub.f32 %v6918, %v6930
    %v6936 = vsub.f32 %v6919, %v6932
    %v6939 = vrot.slane %v6936, 7
    %v6940 = vsel %vm6923, %v6939, %v6935
    %v6942 = vsel %vm1971, %v6940, 0.0
    %v6943 = vmul.f32 %v6942, %v6942
    %v6944 = vsel %vm6926, %v6943, 0.0
    %6945 = vadd.xlane.f32.xlu0 %v6944
    %v6946 = vpop.xlane.xlu0 %6945
    %v6947 = vmul.f32 %v6946, 0.020833334
    %v6948 = vadd.f32 %v6947, 1e-05
    %v6949 = vrsqrt.pop %v6948
    %v6950 = vmul.f32 %v6942, %v6949
    %v6951 = vlaneseq
    %v6952 = vshrl.u32 %v6951, 7
    %v6953 = vsub.s32 0, %v6952
    %v6954 = vrot.slane %v34, %v6953
    %v6955 = vmul.f32 %v6950, %v6954
    %v6956 = vlaneseq
    %v6957 = vshrl.u32 %v6956, 7
    %v6958 = vsub.s32 0, %v6957
    %v6959 = vrot.slane %v35, %v6958
    %v6960 = vadd.f32 %v6955, %v6959
    %6961 = vst [vmem:[#allocation2] sm:$0x3] %v6960
    // Predicated region
    $region34: #{iqst_backbone_forward.1} parent=1 // pred_check
      _
    $region35: #{iqst_backbone_forward.1} parent=1 // pred_check_branch
      %6963 = sbr.rel (0) target = $region37
    $region36: #{iqst_backbone_forward.1} parent=1 // pred_region
      %s6965 = ssub.s32 32, 32
      %6966 = vsyncadd [#allocation3], %s6965
      %s6968 = sshll.u32 [#allocation2], 4
      %s6969 = int_to_ptr.vmem [resolvable:$true] %s6968
      %6971 = dma.vmem_to_hbm [thread:$0]  %s6969, 32, %s8, [#allocation3]
    $region37: #{iqst_backbone_forward.1} parent=1 // pred_fallthru
      _
    // Predicated region
    $region38: #{iqst_backbone_forward.1} parent=1 // pred_check
      _
    $region39: #{iqst_backbone_forward.1} parent=1 // pred_check_branch
      %6973 = sbr.rel (0) target = $region41
    $region40: #{iqst_backbone_forward.1} parent=1 // pred_region
      %6974 = dma.done [#allocation3], 32
    $region41: #{iqst_backbone_forward.1} parent=1 // pred_fallthru
      _
    %6975 = vsyncpa [#allocation3], 1

</llo_original>
